<compile_context>
chip_gen: v6e
topology: v6e:2x2x1
jax: 0.10.0
libtpu: 0.0.40
codegen_flags: <defaults>
</compile_context>

<pallas_src>
import numpy as np
import jax
import jax.numpy as jnp
from jax.experimental import pallas as pl
from jax.experimental.pallas import tpu as pltpu

D_MODEL = 64
N_HEADS = 4
HEAD_DIM = D_MODEL // N_HEADS
D_FF = 128
LN_EPS = 1e-5


def _layer_norm(z, g, b):
    mu = jnp.mean(z, axis=-1, keepdims=True)
    var = jnp.mean((z - mu) ** 2, axis=-1, keepdims=True)
    return (z - mu) * jax.lax.rsqrt(var + LN_EPS) * g + b


def _choose_seq_block(seq, batch):
    """Smallest divisor of `seq` whose row count (ts*batch) is sublane (8) aligned."""
    for ts in range(1, seq + 1):
        if seq % ts == 0 and (ts * batch) % 8 == 0:
            return ts
    return seq          # single block: block dims equal full dims, always legal


def make_encoder_kernel(batch, seq_block, num_layers):
    """One grid step = `seq_block` sequence positions (all batch rows, seq-major)."""

    def kernel(x_ref, pos_ref, wemb_ref, bemb_ref,
               wq_ref, bq_ref, wk_ref, bk_ref, wv_ref, bv_ref,
               wo_ref, bo_ref, w1_ref, b1_ref, w2_ref, b2_ref,
               g1_ref, be1_ref, g2_ref, be2_ref,
               out_ref):
        f32 = jnp.float32
        bf16 = jnp.bfloat16
        q_scale = f32(1.0 / np.sqrt(HEAD_DIM))

        def mm(a, w):  # bf16 MXU operands, f32 accumulation
            return jnp.dot(a.astype(bf16), w, preferred_element_type=f32)

        # input embedding + positional encoding (pos already replicated per batch row)
        h = mm(x_ref[...], wemb_ref[...]) + bemb_ref[...] + pos_ref[...]

        for l in range(num_layers):
            # ---- multi-head self-attention (post-norm encoder layer) ----
            q = (mm(h, wq_ref[l]) + bq_ref[l]) * q_scale
            k = mm(h, wk_ref[l]) + bk_ref[l]
            v = mm(h, wv_ref[l]) + bv_ref[l]

            ctx_rows = []
            for s in range(seq_block):                    # attention group = seq pos
                rows = slice(s * batch, (s + 1) * batch)
                qs, ks, vs = q[rows], k[rows], v[rows]
                head_ctx = []
                for hh in range(N_HEADS):
                    cols = slice(hh * HEAD_DIM, (hh + 1) * HEAD_DIM)
                    qh = qs[:, cols].astype(bf16)
                    kh = ks[:, cols].astype(bf16)
                    vh = vs[:, cols].astype(bf16)
                    sc = jnp.einsum('bd,cd->bc', qh, kh,
                                    preferred_element_type=f32)   # (B, B), no mask
                    sc = sc - jnp.max(sc, axis=-1, keepdims=True)
                    p = jnp.exp(sc)                                # softmax in f32
                    p = p / jnp.sum(p, axis=-1, keepdims=True)
                    head_ctx.append(jnp.dot(p.astype(bf16), vh,
                                            preferred_element_type=f32))
                ctx_rows.append(jnp.concatenate(head_ctx, axis=-1))
            ctx = jnp.concatenate(ctx_rows, axis=0)               # (seq_block*B, 64)

            attn = mm(ctx, wo_ref[l]) + bo_ref[l]                 # single fused out-proj
            h = _layer_norm(h + attn, g1_ref[l], be1_ref[l])

            # ---- feed-forward ----
            ff = jnp.maximum(mm(h, w1_ref[l]) + b1_ref[l], 0.0)
            ff = mm(ff, w2_ref[l]) + b2_ref[l]
            h = _layer_norm(h + ff, g2_ref[l], be2_ref[l])

        # partial sum over this block's sequence positions (mean pooling finished later)
        part = h[0:batch]
        for s in range(1, seq_block):
            part = part + h[s * batch:(s + 1) * batch]
        out_ref[0] = part

    return kernel


def make_head_kernel(seq):
    inv_seq = 1.0 / float(seq)

    def kernel(hsum_ref, wf1_ref, bf1_ref, wf2_ref, bf2_ref, wf3_ref, bf3_ref,
               out_ref):
        f32 = jnp.float32
        bf16 = jnp.bfloat16
        pooled = jnp.sum(hsum_ref[...], axis=0) * f32(inv_seq)    # (B, 64) mean over seq
        z = jnp.dot(pooled.astype(bf16), wf1_ref[...],
                    preferred_element_type=f32) + bf1_ref[...]
        z = jnp.maximum(z, 0.0)
        z = jnp.dot(z.astype(bf16), wf2_ref[...],
                    preferred_element_type=f32) + bf2_ref[...]
        z = jnp.maximum(z, 0.0)
        z = jnp.dot(z.astype(bf16), wf3_ref[...],
                    preferred_element_type=f32) + bf3_ref[...]
        out_ref[...] = z                                          # lane-dense padded

    return kernel


def transformer_nn_forward(x, p, seq_block=None):
    B, S, Din = x.shape
    A = p['wf3'].shape[0]
    L = p['wqkv'].shape[0]
    N = B * S
    f32, bf16 = jnp.float32, jnp.bfloat16

    if seq_block is None:
        seq_block = _choose_seq_block(S, B)
    assert S % seq_block == 0
    num_blocks = S // seq_block
    rows_per_block = seq_block * B

    # glue: seq-major row slab (row n = s*B + b) + per-row positional encoding
    x_rows = jnp.transpose(x, (1, 0, 2)).reshape(N, Din).astype(f32)
    pos_rep = jnp.repeat(p['pos'][0, :S, :], B, axis=0).astype(f32)      # (N, 64)

    def T(w):  # (out, in) -> (in, out); bf16 MXU operand, transposed once in wrapper
        return jnp.swapaxes(w, -1, -2).astype(bf16)

    wqkv, bqkv = p['wqkv'], p['bqkv']
    enc_args = (
        x_rows, pos_rep,
        T(p['wemb']), p['bemb'].reshape(1, D_MODEL),
        T(wqkv[:, :D_MODEL, :]),
        bqkv[:, :D_MODEL].reshape(L, 1, D_MODEL),
        T(wqkv[:, D_MODEL:2 * D_MODEL, :]),
        bqkv[:, D_MODEL:2 * D_MODEL].reshape(L, 1, D_MODEL),
        T(wqkv[:, 2 * D_MODEL:, :]),
        bqkv[:, 2 * D_MODEL:].reshape(L, 1, D_MODEL),
        T(p['wo']), p['bo'].reshape(L, 1, D_MODEL),
        T(p['w1']), p['b1'].reshape(L, 1, D_FF),
        T(p['w2']), p['b2'].reshape(L, 1, D_MODEL),
        p['g1'].reshape(L, 1, D_MODEL), p['be1'].reshape(L, 1, D_MODEL),
        p['g2'].reshape(L, 1, D_MODEL), p['be2'].reshape(L, 1, D_MODEL),
    )

    def full_spec(a):  # weights resident: full block, constant index map
        nd = a.ndim
        return pl.BlockSpec(a.shape, lambda i, _nd=nd: (0,) * _nd)

    enc_in_specs = (
        [pl.BlockSpec((rows_per_block, Din), lambda i: (i, 0)),
         pl.BlockSpec((rows_per_block, D_MODEL), lambda i: (i, 0))]
        + [full_spec(a) for a in enc_args[2:]]
    )

    hsum = pl.pallas_call(
        make_encoder_kernel(B, seq_block, L),
        out_shape=jax.ShapeDtypeStruct((num_blocks, B, D_MODEL), f32),
        grid_spec=pltpu.PrefetchScalarGridSpec(
            num_scalar_prefetch=0,
            grid=(num_blocks,),
            in_specs=enc_in_specs,
            out_specs=pl.BlockSpec((1, B, D_MODEL), lambda i: (i, 0, 0)),
        ),
        compiler_params=pltpu.CompilerParams(
            dimension_semantics=("parallel",)),
    )(*enc_args)

    # ---- pooling + fc head (64 -> 128 -> 64 -> action_size), lane-dense padded out ----
    A_pad = max(128, ((A + 127) // 128) * 128)
    head_args = (
        hsum,
        T(p['wf1']), p['bf1'].reshape(1, D_FF),
        T(p['wf2']), p['bf2'].reshape(1, D_MODEL),
        jnp.pad(p['wf3'].T, ((0, 0), (0, A_pad - A))).astype(bf16),
        jnp.pad(p['bf3'].reshape(1, A), ((0, 0), (0, A_pad - A))).astype(f32),
    )
    out_pad = pl.pallas_call(
        make_head_kernel(S),
        out_shape=jax.ShapeDtypeStruct((B, A_pad), f32),
        in_specs=[pl.BlockSpec(memory_space=pltpu.MemorySpace.VMEM)] * len(head_args),
        out_specs=pl.BlockSpec(memory_space=pltpu.MemorySpace.VMEM),
    )(*head_args)
    return out_pad[:, :A]


def init_params(key, state_dim, action_size, num_layers=2):
    keys = jax.random.split(key, 16)

    def nrm(k, shape, scale=0.1):
        return scale * jax.random.normal(k, shape, dtype=jnp.float32)

    p = {}
    p['wemb'] = nrm(keys[0], (D_MODEL, state_dim))
    p['bemb'] = nrm(keys[1], (D_MODEL,))
    p['pos'] = nrm(keys[2], (1, state_dim, D_MODEL))

    lkeys = jax.random.split(keys[3], num_layers * 8)
    wqkv, bqkv, wo, bo, w1, b1, w2, b2 = ([] for _ in range(8))
    for l in range(num_layers):
        ks = lkeys[l * 8:(l + 1) * 8]
        wqkv.append(nrm(ks[0], (3 * D_MODEL, D_MODEL)))
        bqkv.append(nrm(ks[1], (3 * D_MODEL,)))
        wo.append(nrm(ks[2], (D_MODEL, D_MODEL)))
        bo.append(nrm(ks[3], (D_MODEL,)))
        w1.append(nrm(ks[4], (D_FF, D_MODEL)))
        b1.append(nrm(ks[5], (D_FF,)))
        w2.append(nrm(ks[6], (D_MODEL, D_FF)))
        b2.append(nrm(ks[7], (D_MODEL,)))
    p['wqkv'] = jnp.stack(wqkv); p['bqkv'] = jnp.stack(bqkv)
    p['wo'] = jnp.stack(wo);     p['bo'] = jnp.stack(bo)
    p['w1'] = jnp.stack(w1);     p['b1'] = jnp.stack(b1)
    p['w2'] = jnp.stack(w2);     p['b2'] = jnp.stack(b2)
    p['g1'] = jnp.ones((num_layers, D_MODEL), jnp.float32)
    p['be1'] = jnp.zeros((num_layers, D_MODEL), jnp.float32)
    p['g2'] = jnp.ones((num_layers, D_MODEL), jnp.float32)
    p['be2'] = jnp.zeros((num_layers, D_MODEL), jnp.float32)

    p['wf1'] = nrm(keys[4], (D_FF, D_MODEL)); p['bf1'] = nrm(keys[5], (D_FF,))
    p['wf2'] = nrm(keys[6], (D_MODEL, D_FF)); p['bf2'] = nrm(keys[7], (D_MODEL,))
    p['wf3'] = nrm(keys[8], (action_size, D_MODEL))
    p['bf3'] = nrm(keys[9], (action_size,))
    return p


def reference_forward(x, p):
    # pure-JAX mirror of the PyTorch module (eval mode), for validation
    B, S, _ = x.shape
    h = x @ p['wemb'].T + p['bemb'] + p['pos'][:, :S, :]            # (B,S,64)
    L = p['wqkv'].shape[0]
    for l in range(L):
        qkv = h @ p['wqkv'][l].T + p['bqkv'][l]                     # (B,S,192)
        q, k, v = (qkv[..., :64], qkv[..., 64:128], qkv[..., 128:])
        q = q.reshape(B, S, N_HEADS, HEAD_DIM) / np.sqrt(HEAD_DIM)
        k = k.reshape(B, S, N_HEADS, HEAD_DIM)
        v = v.reshape(B, S, N_HEADS, HEAD_DIM)
        # attention over dim 0 (B): batch_first=False semantics
        sc = jnp.einsum('ishd,jshd->shij', q, k)
        a = jax.nn.softmax(sc, axis=-1)
        ctx = jnp.einsum('shij,jshd->ishd', a, v).reshape(B, S, D_MODEL)
        attn_out = ctx @ p['wo'][l].T + p['bo'][l]
        h = _layer_norm(h + attn_out, p['g1'][l], p['be1'][l])
        ff = jnp.maximum(h @ p['w1'][l].T + p['b1'][l], 0.0)
        ff = ff @ p['w2'][l].T + p['b2'][l]
        h = _layer_norm(h + ff, p['g2'][l], p['be2'][l])
    pooled = jnp.mean(h, axis=1)
    z = jnp.maximum(pooled @ p['wf1'].T + p['bf1'], 0.0)
    z = jnp.maximum(z @ p['wf2'].T + p['bf2'], 0.0)
    return z @ p['wf3'].T + p['bf3']


if __name__ == "__main__":
    state_dim = 8
    action_size = 4
    B, S = 2, 8                       # S <= state_dim (positional-encoding slice)

    key = jax.random.PRNGKey(0)
    kx, kp = jax.random.split(key)
    x = jax.random.normal(kx, (B, S, state_dim), dtype=jnp.float32)
    params = init_params(kp, state_dim, action_size, num_layers=2)

    out = transformer_nn_forward(x, params)      # seq_block auto -> 4  => grid of 2 steps
    out = jax.block_until_ready(out)

    ref = reference_forward(x, params)
    err = float(jnp.max(jnp.abs(out - ref)))
    assert out.shape == (B, action_size)
    # bf16 MXU operands (f32 accumulation) vs f32 reference: tolerance sized for bf16,
    # tighter than the previous 5e-2 f32-only bound would warrant.
    assert err < 3e-2, f"max abs error vs reference: {err}"
    print("KERNEL_OK")
</pallas_src>

<mosaic_0001>
module attributes {stable_mosaic.version = 11 : i64} {
  func.func @kernel(%arg0: i32, %arg1: memref<8x8xf32, #tpu.memory_space<vmem>>, %arg2: memref<8x64xf32, #tpu.memory_space<vmem>>, %arg3: memref<8x64xbf16, #tpu.memory_space<vmem>>, %arg4: memref<1x64xf32, #tpu.memory_space<vmem>>, %arg5: memref<2x64x64xbf16, #tpu.memory_space<vmem>>, %arg6: memref<2x1x64xf32, #tpu.memory_space<vmem>>, %arg7: memref<2x64x64xbf16, #tpu.memory_space<vmem>>, %arg8: memref<2x1x64xf32, #tpu.memory_space<vmem>>, %arg9: memref<2x64x64xbf16, #tpu.memory_space<vmem>>, %arg10: memref<2x1x64xf32, #tpu.memory_space<vmem>>, %arg11: memref<2x64x64xbf16, #tpu.memory_space<vmem>>, %arg12: memref<2x1x64xf32, #tpu.memory_space<vmem>>, %arg13: memref<2x64x128xbf16, #tpu.memory_space<vmem>>, %arg14: memref<2x1x128xf32, #tpu.memory_space<vmem>>, %arg15: memref<2x128x64xbf16, #tpu.memory_space<vmem>>, %arg16: memref<2x1x64xf32, #tpu.memory_space<vmem>>, %arg17: memref<2x1x64xf32, #tpu.memory_space<vmem>>, %arg18: memref<2x1x64xf32, #tpu.memory_space<vmem>>, %arg19: memref<2x1x64xf32, #tpu.memory_space<vmem>>, %arg20: memref<2x1x64xf32, #tpu.memory_space<vmem>>, %arg21: memref<1x2x64xf32, #tpu.memory_space<vmem>>) attributes {dimension_semantics = [#tpu.dimension_semantics<parallel>], iteration_bounds = array<i64: 2>, scalar_prefetch = 0 : i64, scratch_operands = 0 : i64, tpu.core_type = #tpu.core_type<tc>, window_params = [{transform_indices = @transform_0, window_bounds = array<i64: 8, 8>}, {transform_indices = @transform_1, window_bounds = array<i64: 8, 64>}, {pipeline_mode = #tpu.pipeline_mode<synchronous>, transform_indices = @transform_2, window_bounds = array<i64: 8, 64>}, {pipeline_mode = #tpu.pipeline_mode<synchronous>, transform_indices = @transform_3, window_bounds = array<i64: 1, 64>}, {pipeline_mode = #tpu.pipeline_mode<synchronous>, transform_indices = @transform_4, window_bounds = array<i64: 2, 64, 64>}, {pipeline_mode = #tpu.pipeline_mode<synchronous>, transform_indices = @transform_5, window_bounds = array<i64: 2, 1, 64>}, {pipeline_mode = #tpu.pipeline_mode<synchronous>, transform_indices = @transform_6, window_bounds = array<i64: 2, 64, 64>}, {pipeline_mode = #tpu.pipeline_mode<synchronous>, transform_indices = @transform_7, window_bounds = array<i64: 2, 1, 64>}, {pipeline_mode = #tpu.pipeline_mode<synchronous>, transform_indices = @transform_8, window_bounds = array<i64: 2, 64, 64>}, {pipeline_mode = #tpu.pipeline_mode<synchronous>, transform_indices = @transform_9, window_bounds = array<i64: 2, 1, 64>}, {pipeline_mode = #tpu.pipeline_mode<synchronous>, transform_indices = @transform_10, window_bounds = array<i64: 2, 64, 64>}, {pipeline_mode = #tpu.pipeline_mode<synchronous>, transform_indices = @transform_11, window_bounds = array<i64: 2, 1, 64>}, {pipeline_mode = #tpu.pipeline_mode<synchronous>, transform_indices = @transform_12, window_bounds = array<i64: 2, 64, 128>}, {pipeline_mode = #tpu.pipeline_mode<synchronous>, transform_indices = @transform_13, window_bounds = array<i64: 2, 1, 128>}, {pipeline_mode = #tpu.pipeline_mode<synchronous>, transform_indices = @transform_14, window_bounds = array<i64: 2, 128, 64>}, {pipeline_mode = #tpu.pipeline_mode<synchronous>, transform_indices = @transform_15, window_bounds = array<i64: 2, 1, 64>}, {pipeline_mode = #tpu.pipeline_mode<synchronous>, transform_indices = @transform_16, window_bounds = array<i64: 2, 1, 64>}, {pipeline_mode = #tpu.pipeline_mode<synchronous>, transform_indices = @transform_17, window_bounds = array<i64: 2, 1, 64>}, {pipeline_mode = #tpu.pipeline_mode<synchronous>, transform_indices = @transform_18, window_bounds = array<i64: 2, 1, 64>}, {pipeline_mode = #tpu.pipeline_mode<synchronous>, transform_indices = @transform_19, window_bounds = array<i64: 2, 1, 64>}, {transform_indices = @transform_20, window_bounds = array<i64: 1, 2, 64>}]} {
    %c0 = arith.constant 0 : index
    %c0_0 = arith.constant 0 : index
    %0 = vector.load %arg1[%c0, %c0_0] : memref<8x8xf32, #tpu.memory_space<vmem>>, vector<8x8xf32>
    %c0_1 = arith.constant 0 : index
    %c0_2 = arith.constant 0 : index
    %1 = vector.load %arg3[%c0_1, %c0_2] : memref<8x64xbf16, #tpu.memory_space<vmem>>, vector<8x64xbf16>
    %2 = arith.truncf %0 : vector<8x8xf32> to vector<8x8xbf16>
    %cst = arith.constant dense<0.000000e+00> : vector<8x64xf32>
    %3 = tpu.matmul %2, %1, %cst {dimension_numbers = #tpu.dot_dimension_numbers<[1], [0], [0], [1], [0, 0, 1, 1], [], []>} : vector<8x8xbf16>, vector<8x64xbf16>, vector<8x64xf32> -> vector<8x64xf32>
    %c0_3 = arith.constant 0 : index
    %c0_4 = arith.constant 0 : index
    %4 = vector.load %arg4[%c0_3, %c0_4] : memref<1x64xf32, #tpu.memory_space<vmem>>, vector<1x64xf32>
    %5 = vector.broadcast %4 : vector<1x64xf32> to vector<8x64xf32>
    %6 = arith.addf %3, %5 : vector<8x64xf32>
    %c0_5 = arith.constant 0 : index
    %c0_6 = arith.constant 0 : index
    %7 = vector.load %arg2[%c0_5, %c0_6] : memref<8x64xf32, #tpu.memory_space<vmem>>, vector<8x64xf32>
    %8 = arith.addf %6, %7 : vector<8x64xf32>
    %c0_7 = arith.constant 0 : index
    %c0_8 = arith.constant 0 : index
    %c0_9 = arith.constant 0 : index
    %9 = vector.load %arg5[%c0_7, %c0_8, %c0_9] : memref<2x64x64xbf16, #tpu.memory_space<vmem>>, vector<1x64x64xbf16>
    %10 = vector.shape_cast %9 : vector<1x64x64xbf16> to vector<64x64xbf16>
    %11 = arith.truncf %8 : vector<8x64xf32> to vector<8x64xbf16>
    %cst_10 = arith.constant dense<0.000000e+00> : vector<8x64xf32>
    %12 = tpu.matmul %11, %10, %cst_10 {dimension_numbers = #tpu.dot_dimension_numbers<[1], [0], [0], [1], [0, 0, 1, 1], [], []>} : vector<8x64xbf16>, vector<64x64xbf16>, vector<8x64xf32> -> vector<8x64xf32>
    %c0_11 = arith.constant 0 : index
    %c0_12 = arith.constant 0 : index
    %c0_13 = arith.constant 0 : index
    %13 = vector.load %arg6[%c0_11, %c0_12, %c0_13] : memref<2x1x64xf32, #tpu.memory_space<vmem>>, vector<1x1x64xf32>
    %14 = vector.shape_cast %13 : vector<1x1x64xf32> to vector<1x64xf32>
    %15 = vector.broadcast %14 : vector<1x64xf32> to vector<8x64xf32>
    %16 = arith.addf %12, %15 : vector<8x64xf32>
    %cst_14 = arith.constant 2.500000e-01 : f32
    %17 = vector.broadcast %cst_14 : f32 to vector<8x64xf32>
    %18 = arith.mulf %16, %17 : vector<8x64xf32>
    %c0_15 = arith.constant 0 : index
    %c0_16 = arith.constant 0 : index
    %c0_17 = arith.constant 0 : index
    %19 = vector.load %arg7[%c0_15, %c0_16, %c0_17] : memref<2x64x64xbf16, #tpu.memory_space<vmem>>, vector<1x64x64xbf16>
    %20 = vector.shape_cast %19 : vector<1x64x64xbf16> to vector<64x64xbf16>
    %21 = arith.truncf %8 : vector<8x64xf32> to vector<8x64xbf16>
    %cst_18 = arith.constant dense<0.000000e+00> : vector<8x64xf32>
    %22 = tpu.matmul %21, %20, %cst_18 {dimension_numbers = #tpu.dot_dimension_numbers<[1], [0], [0], [1], [0, 0, 1, 1], [], []>} : vector<8x64xbf16>, vector<64x64xbf16>, vector<8x64xf32> -> vector<8x64xf32>
    %c0_19 = arith.constant 0 : index
    %c0_20 = arith.constant 0 : index
    %c0_21 = arith.constant 0 : index
    %23 = vector.load %arg8[%c0_19, %c0_20, %c0_21] : memref<2x1x64xf32, #tpu.memory_space<vmem>>, vector<1x1x64xf32>
    %24 = vector.shape_cast %23 : vector<1x1x64xf32> to vector<1x64xf32>
    %25 = vector.broadcast %24 : vector<1x64xf32> to vector<8x64xf32>
    %26 = arith.addf %22, %25 : vector<8x64xf32>
    %c0_22 = arith.constant 0 : index
    %c0_23 = arith.constant 0 : index
    %c0_24 = arith.constant 0 : index
    %27 = vector.load %arg9[%c0_22, %c0_23, %c0_24] : memref<2x64x64xbf16, #tpu.memory_space<vmem>>, vector<1x64x64xbf16>
    %28 = vector.shape_cast %27 : vector<1x64x64xbf16> to vector<64x64xbf16>
    %29 = arith.truncf %8 : vector<8x64xf32> to vector<8x64xbf16>
    %cst_25 = arith.constant dense<0.000000e+00> : vector<8x64xf32>
    %30 = tpu.matmul %29, %28, %cst_25 {dimension_numbers = #tpu.dot_dimension_numbers<[1], [0], [0], [1], [0, 0, 1, 1], [], []>} : vector<8x64xbf16>, vector<64x64xbf16>, vector<8x64xf32> -> vector<8x64xf32>
    %c0_26 = arith.constant 0 : index
    %c0_27 = arith.constant 0 : index
    %c0_28 = arith.constant 0 : index
    %31 = vector.load %arg10[%c0_26, %c0_27, %c0_28] : memref<2x1x64xf32, #tpu.memory_space<vmem>>, vector<1x1x64xf32>
    %32 = vector.shape_cast %31 : vector<1x1x64xf32> to vector<1x64xf32>
    %33 = vector.broadcast %32 : vector<1x64xf32> to vector<8x64xf32>
    %34 = arith.addf %30, %33 : vector<8x64xf32>
    %35 = vector.extract_strided_slice %18 {offsets = [0, 0], sizes = [2, 64], strides = [1, 1]} : vector<8x64xf32> to vector<2x64xf32>
    %36 = vector.extract_strided_slice %26 {offsets = [0, 0], sizes = [2, 64], strides = [1, 1]} : vector<8x64xf32> to vector<2x64xf32>
    %37 = vector.extract_strided_slice %34 {offsets = [0, 0], sizes = [2, 64], strides = [1, 1]} : vector<8x64xf32> to vector<2x64xf32>
    %38 = vector.extract_strided_slice %35 {offsets = [0, 0], sizes = [2, 16], strides = [1, 1]} : vector<2x64xf32> to vector<2x16xf32>
    %39 = arith.truncf %38 : vector<2x16xf32> to vector<2x16xbf16>
    %40 = vector.extract_strided_slice %36 {offsets = [0, 0], sizes = [2, 16], strides = [1, 1]} : vector<2x64xf32> to vector<2x16xf32>
    %41 = arith.truncf %40 : vector<2x16xf32> to vector<2x16xbf16>
    %42 = vector.extract_strided_slice %37 {offsets = [0, 0], sizes = [2, 16], strides = [1, 1]} : vector<2x64xf32> to vector<2x16xf32>
    %43 = arith.truncf %42 : vector<2x16xf32> to vector<2x16xbf16>
    "tpu.trace_start"() <{level = 10 : i32, message = "bd,cd->bc"}> : () -> ()
    %cst_29 = arith.constant dense<0.000000e+00> : vector<2x2xf32>
    %44 = tpu.matmul %39, %41, %cst_29 {dimension_numbers = #tpu.dot_dimension_numbers<[1], [1], [0], [0], [0, 0, 1, 0], [], []>} : vector<2x16xbf16>, vector<2x16xbf16>, vector<2x2xf32> -> vector<2x2xf32>
    "tpu.trace_stop"() : () -> ()
    %cst_30 = arith.constant dense<0xFF800000> : vector<2xf32>
    %45 = vector.multi_reduction <maximumf>, %44, %cst_30 [1] : vector<2x2xf32> to vector<2xf32>
    %46 = vector.shape_cast %45 : vector<2xf32> to vector<2x1xf32>
    %47 = vector.broadcast %46 : vector<2x1xf32> to vector<2x2xf32>
    %48 = arith.subf %44, %47 : vector<2x2xf32>
    %49 = math.exp %48 : vector<2x2xf32>
    %cst_31 = arith.constant dense<0.000000e+00> : vector<2xf32>
    %50 = vector.multi_reduction <add>, %49, %cst_31 [1] : vector<2x2xf32> to vector<2xf32>
    %51 = vector.shape_cast %50 : vector<2xf32> to vector<2x1xf32>
    %52 = vector.broadcast %51 : vector<2x1xf32> to vector<2x2xf32>
    %53 = arith.divf %49, %52 : vector<2x2xf32>
    %54 = arith.truncf %53 : vector<2x2xf32> to vector<2x2xbf16>
    %cst_32 = arith.constant dense<0.000000e+00> : vector<2x16xf32>
    %55 = tpu.matmul %54, %43, %cst_32 {dimension_numbers = #tpu.dot_dimension_numbers<[1], [0], [0], [1], [0, 0, 1, 1], [], []>} : vector<2x2xbf16>, vector<2x16xbf16>, vector<2x16xf32> -> vector<2x16xf32>
    %56 = vector.extract_strided_slice %35 {offsets = [0, 16], sizes = [2, 16], strides = [1, 1]} : vector<2x64xf32> to vector<2x16xf32>
    %57 = arith.truncf %56 : vector<2x16xf32> to vector<2x16xbf16>
    %58 = vector.extract_strided_slice %36 {offsets = [0, 16], sizes = [2, 16], strides = [1, 1]} : vector<2x64xf32> to vector<2x16xf32>
    %59 = arith.truncf %58 : vector<2x16xf32> to vector<2x16xbf16>
    %60 = vector.extract_strided_slice %37 {offsets = [0, 16], sizes = [2, 16], strides = [1, 1]} : vector<2x64xf32> to vector<2x16xf32>
    %61 = arith.truncf %60 : vector<2x16xf32> to vector<2x16xbf16>
    "tpu.trace_start"() <{level = 10 : i32, message = "bd,cd->bc"}> : () -> ()
    %cst_33 = arith.constant dense<0.000000e+00> : vector<2x2xf32>
    %62 = tpu.matmul %57, %59, %cst_33 {dimension_numbers = #tpu.dot_dimension_numbers<[1], [1], [0], [0], [0, 0, 1, 0], [], []>} : vector<2x16xbf16>, vector<2x16xbf16>, vector<2x2xf32> -> vector<2x2xf32>
    "tpu.trace_stop"() : () -> ()
    %cst_34 = arith.constant dense<0xFF800000> : vector<2xf32>
    %63 = vector.multi_reduction <maximumf>, %62, %cst_34 [1] : vector<2x2xf32> to vector<2xf32>
    %64 = vector.shape_cast %63 : vector<2xf32> to vector<2x1xf32>
    %65 = vector.broadcast %64 : vector<2x1xf32> to vector<2x2xf32>
    %66 = arith.subf %62, %65 : vector<2x2xf32>
    %67 = math.exp %66 : vector<2x2xf32>
    %cst_35 = arith.constant dense<0.000000e+00> : vector<2xf32>
    %68 = vector.multi_reduction <add>, %67, %cst_35 [1] : vector<2x2xf32> to vector<2xf32>
    %69 = vector.shape_cast %68 : vector<2xf32> to vector<2x1xf32>
    %70 = vector.broadcast %69 : vector<2x1xf32> to vector<2x2xf32>
    %71 = arith.divf %67, %70 : vector<2x2xf32>
    %72 = arith.truncf %71 : vector<2x2xf32> to vector<2x2xbf16>
    %cst_36 = arith.constant dense<0.000000e+00> : vector<2x16xf32>
    %73 = tpu.matmul %72, %61, %cst_36 {dimension_numbers = #tpu.dot_dimension_numbers<[1], [0], [0], [1], [0, 0, 1, 1], [], []>} : vector<2x2xbf16>, vector<2x16xbf16>, vector<2x16xf32> -> vector<2x16xf32>
    %74 = vector.extract_strided_slice %35 {offsets = [0, 32], sizes = [2, 16], strides = [1, 1]} : vector<2x64xf32> to vector<2x16xf32>
    %75 = arith.truncf %74 : vector<2x16xf32> to vector<2x16xbf16>
    %76 = vector.extract_strided_slice %36 {offsets = [0, 32], sizes = [2, 16], strides = [1, 1]} : vector<2x64xf32> to vector<2x16xf32>
    %77 = arith.truncf %76 : vector<2x16xf32> to vector<2x16xbf16>
    %78 = vector.extract_strided_slice %37 {offsets = [0, 32], sizes = [2, 16], strides = [1, 1]} : vector<2x64xf32> to vector<2x16xf32>
    %79 = arith.truncf %78 : vector<2x16xf32> to vector<2x16xbf16>
    "tpu.trace_start"() <{level = 10 : i32, message = "bd,cd->bc"}> : () -> ()
    %cst_37 = arith.constant dense<0.000000e+00> : vector<2x2xf32>
    %80 = tpu.matmul %75, %77, %cst_37 {dimension_numbers = #tpu.dot_dimension_numbers<[1], [1], [0], [0], [0, 0, 1, 0], [], []>} : vector<2x16xbf16>, vector<2x16xbf16>, vector<2x2xf32> -> vector<2x2xf32>
    "tpu.trace_stop"() : () -> ()
    %cst_38 = arith.constant dense<0xFF800000> : vector<2xf32>
    %81 = vector.multi_reduction <maximumf>, %80, %cst_38 [1] : vector<2x2xf32> to vector<2xf32>
    %82 = vector.shape_cast %81 : vector<2xf32> to vector<2x1xf32>
    %83 = vector.broadcast %82 : vector<2x1xf32> to vector<2x2xf32>
    %84 = arith.subf %80, %83 : vector<2x2xf32>
    %85 = math.exp %84 : vector<2x2xf32>
    %cst_39 = arith.constant dense<0.000000e+00> : vector<2xf32>
    %86 = vector.multi_reduction <add>, %85, %cst_39 [1] : vector<2x2xf32> to vector<2xf32>
    %87 = vector.shape_cast %86 : vector<2xf32> to vector<2x1xf32>
    %88 = vector.broadcast %87 : vector<2x1xf32> to vector<2x2xf32>
    %89 = arith.divf %85, %88 : vector<2x2xf32>
    %90 = arith.truncf %89 : vector<2x2xf32> to vector<2x2xbf16>
    %cst_40 = arith.constant dense<0.000000e+00> : vector<2x16xf32>
    %91 = tpu.matmul %90, %79, %cst_40 {dimension_numbers = #tpu.dot_dimension_numbers<[1], [0], [0], [1], [0, 0, 1, 1], [], []>} : vector<2x2xbf16>, vector<2x16xbf16>, vector<2x16xf32> -> vector<2x16xf32>
    %92 = vector.extract_strided_slice %35 {offsets = [0, 48], sizes = [2, 16], strides = [1, 1]} : vector<2x64xf32> to vector<2x16xf32>
    %93 = arith.truncf %92 : vector<2x16xf32> to vector<2x16xbf16>
    %94 = vector.extract_strided_slice %36 {offsets = [0, 48], sizes = [2, 16], strides = [1, 1]} : vector<2x64xf32> to vector<2x16xf32>
    %95 = arith.truncf %94 : vector<2x16xf32> to vector<2x16xbf16>
    %96 = vector.extract_strided_slice %37 {offsets = [0, 48], sizes = [2, 16], strides = [1, 1]} : vector<2x64xf32> to vector<2x16xf32>
    %97 = arith.truncf %96 : vector<2x16xf32> to vector<2x16xbf16>
    "tpu.trace_start"() <{level = 10 : i32, message = "bd,cd->bc"}> : () -> ()
    %cst_41 = arith.constant dense<0.000000e+00> : vector<2x2xf32>
    %98 = tpu.matmul %93, %95, %cst_41 {dimension_numbers = #tpu.dot_dimension_numbers<[1], [1], [0], [0], [0, 0, 1, 0], [], []>} : vector<2x16xbf16>, vector<2x16xbf16>, vector<2x2xf32> -> vector<2x2xf32>
    "tpu.trace_stop"() : () -> ()
    %cst_42 = arith.constant dense<0xFF800000> : vector<2xf32>
    %99 = vector.multi_reduction <maximumf>, %98, %cst_42 [1] : vector<2x2xf32> to vector<2xf32>
    %100 = vector.shape_cast %99 : vector<2xf32> to vector<2x1xf32>
    %101 = vector.broadcast %100 : vector<2x1xf32> to vector<2x2xf32>
    %102 = arith.subf %98, %101 : vector<2x2xf32>
    %103 = math.exp %102 : vector<2x2xf32>
    %cst_43 = arith.constant dense<0.000000e+00> : vector<2xf32>
    %104 = vector.multi_reduction <add>, %103, %cst_43 [1] : vector<2x2xf32> to vector<2xf32>
    %105 = vector.shape_cast %104 : vector<2xf32> to vector<2x1xf32>
    %106 = vector.broadcast %105 : vector<2x1xf32> to vector<2x2xf32>
    %107 = arith.divf %103, %106 : vector<2x2xf32>
    %108 = arith.truncf %107 : vector<2x2xf32> to vector<2x2xbf16>
    %cst_44 = arith.constant dense<0.000000e+00> : vector<2x16xf32>
    %109 = tpu.matmul %108, %97, %cst_44 {dimension_numbers = #tpu.dot_dimension_numbers<[1], [0], [0], [1], [0, 0, 1, 1], [], []>} : vector<2x2xbf16>, vector<2x16xbf16>, vector<2x16xf32> -> vector<2x16xf32>
    %110 = tpu.concatenate %55, %73, %91, %109 in 1 : vector<2x16xf32>, vector<2x16xf32>, vector<2x16xf32>, vector<2x16xf32> -> vector<2x64xf32>
    %111 = vector.extract_strided_slice %18 {offsets = [2, 0], sizes = [2, 64], strides = [1, 1]} : vector<8x64xf32> to vector<2x64xf32>
    %112 = vector.extract_strided_slice %26 {offsets = [2, 0], sizes = [2, 64], strides = [1, 1]} : vector<8x64xf32> to vector<2x64xf32>
    %113 = vector.extract_strided_slice %34 {offsets = [2, 0], sizes = [2, 64], strides = [1, 1]} : vector<8x64xf32> to vector<2x64xf32>
    %114 = vector.extract_strided_slice %111 {offsets = [0, 0], sizes = [2, 16], strides = [1, 1]} : vector<2x64xf32> to vector<2x16xf32>
    %115 = arith.truncf %114 : vector<2x16xf32> to vector<2x16xbf16>
    %116 = vector.extract_strided_slice %112 {offsets = [0, 0], sizes = [2, 16], strides = [1, 1]} : vector<2x64xf32> to vector<2x16xf32>
    %117 = arith.truncf %116 : vector<2x16xf32> to vector<2x16xbf16>
    %118 = vector.extract_strided_slice %113 {offsets = [0, 0], sizes = [2, 16], strides = [1, 1]} : vector<2x64xf32> to vector<2x16xf32>
    %119 = arith.truncf %118 : vector<2x16xf32> to vector<2x16xbf16>
    "tpu.trace_start"() <{level = 10 : i32, message = "bd,cd->bc"}> : () -> ()
    %cst_45 = arith.constant dense<0.000000e+00> : vector<2x2xf32>
    %120 = tpu.matmul %115, %117, %cst_45 {dimension_numbers = #tpu.dot_dimension_numbers<[1], [1], [0], [0], [0, 0, 1, 0], [], []>} : vector<2x16xbf16>, vector<2x16xbf16>, vector<2x2xf32> -> vector<2x2xf32>
    "tpu.trace_stop"() : () -> ()
    %cst_46 = arith.constant dense<0xFF800000> : vector<2xf32>
    %121 = vector.multi_reduction <maximumf>, %120, %cst_46 [1] : vector<2x2xf32> to vector<2xf32>
    %122 = vector.shape_cast %121 : vector<2xf32> to vector<2x1xf32>
    %123 = vector.broadcast %122 : vector<2x1xf32> to vector<2x2xf32>
    %124 = arith.subf %120, %123 : vector<2x2xf32>
    %125 = math.exp %124 : vector<2x2xf32>
    %cst_47 = arith.constant dense<0.000000e+00> : vector<2xf32>
    %126 = vector.multi_reduction <add>, %125, %cst_47 [1] : vector<2x2xf32> to vector<2xf32>
    %127 = vector.shape_cast %126 : vector<2xf32> to vector<2x1xf32>
    %128 = vector.broadcast %127 : vector<2x1xf32> to vector<2x2xf32>
    %129 = arith.divf %125, %128 : vector<2x2xf32>
    %130 = arith.truncf %129 : vector<2x2xf32> to vector<2x2xbf16>
    %cst_48 = arith.constant dense<0.000000e+00> : vector<2x16xf32>
    %131 = tpu.matmul %130, %119, %cst_48 {dimension_numbers = #tpu.dot_dimension_numbers<[1], [0], [0], [1], [0, 0, 1, 1], [], []>} : vector<2x2xbf16>, vector<2x16xbf16>, vector<2x16xf32> -> vector<2x16xf32>
    %132 = vector.extract_strided_slice %111 {offsets = [0, 16], sizes = [2, 16], strides = [1, 1]} : vector<2x64xf32> to vector<2x16xf32>
    %133 = arith.truncf %132 : vector<2x16xf32> to vector<2x16xbf16>
    %134 = vector.extract_strided_slice %112 {offsets = [0, 16], sizes = [2, 16], strides = [1, 1]} : vector<2x64xf32> to vector<2x16xf32>
    %135 = arith.truncf %134 : vector<2x16xf32> to vector<2x16xbf16>
    %136 = vector.extract_strided_slice %113 {offsets = [0, 16], sizes = [2, 16], strides = [1, 1]} : vector<2x64xf32> to vector<2x16xf32>
    %137 = arith.truncf %136 : vector<2x16xf32> to vector<2x16xbf16>
    "tpu.trace_start"() <{level = 10 : i32, message = "bd,cd->bc"}> : () -> ()
    %cst_49 = arith.constant dense<0.000000e+00> : vector<2x2xf32>
    %138 = tpu.matmul %133, %135, %cst_49 {dimension_numbers = #tpu.dot_dimension_numbers<[1], [1], [0], [0], [0, 0, 1, 0], [], []>} : vector<2x16xbf16>, vector<2x16xbf16>, vector<2x2xf32> -> vector<2x2xf32>
    "tpu.trace_stop"() : () -> ()
    %cst_50 = arith.constant dense<0xFF800000> : vector<2xf32>
    %139 = vector.multi_reduction <maximumf>, %138, %cst_50 [1] : vector<2x2xf32> to vector<2xf32>
    %140 = vector.shape_cast %139 : vector<2xf32> to vector<2x1xf32>
    %141 = vector.broadcast %140 : vector<2x1xf32> to vector<2x2xf32>
    %142 = arith.subf %138, %141 : vector<2x2xf32>
    %143 = math.exp %142 : vector<2x2xf32>
    %cst_51 = arith.constant dense<0.000000e+00> : vector<2xf32>
    %144 = vector.multi_reduction <add>, %143, %cst_51 [1] : vector<2x2xf32> to vector<2xf32>
    %145 = vector.shape_cast %144 : vector<2xf32> to vector<2x1xf32>
    %146 = vector.broadcast %145 : vector<2x1xf32> to vector<2x2xf32>
    %147 = arith.divf %143, %146 : vector<2x2xf32>
    %148 = arith.truncf %147 : vector<2x2xf32> to vector<2x2xbf16>
    %cst_52 = arith.constant dense<0.000000e+00> : vector<2x16xf32>
    %149 = tpu.matmul %148, %137, %cst_52 {dimension_numbers = #tpu.dot_dimension_numbers<[1], [0], [0], [1], [0, 0, 1, 1], [], []>} : vector<2x2xbf16>, vector<2x16xbf16>, vector<2x16xf32> -> vector<2x16xf32>
    %150 = vector.extract_strided_slice %111 {offsets = [0, 32], sizes = [2, 16], strides = [1, 1]} : vector<2x64xf32> to vector<2x16xf32>
    %151 = arith.truncf %150 : vector<2x16xf32> to vector<2x16xbf16>
    %152 = vector.extract_strided_slice %112 {offsets = [0, 32], sizes = [2, 16], strides = [1, 1]} : vector<2x64xf32> to vector<2x16xf32>
    %153 = arith.truncf %152 : vector<2x16xf32> to vector<2x16xbf16>
    %154 = vector.extract_strided_slice %113 {offsets = [0, 32], sizes = [2, 16], strides = [1, 1]} : vector<2x64xf32> to vector<2x16xf32>
    %155 = arith.truncf %154 : vector<2x16xf32> to vector<2x16xbf16>
    "tpu.trace_start"() <{level = 10 : i32, message = "bd,cd->bc"}> : () -> ()
    %cst_53 = arith.constant dense<0.000000e+00> : vector<2x2xf32>
    %156 = tpu.matmul %151, %153, %cst_53 {dimension_numbers = #tpu.dot_dimension_numbers<[1], [1], [0], [0], [0, 0, 1, 0], [], []>} : vector<2x16xbf16>, vector<2x16xbf16>, vector<2x2xf32> -> vector<2x2xf32>
    "tpu.trace_stop"() : () -> ()
    %cst_54 = arith.constant dense<0xFF800000> : vector<2xf32>
    %157 = vector.multi_reduction <maximumf>, %156, %cst_54 [1] : vector<2x2xf32> to vector<2xf32>
    %158 = vector.shape_cast %157 : vector<2xf32> to vector<2x1xf32>
    %159 = vector.broadcast %158 : vector<2x1xf32> to vector<2x2xf32>
    %160 = arith.subf %156, %159 : vector<2x2xf32>
    %161 = math.exp %160 : vector<2x2xf32>
    %cst_55 = arith.constant dense<0.000000e+00> : vector<2xf32>
    %162 = vector.multi_reduction <add>, %161, %cst_55 [1] : vector<2x2xf32> to vector<2xf32>
    %163 = vector.shape_cast %162 : vector<2xf32> to vector<2x1xf32>
    %164 = vector.broadcast %163 : vector<2x1xf32> to vector<2x2xf32>
    %165 = arith.divf %161, %164 : vector<2x2xf32>
    %166 = arith.truncf %165 : vector<2x2xf32> to vector<2x2xbf16>
    %cst_56 = arith.constant dense<0.000000e+00> : vector<2x16xf32>
    %167 = tpu.matmul %166, %155, %cst_56 {dimension_numbers = #tpu.dot_dimension_numbers<[1], [0], [0], [1], [0, 0, 1, 1], [], []>} : vector<2x2xbf16>, vector<2x16xbf16>, vector<2x16xf32> -> vector<2x16xf32>
    %168 = vector.extract_strided_slice %111 {offsets = [0, 48], sizes = [2, 16], strides = [1, 1]} : vector<2x64xf32> to vector<2x16xf32>
    %169 = arith.truncf %168 : vector<2x16xf32> to vector<2x16xbf16>
    %170 = vector.extract_strided_slice %112 {offsets = [0, 48], sizes = [2, 16], strides = [1, 1]} : vector<2x64xf32> to vector<2x16xf32>
    %171 = arith.truncf %170 : vector<2x16xf32> to vector<2x16xbf16>
    %172 = vector.extract_strided_slice %113 {offsets = [0, 48], sizes = [2, 16], strides = [1, 1]} : vector<2x64xf32> to vector<2x16xf32>
    %173 = arith.truncf %172 : vector<2x16xf32> to vector<2x16xbf16>
    "tpu.trace_start"() <{level = 10 : i32, message = "bd,cd->bc"}> : () -> ()
    %cst_57 = arith.constant dense<0.000000e+00> : vector<2x2xf32>
    %174 = tpu.matmul %169, %171, %cst_57 {dimension_numbers = #tpu.dot_dimension_numbers<[1], [1], [0], [0], [0, 0, 1, 0], [], []>} : vector<2x16xbf16>, vector<2x16xbf16>, vector<2x2xf32> -> vector<2x2xf32>
    "tpu.trace_stop"() : () -> ()
    %cst_58 = arith.constant dense<0xFF800000> : vector<2xf32>
    %175 = vector.multi_reduction <maximumf>, %174, %cst_58 [1] : vector<2x2xf32> to vector<2xf32>
    %176 = vector.shape_cast %175 : vector<2xf32> to vector<2x1xf32>
    %177 = vector.broadcast %176 : vector<2x1xf32> to vector<2x2xf32>
    %178 = arith.subf %174, %177 : vector<2x2xf32>
    %179 = math.exp %178 : vector<2x2xf32>
    %cst_59 = arith.constant dense<0.000000e+00> : vector<2xf32>
    %180 = vector.multi_reduction <add>, %179, %cst_59 [1] : vector<2x2xf32> to vector<2xf32>
    %181 = vector.shape_cast %180 : vector<2xf32> to vector<2x1xf32>
    %182 = vector.broadcast %181 : vector<2x1xf32> to vector<2x2xf32>
    %183 = arith.divf %179, %182 : vector<2x2xf32>
    %184 = arith.truncf %183 : vector<2x2xf32> to vector<2x2xbf16>
    %cst_60 = arith.constant dense<0.000000e+00> : vector<2x16xf32>
    %185 = tpu.matmul %184, %173, %cst_60 {dimension_numbers = #tpu.dot_dimension_numbers<[1], [0], [0], [1], [0, 0, 1, 1], [], []>} : vector<2x2xbf16>, vector<2x16xbf16>, vector<2x16xf32> -> vector<2x16xf32>
    %186 = tpu.concatenate %131, %149, %167, %185 in 1 : vector<2x16xf32>, vector<2x16xf32>, vector<2x16xf32>, vector<2x16xf32> -> vector<2x64xf32>
    %187 = vector.extract_strided_slice %18 {offsets = [4, 0], sizes = [2, 64], strides = [1, 1]} : vector<8x64xf32> to vector<2x64xf32>
    %188 = vector.extract_strided_slice %26 {offsets = [4, 0], sizes = [2, 64], strides = [1, 1]} : vector<8x64xf32> to vector<2x64xf32>
    %189 = vector.extract_strided_slice %34 {offsets = [4, 0], sizes = [2, 64], strides = [1, 1]} : vector<8x64xf32> to vector<2x64xf32>
    %190 = vector.extract_strided_slice %187 {offsets = [0, 0], sizes = [2, 16], strides = [1, 1]} : vector<2x64xf32> to vector<2x16xf32>
    %191 = arith.truncf %190 : vector<2x16xf32> to vector<2x16xbf16>
    %192 = vector.extract_strided_slice %188 {offsets = [0, 0], sizes = [2, 16], strides = [1, 1]} : vector<2x64xf32> to vector<2x16xf32>
    %193 = arith.truncf %192 : vector<2x16xf32> to vector<2x16xbf16>
    %194 = vector.extract_strided_slice %189 {offsets = [0, 0], sizes = [2, 16], strides = [1, 1]} : vector<2x64xf32> to vector<2x16xf32>
    %195 = arith.truncf %194 : vector<2x16xf32> to vector<2x16xbf16>
    "tpu.trace_start"() <{level = 10 : i32, message = "bd,cd->bc"}> : () -> ()
    %cst_61 = arith.constant dense<0.000000e+00> : vector<2x2xf32>
    %196 = tpu.matmul %191, %193, %cst_61 {dimension_numbers = #tpu.dot_dimension_numbers<[1], [1], [0], [0], [0, 0, 1, 0], [], []>} : vector<2x16xbf16>, vector<2x16xbf16>, vector<2x2xf32> -> vector<2x2xf32>
    "tpu.trace_stop"() : () -> ()
    %cst_62 = arith.constant dense<0xFF800000> : vector<2xf32>
    %197 = vector.multi_reduction <maximumf>, %196, %cst_62 [1] : vector<2x2xf32> to vector<2xf32>
    %198 = vector.shape_cast %197 : vector<2xf32> to vector<2x1xf32>
    %199 = vector.broadcast %198 : vector<2x1xf32> to vector<2x2xf32>
    %200 = arith.subf %196, %199 : vector<2x2xf32>
    %201 = math.exp %200 : vector<2x2xf32>
    %cst_63 = arith.constant dense<0.000000e+00> : vector<2xf32>
    %202 = vector.multi_reduction <add>, %201, %cst_63 [1] : vector<2x2xf32> to vector<2xf32>
    %203 = vector.shape_cast %202 : vector<2xf32> to vector<2x1xf32>
    %204 = vector.broadcast %203 : vector<2x1xf32> to vector<2x2xf32>
    %205 = arith.divf %201, %204 : vector<2x2xf32>
    %206 = arith.truncf %205 : vector<2x2xf32> to vector<2x2xbf16>
    %cst_64 = arith.constant dense<0.000000e+00> : vector<2x16xf32>
    %207 = tpu.matmul %206, %195, %cst_64 {dimension_numbers = #tpu.dot_dimension_numbers<[1], [0], [0], [1], [0, 0, 1, 1], [], []>} : vector<2x2xbf16>, vector<2x16xbf16>, vector<2x16xf32> -> vector<2x16xf32>
    %208 = vector.extract_strided_slice %187 {offsets = [0, 16], sizes = [2, 16], strides = [1, 1]} : vector<2x64xf32> to vector<2x16xf32>
    %209 = arith.truncf %208 : vector<2x16xf32> to vector<2x16xbf16>
    %210 = vector.extract_strided_slice %188 {offsets = [0, 16], sizes = [2, 16], strides = [1, 1]} : vector<2x64xf32> to vector<2x16xf32>
    %211 = arith.truncf %210 : vector<2x16xf32> to vector<2x16xbf16>
    %212 = vector.extract_strided_slice %189 {offsets = [0, 16], sizes = [2, 16], strides = [1, 1]} : vector<2x64xf32> to vector<2x16xf32>
    %213 = arith.truncf %212 : vector<2x16xf32> to vector<2x16xbf16>
    "tpu.trace_start"() <{level = 10 : i32, message = "bd,cd->bc"}> : () -> ()
    %cst_65 = arith.constant dense<0.000000e+00> : vector<2x2xf32>
    %214 = tpu.matmul %209, %211, %cst_65 {dimension_numbers = #tpu.dot_dimension_numbers<[1], [1], [0], [0], [0, 0, 1, 0], [], []>} : vector<2x16xbf16>, vector<2x16xbf16>, vector<2x2xf32> -> vector<2x2xf32>
    "tpu.trace_stop"() : () -> ()
    %cst_66 = arith.constant dense<0xFF800000> : vector<2xf32>
    %215 = vector.multi_reduction <maximumf>, %214, %cst_66 [1] : vector<2x2xf32> to vector<2xf32>
    %216 = vector.shape_cast %215 : vector<2xf32> to vector<2x1xf32>
    %217 = vector.broadcast %216 : vector<2x1xf32> to vector<2x2xf32>
    %218 = arith.subf %214, %217 : vector<2x2xf32>
    %219 = math.exp %218 : vector<2x2xf32>
    %cst_67 = arith.constant dense<0.000000e+00> : vector<2xf32>
    %220 = vector.multi_reduction <add>, %219, %cst_67 [1] : vector<2x2xf32> to vector<2xf32>
    %221 = vector.shape_cast %220 : vector<2xf32> to vector<2x1xf32>
    %222 = vector.broadcast %221 : vector<2x1xf32> to vector<2x2xf32>
    %223 = arith.divf %219, %222 : vector<2x2xf32>
    %224 = arith.truncf %223 : vector<2x2xf32> to vector<2x2xbf16>
    %cst_68 = arith.constant dense<0.000000e+00> : vector<2x16xf32>
    %225 = tpu.matmul %224, %213, %cst_68 {dimension_numbers = #tpu.dot_dimension_numbers<[1], [0], [0], [1], [0, 0, 1, 1], [], []>} : vector<2x2xbf16>, vector<2x16xbf16>, vector<2x16xf32> -> vector<2x16xf32>
    %226 = vector.extract_strided_slice %187 {offsets = [0, 32], sizes = [2, 16], strides = [1, 1]} : vector<2x64xf32> to vector<2x16xf32>
    %227 = arith.truncf %226 : vector<2x16xf32> to vector<2x16xbf16>
    %228 = vector.extract_strided_slice %188 {offsets = [0, 32], sizes = [2, 16], strides = [1, 1]} : vector<2x64xf32> to vector<2x16xf32>
    %229 = arith.truncf %228 : vector<2x16xf32> to vector<2x16xbf16>
    %230 = vector.extract_strided_slice %189 {offsets = [0, 32], sizes = [2, 16], strides = [1, 1]} : vector<2x64xf32> to vector<2x16xf32>
    %231 = arith.truncf %230 : vector<2x16xf32> to vector<2x16xbf16>
    "tpu.trace_start"() <{level = 10 : i32, message = "bd,cd->bc"}> : () -> ()
    %cst_69 = arith.constant dense<0.000000e+00> : vector<2x2xf32>
    %232 = tpu.matmul %227, %229, %cst_69 {dimension_numbers = #tpu.dot_dimension_numbers<[1], [1], [0], [0], [0, 0, 1, 0], [], []>} : vector<2x16xbf16>, vector<2x16xbf16>, vector<2x2xf32> -> vector<2x2xf32>
    "tpu.trace_stop"() : () -> ()
    %cst_70 = arith.constant dense<0xFF800000> : vector<2xf32>
    %233 = vector.multi_reduction <maximumf>, %232, %cst_70 [1] : vector<2x2xf32> to vector<2xf32>
    %234 = vector.shape_cast %233 : vector<2xf32> to vector<2x1xf32>
    %235 = vector.broadcast %234 : vector<2x1xf32> to vector<2x2xf32>
    %236 = arith.subf %232, %235 : vector<2x2xf32>
    %237 = math.exp %236 : vector<2x2xf32>
    %cst_71 = arith.constant dense<0.000000e+00> : vector<2xf32>
    %238 = vector.multi_reduction <add>, %237, %cst_71 [1] : vector<2x2xf32> to vector<2xf32>
    %239 = vector.shape_cast %238 : vector<2xf32> to vector<2x1xf32>
    %240 = vector.broadcast %239 : vector<2x1xf32> to vector<2x2xf32>
    %241 = arith.divf %237, %240 : vector<2x2xf32>
    %242 = arith.truncf %241 : vector<2x2xf32> to vector<2x2xbf16>
    %cst_72 = arith.constant dense<0.000000e+00> : vector<2x16xf32>
    %243 = tpu.matmul %242, %231, %cst_72 {dimension_numbers = #tpu.dot_dimension_numbers<[1], [0], [0], [1], [0, 0, 1, 1], [], []>} : vector<2x2xbf16>, vector<2x16xbf16>, vector<2x16xf32> -> vector<2x16xf32>
    %244 = vector.extract_strided_slice %187 {offsets = [0, 48], sizes = [2, 16], strides = [1, 1]} : vector<2x64xf32> to vector<2x16xf32>
    %245 = arith.truncf %244 : vector<2x16xf32> to vector<2x16xbf16>
    %246 = vector.extract_strided_slice %188 {offsets = [0, 48], sizes = [2, 16], strides = [1, 1]} : vector<2x64xf32> to vector<2x16xf32>
    %247 = arith.truncf %246 : vector<2x16xf32> to vector<2x16xbf16>
    %248 = vector.extract_strided_slice %189 {offsets = [0, 48], sizes = [2, 16], strides = [1, 1]} : vector<2x64xf32> to vector<2x16xf32>
    %249 = arith.truncf %248 : vector<2x16xf32> to vector<2x16xbf16>
    "tpu.trace_start"() <{level = 10 : i32, message = "bd,cd->bc"}> : () -> ()
    %cst_73 = arith.constant dense<0.000000e+00> : vector<2x2xf32>
    %250 = tpu.matmul %245, %247, %cst_73 {dimension_numbers = #tpu.dot_dimension_numbers<[1], [1], [0], [0], [0, 0, 1, 0], [], []>} : vector<2x16xbf16>, vector<2x16xbf16>, vector<2x2xf32> -> vector<2x2xf32>
    "tpu.trace_stop"() : () -> ()
    %cst_74 = arith.constant dense<0xFF800000> : vector<2xf32>
    %251 = vector.multi_reduction <maximumf>, %250, %cst_74 [1] : vector<2x2xf32> to vector<2xf32>
    %252 = vector.shape_cast %251 : vector<2xf32> to vector<2x1xf32>
    %253 = vector.broadcast %252 : vector<2x1xf32> to vector<2x2xf32>
    %254 = arith.subf %250, %253 : vector<2x2xf32>
    %255 = math.exp %254 : vector<2x2xf32>
    %cst_75 = arith.constant dense<0.000000e+00> : vector<2xf32>
    %256 = vector.multi_reduction <add>, %255, %cst_75 [1] : vector<2x2xf32> to vector<2xf32>
    %257 = vector.shape_cast %256 : vector<2xf32> to vector<2x1xf32>
    %258 = vector.broadcast %257 : vector<2x1xf32> to vector<2x2xf32>
    %259 = arith.divf %255, %258 : vector<2x2xf32>
    %260 = arith.truncf %259 : vector<2x2xf32> to vector<2x2xbf16>
    %cst_76 = arith.constant dense<0.000000e+00> : vector<2x16xf32>
    %261 = tpu.matmul %260, %249, %cst_76 {dimension_numbers = #tpu.dot_dimension_numbers<[1], [0], [0], [1], [0, 0, 1, 1], [], []>} : vector<2x2xbf16>, vector<2x16xbf16>, vector<2x16xf32> -> vector<2x16xf32>
    %262 = tpu.concatenate %207, %225, %243, %261 in 1 : vector<2x16xf32>, vector<2x16xf32>, vector<2x16xf32>, vector<2x16xf32> -> vector<2x64xf32>
    %263 = vector.extract_strided_slice %18 {offsets = [6, 0], sizes = [2, 64], strides = [1, 1]} : vector<8x64xf32> to vector<2x64xf32>
    %264 = vector.extract_strided_slice %26 {offsets = [6, 0], sizes = [2, 64], strides = [1, 1]} : vector<8x64xf32> to vector<2x64xf32>
    %265 = vector.extract_strided_slice %34 {offsets = [6, 0], sizes = [2, 64], strides = [1, 1]} : vector<8x64xf32> to vector<2x64xf32>
    %266 = vector.extract_strided_slice %263 {offsets = [0, 0], sizes = [2, 16], strides = [1, 1]} : vector<2x64xf32> to vector<2x16xf32>
    %267 = arith.truncf %266 : vector<2x16xf32> to vector<2x16xbf16>
    %268 = vector.extract_strided_slice %264 {offsets = [0, 0], sizes = [2, 16], strides = [1, 1]} : vector<2x64xf32> to vector<2x16xf32>
    %269 = arith.truncf %268 : vector<2x16xf32> to vector<2x16xbf16>
    %270 = vector.extract_strided_slice %265 {offsets = [0, 0], sizes = [2, 16], strides = [1, 1]} : vector<2x64xf32> to vector<2x16xf32>
    %271 = arith.truncf %270 : vector<2x16xf32> to vector<2x16xbf16>
    "tpu.trace_start"() <{level = 10 : i32, message = "bd,cd->bc"}> : () -> ()
    %cst_77 = arith.constant dense<0.000000e+00> : vector<2x2xf32>
    %272 = tpu.matmul %267, %269, %cst_77 {dimension_numbers = #tpu.dot_dimension_numbers<[1], [1], [0], [0], [0, 0, 1, 0], [], []>} : vector<2x16xbf16>, vector<2x16xbf16>, vector<2x2xf32> -> vector<2x2xf32>
    "tpu.trace_stop"() : () -> ()
    %cst_78 = arith.constant dense<0xFF800000> : vector<2xf32>
    %273 = vector.multi_reduction <maximumf>, %272, %cst_78 [1] : vector<2x2xf32> to vector<2xf32>
    %274 = vector.shape_cast %273 : vector<2xf32> to vector<2x1xf32>
    %275 = vector.broadcast %274 : vector<2x1xf32> to vector<2x2xf32>
    %276 = arith.subf %272, %275 : vector<2x2xf32>
    %277 = math.exp %276 : vector<2x2xf32>
    %cst_79 = arith.constant dense<0.000000e+00> : vector<2xf32>
    %278 = vector.multi_reduction <add>, %277, %cst_79 [1] : vector<2x2xf32> to vector<2xf32>
    %279 = vector.shape_cast %278 : vector<2xf32> to vector<2x1xf32>
    %280 = vector.broadcast %279 : vector<2x1xf32> to vector<2x2xf32>
    %281 = arith.divf %277, %280 : vector<2x2xf32>
    %282 = arith.truncf %281 : vector<2x2xf32> to vector<2x2xbf16>
    %cst_80 = arith.constant dense<0.000000e+00> : vector<2x16xf32>
    %283 = tpu.matmul %282, %271, %cst_80 {dimension_numbers = #tpu.dot_dimension_numbers<[1], [0], [0], [1], [0, 0, 1, 1], [], []>} : vector<2x2xbf16>, vector<2x16xbf16>, vector<2x16xf32> -> vector<2x16xf32>
    %284 = vector.extract_strided_slice %263 {offsets = [0, 16], sizes = [2, 16], strides = [1, 1]} : vector<2x64xf32> to vector<2x16xf32>
    %285 = arith.truncf %284 : vector<2x16xf32> to vector<2x16xbf16>
    %286 = vector.extract_strided_slice %264 {offsets = [0, 16], sizes = [2, 16], strides = [1, 1]} : vector<2x64xf32> to vector<2x16xf32>
    %287 = arith.truncf %286 : vector<2x16xf32> to vector<2x16xbf16>
    %288 = vector.extract_strided_slice %265 {offsets = [0, 16], sizes = [2, 16], strides = [1, 1]} : vector<2x64xf32> to vector<2x16xf32>
    %289 = arith.truncf %288 : vector<2x16xf32> to vector<2x16xbf16>
    "tpu.trace_start"() <{level = 10 : i32, message = "bd,cd->bc"}> : () -> ()
    %cst_81 = arith.constant dense<0.000000e+00> : vector<2x2xf32>
    %290 = tpu.matmul %285, %287, %cst_81 {dimension_numbers = #tpu.dot_dimension_numbers<[1], [1], [0], [0], [0, 0, 1, 0], [], []>} : vector<2x16xbf16>, vector<2x16xbf16>, vector<2x2xf32> -> vector<2x2xf32>
    "tpu.trace_stop"() : () -> ()
    %cst_82 = arith.constant dense<0xFF800000> : vector<2xf32>
    %291 = vector.multi_reduction <maximumf>, %290, %cst_82 [1] : vector<2x2xf32> to vector<2xf32>
    %292 = vector.shape_cast %291 : vector<2xf32> to vector<2x1xf32>
    %293 = vector.broadcast %292 : vector<2x1xf32> to vector<2x2xf32>
    %294 = arith.subf %290, %293 : vector<2x2xf32>
    %295 = math.exp %294 : vector<2x2xf32>
    %cst_83 = arith.constant dense<0.000000e+00> : vector<2xf32>
    %296 = vector.multi_reduction <add>, %295, %cst_83 [1] : vector<2x2xf32> to vector<2xf32>
    %297 = vector.shape_cast %296 : vector<2xf32> to vector<2x1xf32>
    %298 = vector.broadcast %297 : vector<2x1xf32> to vector<2x2xf32>
    %299 = arith.divf %295, %298 : vector<2x2xf32>
    %300 = arith.truncf %299 : vector<2x2xf32> to vector<2x2xbf16>
    %cst_84 = arith.constant dense<0.000000e+00> : vector<2x16xf32>
    %301 = tpu.matmul %300, %289, %cst_84 {dimension_numbers = #tpu.dot_dimension_numbers<[1], [0], [0], [1], [0, 0, 1, 1], [], []>} : vector<2x2xbf16>, vector<2x16xbf16>, vector<2x16xf32> -> vector<2x16xf32>
    %302 = vector.extract_strided_slice %263 {offsets = [0, 32], sizes = [2, 16], strides = [1, 1]} : vector<2x64xf32> to vector<2x16xf32>
    %303 = arith.truncf %302 : vector<2x16xf32> to vector<2x16xbf16>
    %304 = vector.extract_strided_slice %264 {offsets = [0, 32], sizes = [2, 16], strides = [1, 1]} : vector<2x64xf32> to vector<2x16xf32>
    %305 = arith.truncf %304 : vector<2x16xf32> to vector<2x16xbf16>
    %306 = vector.extract_strided_slice %265 {offsets = [0, 32], sizes = [2, 16], strides = [1, 1]} : vector<2x64xf32> to vector<2x16xf32>
    %307 = arith.truncf %306 : vector<2x16xf32> to vector<2x16xbf16>
    "tpu.trace_start"() <{level = 10 : i32, message = "bd,cd->bc"}> : () -> ()
    %cst_85 = arith.constant dense<0.000000e+00> : vector<2x2xf32>
    %308 = tpu.matmul %303, %305, %cst_85 {dimension_numbers = #tpu.dot_dimension_numbers<[1], [1], [0], [0], [0, 0, 1, 0], [], []>} : vector<2x16xbf16>, vector<2x16xbf16>, vector<2x2xf32> -> vector<2x2xf32>
    "tpu.trace_stop"() : () -> ()
    %cst_86 = arith.constant dense<0xFF800000> : vector<2xf32>
    %309 = vector.multi_reduction <maximumf>, %308, %cst_86 [1] : vector<2x2xf32> to vector<2xf32>
    %310 = vector.shape_cast %309 : vector<2xf32> to vector<2x1xf32>
    %311 = vector.broadcast %310 : vector<2x1xf32> to vector<2x2xf32>
    %312 = arith.subf %308, %311 : vector<2x2xf32>
    %313 = math.exp %312 : vector<2x2xf32>
    %cst_87 = arith.constant dense<0.000000e+00> : vector<2xf32>
    %314 = vector.multi_reduction <add>, %313, %cst_87 [1] : vector<2x2xf32> to vector<2xf32>
    %315 = vector.shape_cast %314 : vector<2xf32> to vector<2x1xf32>
    %316 = vector.broadcast %315 : vector<2x1xf32> to vector<2x2xf32>
    %317 = arith.divf %313, %316 : vector<2x2xf32>
    %318 = arith.truncf %317 : vector<2x2xf32> to vector<2x2xbf16>
    %cst_88 = arith.constant dense<0.000000e+00> : vector<2x16xf32>
    %319 = tpu.matmul %318, %307, %cst_88 {dimension_numbers = #tpu.dot_dimension_numbers<[1], [0], [0], [1], [0, 0, 1, 1], [], []>} : vector<2x2xbf16>, vector<2x16xbf16>, vector<2x16xf32> -> vector<2x16xf32>
    %320 = vector.extract_strided_slice %263 {offsets = [0, 48], sizes = [2, 16], strides = [1, 1]} : vector<2x64xf32> to vector<2x16xf32>
    %321 = arith.truncf %320 : vector<2x16xf32> to vector<2x16xbf16>
    %322 = vector.extract_strided_slice %264 {offsets = [0, 48], sizes = [2, 16], strides = [1, 1]} : vector<2x64xf32> to vector<2x16xf32>
    %323 = arith.truncf %322 : vector<2x16xf32> to vector<2x16xbf16>
    %324 = vector.extract_strided_slice %265 {offsets = [0, 48], sizes = [2, 16], strides = [1, 1]} : vector<2x64xf32> to vector<2x16xf32>
    %325 = arith.truncf %324 : vector<2x16xf32> to vector<2x16xbf16>
    "tpu.trace_start"() <{level = 10 : i32, message = "bd,cd->bc"}> : () -> ()
    %cst_89 = arith.constant dense<0.000000e+00> : vector<2x2xf32>
    %326 = tpu.matmul %321, %323, %cst_89 {dimension_numbers = #tpu.dot_dimension_numbers<[1], [1], [0], [0], [0, 0, 1, 0], [], []>} : vector<2x16xbf16>, vector<2x16xbf16>, vector<2x2xf32> -> vector<2x2xf32>
    "tpu.trace_stop"() : () -> ()
    %cst_90 = arith.constant dense<0xFF800000> : vector<2xf32>
    %327 = vector.multi_reduction <maximumf>, %326, %cst_90 [1] : vector<2x2xf32> to vector<2xf32>
    %328 = vector.shape_cast %327 : vector<2xf32> to vector<2x1xf32>
    %329 = vector.broadcast %328 : vector<2x1xf32> to vector<2x2xf32>
    %330 = arith.subf %326, %329 : vector<2x2xf32>
    %331 = math.exp %330 : vector<2x2xf32>
    %cst_91 = arith.constant dense<0.000000e+00> : vector<2xf32>
    %332 = vector.multi_reduction <add>, %331, %cst_91 [1] : vector<2x2xf32> to vector<2xf32>
    %333 = vector.shape_cast %332 : vector<2xf32> to vector<2x1xf32>
    %334 = vector.broadcast %333 : vector<2x1xf32> to vector<2x2xf32>
    %335 = arith.divf %331, %334 : vector<2x2xf32>
    %336 = arith.truncf %335 : vector<2x2xf32> to vector<2x2xbf16>
    %cst_92 = arith.constant dense<0.000000e+00> : vector<2x16xf32>
    %337 = tpu.matmul %336, %325, %cst_92 {dimension_numbers = #tpu.dot_dimension_numbers<[1], [0], [0], [1], [0, 0, 1, 1], [], []>} : vector<2x2xbf16>, vector<2x16xbf16>, vector<2x16xf32> -> vector<2x16xf32>
    %338 = tpu.concatenate %283, %301, %319, %337 in 1 : vector<2x16xf32>, vector<2x16xf32>, vector<2x16xf32>, vector<2x16xf32> -> vector<2x64xf32>
    %339 = tpu.concatenate %110, %186, %262, %338 in 0 : vector<2x64xf32>, vector<2x64xf32>, vector<2x64xf32>, vector<2x64xf32> -> vector<8x64xf32>
    %c0_93 = arith.constant 0 : index
    %c0_94 = arith.constant 0 : index
    %c0_95 = arith.constant 0 : index
    %340 = vector.load %arg11[%c0_93, %c0_94, %c0_95] : memref<2x64x64xbf16, #tpu.memory_space<vmem>>, vector<1x64x64xbf16>
    %341 = vector.shape_cast %340 : vector<1x64x64xbf16> to vector<64x64xbf16>
    %342 = arith.truncf %339 : vector<8x64xf32> to vector<8x64xbf16>
    %cst_96 = arith.constant dense<0.000000e+00> : vector<8x64xf32>
    %343 = tpu.matmul %342, %341, %cst_96 {dimension_numbers = #tpu.dot_dimension_numbers<[1], [0], [0], [1], [0, 0, 1, 1], [], []>} : vector<8x64xbf16>, vector<64x64xbf16>, vector<8x64xf32> -> vector<8x64xf32>
    %c0_97 = arith.constant 0 : index
    %c0_98 = arith.constant 0 : index
    %c0_99 = arith.constant 0 : index
    %344 = vector.load %arg12[%c0_97, %c0_98, %c0_99] : memref<2x1x64xf32, #tpu.memory_space<vmem>>, vector<1x1x64xf32>
    %345 = vector.shape_cast %344 : vector<1x1x64xf32> to vector<1x64xf32>
    %346 = vector.broadcast %345 : vector<1x64xf32> to vector<8x64xf32>
    %347 = arith.addf %343, %346 : vector<8x64xf32>
    %348 = arith.addf %8, %347 : vector<8x64xf32>
    %c0_100 = arith.constant 0 : index
    %c0_101 = arith.constant 0 : index
    %c0_102 = arith.constant 0 : index
    %349 = vector.load %arg17[%c0_100, %c0_101, %c0_102] : memref<2x1x64xf32, #tpu.memory_space<vmem>>, vector<1x1x64xf32>
    %350 = vector.shape_cast %349 : vector<1x1x64xf32> to vector<1x64xf32>
    %c0_103 = arith.constant 0 : index
    %c0_104 = arith.constant 0 : index
    %c0_105 = arith.constant 0 : index
    %351 = vector.load %arg18[%c0_103, %c0_104, %c0_105] : memref<2x1x64xf32, #tpu.memory_space<vmem>>, vector<1x1x64xf32>
    %352 = vector.shape_cast %351 : vector<1x1x64xf32> to vector<1x64xf32>
    %cst_106 = arith.constant dense<0.000000e+00> : vector<8xf32>
    %353 = vector.multi_reduction <add>, %348, %cst_106 [1] : vector<8x64xf32> to vector<8xf32>
    %354 = vector.shape_cast %353 : vector<8xf32> to vector<8x1xf32>
    %cst_107 = arith.constant 6.400000e+01 : f32
    %355 = vector.broadcast %cst_107 : f32 to vector<8x1xf32>
    %356 = arith.divf %354, %355 : vector<8x1xf32>
    %357 = vector.broadcast %356 : vector<8x1xf32> to vector<8x64xf32>
    %358 = arith.subf %348, %357 : vector<8x64xf32>
    %359 = arith.mulf %358, %358 : vector<8x64xf32>
    %cst_108 = arith.constant dense<0.000000e+00> : vector<8xf32>
    %360 = vector.multi_reduction <add>, %359, %cst_108 [1] : vector<8x64xf32> to vector<8xf32>
    %361 = vector.shape_cast %360 : vector<8xf32> to vector<8x1xf32>
    %cst_109 = arith.constant 6.400000e+01 : f32
    %362 = vector.broadcast %cst_109 : f32 to vector<8x1xf32>
    %363 = arith.divf %361, %362 : vector<8x1xf32>
    %364 = vector.broadcast %356 : vector<8x1xf32> to vector<8x64xf32>
    %365 = arith.subf %348, %364 : vector<8x64xf32>
    %cst_110 = arith.constant 9.99999974E-6 : f32
    %366 = vector.broadcast %cst_110 : f32 to vector<8x1xf32>
    %367 = arith.addf %363, %366 : vector<8x1xf32>
    %368 = math.rsqrt %367 : vector<8x1xf32>
    %369 = vector.broadcast %368 : vector<8x1xf32> to vector<8x64xf32>
    %370 = arith.mulf %365, %369 : vector<8x64xf32>
    %371 = vector.broadcast %350 : vector<1x64xf32> to vector<8x64xf32>
    %372 = arith.mulf %370, %371 : vector<8x64xf32>
    %373 = vector.broadcast %352 : vector<1x64xf32> to vector<8x64xf32>
    %374 = arith.addf %372, %373 : vector<8x64xf32>
    %c0_111 = arith.constant 0 : index
    %c0_112 = arith.constant 0 : index
    %c0_113 = arith.constant 0 : index
    %375 = vector.load %arg13[%c0_111, %c0_112, %c0_113] : memref<2x64x128xbf16, #tpu.memory_space<vmem>>, vector<1x64x128xbf16>
    %376 = vector.shape_cast %375 : vector<1x64x128xbf16> to vector<64x128xbf16>
    %377 = arith.truncf %374 : vector<8x64xf32> to vector<8x64xbf16>
    %cst_114 = arith.constant dense<0.000000e+00> : vector<8x128xf32>
    %378 = tpu.matmul %377, %376, %cst_114 {dimension_numbers = #tpu.dot_dimension_numbers<[1], [0], [0], [1], [0, 0, 1, 1], [], []>} : vector<8x64xbf16>, vector<64x128xbf16>, vector<8x128xf32> -> vector<8x128xf32>
    %c0_115 = arith.constant 0 : index
    %c0_116 = arith.constant 0 : index
    %c0_117 = arith.constant 0 : index
    %379 = vector.load %arg14[%c0_115, %c0_116, %c0_117] : memref<2x1x128xf32, #tpu.memory_space<vmem>>, vector<1x1x128xf32>
    %380 = vector.shape_cast %379 : vector<1x1x128xf32> to vector<1x128xf32>
    %381 = vector.broadcast %380 : vector<1x128xf32> to vector<8x128xf32>
    %382 = arith.addf %378, %381 : vector<8x128xf32>
    %cst_118 = arith.constant 0.000000e+00 : f32
    %383 = vector.broadcast %cst_118 : f32 to vector<8x128xf32>
    %384 = arith.maximumf %382, %383 : vector<8x128xf32>
    %c0_119 = arith.constant 0 : index
    %c0_120 = arith.constant 0 : index
    %c0_121 = arith.constant 0 : index
    %385 = vector.load %arg15[%c0_119, %c0_120, %c0_121] : memref<2x128x64xbf16, #tpu.memory_space<vmem>>, vector<1x128x64xbf16>
    %386 = vector.shape_cast %385 : vector<1x128x64xbf16> to vector<128x64xbf16>
    %387 = arith.truncf %384 : vector<8x128xf32> to vector<8x128xbf16>
    %cst_122 = arith.constant dense<0.000000e+00> : vector<8x64xf32>
    %388 = tpu.matmul %387, %386, %cst_122 {dimension_numbers = #tpu.dot_dimension_numbers<[1], [0], [0], [1], [0, 0, 1, 1], [], []>} : vector<8x128xbf16>, vector<128x64xbf16>, vector<8x64xf32> -> vector<8x64xf32>
    %c0_123 = arith.constant 0 : index
    %c0_124 = arith.constant 0 : index
    %c0_125 = arith.constant 0 : index
    %389 = vector.load %arg16[%c0_123, %c0_124, %c0_125] : memref<2x1x64xf32, #tpu.memory_space<vmem>>, vector<1x1x64xf32>
    %390 = vector.shape_cast %389 : vector<1x1x64xf32> to vector<1x64xf32>
    %391 = vector.broadcast %390 : vector<1x64xf32> to vector<8x64xf32>
    %392 = arith.addf %388, %391 : vector<8x64xf32>
    %393 = arith.addf %374, %392 : vector<8x64xf32>
    %c0_126 = arith.constant 0 : index
    %c0_127 = arith.constant 0 : index
    %c0_128 = arith.constant 0 : index
    %394 = vector.load %arg19[%c0_126, %c0_127, %c0_128] : memref<2x1x64xf32, #tpu.memory_space<vmem>>, vector<1x1x64xf32>
    %395 = vector.shape_cast %394 : vector<1x1x64xf32> to vector<1x64xf32>
    %c0_129 = arith.constant 0 : index
    %c0_130 = arith.constant 0 : index
    %c0_131 = arith.constant 0 : index
    %396 = vector.load %arg20[%c0_129, %c0_130, %c0_131] : memref<2x1x64xf32, #tpu.memory_space<vmem>>, vector<1x1x64xf32>
    %397 = vector.shape_cast %396 : vector<1x1x64xf32> to vector<1x64xf32>
    %cst_132 = arith.constant dense<0.000000e+00> : vector<8xf32>
    %398 = vector.multi_reduction <add>, %393, %cst_132 [1] : vector<8x64xf32> to vector<8xf32>
    %399 = vector.shape_cast %398 : vector<8xf32> to vector<8x1xf32>
    %cst_133 = arith.constant 6.400000e+01 : f32
    %400 = vector.broadcast %cst_133 : f32 to vector<8x1xf32>
    %401 = arith.divf %399, %400 : vector<8x1xf32>
    %402 = vector.broadcast %401 : vector<8x1xf32> to vector<8x64xf32>
    %403 = arith.subf %393, %402 : vector<8x64xf32>
    %404 = arith.mulf %403, %403 : vector<8x64xf32>
    %cst_134 = arith.constant dense<0.000000e+00> : vector<8xf32>
    %405 = vector.multi_reduction <add>, %404, %cst_134 [1] : vector<8x64xf32> to vector<8xf32>
    %406 = vector.shape_cast %405 : vector<8xf32> to vector<8x1xf32>
    %cst_135 = arith.constant 6.400000e+01 : f32
    %407 = vector.broadcast %cst_135 : f32 to vector<8x1xf32>
    %408 = arith.divf %406, %407 : vector<8x1xf32>
    %409 = vector.broadcast %401 : vector<8x1xf32> to vector<8x64xf32>
    %410 = arith.subf %393, %409 : vector<8x64xf32>
    %cst_136 = arith.constant 9.99999974E-6 : f32
    %411 = vector.broadcast %cst_136 : f32 to vector<8x1xf32>
    %412 = arith.addf %408, %411 : vector<8x1xf32>
    %413 = math.rsqrt %412 : vector<8x1xf32>
    %414 = vector.broadcast %413 : vector<8x1xf32> to vector<8x64xf32>
    %415 = arith.mulf %410, %414 : vector<8x64xf32>
    %416 = vector.broadcast %395 : vector<1x64xf32> to vector<8x64xf32>
    %417 = arith.mulf %415, %416 : vector<8x64xf32>
    %418 = vector.broadcast %397 : vector<1x64xf32> to vector<8x64xf32>
    %419 = arith.addf %417, %418 : vector<8x64xf32>
    %c1 = arith.constant 1 : index
    %c0_137 = arith.constant 0 : index
    %c0_138 = arith.constant 0 : index
    %420 = vector.load %arg5[%c1, %c0_137, %c0_138] : memref<2x64x64xbf16, #tpu.memory_space<vmem>>, vector<1x64x64xbf16>
    %421 = vector.shape_cast %420 : vector<1x64x64xbf16> to vector<64x64xbf16>
    %422 = arith.truncf %419 : vector<8x64xf32> to vector<8x64xbf16>
    %cst_139 = arith.constant dense<0.000000e+00> : vector<8x64xf32>
    %423 = tpu.matmul %422, %421, %cst_139 {dimension_numbers = #tpu.dot_dimension_numbers<[1], [0], [0], [1], [0, 0, 1, 1], [], []>} : vector<8x64xbf16>, vector<64x64xbf16>, vector<8x64xf32> -> vector<8x64xf32>
    %c1_140 = arith.constant 1 : index
    %c0_141 = arith.constant 0 : index
    %c0_142 = arith.constant 0 : index
    %424 = vector.load %arg6[%c1_140, %c0_141, %c0_142] : memref<2x1x64xf32, #tpu.memory_space<vmem>>, vector<1x1x64xf32>
    %425 = vector.shape_cast %424 : vector<1x1x64xf32> to vector<1x64xf32>
    %426 = vector.broadcast %425 : vector<1x64xf32> to vector<8x64xf32>
    %427 = arith.addf %423, %426 : vector<8x64xf32>
    %cst_143 = arith.constant 2.500000e-01 : f32
    %428 = vector.broadcast %cst_143 : f32 to vector<8x64xf32>
    %429 = arith.mulf %427, %428 : vector<8x64xf32>
    %c1_144 = arith.constant 1 : index
    %c0_145 = arith.constant 0 : index
    %c0_146 = arith.constant 0 : index
    %430 = vector.load %arg7[%c1_144, %c0_145, %c0_146] : memref<2x64x64xbf16, #tpu.memory_space<vmem>>, vector<1x64x64xbf16>
    %431 = vector.shape_cast %430 : vector<1x64x64xbf16> to vector<64x64xbf16>
    %432 = arith.truncf %419 : vector<8x64xf32> to vector<8x64xbf16>
    %cst_147 = arith.constant dense<0.000000e+00> : vector<8x64xf32>
    %433 = tpu.matmul %432, %431, %cst_147 {dimension_numbers = #tpu.dot_dimension_numbers<[1], [0], [0], [1], [0, 0, 1, 1], [], []>} : vector<8x64xbf16>, vector<64x64xbf16>, vector<8x64xf32> -> vector<8x64xf32>
    %c1_148 = arith.constant 1 : index
    %c0_149 = arith.constant 0 : index
    %c0_150 = arith.constant 0 : index
    %434 = vector.load %arg8[%c1_148, %c0_149, %c0_150] : memref<2x1x64xf32, #tpu.memory_space<vmem>>, vector<1x1x64xf32>
    %435 = vector.shape_cast %434 : vector<1x1x64xf32> to vector<1x64xf32>
    %436 = vector.broadcast %435 : vector<1x64xf32> to vector<8x64xf32>
    %437 = arith.addf %433, %436 : vector<8x64xf32>
    %c1_151 = arith.constant 1 : index
    %c0_152 = arith.constant 0 : index
    %c0_153 = arith.constant 0 : index
    %438 = vector.load %arg9[%c1_151, %c0_152, %c0_153] : memref<2x64x64xbf16, #tpu.memory_space<vmem>>, vector<1x64x64xbf16>
    %439 = vector.shape_cast %438 : vector<1x64x64xbf16> to vector<64x64xbf16>
    %440 = arith.truncf %419 : vector<8x64xf32> to vector<8x64xbf16>
    %cst_154 = arith.constant dense<0.000000e+00> : vector<8x64xf32>
    %441 = tpu.matmul %440, %439, %cst_154 {dimension_numbers = #tpu.dot_dimension_numbers<[1], [0], [0], [1], [0, 0, 1, 1], [], []>} : vector<8x64xbf16>, vector<64x64xbf16>, vector<8x64xf32> -> vector<8x64xf32>
    %c1_155 = arith.constant 1 : index
    %c0_156 = arith.constant 0 : index
    %c0_157 = arith.constant 0 : index
    %442 = vector.load %arg10[%c1_155, %c0_156, %c0_157] : memref<2x1x64xf32, #tpu.memory_space<vmem>>, vector<1x1x64xf32>
    %443 = vector.shape_cast %442 : vector<1x1x64xf32> to vector<1x64xf32>
    %444 = vector.broadcast %443 : vector<1x64xf32> to vector<8x64xf32>
    %445 = arith.addf %441, %444 : vector<8x64xf32>
    %446 = vector.extract_strided_slice %429 {offsets = [0, 0], sizes = [2, 64], strides = [1, 1]} : vector<8x64xf32> to vector<2x64xf32>
    %447 = vector.extract_strided_slice %437 {offsets = [0, 0], sizes = [2, 64], strides = [1, 1]} : vector<8x64xf32> to vector<2x64xf32>
    %448 = vector.extract_strided_slice %445 {offsets = [0, 0], sizes = [2, 64], strides = [1, 1]} : vector<8x64xf32> to vector<2x64xf32>
    %449 = vector.extract_strided_slice %446 {offsets = [0, 0], sizes = [2, 16], strides = [1, 1]} : vector<2x64xf32> to vector<2x16xf32>
    %450 = arith.truncf %449 : vector<2x16xf32> to vector<2x16xbf16>
    %451 = vector.extract_strided_slice %447 {offsets = [0, 0], sizes = [2, 16], strides = [1, 1]} : vector<2x64xf32> to vector<2x16xf32>
    %452 = arith.truncf %451 : vector<2x16xf32> to vector<2x16xbf16>
    %453 = vector.extract_strided_slice %448 {offsets = [0, 0], sizes = [2, 16], strides = [1, 1]} : vector<2x64xf32> to vector<2x16xf32>
    %454 = arith.truncf %453 : vector<2x16xf32> to vector<2x16xbf16>
    "tpu.trace_start"() <{level = 10 : i32, message = "bd,cd->bc"}> : () -> ()
    %cst_158 = arith.constant dense<0.000000e+00> : vector<2x2xf32>
    %455 = tpu.matmul %450, %452, %cst_158 {dimension_numbers = #tpu.dot_dimension_numbers<[1], [1], [0], [0], [0, 0, 1, 0], [], []>} : vector<2x16xbf16>, vector<2x16xbf16>, vector<2x2xf32> -> vector<2x2xf32>
    "tpu.trace_stop"() : () -> ()
    %cst_159 = arith.constant dense<0xFF800000> : vector<2xf32>
    %456 = vector.multi_reduction <maximumf>, %455, %cst_159 [1] : vector<2x2xf32> to vector<2xf32>
    %457 = vector.shape_cast %456 : vector<2xf32> to vector<2x1xf32>
    %458 = vector.broadcast %457 : vector<2x1xf32> to vector<2x2xf32>
    %459 = arith.subf %455, %458 : vector<2x2xf32>
    %460 = math.exp %459 : vector<2x2xf32>
    %cst_160 = arith.constant dense<0.000000e+00> : vector<2xf32>
    %461 = vector.multi_reduction <add>, %460, %cst_160 [1] : vector<2x2xf32> to vector<2xf32>
    %462 = vector.shape_cast %461 : vector<2xf32> to vector<2x1xf32>
    %463 = vector.broadcast %462 : vector<2x1xf32> to vector<2x2xf32>
    %464 = arith.divf %460, %463 : vector<2x2xf32>
    %465 = arith.truncf %464 : vector<2x2xf32> to vector<2x2xbf16>
    %cst_161 = arith.constant dense<0.000000e+00> : vector<2x16xf32>
    %466 = tpu.matmul %465, %454, %cst_161 {dimension_numbers = #tpu.dot_dimension_numbers<[1], [0], [0], [1], [0, 0, 1, 1], [], []>} : vector<2x2xbf16>, vector<2x16xbf16>, vector<2x16xf32> -> vector<2x16xf32>
    %467 = vector.extract_strided_slice %446 {offsets = [0, 16], sizes = [2, 16], strides = [1, 1]} : vector<2x64xf32> to vector<2x16xf32>
    %468 = arith.truncf %467 : vector<2x16xf32> to vector<2x16xbf16>
    %469 = vector.extract_strided_slice %447 {offsets = [0, 16], sizes = [2, 16], strides = [1, 1]} : vector<2x64xf32> to vector<2x16xf32>
    %470 = arith.truncf %469 : vector<2x16xf32> to vector<2x16xbf16>
    %471 = vector.extract_strided_slice %448 {offsets = [0, 16], sizes = [2, 16], strides = [1, 1]} : vector<2x64xf32> to vector<2x16xf32>
    %472 = arith.truncf %471 : vector<2x16xf32> to vector<2x16xbf16>
    "tpu.trace_start"() <{level = 10 : i32, message = "bd,cd->bc"}> : () -> ()
    %cst_162 = arith.constant dense<0.000000e+00> : vector<2x2xf32>
    %473 = tpu.matmul %468, %470, %cst_162 {dimension_numbers = #tpu.dot_dimension_numbers<[1], [1], [0], [0], [0, 0, 1, 0], [], []>} : vector<2x16xbf16>, vector<2x16xbf16>, vector<2x2xf32> -> vector<2x2xf32>
    "tpu.trace_stop"() : () -> ()
    %cst_163 = arith.constant dense<0xFF800000> : vector<2xf32>
    %474 = vector.multi_reduction <maximumf>, %473, %cst_163 [1] : vector<2x2xf32> to vector<2xf32>
    %475 = vector.shape_cast %474 : vector<2xf32> to vector<2x1xf32>
    %476 = vector.broadcast %475 : vector<2x1xf32> to vector<2x2xf32>
    %477 = arith.subf %473, %476 : vector<2x2xf32>
    %478 = math.exp %477 : vector<2x2xf32>
    %cst_164 = arith.constant dense<0.000000e+00> : vector<2xf32>
    %479 = vector.multi_reduction <add>, %478, %cst_164 [1] : vector<2x2xf32> to vector<2xf32>
    %480 = vector.shape_cast %479 : vector<2xf32> to vector<2x1xf32>
    %481 = vector.broadcast %480 : vector<2x1xf32> to vector<2x2xf32>
    %482 = arith.divf %478, %481 : vector<2x2xf32>
    %483 = arith.truncf %482 : vector<2x2xf32> to vector<2x2xbf16>
    %cst_165 = arith.constant dense<0.000000e+00> : vector<2x16xf32>
    %484 = tpu.matmul %483, %472, %cst_165 {dimension_numbers = #tpu.dot_dimension_numbers<[1], [0], [0], [1], [0, 0, 1, 1], [], []>} : vector<2x2xbf16>, vector<2x16xbf16>, vector<2x16xf32> -> vector<2x16xf32>
    %485 = vector.extract_strided_slice %446 {offsets = [0, 32], sizes = [2, 16], strides = [1, 1]} : vector<2x64xf32> to vector<2x16xf32>
    %486 = arith.truncf %485 : vector<2x16xf32> to vector<2x16xbf16>
    %487 = vector.extract_strided_slice %447 {offsets = [0, 32], sizes = [2, 16], strides = [1, 1]} : vector<2x64xf32> to vector<2x16xf32>
    %488 = arith.truncf %487 : vector<2x16xf32> to vector<2x16xbf16>
    %489 = vector.extract_strided_slice %448 {offsets = [0, 32], sizes = [2, 16], strides = [1, 1]} : vector<2x64xf32> to vector<2x16xf32>
    %490 = arith.truncf %489 : vector<2x16xf32> to vector<2x16xbf16>
    "tpu.trace_start"() <{level = 10 : i32, message = "bd,cd->bc"}> : () -> ()
    %cst_166 = arith.constant dense<0.000000e+00> : vector<2x2xf32>
    %491 = tpu.matmul %486, %488, %cst_166 {dimension_numbers = #tpu.dot_dimension_numbers<[1], [1], [0], [0], [0, 0, 1, 0], [], []>} : vector<2x16xbf16>, vector<2x16xbf16>, vector<2x2xf32> -> vector<2x2xf32>
    "tpu.trace_stop"() : () -> ()
    %cst_167 = arith.constant dense<0xFF800000> : vector<2xf32>
    %492 = vector.multi_reduction <maximumf>, %491, %cst_167 [1] : vector<2x2xf32> to vector<2xf32>
    %493 = vector.shape_cast %492 : vector<2xf32> to vector<2x1xf32>
    %494 = vector.broadcast %493 : vector<2x1xf32> to vector<2x2xf32>
    %495 = arith.subf %491, %494 : vector<2x2xf32>
    %496 = math.exp %495 : vector<2x2xf32>
    %cst_168 = arith.constant dense<0.000000e+00> : vector<2xf32>
    %497 = vector.multi_reduction <add>, %496, %cst_168 [1] : vector<2x2xf32> to vector<2xf32>
    %498 = vector.shape_cast %497 : vector<2xf32> to vector<2x1xf32>
    %499 = vector.broadcast %498 : vector<2x1xf32> to vector<2x2xf32>
    %500 = arith.divf %496, %499 : vector<2x2xf32>
    %501 = arith.truncf %500 : vector<2x2xf32> to vector<2x2xbf16>
    %cst_169 = arith.constant dense<0.000000e+00> : vector<2x16xf32>
    %502 = tpu.matmul %501, %490, %cst_169 {dimension_numbers = #tpu.dot_dimension_numbers<[1], [0], [0], [1], [0, 0, 1, 1], [], []>} : vector<2x2xbf16>, vector<2x16xbf16>, vector<2x16xf32> -> vector<2x16xf32>
    %503 = vector.extract_strided_slice %446 {offsets = [0, 48], sizes = [2, 16], strides = [1, 1]} : vector<2x64xf32> to vector<2x16xf32>
    %504 = arith.truncf %503 : vector<2x16xf32> to vector<2x16xbf16>
    %505 = vector.extract_strided_slice %447 {offsets = [0, 48], sizes = [2, 16], strides = [1, 1]} : vector<2x64xf32> to vector<2x16xf32>
    %506 = arith.truncf %505 : vector<2x16xf32> to vector<2x16xbf16>
    %507 = vector.extract_strided_slice %448 {offsets = [0, 48], sizes = [2, 16], strides = [1, 1]} : vector<2x64xf32> to vector<2x16xf32>
    %508 = arith.truncf %507 : vector<2x16xf32> to vector<2x16xbf16>
    "tpu.trace_start"() <{level = 10 : i32, message = "bd,cd->bc"}> : () -> ()
    %cst_170 = arith.constant dense<0.000000e+00> : vector<2x2xf32>
    %509 = tpu.matmul %504, %506, %cst_170 {dimension_numbers = #tpu.dot_dimension_numbers<[1], [1], [0], [0], [0, 0, 1, 0], [], []>} : vector<2x16xbf16>, vector<2x16xbf16>, vector<2x2xf32> -> vector<2x2xf32>
    "tpu.trace_stop"() : () -> ()
    %cst_171 = arith.constant dense<0xFF800000> : vector<2xf32>
    %510 = vector.multi_reduction <maximumf>, %509, %cst_171 [1] : vector<2x2xf32> to vector<2xf32>
    %511 = vector.shape_cast %510 : vector<2xf32> to vector<2x1xf32>
    %512 = vector.broadcast %511 : vector<2x1xf32> to vector<2x2xf32>
    %513 = arith.subf %509, %512 : vector<2x2xf32>
    %514 = math.exp %513 : vector<2x2xf32>
    %cst_172 = arith.constant dense<0.000000e+00> : vector<2xf32>
    %515 = vector.multi_reduction <add>, %514, %cst_172 [1] : vector<2x2xf32> to vector<2xf32>
    %516 = vector.shape_cast %515 : vector<2xf32> to vector<2x1xf32>
    %517 = vector.broadcast %516 : vector<2x1xf32> to vector<2x2xf32>
    %518 = arith.divf %514, %517 : vector<2x2xf32>
    %519 = arith.truncf %518 : vector<2x2xf32> to vector<2x2xbf16>
    %cst_173 = arith.constant dense<0.000000e+00> : vector<2x16xf32>
    %520 = tpu.matmul %519, %508, %cst_173 {dimension_numbers = #tpu.dot_dimension_numbers<[1], [0], [0], [1], [0, 0, 1, 1], [], []>} : vector<2x2xbf16>, vector<2x16xbf16>, vector<2x16xf32> -> vector<2x16xf32>
    %521 = tpu.concatenate %466, %484, %502, %520 in 1 : vector<2x16xf32>, vector<2x16xf32>, vector<2x16xf32>, vector<2x16xf32> -> vector<2x64xf32>
    %522 = vector.extract_strided_slice %429 {offsets = [2, 0], sizes = [2, 64], strides = [1, 1]} : vector<8x64xf32> to vector<2x64xf32>
    %523 = vector.extract_strided_slice %437 {offsets = [2, 0], sizes = [2, 64], strides = [1, 1]} : vector<8x64xf32> to vector<2x64xf32>
    %524 = vector.extract_strided_slice %445 {offsets = [2, 0], sizes = [2, 64], strides = [1, 1]} : vector<8x64xf32> to vector<2x64xf32>
    %525 = vector.extract_strided_slice %522 {offsets = [0, 0], sizes = [2, 16], strides = [1, 1]} : vector<2x64xf32> to vector<2x16xf32>
    %526 = arith.truncf %525 : vector<2x16xf32> to vector<2x16xbf16>
    %527 = vector.extract_strided_slice %523 {offsets = [0, 0], sizes = [2, 16], strides = [1, 1]} : vector<2x64xf32> to vector<2x16xf32>
    %528 = arith.truncf %527 : vector<2x16xf32> to vector<2x16xbf16>
    %529 = vector.extract_strided_slice %524 {offsets = [0, 0], sizes = [2, 16], strides = [1, 1]} : vector<2x64xf32> to vector<2x16xf32>
    %530 = arith.truncf %529 : vector<2x16xf32> to vector<2x16xbf16>
    "tpu.trace_start"() <{level = 10 : i32, message = "bd,cd->bc"}> : () -> ()
    %cst_174 = arith.constant dense<0.000000e+00> : vector<2x2xf32>
    %531 = tpu.matmul %526, %528, %cst_174 {dimension_numbers = #tpu.dot_dimension_numbers<[1], [1], [0], [0], [0, 0, 1, 0], [], []>} : vector<2x16xbf16>, vector<2x16xbf16>, vector<2x2xf32> -> vector<2x2xf32>
    "tpu.trace_stop"() : () -> ()
    %cst_175 = arith.constant dense<0xFF800000> : vector<2xf32>
    %532 = vector.multi_reduction <maximumf>, %531, %cst_175 [1] : vector<2x2xf32> to vector<2xf32>
    %533 = vector.shape_cast %532 : vector<2xf32> to vector<2x1xf32>
    %534 = vector.broadcast %533 : vector<2x1xf32> to vector<2x2xf32>
    %535 = arith.subf %531, %534 : vector<2x2xf32>
    %536 = math.exp %535 : vector<2x2xf32>
    %cst_176 = arith.constant dense<0.000000e+00> : vector<2xf32>
    %537 = vector.multi_reduction <add>, %536, %cst_176 [1] : vector<2x2xf32> to vector<2xf32>
    %538 = vector.shape_cast %537 : vector<2xf32> to vector<2x1xf32>
    %539 = vector.broadcast %538 : vector<2x1xf32> to vector<2x2xf32>
    %540 = arith.divf %536, %539 : vector<2x2xf32>
    %541 = arith.truncf %540 : vector<2x2xf32> to vector<2x2xbf16>
    %cst_177 = arith.constant dense<0.000000e+00> : vector<2x16xf32>
    %542 = tpu.matmul %541, %530, %cst_177 {dimension_numbers = #tpu.dot_dimension_numbers<[1], [0], [0], [1], [0, 0, 1, 1], [], []>} : vector<2x2xbf16>, vector<2x16xbf16>, vector<2x16xf32> -> vector<2x16xf32>
    %543 = vector.extract_strided_slice %522 {offsets = [0, 16], sizes = [2, 16], strides = [1, 1]} : vector<2x64xf32> to vector<2x16xf32>
    %544 = arith.truncf %543 : vector<2x16xf32> to vector<2x16xbf16>
    %545 = vector.extract_strided_slice %523 {offsets = [0, 16], sizes = [2, 16], strides = [1, 1]} : vector<2x64xf32> to vector<2x16xf32>
    %546 = arith.truncf %545 : vector<2x16xf32> to vector<2x16xbf16>
    %547 = vector.extract_strided_slice %524 {offsets = [0, 16], sizes = [2, 16], strides = [1, 1]} : vector<2x64xf32> to vector<2x16xf32>
    %548 = arith.truncf %547 : vector<2x16xf32> to vector<2x16xbf16>
    "tpu.trace_start"() <{level = 10 : i32, message = "bd,cd->bc"}> : () -> ()
    %cst_178 = arith.constant dense<0.000000e+00> : vector<2x2xf32>
    %549 = tpu.matmul %544, %546, %cst_178 {dimension_numbers = #tpu.dot_dimension_numbers<[1], [1], [0], [0], [0, 0, 1, 0], [], []>} : vector<2x16xbf16>, vector<2x16xbf16>, vector<2x2xf32> -> vector<2x2xf32>
    "tpu.trace_stop"() : () -> ()
    %cst_179 = arith.constant dense<0xFF800000> : vector<2xf32>
    %550 = vector.multi_reduction <maximumf>, %549, %cst_179 [1] : vector<2x2xf32> to vector<2xf32>
    %551 = vector.shape_cast %550 : vector<2xf32> to vector<2x1xf32>
    %552 = vector.broadcast %551 : vector<2x1xf32> to vector<2x2xf32>
    %553 = arith.subf %549, %552 : vector<2x2xf32>
    %554 = math.exp %553 : vector<2x2xf32>
    %cst_180 = arith.constant dense<0.000000e+00> : vector<2xf32>
    %555 = vector.multi_reduction <add>, %554, %cst_180 [1] : vector<2x2xf32> to vector<2xf32>
    %556 = vector.shape_cast %555 : vector<2xf32> to vector<2x1xf32>
    %557 = vector.broadcast %556 : vector<2x1xf32> to vector<2x2xf32>
    %558 = arith.divf %554, %557 : vector<2x2xf32>
    %559 = arith.truncf %558 : vector<2x2xf32> to vector<2x2xbf16>
    %cst_181 = arith.constant dense<0.000000e+00> : vector<2x16xf32>
    %560 = tpu.matmul %559, %548, %cst_181 {dimension_numbers = #tpu.dot_dimension_numbers<[1], [0], [0], [1], [0, 0, 1, 1], [], []>} : vector<2x2xbf16>, vector<2x16xbf16>, vector<2x16xf32> -> vector<2x16xf32>
    %561 = vector.extract_strided_slice %522 {offsets = [0, 32], sizes = [2, 16], strides = [1, 1]} : vector<2x64xf32> to vector<2x16xf32>
    %562 = arith.truncf %561 : vector<2x16xf32> to vector<2x16xbf16>
    %563 = vector.extract_strided_slice %523 {offsets = [0, 32], sizes = [2, 16], strides = [1, 1]} : vector<2x64xf32> to vector<2x16xf32>
    %564 = arith.truncf %563 : vector<2x16xf32> to vector<2x16xbf16>
    %565 = vector.extract_strided_slice %524 {offsets = [0, 32], sizes = [2, 16], strides = [1, 1]} : vector<2x64xf32> to vector<2x16xf32>
    %566 = arith.truncf %565 : vector<2x16xf32> to vector<2x16xbf16>
    "tpu.trace_start"() <{level = 10 : i32, message = "bd,cd->bc"}> : () -> ()
    %cst_182 = arith.constant dense<0.000000e+00> : vector<2x2xf32>
    %567 = tpu.matmul %562, %564, %cst_182 {dimension_numbers = #tpu.dot_dimension_numbers<[1], [1], [0], [0], [0, 0, 1, 0], [], []>} : vector<2x16xbf16>, vector<2x16xbf16>, vector<2x2xf32> -> vector<2x2xf32>
    "tpu.trace_stop"() : () -> ()
    %cst_183 = arith.constant dense<0xFF800000> : vector<2xf32>
    %568 = vector.multi_reduction <maximumf>, %567, %cst_183 [1] : vector<2x2xf32> to vector<2xf32>
    %569 = vector.shape_cast %568 : vector<2xf32> to vector<2x1xf32>
    %570 = vector.broadcast %569 : vector<2x1xf32> to vector<2x2xf32>
    %571 = arith.subf %567, %570 : vector<2x2xf32>
    %572 = math.exp %571 : vector<2x2xf32>
    %cst_184 = arith.constant dense<0.000000e+00> : vector<2xf32>
    %573 = vector.multi_reduction <add>, %572, %cst_184 [1] : vector<2x2xf32> to vector<2xf32>
    %574 = vector.shape_cast %573 : vector<2xf32> to vector<2x1xf32>
    %575 = vector.broadcast %574 : vector<2x1xf32> to vector<2x2xf32>
    %576 = arith.divf %572, %575 : vector<2x2xf32>
    %577 = arith.truncf %576 : vector<2x2xf32> to vector<2x2xbf16>
    %cst_185 = arith.constant dense<0.000000e+00> : vector<2x16xf32>
    %578 = tpu.matmul %577, %566, %cst_185 {dimension_numbers = #tpu.dot_dimension_numbers<[1], [0], [0], [1], [0, 0, 1, 1], [], []>} : vector<2x2xbf16>, vector<2x16xbf16>, vector<2x16xf32> -> vector<2x16xf32>
    %579 = vector.extract_strided_slice %522 {offsets = [0, 48], sizes = [2, 16], strides = [1, 1]} : vector<2x64xf32> to vector<2x16xf32>
    %580 = arith.truncf %579 : vector<2x16xf32> to vector<2x16xbf16>
    %581 = vector.extract_strided_slice %523 {offsets = [0, 48], sizes = [2, 16], strides = [1, 1]} : vector<2x64xf32> to vector<2x16xf32>
    %582 = arith.truncf %581 : vector<2x16xf32> to vector<2x16xbf16>
    %583 = vector.extract_strided_slice %524 {offsets = [0, 48], sizes = [2, 16], strides = [1, 1]} : vector<2x64xf32> to vector<2x16xf32>
    %584 = arith.truncf %583 : vector<2x16xf32> to vector<2x16xbf16>
    "tpu.trace_start"() <{level = 10 : i32, message = "bd,cd->bc"}> : () -> ()
    %cst_186 = arith.constant dense<0.000000e+00> : vector<2x2xf32>
    %585 = tpu.matmul %580, %582, %cst_186 {dimension_numbers = #tpu.dot_dimension_numbers<[1], [1], [0], [0], [0, 0, 1, 0], [], []>} : vector<2x16xbf16>, vector<2x16xbf16>, vector<2x2xf32> -> vector<2x2xf32>
    "tpu.trace_stop"() : () -> ()
    %cst_187 = arith.constant dense<0xFF800000> : vector<2xf32>
    %586 = vector.multi_reduction <maximumf>, %585, %cst_187 [1] : vector<2x2xf32> to vector<2xf32>
    %587 = vector.shape_cast %586 : vector<2xf32> to vector<2x1xf32>
    %588 = vector.broadcast %587 : vector<2x1xf32> to vector<2x2xf32>
    %589 = arith.subf %585, %588 : vector<2x2xf32>
    %590 = math.exp %589 : vector<2x2xf32>
    %cst_188 = arith.constant dense<0.000000e+00> : vector<2xf32>
    %591 = vector.multi_reduction <add>, %590, %cst_188 [1] : vector<2x2xf32> to vector<2xf32>
    %592 = vector.shape_cast %591 : vector<2xf32> to vector<2x1xf32>
    %593 = vector.broadcast %592 : vector<2x1xf32> to vector<2x2xf32>
    %594 = arith.divf %590, %593 : vector<2x2xf32>
    %595 = arith.truncf %594 : vector<2x2xf32> to vector<2x2xbf16>
    %cst_189 = arith.constant dense<0.000000e+00> : vector<2x16xf32>
    %596 = tpu.matmul %595, %584, %cst_189 {dimension_numbers = #tpu.dot_dimension_numbers<[1], [0], [0], [1], [0, 0, 1, 1], [], []>} : vector<2x2xbf16>, vector<2x16xbf16>, vector<2x16xf32> -> vector<2x16xf32>
    %597 = tpu.concatenate %542, %560, %578, %596 in 1 : vector<2x16xf32>, vector<2x16xf32>, vector<2x16xf32>, vector<2x16xf32> -> vector<2x64xf32>
    %598 = vector.extract_strided_slice %429 {offsets = [4, 0], sizes = [2, 64], strides = [1, 1]} : vector<8x64xf32> to vector<2x64xf32>
    %599 = vector.extract_strided_slice %437 {offsets = [4, 0], sizes = [2, 64], strides = [1, 1]} : vector<8x64xf32> to vector<2x64xf32>
    %600 = vector.extract_strided_slice %445 {offsets = [4, 0], sizes = [2, 64], strides = [1, 1]} : vector<8x64xf32> to vector<2x64xf32>
    %601 = vector.extract_strided_slice %598 {offsets = [0, 0], sizes = [2, 16], strides = [1, 1]} : vector<2x64xf32> to vector<2x16xf32>
    %602 = arith.truncf %601 : vector<2x16xf32> to vector<2x16xbf16>
    %603 = vector.extract_strided_slice %599 {offsets = [0, 0], sizes = [2, 16], strides = [1, 1]} : vector<2x64xf32> to vector<2x16xf32>
    %604 = arith.truncf %603 : vector<2x16xf32> to vector<2x16xbf16>
    %605 = vector.extract_strided_slice %600 {offsets = [0, 0], sizes = [2, 16], strides = [1, 1]} : vector<2x64xf32> to vector<2x16xf32>
    %606 = arith.truncf %605 : vector<2x16xf32> to vector<2x16xbf16>
    "tpu.trace_start"() <{level = 10 : i32, message = "bd,cd->bc"}> : () -> ()
    %cst_190 = arith.constant dense<0.000000e+00> : vector<2x2xf32>
    %607 = tpu.matmul %602, %604, %cst_190 {dimension_numbers = #tpu.dot_dimension_numbers<[1], [1], [0], [0], [0, 0, 1, 0], [], []>} : vector<2x16xbf16>, vector<2x16xbf16>, vector<2x2xf32> -> vector<2x2xf32>
    "tpu.trace_stop"() : () -> ()
    %cst_191 = arith.constant dense<0xFF800000> : vector<2xf32>
    %608 = vector.multi_reduction <maximumf>, %607, %cst_191 [1] : vector<2x2xf32> to vector<2xf32>
    %609 = vector.shape_cast %608 : vector<2xf32> to vector<2x1xf32>
    %610 = vector.broadcast %609 : vector<2x1xf32> to vector<2x2xf32>
    %611 = arith.subf %607, %610 : vector<2x2xf32>
    %612 = math.exp %611 : vector<2x2xf32>
    %cst_192 = arith.constant dense<0.000000e+00> : vector<2xf32>
    %613 = vector.multi_reduction <add>, %612, %cst_192 [1] : vector<2x2xf32> to vector<2xf32>
    %614 = vector.shape_cast %613 : vector<2xf32> to vector<2x1xf32>
    %615 = vector.broadcast %614 : vector<2x1xf32> to vector<2x2xf32>
    %616 = arith.divf %612, %615 : vector<2x2xf32>
    %617 = arith.truncf %616 : vector<2x2xf32> to vector<2x2xbf16>
    %cst_193 = arith.constant dense<0.000000e+00> : vector<2x16xf32>
    %618 = tpu.matmul %617, %606, %cst_193 {dimension_numbers = #tpu.dot_dimension_numbers<[1], [0], [0], [1], [0, 0, 1, 1], [], []>} : vector<2x2xbf16>, vector<2x16xbf16>, vector<2x16xf32> -> vector<2x16xf32>
    %619 = vector.extract_strided_slice %598 {offsets = [0, 16], sizes = [2, 16], strides = [1, 1]} : vector<2x64xf32> to vector<2x16xf32>
    %620 = arith.truncf %619 : vector<2x16xf32> to vector<2x16xbf16>
    %621 = vector.extract_strided_slice %599 {offsets = [0, 16], sizes = [2, 16], strides = [1, 1]} : vector<2x64xf32> to vector<2x16xf32>
    %622 = arith.truncf %621 : vector<2x16xf32> to vector<2x16xbf16>
    %623 = vector.extract_strided_slice %600 {offsets = [0, 16], sizes = [2, 16], strides = [1, 1]} : vector<2x64xf32> to vector<2x16xf32>
    %624 = arith.truncf %623 : vector<2x16xf32> to vector<2x16xbf16>
    "tpu.trace_start"() <{level = 10 : i32, message = "bd,cd->bc"}> : () -> ()
    %cst_194 = arith.constant dense<0.000000e+00> : vector<2x2xf32>
    %625 = tpu.matmul %620, %622, %cst_194 {dimension_numbers = #tpu.dot_dimension_numbers<[1], [1], [0], [0], [0, 0, 1, 0], [], []>} : vector<2x16xbf16>, vector<2x16xbf16>, vector<2x2xf32> -> vector<2x2xf32>
    "tpu.trace_stop"() : () -> ()
    %cst_195 = arith.constant dense<0xFF800000> : vector<2xf32>
    %626 = vector.multi_reduction <maximumf>, %625, %cst_195 [1] : vector<2x2xf32> to vector<2xf32>
    %627 = vector.shape_cast %626 : vector<2xf32> to vector<2x1xf32>
    %628 = vector.broadcast %627 : vector<2x1xf32> to vector<2x2xf32>
    %629 = arith.subf %625, %628 : vector<2x2xf32>
    %630 = math.exp %629 : vector<2x2xf32>
    %cst_196 = arith.constant dense<0.000000e+00> : vector<2xf32>
    %631 = vector.multi_reduction <add>, %630, %cst_196 [1] : vector<2x2xf32> to vector<2xf32>
    %632 = vector.shape_cast %631 : vector<2xf32> to vector<2x1xf32>
    %633 = vector.broadcast %632 : vector<2x1xf32> to vector<2x2xf32>
    %634 = arith.divf %630, %633 : vector<2x2xf32>
    %635 = arith.truncf %634 : vector<2x2xf32> to vector<2x2xbf16>
    %cst_197 = arith.constant dense<0.000000e+00> : vector<2x16xf32>
    %636 = tpu.matmul %635, %624, %cst_197 {dimension_numbers = #tpu.dot_dimension_numbers<[1], [0], [0], [1], [0, 0, 1, 1], [], []>} : vector<2x2xbf16>, vector<2x16xbf16>, vector<2x16xf32> -> vector<2x16xf32>
    %637 = vector.extract_strided_slice %598 {offsets = [0, 32], sizes = [2, 16], strides = [1, 1]} : vector<2x64xf32> to vector<2x16xf32>
    %638 = arith.truncf %637 : vector<2x16xf32> to vector<2x16xbf16>
    %639 = vector.extract_strided_slice %599 {offsets = [0, 32], sizes = [2, 16], strides = [1, 1]} : vector<2x64xf32> to vector<2x16xf32>
    %640 = arith.truncf %639 : vector<2x16xf32> to vector<2x16xbf16>
    %641 = vector.extract_strided_slice %600 {offsets = [0, 32], sizes = [2, 16], strides = [1, 1]} : vector<2x64xf32> to vector<2x16xf32>
    %642 = arith.truncf %641 : vector<2x16xf32> to vector<2x16xbf16>
    "tpu.trace_start"() <{level = 10 : i32, message = "bd,cd->bc"}> : () -> ()
    %cst_198 = arith.constant dense<0.000000e+00> : vector<2x2xf32>
    %643 = tpu.matmul %638, %640, %cst_198 {dimension_numbers = #tpu.dot_dimension_numbers<[1], [1], [0], [0], [0, 0, 1, 0], [], []>} : vector<2x16xbf16>, vector<2x16xbf16>, vector<2x2xf32> -> vector<2x2xf32>
    "tpu.trace_stop"() : () -> ()
    %cst_199 = arith.constant dense<0xFF800000> : vector<2xf32>
    %644 = vector.multi_reduction <maximumf>, %643, %cst_199 [1] : vector<2x2xf32> to vector<2xf32>
    %645 = vector.shape_cast %644 : vector<2xf32> to vector<2x1xf32>
    %646 = vector.broadcast %645 : vector<2x1xf32> to vector<2x2xf32>
    %647 = arith.subf %643, %646 : vector<2x2xf32>
    %648 = math.exp %647 : vector<2x2xf32>
    %cst_200 = arith.constant dense<0.000000e+00> : vector<2xf32>
    %649 = vector.multi_reduction <add>, %648, %cst_200 [1] : vector<2x2xf32> to vector<2xf32>
    %650 = vector.shape_cast %649 : vector<2xf32> to vector<2x1xf32>
    %651 = vector.broadcast %650 : vector<2x1xf32> to vector<2x2xf32>
    %652 = arith.divf %648, %651 : vector<2x2xf32>
    %653 = arith.truncf %652 : vector<2x2xf32> to vector<2x2xbf16>
    %cst_201 = arith.constant dense<0.000000e+00> : vector<2x16xf32>
    %654 = tpu.matmul %653, %642, %cst_201 {dimension_numbers = #tpu.dot_dimension_numbers<[1], [0], [0], [1], [0, 0, 1, 1], [], []>} : vector<2x2xbf16>, vector<2x16xbf16>, vector<2x16xf32> -> vector<2x16xf32>
    %655 = vector.extract_strided_slice %598 {offsets = [0, 48], sizes = [2, 16], strides = [1, 1]} : vector<2x64xf32> to vector<2x16xf32>
    %656 = arith.truncf %655 : vector<2x16xf32> to vector<2x16xbf16>
    %657 = vector.extract_strided_slice %599 {offsets = [0, 48], sizes = [2, 16], strides = [1, 1]} : vector<2x64xf32> to vector<2x16xf32>
    %658 = arith.truncf %657 : vector<2x16xf32> to vector<2x16xbf16>
    %659 = vector.extract_strided_slice %600 {offsets = [0, 48], sizes = [2, 16], strides = [1, 1]} : vector<2x64xf32> to vector<2x16xf32>
    %660 = arith.truncf %659 : vector<2x16xf32> to vector<2x16xbf16>
    "tpu.trace_start"() <{level = 10 : i32, message = "bd,cd->bc"}> : () -> ()
    %cst_202 = arith.constant dense<0.000000e+00> : vector<2x2xf32>
    %661 = tpu.matmul %656, %658, %cst_202 {dimension_numbers = #tpu.dot_dimension_numbers<[1], [1], [0], [0], [0, 0, 1, 0], [], []>} : vector<2x16xbf16>, vector<2x16xbf16>, vector<2x2xf32> -> vector<2x2xf32>
    "tpu.trace_stop"() : () -> ()
    %cst_203 = arith.constant dense<0xFF800000> : vector<2xf32>
    %662 = vector.multi_reduction <maximumf>, %661, %cst_203 [1] : vector<2x2xf32> to vector<2xf32>
    %663 = vector.shape_cast %662 : vector<2xf32> to vector<2x1xf32>
    %664 = vector.broadcast %663 : vector<2x1xf32> to vector<2x2xf32>
    %665 = arith.subf %661, %664 : vector<2x2xf32>
    %666 = math.exp %665 : vector<2x2xf32>
    %cst_204 = arith.constant dense<0.000000e+00> : vector<2xf32>
    %667 = vector.multi_reduction <add>, %666, %cst_204 [1] : vector<2x2xf32> to vector<2xf32>
    %668 = vector.shape_cast %667 : vector<2xf32> to vector<2x1xf32>
    %669 = vector.broadcast %668 : vector<2x1xf32> to vector<2x2xf32>
    %670 = arith.divf %666, %669 : vector<2x2xf32>
    %671 = arith.truncf %670 : vector<2x2xf32> to vector<2x2xbf16>
    %cst_205 = arith.constant dense<0.000000e+00> : vector<2x16xf32>
    %672 = tpu.matmul %671, %660, %cst_205 {dimension_numbers = #tpu.dot_dimension_numbers<[1], [0], [0], [1], [0, 0, 1, 1], [], []>} : vector<2x2xbf16>, vector<2x16xbf16>, vector<2x16xf32> -> vector<2x16xf32>
    %673 = tpu.concatenate %618, %636, %654, %672 in 1 : vector<2x16xf32>, vector<2x16xf32>, vector<2x16xf32>, vector<2x16xf32> -> vector<2x64xf32>
    %674 = vector.extract_strided_slice %429 {offsets = [6, 0], sizes = [2, 64], strides = [1, 1]} : vector<8x64xf32> to vector<2x64xf32>
    %675 = vector.extract_strided_slice %437 {offsets = [6, 0], sizes = [2, 64], strides = [1, 1]} : vector<8x64xf32> to vector<2x64xf32>
    %676 = vector.extract_strided_slice %445 {offsets = [6, 0], sizes = [2, 64], strides = [1, 1]} : vector<8x64xf32> to vector<2x64xf32>
    %677 = vector.extract_strided_slice %674 {offsets = [0, 0], sizes = [2, 16], strides = [1, 1]} : vector<2x64xf32> to vector<2x16xf32>
    %678 = arith.truncf %677 : vector<2x16xf32> to vector<2x16xbf16>
    %679 = vector.extract_strided_slice %675 {offsets = [0, 0], sizes = [2, 16], strides = [1, 1]} : vector<2x64xf32> to vector<2x16xf32>
    %680 = arith.truncf %679 : vector<2x16xf32> to vector<2x16xbf16>
    %681 = vector.extract_strided_slice %676 {offsets = [0, 0], sizes = [2, 16], strides = [1, 1]} : vector<2x64xf32> to vector<2x16xf32>
    %682 = arith.truncf %681 : vector<2x16xf32> to vector<2x16xbf16>
    "tpu.trace_start"() <{level = 10 : i32, message = "bd,cd->bc"}> : () -> ()
    %cst_206 = arith.constant dense<0.000000e+00> : vector<2x2xf32>
    %683 = tpu.matmul %678, %680, %cst_206 {dimension_numbers = #tpu.dot_dimension_numbers<[1], [1], [0], [0], [0, 0, 1, 0], [], []>} : vector<2x16xbf16>, vector<2x16xbf16>, vector<2x2xf32> -> vector<2x2xf32>
    "tpu.trace_stop"() : () -> ()
    %cst_207 = arith.constant dense<0xFF800000> : vector<2xf32>
    %684 = vector.multi_reduction <maximumf>, %683, %cst_207 [1] : vector<2x2xf32> to vector<2xf32>
    %685 = vector.shape_cast %684 : vector<2xf32> to vector<2x1xf32>
    %686 = vector.broadcast %685 : vector<2x1xf32> to vector<2x2xf32>
    %687 = arith.subf %683, %686 : vector<2x2xf32>
    %688 = math.exp %687 : vector<2x2xf32>
    %cst_208 = arith.constant dense<0.000000e+00> : vector<2xf32>
    %689 = vector.multi_reduction <add>, %688, %cst_208 [1] : vector<2x2xf32> to vector<2xf32>
    %690 = vector.shape_cast %689 : vector<2xf32> to vector<2x1xf32>
    %691 = vector.broadcast %690 : vector<2x1xf32> to vector<2x2xf32>
    %692 = arith.divf %688, %691 : vector<2x2xf32>
    %693 = arith.truncf %692 : vector<2x2xf32> to vector<2x2xbf16>
    %cst_209 = arith.constant dense<0.000000e+00> : vector<2x16xf32>
    %694 = tpu.matmul %693, %682, %cst_209 {dimension_numbers = #tpu.dot_dimension_numbers<[1], [0], [0], [1], [0, 0, 1, 1], [], []>} : vector<2x2xbf16>, vector<2x16xbf16>, vector<2x16xf32> -> vector<2x16xf32>
    %695 = vector.extract_strided_slice %674 {offsets = [0, 16], sizes = [2, 16], strides = [1, 1]} : vector<2x64xf32> to vector<2x16xf32>
    %696 = arith.truncf %695 : vector<2x16xf32> to vector<2x16xbf16>
    %697 = vector.extract_strided_slice %675 {offsets = [0, 16], sizes = [2, 16], strides = [1, 1]} : vector<2x64xf32> to vector<2x16xf32>
    %698 = arith.truncf %697 : vector<2x16xf32> to vector<2x16xbf16>
    %699 = vector.extract_strided_slice %676 {offsets = [0, 16], sizes = [2, 16], strides = [1, 1]} : vector<2x64xf32> to vector<2x16xf32>
    %700 = arith.truncf %699 : vector<2x16xf32> to vector<2x16xbf16>
    "tpu.trace_start"() <{level = 10 : i32, message = "bd,cd->bc"}> : () -> ()
    %cst_210 = arith.constant dense<0.000000e+00> : vector<2x2xf32>
    %701 = tpu.matmul %696, %698, %cst_210 {dimension_numbers = #tpu.dot_dimension_numbers<[1], [1], [0], [0], [0, 0, 1, 0], [], []>} : vector<2x16xbf16>, vector<2x16xbf16>, vector<2x2xf32> -> vector<2x2xf32>
    "tpu.trace_stop"() : () -> ()
    %cst_211 = arith.constant dense<0xFF800000> : vector<2xf32>
    %702 = vector.multi_reduction <maximumf>, %701, %cst_211 [1] : vector<2x2xf32> to vector<2xf32>
    %703 = vector.shape_cast %702 : vector<2xf32> to vector<2x1xf32>
    %704 = vector.broadcast %703 : vector<2x1xf32> to vector<2x2xf32>
    %705 = arith.subf %701, %704 : vector<2x2xf32>
    %706 = math.exp %705 : vector<2x2xf32>
    %cst_212 = arith.constant dense<0.000000e+00> : vector<2xf32>
    %707 = vector.multi_reduction <add>, %706, %cst_212 [1] : vector<2x2xf32> to vector<2xf32>
    %708 = vector.shape_cast %707 : vector<2xf32> to vector<2x1xf32>
    %709 = vector.broadcast %708 : vector<2x1xf32> to vector<2x2xf32>
    %710 = arith.divf %706, %709 : vector<2x2xf32>
    %711 = arith.truncf %710 : vector<2x2xf32> to vector<2x2xbf16>
    %cst_213 = arith.constant dense<0.000000e+00> : vector<2x16xf32>
    %712 = tpu.matmul %711, %700, %cst_213 {dimension_numbers = #tpu.dot_dimension_numbers<[1], [0], [0], [1], [0, 0, 1, 1], [], []>} : vector<2x2xbf16>, vector<2x16xbf16>, vector<2x16xf32> -> vector<2x16xf32>
    %713 = vector.extract_strided_slice %674 {offsets = [0, 32], sizes = [2, 16], strides = [1, 1]} : vector<2x64xf32> to vector<2x16xf32>
    %714 = arith.truncf %713 : vector<2x16xf32> to vector<2x16xbf16>
    %715 = vector.extract_strided_slice %675 {offsets = [0, 32], sizes = [2, 16], strides = [1, 1]} : vector<2x64xf32> to vector<2x16xf32>
    %716 = arith.truncf %715 : vector<2x16xf32> to vector<2x16xbf16>
    %717 = vector.extract_strided_slice %676 {offsets = [0, 32], sizes = [2, 16], strides = [1, 1]} : vector<2x64xf32> to vector<2x16xf32>
    %718 = arith.truncf %717 : vector<2x16xf32> to vector<2x16xbf16>
    "tpu.trace_start"() <{level = 10 : i32, message = "bd,cd->bc"}> : () -> ()
    %cst_214 = arith.constant dense<0.000000e+00> : vector<2x2xf32>
    %719 = tpu.matmul %714, %716, %cst_214 {dimension_numbers = #tpu.dot_dimension_numbers<[1], [1], [0], [0], [0, 0, 1, 0], [], []>} : vector<2x16xbf16>, vector<2x16xbf16>, vector<2x2xf32> -> vector<2x2xf32>
    "tpu.trace_stop"() : () -> ()
    %cst_215 = arith.constant dense<0xFF800000> : vector<2xf32>
    %720 = vector.multi_reduction <maximumf>, %719, %cst_215 [1] : vector<2x2xf32> to vector<2xf32>
    %721 = vector.shape_cast %720 : vector<2xf32> to vector<2x1xf32>
    %722 = vector.broadcast %721 : vector<2x1xf32> to vector<2x2xf32>
    %723 = arith.subf %719, %722 : vector<2x2xf32>
    %724 = math.exp %723 : vector<2x2xf32>
    %cst_216 = arith.constant dense<0.000000e+00> : vector<2xf32>
    %725 = vector.multi_reduction <add>, %724, %cst_216 [1] : vector<2x2xf32> to vector<2xf32>
    %726 = vector.shape_cast %725 : vector<2xf32> to vector<2x1xf32>
    %727 = vector.broadcast %726 : vector<2x1xf32> to vector<2x2xf32>
    %728 = arith.divf %724, %727 : vector<2x2xf32>
    %729 = arith.truncf %728 : vector<2x2xf32> to vector<2x2xbf16>
    %cst_217 = arith.constant dense<0.000000e+00> : vector<2x16xf32>
    %730 = tpu.matmul %729, %718, %cst_217 {dimension_numbers = #tpu.dot_dimension_numbers<[1], [0], [0], [1], [0, 0, 1, 1], [], []>} : vector<2x2xbf16>, vector<2x16xbf16>, vector<2x16xf32> -> vector<2x16xf32>
    %731 = vector.extract_strided_slice %674 {offsets = [0, 48], sizes = [2, 16], strides = [1, 1]} : vector<2x64xf32> to vector<2x16xf32>
    %732 = arith.truncf %731 : vector<2x16xf32> to vector<2x16xbf16>
    %733 = vector.extract_strided_slice %675 {offsets = [0, 48], sizes = [2, 16], strides = [1, 1]} : vector<2x64xf32> to vector<2x16xf32>
    %734 = arith.truncf %733 : vector<2x16xf32> to vector<2x16xbf16>
    %735 = vector.extract_strided_slice %676 {offsets = [0, 48], sizes = [2, 16], strides = [1, 1]} : vector<2x64xf32> to vector<2x16xf32>
    %736 = arith.truncf %735 : vector<2x16xf32> to vector<2x16xbf16>
    "tpu.trace_start"() <{level = 10 : i32, message = "bd,cd->bc"}> : () -> ()
    %cst_218 = arith.constant dense<0.000000e+00> : vector<2x2xf32>
    %737 = tpu.matmul %732, %734, %cst_218 {dimension_numbers = #tpu.dot_dimension_numbers<[1], [1], [0], [0], [0, 0, 1, 0], [], []>} : vector<2x16xbf16>, vector<2x16xbf16>, vector<2x2xf32> -> vector<2x2xf32>
    "tpu.trace_stop"() : () -> ()
    %cst_219 = arith.constant dense<0xFF800000> : vector<2xf32>
    %738 = vector.multi_reduction <maximumf>, %737, %cst_219 [1] : vector<2x2xf32> to vector<2xf32>
    %739 = vector.shape_cast %738 : vector<2xf32> to vector<2x1xf32>
    %740 = vector.broadcast %739 : vector<2x1xf32> to vector<2x2xf32>
    %741 = arith.subf %737, %740 : vector<2x2xf32>
    %742 = math.exp %741 : vector<2x2xf32>
    %cst_220 = arith.constant dense<0.000000e+00> : vector<2xf32>
    %743 = vector.multi_reduction <add>, %742, %cst_220 [1] : vector<2x2xf32> to vector<2xf32>
    %744 = vector.shape_cast %743 : vector<2xf32> to vector<2x1xf32>
    %745 = vector.broadcast %744 : vector<2x1xf32> to vector<2x2xf32>
    %746 = arith.divf %742, %745 : vector<2x2xf32>
    %747 = arith.truncf %746 : vector<2x2xf32> to vector<2x2xbf16>
    %cst_221 = arith.constant dense<0.000000e+00> : vector<2x16xf32>
    %748 = tpu.matmul %747, %736, %cst_221 {dimension_numbers = #tpu.dot_dimension_numbers<[1], [0], [0], [1], [0, 0, 1, 1], [], []>} : vector<2x2xbf16>, vector<2x16xbf16>, vector<2x16xf32> -> vector<2x16xf32>
    %749 = tpu.concatenate %694, %712, %730, %748 in 1 : vector<2x16xf32>, vector<2x16xf32>, vector<2x16xf32>, vector<2x16xf32> -> vector<2x64xf32>
    %750 = tpu.concatenate %521, %597, %673, %749 in 0 : vector<2x64xf32>, vector<2x64xf32>, vector<2x64xf32>, vector<2x64xf32> -> vector<8x64xf32>
    %c1_222 = arith.constant 1 : index
    %c0_223 = arith.constant 0 : index
    %c0_224 = arith.constant 0 : index
    %751 = vector.load %arg11[%c1_222, %c0_223, %c0_224] : memref<2x64x64xbf16, #tpu.memory_space<vmem>>, vector<1x64x64xbf16>
    %752 = vector.shape_cast %751 : vector<1x64x64xbf16> to vector<64x64xbf16>
    %753 = arith.truncf %750 : vector<8x64xf32> to vector<8x64xbf16>
    %cst_225 = arith.constant dense<0.000000e+00> : vector<8x64xf32>
    %754 = tpu.matmul %753, %752, %cst_225 {dimension_numbers = #tpu.dot_dimension_numbers<[1], [0], [0], [1], [0, 0, 1, 1], [], []>} : vector<8x64xbf16>, vector<64x64xbf16>, vector<8x64xf32> -> vector<8x64xf32>
    %c1_226 = arith.constant 1 : index
    %c0_227 = arith.constant 0 : index
    %c0_228 = arith.constant 0 : index
    %755 = vector.load %arg12[%c1_226, %c0_227, %c0_228] : memref<2x1x64xf32, #tpu.memory_space<vmem>>, vector<1x1x64xf32>
    %756 = vector.shape_cast %755 : vector<1x1x64xf32> to vector<1x64xf32>
    %757 = vector.broadcast %756 : vector<1x64xf32> to vector<8x64xf32>
    %758 = arith.addf %754, %757 : vector<8x64xf32>
    %759 = arith.addf %419, %758 : vector<8x64xf32>
    %c1_229 = arith.constant 1 : index
    %c0_230 = arith.constant 0 : index
    %c0_231 = arith.constant 0 : index
    %760 = vector.load %arg17[%c1_229, %c0_230, %c0_231] : memref<2x1x64xf32, #tpu.memory_space<vmem>>, vector<1x1x64xf32>
    %761 = vector.shape_cast %760 : vector<1x1x64xf32> to vector<1x64xf32>
    %c1_232 = arith.constant 1 : index
    %c0_233 = arith.constant 0 : index
    %c0_234 = arith.constant 0 : index
    %762 = vector.load %arg18[%c1_232, %c0_233, %c0_234] : memref<2x1x64xf32, #tpu.memory_space<vmem>>, vector<1x1x64xf32>
    %763 = vector.shape_cast %762 : vector<1x1x64xf32> to vector<1x64xf32>
    %cst_235 = arith.constant dense<0.000000e+00> : vector<8xf32>
    %764 = vector.multi_reduction <add>, %759, %cst_235 [1] : vector<8x64xf32> to vector<8xf32>
    %765 = vector.shape_cast %764 : vector<8xf32> to vector<8x1xf32>
    %cst_236 = arith.constant 6.400000e+01 : f32
    %766 = vector.broadcast %cst_236 : f32 to vector<8x1xf32>
    %767 = arith.divf %765, %766 : vector<8x1xf32>
    %768 = vector.broadcast %767 : vector<8x1xf32> to vector<8x64xf32>
    %769 = arith.subf %759, %768 : vector<8x64xf32>
    %770 = arith.mulf %769, %769 : vector<8x64xf32>
    %cst_237 = arith.constant dense<0.000000e+00> : vector<8xf32>
    %771 = vector.multi_reduction <add>, %770, %cst_237 [1] : vector<8x64xf32> to vector<8xf32>
    %772 = vector.shape_cast %771 : vector<8xf32> to vector<8x1xf32>
    %cst_238 = arith.constant 6.400000e+01 : f32
    %773 = vector.broadcast %cst_238 : f32 to vector<8x1xf32>
    %774 = arith.divf %772, %773 : vector<8x1xf32>
    %775 = vector.broadcast %767 : vector<8x1xf32> to vector<8x64xf32>
    %776 = arith.subf %759, %775 : vector<8x64xf32>
    %cst_239 = arith.constant 9.99999974E-6 : f32
    %777 = vector.broadcast %cst_239 : f32 to vector<8x1xf32>
    %778 = arith.addf %774, %777 : vector<8x1xf32>
    %779 = math.rsqrt %778 : vector<8x1xf32>
    %780 = vector.broadcast %779 : vector<8x1xf32> to vector<8x64xf32>
    %781 = arith.mulf %776, %780 : vector<8x64xf32>
    %782 = vector.broadcast %761 : vector<1x64xf32> to vector<8x64xf32>
    %783 = arith.mulf %781, %782 : vector<8x64xf32>
    %784 = vector.broadcast %763 : vector<1x64xf32> to vector<8x64xf32>
    %785 = arith.addf %783, %784 : vector<8x64xf32>
    %c1_240 = arith.constant 1 : index
    %c0_241 = arith.constant 0 : index
    %c0_242 = arith.constant 0 : index
    %786 = vector.load %arg13[%c1_240, %c0_241, %c0_242] : memref<2x64x128xbf16, #tpu.memory_space<vmem>>, vector<1x64x128xbf16>
    %787 = vector.shape_cast %786 : vector<1x64x128xbf16> to vector<64x128xbf16>
    %788 = arith.truncf %785 : vector<8x64xf32> to vector<8x64xbf16>
    %cst_243 = arith.constant dense<0.000000e+00> : vector<8x128xf32>
    %789 = tpu.matmul %788, %787, %cst_243 {dimension_numbers = #tpu.dot_dimension_numbers<[1], [0], [0], [1], [0, 0, 1, 1], [], []>} : vector<8x64xbf16>, vector<64x128xbf16>, vector<8x128xf32> -> vector<8x128xf32>
    %c1_244 = arith.constant 1 : index
    %c0_245 = arith.constant 0 : index
    %c0_246 = arith.constant 0 : index
    %790 = vector.load %arg14[%c1_244, %c0_245, %c0_246] : memref<2x1x128xf32, #tpu.memory_space<vmem>>, vector<1x1x128xf32>
    %791 = vector.shape_cast %790 : vector<1x1x128xf32> to vector<1x128xf32>
    %792 = vector.broadcast %791 : vector<1x128xf32> to vector<8x128xf32>
    %793 = arith.addf %789, %792 : vector<8x128xf32>
    %cst_247 = arith.constant 0.000000e+00 : f32
    %794 = vector.broadcast %cst_247 : f32 to vector<8x128xf32>
    %795 = arith.maximumf %793, %794 : vector<8x128xf32>
    %c1_248 = arith.constant 1 : index
    %c0_249 = arith.constant 0 : index
    %c0_250 = arith.constant 0 : index
    %796 = vector.load %arg15[%c1_248, %c0_249, %c0_250] : memref<2x128x64xbf16, #tpu.memory_space<vmem>>, vector<1x128x64xbf16>
    %797 = vector.shape_cast %796 : vector<1x128x64xbf16> to vector<128x64xbf16>
    %798 = arith.truncf %795 : vector<8x128xf32> to vector<8x128xbf16>
    %cst_251 = arith.constant dense<0.000000e+00> : vector<8x64xf32>
    %799 = tpu.matmul %798, %797, %cst_251 {dimension_numbers = #tpu.dot_dimension_numbers<[1], [0], [0], [1], [0, 0, 1, 1], [], []>} : vector<8x128xbf16>, vector<128x64xbf16>, vector<8x64xf32> -> vector<8x64xf32>
    %c1_252 = arith.constant 1 : index
    %c0_253 = arith.constant 0 : index
    %c0_254 = arith.constant 0 : index
    %800 = vector.load %arg16[%c1_252, %c0_253, %c0_254] : memref<2x1x64xf32, #tpu.memory_space<vmem>>, vector<1x1x64xf32>
    %801 = vector.shape_cast %800 : vector<1x1x64xf32> to vector<1x64xf32>
    %802 = vector.broadcast %801 : vector<1x64xf32> to vector<8x64xf32>
    %803 = arith.addf %799, %802 : vector<8x64xf32>
    %804 = arith.addf %785, %803 : vector<8x64xf32>
    %c1_255 = arith.constant 1 : index
    %c0_256 = arith.constant 0 : index
    %c0_257 = arith.constant 0 : index
    %805 = vector.load %arg19[%c1_255, %c0_256, %c0_257] : memref<2x1x64xf32, #tpu.memory_space<vmem>>, vector<1x1x64xf32>
    %806 = vector.shape_cast %805 : vector<1x1x64xf32> to vector<1x64xf32>
    %c1_258 = arith.constant 1 : index
    %c0_259 = arith.constant 0 : index
    %c0_260 = arith.constant 0 : index
    %807 = vector.load %arg20[%c1_258, %c0_259, %c0_260] : memref<2x1x64xf32, #tpu.memory_space<vmem>>, vector<1x1x64xf32>
    %808 = vector.shape_cast %807 : vector<1x1x64xf32> to vector<1x64xf32>
    %cst_261 = arith.constant dense<0.000000e+00> : vector<8xf32>
    %809 = vector.multi_reduction <add>, %804, %cst_261 [1] : vector<8x64xf32> to vector<8xf32>
    %810 = vector.shape_cast %809 : vector<8xf32> to vector<8x1xf32>
    %cst_262 = arith.constant 6.400000e+01 : f32
    %811 = vector.broadcast %cst_262 : f32 to vector<8x1xf32>
    %812 = arith.divf %810, %811 : vector<8x1xf32>
    %813 = vector.broadcast %812 : vector<8x1xf32> to vector<8x64xf32>
    %814 = arith.subf %804, %813 : vector<8x64xf32>
    %815 = arith.mulf %814, %814 : vector<8x64xf32>
    %cst_263 = arith.constant dense<0.000000e+00> : vector<8xf32>
    %816 = vector.multi_reduction <add>, %815, %cst_263 [1] : vector<8x64xf32> to vector<8xf32>
    %817 = vector.shape_cast %816 : vector<8xf32> to vector<8x1xf32>
    %cst_264 = arith.constant 6.400000e+01 : f32
    %818 = vector.broadcast %cst_264 : f32 to vector<8x1xf32>
    %819 = arith.divf %817, %818 : vector<8x1xf32>
    %820 = vector.broadcast %812 : vector<8x1xf32> to vector<8x64xf32>
    %821 = arith.subf %804, %820 : vector<8x64xf32>
    %cst_265 = arith.constant 9.99999974E-6 : f32
    %822 = vector.broadcast %cst_265 : f32 to vector<8x1xf32>
    %823 = arith.addf %819, %822 : vector<8x1xf32>
    %824 = math.rsqrt %823 : vector<8x1xf32>
    %825 = vector.broadcast %824 : vector<8x1xf32> to vector<8x64xf32>
    %826 = arith.mulf %821, %825 : vector<8x64xf32>
    %827 = vector.broadcast %806 : vector<1x64xf32> to vector<8x64xf32>
    %828 = arith.mulf %826, %827 : vector<8x64xf32>
    %829 = vector.broadcast %808 : vector<1x64xf32> to vector<8x64xf32>
    %830 = arith.addf %828, %829 : vector<8x64xf32>
    %831 = vector.extract_strided_slice %830 {offsets = [0, 0], sizes = [2, 64], strides = [1, 1]} : vector<8x64xf32> to vector<2x64xf32>
    %832 = vector.extract_strided_slice %830 {offsets = [2, 0], sizes = [2, 64], strides = [1, 1]} : vector<8x64xf32> to vector<2x64xf32>
    %833 = arith.addf %831, %832 : vector<2x64xf32>
    %834 = vector.extract_strided_slice %830 {offsets = [4, 0], sizes = [2, 64], strides = [1, 1]} : vector<8x64xf32> to vector<2x64xf32>
    %835 = arith.addf %833, %834 : vector<2x64xf32>
    %836 = vector.extract_strided_slice %830 {offsets = [6, 0], sizes = [2, 64], strides = [1, 1]} : vector<8x64xf32> to vector<2x64xf32>
    %837 = arith.addf %835, %836 : vector<2x64xf32>
    %c0_266 = arith.constant 0 : index
    %c0_267 = arith.constant 0 : index
    %c0_268 = arith.constant 0 : index
    %838 = vector.load %arg21[%c0_266, %c0_267, %c0_268] : memref<1x2x64xf32, #tpu.memory_space<vmem>>, vector<1x2x64xf32>
    %839 = vector.shape_cast %838 : vector<1x2x64xf32> to vector<2x64xf32>
    %840 = vector.shape_cast %837 : vector<2x64xf32> to vector<1x2x64xf32>
    tpu.vector_store %arg21[%c0_266, %c0_267, %c0_268], %840 {strides = array<i32>} : memref<1x2x64xf32, #tpu.memory_space<vmem>>, vector<1x2x64xf32>,
    return
  }
  func.func @transform_0(%arg0: i32) -> (i32, i32) {
    %c0_i32 = arith.constant 0 : i32
    %c0_i32_0 = arith.constant 0 : i32
    return %arg0, %c0_i32 : i32, i32
  }
  func.func @transform_1(%arg0: i32) -> (i32, i32) {
    %c0_i32 = arith.constant 0 : i32
    %c0_i32_0 = arith.constant 0 : i32
    return %arg0, %c0_i32 : i32, i32
  }
  func.func @transform_2(%arg0: i32) -> (i32, i32) {
    %c0_i32 = arith.constant 0 : i32
    %c0_i32_0 = arith.constant 0 : i32
    %c0_i32_1 = arith.constant 0 : i32
    return %c0_i32, %c0_i32_0 : i32, i32
  }
  func.func @transform_3(%arg0: i32) -> (i32, i32) {
    %c0_i32 = arith.constant 0 : i32
    %c0_i32_0 = arith.constant 0 : i32
    %c0_i32_1 = arith.constant 0 : i32
    return %c0_i32, %c0_i32_0 : i32, i32
  }
  func.func @transform_4(%arg0: i32) -> (i32, i32, i32) {
    %c0_i32 = arith.constant 0 : i32
    %c0_i32_0 = arith.constant 0 : i32
    %c0_i32_1 = arith.constant 0 : i32
    %c0_i32_2 = arith.constant 0 : i32
    return %c0_i32, %c0_i32_0, %c0_i32_1 : i32, i32, i32
  }
  func.func @transform_5(%arg0: i32) -> (i32, i32, i32) {
    %c0_i32 = arith.constant 0 : i32
    %c0_i32_0 = arith.constant 0 : i32
    %c0_i32_1 = arith.constant 0 : i32
    %c0_i32_2 = arith.constant 0 : i32
    return %c0_i32, %c0_i32_0, %c0_i32_1 : i32, i32, i32
  }
  func.func @transform_6(%arg0: i32) -> (i32, i32, i32) {
    %c0_i32 = arith.constant 0 : i32
    %c0_i32_0 = arith.constant 0 : i32
    %c0_i32_1 = arith.constant 0 : i32
    %c0_i32_2 = arith.constant 0 : i32
    return %c0_i32, %c0_i32_0, %c0_i32_1 : i32, i32, i32
  }
  func.func @transform_7(%arg0: i32) -> (i32, i32, i32) {
    %c0_i32 = arith.constant 0 : i32
    %c0_i32_0 = arith.constant 0 : i32
    %c0_i32_1 = arith.constant 0 : i32
    %c0_i32_2 = arith.constant 0 : i32
    return %c0_i32, %c0_i32_0, %c0_i32_1 : i32, i32, i32
  }
  func.func @transform_8(%arg0: i32) -> (i32, i32, i32) {
    %c0_i32 = arith.constant 0 : i32
    %c0_i32_0 = arith.constant 0 : i32
    %c0_i32_1 = arith.constant 0 : i32
    %c0_i32_2 = arith.constant 0 : i32
    return %c0_i32, %c0_i32_0, %c0_i32_1 : i32, i32, i32
  }
  func.func @transform_9(%arg0: i32) -> (i32, i32, i32) {
    %c0_i32 = arith.constant 0 : i32
    %c0_i32_0 = arith.constant 0 : i32
    %c0_i32_1 = arith.constant 0 : i32
    %c0_i32_2 = arith.constant 0 : i32
    return %c0_i32, %c0_i32_0, %c0_i32_1 : i32, i32, i32
  }
  func.func @transform_10(%arg0: i32) -> (i32, i32, i32) {
    %c0_i32 = arith.constant 0 : i32
    %c0_i32_0 = arith.constant 0 : i32
    %c0_i32_1 = arith.constant 0 : i32
    %c0_i32_2 = arith.constant 0 : i32
    return %c0_i32, %c0_i32_0, %c0_i32_1 : i32, i32, i32
  }
  func.func @transform_11(%arg0: i32) -> (i32, i32, i32) {
    %c0_i32 = arith.constant 0 : i32
    %c0_i32_0 = arith.constant 0 : i32
    %c0_i32_1 = arith.constant 0 : i32
    %c0_i32_2 = arith.constant 0 : i32
    return %c0_i32, %c0_i32_0, %c0_i32_1 : i32, i32, i32
  }
  func.func @transform_12(%arg0: i32) -> (i32, i32, i32) {
    %c0_i32 = arith.constant 0 : i32
    %c0_i32_0 = arith.constant 0 : i32
    %c0_i32_1 = arith.constant 0 : i32
    %c0_i32_2 = arith.constant 0 : i32
    return %c0_i32, %c0_i32_0, %c0_i32_1 : i32, i32, i32
  }
  func.func @transform_13(%arg0: i32) -> (i32, i32, i32) {
    %c0_i32 = arith.constant 0 : i32
    %c0_i32_0 = arith.constant 0 : i32
    %c0_i32_1 = arith.constant 0 : i32
    %c0_i32_2 = arith.constant 0 : i32
    return %c0_i32, %c0_i32_0, %c0_i32_1 : i32, i32, i32
  }
  func.func @transform_14(%arg0: i32) -> (i32, i32, i32) {
    %c0_i32 = arith.constant 0 : i32
    %c0_i32_0 = arith.constant 0 : i32
    %c0_i32_1 = arith.constant 0 : i32
    %c0_i32_2 = arith.constant 0 : i32
    return %c0_i32, %c0_i32_0, %c0_i32_1 : i32, i32, i32
  }
  func.func @transform_15(%arg0: i32) -> (i32, i32, i32) {
    %c0_i32 = arith.constant 0 : i32
    %c0_i32_0 = arith.constant 0 : i32
    %c0_i32_1 = arith.constant 0 : i32
    %c0_i32_2 = arith.constant 0 : i32
    return %c0_i32, %c0_i32_0, %c0_i32_1 : i32, i32, i32
  }
  func.func @transform_16(%arg0: i32) -> (i32, i32, i32) {
    %c0_i32 = arith.constant 0 : i32
    %c0_i32_0 = arith.constant 0 : i32
    %c0_i32_1 = arith.constant 0 : i32
    %c0_i32_2 = arith.constant 0 : i32
    return %c0_i32, %c0_i32_0, %c0_i32_1 : i32, i32, i32
  }
  func.func @transform_17(%arg0: i32) -> (i32, i32, i32) {
    %c0_i32 = arith.constant 0 : i32
    %c0_i32_0 = arith.constant 0 : i32
    %c0_i32_1 = arith.constant 0 : i32
    %c0_i32_2 = arith.constant 0 : i32
    return %c0_i32, %c0_i32_0, %c0_i32_1 : i32, i32, i32
  }
  func.func @transform_18(%arg0: i32) -> (i32, i32, i32) {
    %c0_i32 = arith.constant 0 : i32
    %c0_i32_0 = arith.constant 0 : i32
    %c0_i32_1 = arith.constant 0 : i32
    %c0_i32_2 = arith.constant 0 : i32
    return %c0_i32, %c0_i32_0, %c0_i32_1 : i32, i32, i32
  }
  func.func @transform_19(%arg0: i32) -> (i32, i32, i32) {
    %c0_i32 = arith.constant 0 : i32
    %c0_i32_0 = arith.constant 0 : i32
    %c0_i32_1 = arith.constant 0 : i32
    %c0_i32_2 = arith.constant 0 : i32
    return %c0_i32, %c0_i32_0, %c0_i32_1 : i32, i32, i32
  }
  func.func @transform_20(%arg0: i32) -> (i32, i32, i32) {
    %c0_i32 = arith.constant 0 : i32
    %c0_i32_0 = arith.constant 0 : i32
    %c0_i32_1 = arith.constant 0 : i32
    return %arg0, %c0_i32, %c0_i32_0 : i32, i32, i32
  }
}

</mosaic_0001>

<llo_original>
// kernel: tpu_custom_call.1
$region0: #{tpu_custom_call.1}
  #allocation0 [shape = 'u32[]', space=smem, size = 0x4, offset = 0x4, fixed_abs, tag = 'smem constant byte address 0x4 - core index']
  #allocation1 [shape = 'u32[144,128]{1,0:T(1,128)}', space=vmem, size = 0x12000, scoped, tag = 'internal scratch']
  %s0 = inlined_call_operand.vmem [shape: f32[16,8], index: 0, kind: input, shape index: {}]
  %s1 = inlined_call_operand.vmem [shape: f32[16,64], index: 1, kind: input, shape index: {}]
  %s2 = inlined_call_operand.vmem [shape: bf16[8,64], index: 2, kind: input, shape index: {}]
  %s3 = inlined_call_operand.hbm [shape: f32[1,64], index: 3, kind: input, shape index: {}]
  %s4 = inlined_call_operand.vmem [shape: bf16[2,64,64], index: 4, kind: input, shape index: {}]
  %s5 = inlined_call_operand.vmem [shape: f32[2,1,64], index: 5, kind: input, shape index: {}]
  %s6 = inlined_call_operand.vmem [shape: bf16[2,64,64], index: 6, kind: input, shape index: {}]
  %s7 = inlined_call_operand.vmem [shape: f32[2,1,64], index: 7, kind: input, shape index: {}]
  %s8 = inlined_call_operand.vmem [shape: bf16[2,64,64], index: 8, kind: input, shape index: {}]
  %s9 = inlined_call_operand.vmem [shape: f32[2,1,64], index: 9, kind: input, shape index: {}]
  %s10 = inlined_call_operand.hbm [shape: bf16[2,64,64], index: 10, kind: input, shape index: {}]
  %s11 = inlined_call_operand.vmem [shape: f32[2,1,64], index: 11, kind: input, shape index: {}]
  %s12 = inlined_call_operand.hbm [shape: bf16[2,64,128], index: 12, kind: input, shape index: {}]
  %s13 = inlined_call_operand.vmem [shape: f32[2,1,128], index: 13, kind: input, shape index: {}]
  %s14 = inlined_call_operand.vmem [shape: bf16[2,128,64], index: 14, kind: input, shape index: {}]
  %s15 = inlined_call_operand.vmem [shape: f32[2,1,64], index: 15, kind: input, shape index: {}]
  %s16 = inlined_call_operand.vmem [shape: f32[2,1,64], index: 16, kind: input, shape index: {}]
  %s17 = inlined_call_operand.vmem [shape: f32[2,1,64], index: 17, kind: input, shape index: {}]
  %s18 = inlined_call_operand.vmem [shape: f32[2,1,64], index: 18, kind: input, shape index: {}]
  %s19 = inlined_call_operand.vmem [shape: f32[2,1,64], index: 19, kind: input, shape index: {}]
  %s20 = inlined_call_operand.hbm [shape: f32[2,2,64], index: 20, kind: output, shape index: {}]
  %s21 = sld [smem:[#allocation0]]
  $region125: #{tpu_custom_call.1} parent=0
    _
  %s23 = ssub.s32 1, %s21
  %s24 = scalar_select 0, %s23, %s21
  $region1: #{tpu_custom_call.1} parent=0
    #allocation2 [shape = 'u8[512]{0}', space=vmem, size = 0x400, scoped, tag = 'input window, operand 3, single buffered']
    #allocation3 [shape = 's32[2]{0}', space=sflag, size = 0x8, scoped, tag = 'scoped memory for tpu_custom_call.1']
    #allocation4 [shape = 's32[2]{0}', space=sflag, size = 0x8, scoped, tag = 'scoped memory for tpu_custom_call.1']
    #allocation5 [shape = 'u8[32768]{0}', space=vmem, size = 0x8000, scoped, tag = 'input window, operand 10, single buffered']
    #allocation6 [shape = 's32[1]{0}', space=sflag, size = 0x4, scoped, tag = 'scoped memory for tpu_custom_call.1']
    #allocation7 [shape = 'u8[32768]{0}', space=vmem, size = 0x8000, scoped, tag = 'input window, operand 12, single buffered']
    #allocation8 [shape = 'u8[2048]{0}', space=vmem, size = 0x800, scoped, tag = 'output window, operand 0']
    %25 = vsyncpa [#allocation3], 0
    %26 = vsyncpa [#allocation6], 0
    %27 = vsyncpa [#allocation4], 0
    %s28 = scalar_lea.sflag [#allocation4], 1
    %29 = vsyncpa %s28, 0
    loop: start=0, step=1, limit=4
    $region2: #{tpu_custom_call.1} parent=1 // loop_pre_header
      _
    $region3: #{tpu_custom_call.1} parent=1 // loop_header
      %s31 = sphi 0, %s35
      %p32 = scmp.ge.s32.totalorder %s31, 4
      %s41 = sphi 0, %s43
      %s44 = sphi 0, %s41
      %s45 = sphi 0, %s44
      %s61 = sphi 0, %s45
      %s67 = sphi 0, %s69
      %s70 = sphi 0, %s67
      %s71 = sphi 0, %s70
      %s87 = sphi 0, %s71
      %s91 = sphi 0, %s91
      %s93 = sphi 0, %s91
      %s94 = sphi 0, %s93
      %s108 = sphi 0, %s94
      %s112 = sphi 0, %s112
      %s114 = sphi 0, %s112
      %s115 = sphi 0, %s114
      %s129 = sphi 0, %s115
      %s133 = sphi 0, %s133
      %s135 = sphi 0, %s133
      %s136 = sphi 0, %s135
      %s150 = sphi 0, %s136
      %s154 = sphi 0, %s154
      %s156 = sphi 0, %s154
      %s157 = sphi 0, %s156
      %s171 = sphi 0, %s157
      %s175 = sphi 0, %s175
      %s177 = sphi 0, %s175
      %s178 = sphi 0, %s177
      %s192 = sphi 0, %s178
      %s196 = sphi 0, %s196
      %s198 = sphi 0, %s196
      %s199 = sphi 0, %s198
      %s213 = sphi 0, %s199
      %s217 = sphi 0, %s217
      %s219 = sphi 0, %s217
      %s220 = sphi 0, %s219
      %s234 = sphi 0, %s220
      %s238 = sphi 0, %s238
      %s240 = sphi 0, %s238
      %s241 = sphi 0, %s240
      %s255 = sphi 0, %s241
      %s259 = sphi 0, %s259
      %s261 = sphi 0, %s259
      %s262 = sphi 0, %s261
      %s276 = sphi 0, %s262
      %s280 = sphi 0, %s280
      %s282 = sphi 0, %s280
      %s283 = sphi 0, %s282
      %s297 = sphi 0, %s283
      %s301 = sphi 0, %s301
      %s303 = sphi 0, %s301
      %s304 = sphi 0, %s303
      %s318 = sphi 0, %s304
      %s322 = sphi 0, %s322
      %s324 = sphi 0, %s322
      %s325 = sphi 0, %s324
      %s339 = sphi 0, %s325
      %s343 = sphi 0, %s343
      %s345 = sphi 0, %s343
      %s346 = sphi 0, %s345
      %s360 = sphi 0, %s346
      %s364 = sphi 0, %s364
      %s366 = sphi 0, %s364
      %s367 = sphi 0, %s366
      %s381 = sphi 0, %s367
      %s385 = sphi 0, %s385
      %s387 = sphi 0, %s385
      %s388 = sphi 0, %s387
      %s402 = sphi 0, %s388
      %s406 = sphi 0, %s406
      %s408 = sphi 0, %s406
      %s409 = sphi 0, %s408
      %s423 = sphi 0, %s409
      %s427 = sphi 0, %s427
      %s429 = sphi 0, %s427
      %s430 = sphi 0, %s429
      %s444 = sphi 0, %s430
      %s448 = sphi 0, %s448
      %s450 = sphi 0, %s448
      %s451 = sphi 0, %s450
      %s465 = sphi 0, %s451
      %s471 = sphi 0, %s473
      %s474 = sphi 0, %s471
      %s475 = sphi 0, %s474
      %s491 = sphi 0, %s475
    $region4: #{tpu_custom_call.1} parent=1 // loop_header_branch
      %34 = sbr.rel (%p32) target = $region8
    $region5: #{tpu_custom_call.1} parent=1 // loop_body
      %s36 = ssub.s32 %s31, 1
      %s37 = ssub.s32 %s31, 2
      %s38 = sadd.s32 %s31, 1
      %s39 = ssub.s32 %s31, %s38
      %p40 = scmp.eq.s32.totalorder %s39, 0
      %s42 = sadd.s32 %s41, 1
      %s43 = scalar_select %p40, %s41, %s42
      %p46 = pneg %p40
      %p47 = scmp.eq.s32.totalorder %s31, 1
      %p48 = por %p46, %p47
      %p49 = scmp.ne.s32.totalorder %s41, %s44
      %p50 = scmp.eq.s32.totalorder %s31, 0
      %p51 = por %p49, %p50
      %p52 = scmp.ne.s32.totalorder %s41, %s44
      %p53 = scmp.eq.s32.totalorder %s36, 1
      %p54 = por %p52, %p53
      %p55 = scmp.ne.s32.totalorder %s44, %s45
      %p56 = scmp.eq.s32.totalorder %s36, 0
      %p57 = por %p55, %p56
      %p58 = scmp.ne.s32.totalorder %s44, %s45
      %p59 = scmp.eq.s32.totalorder %s37, 1
      %p60 = por %p58, %p59
      %p62 = scmp.ne.s32.totalorder %s45, %s61
      %p63 = scmp.eq.s32.totalorder %s37, 0
      %p64 = por %p62, %p63
      %s65 = ssub.s32 %s31, %s38
      %p66 = scmp.eq.s32.totalorder %s65, 0
      %s68 = sadd.s32 %s67, 1
      %s69 = scalar_select %p66, %s67, %s68
      %p72 = pneg %p66
      %p73 = scmp.eq.s32.totalorder %s31, 1
      %p74 = por %p72, %p73
      %p75 = scmp.ne.s32.totalorder %s67, %s70
      %p76 = scmp.eq.s32.totalorder %s31, 0
      %p77 = por %p75, %p76
      %p78 = scmp.ne.s32.totalorder %s67, %s70
      %p79 = scmp.eq.s32.totalorder %s36, 1
      %p80 = por %p78, %p79
      %p81 = scmp.ne.s32.totalorder %s70, %s71
      %p82 = scmp.eq.s32.totalorder %s36, 0
      %p83 = por %p81, %p82
      %p84 = scmp.ne.s32.totalorder %s70, %s71
      %p85 = scmp.eq.s32.totalorder %s37, 1
      %p86 = por %p84, %p85
      %p88 = scmp.ne.s32.totalorder %s71, %s87
      %p89 = scmp.eq.s32.totalorder %s37, 0
      %p90 = por %p88, %p89
      %s92 = sadd.s32 %s91, 1
      %p95 = scmp.eq.s32.totalorder %s31, 1
      %p96 = scmp.ne.s32.totalorder %s91, %s93
      %p97 = scmp.eq.s32.totalorder %s31, 0
      %p98 = por %p96, %p97
      %p99 = scmp.ne.s32.totalorder %s91, %s93
      %p100 = scmp.eq.s32.totalorder %s36, 1
      %p101 = por %p99, %p100
      %p102 = scmp.ne.s32.totalorder %s93, %s94
      %p103 = scmp.eq.s32.totalorder %s36, 0
      %p104 = por %p102, %p103
      %p105 = scmp.ne.s32.totalorder %s93, %s94
      %p106 = scmp.eq.s32.totalorder %s37, 1
      %p107 = por %p105, %p106
      %p109 = scmp.ne.s32.totalorder %s94, %s108
      %p110 = scmp.eq.s32.totalorder %s37, 0
      %p111 = por %p109, %p110
      %s113 = sadd.s32 %s112, 1
      %p116 = scmp.eq.s32.totalorder %s31, 1
      %p117 = scmp.ne.s32.totalorder %s112, %s114
      %p118 = scmp.eq.s32.totalorder %s31, 0
      %p119 = por %p117, %p118
      %p120 = scmp.ne.s32.totalorder %s112, %s114
      %p121 = scmp.eq.s32.totalorder %s36, 1
      %p122 = por %p120, %p121
      %p123 = scmp.ne.s32.totalorder %s114, %s115
      %p124 = scmp.eq.s32.totalorder %s36, 0
      %p125 = por %p123, %p124
      %p126 = scmp.ne.s32.totalorder %s114, %s115
      %p127 = scmp.eq.s32.totalorder %s37, 1
      %p128 = por %p126, %p127
      %p130 = scmp.ne.s32.totalorder %s115, %s129
      %p131 = scmp.eq.s32.totalorder %s37, 0
      %p132 = por %p130, %p131
      %s134 = sadd.s32 %s133, 1
      %p137 = scmp.eq.s32.totalorder %s31, 1
      %p138 = scmp.ne.s32.totalorder %s133, %s135
      %p139 = scmp.eq.s32.totalorder %s31, 0
      %p140 = por %p138, %p139
      %p141 = scmp.ne.s32.totalorder %s133, %s135
      %p142 = scmp.eq.s32.totalorder %s36, 1
      %p143 = por %p141, %p142
      %p144 = scmp.ne.s32.totalorder %s135, %s136
      %p145 = scmp.eq.s32.totalorder %s36, 0
      %p146 = por %p144, %p145
      %p147 = scmp.ne.s32.totalorder %s135, %s136
      %p148 = scmp.eq.s32.totalorder %s37, 1
      %p149 = por %p147, %p148
      %p151 = scmp.ne.s32.totalorder %s136, %s150
      %p152 = scmp.eq.s32.totalorder %s37, 0
      %p153 = por %p151, %p152
      %s155 = sadd.s32 %s154, 1
      %p158 = scmp.eq.s32.totalorder %s31, 1
      %p159 = scmp.ne.s32.totalorder %s154, %s156
      %p160 = scmp.eq.s32.totalorder %s31, 0
      %p161 = por %p159, %p160
      %p162 = scmp.ne.s32.totalorder %s154, %s156
      %p163 = scmp.eq.s32.totalorder %s36, 1
      %p164 = por %p162, %p163
      %p165 = scmp.ne.s32.totalorder %s156, %s157
      %p166 = scmp.eq.s32.totalorder %s36, 0
      %p167 = por %p165, %p166
      %p168 = scmp.ne.s32.totalorder %s156, %s157
      %p169 = scmp.eq.s32.totalorder %s37, 1
      %p170 = por %p168, %p169
      %p172 = scmp.ne.s32.totalorder %s157, %s171
      %p173 = scmp.eq.s32.totalorder %s37, 0
      %p174 = por %p172, %p173
      %s176 = sadd.s32 %s175, 1
      %p179 = scmp.eq.s32.totalorder %s31, 1
      %p180 = scmp.ne.s32.totalorder %s175, %s177
      %p181 = scmp.eq.s32.totalorder %s31, 0
      %p182 = por %p180, %p181
      %p183 = scmp.ne.s32.totalorder %s175, %s177
      %p184 = scmp.eq.s32.totalorder %s36, 1
      %p185 = por %p183, %p184
      %p186 = scmp.ne.s32.totalorder %s177, %s178
      %p187 = scmp.eq.s32.totalorder %s36, 0
      %p188 = por %p186, %p187
      %p189 = scmp.ne.s32.totalorder %s177, %s178
      %p190 = scmp.eq.s32.totalorder %s37, 1
      %p191 = por %p189, %p190
      %p193 = scmp.ne.s32.totalorder %s178, %s192
      %p194 = scmp.eq.s32.totalorder %s37, 0
      %p195 = por %p193, %p194
      %s197 = sadd.s32 %s196, 1
      %p200 = scmp.eq.s32.totalorder %s31, 1
      %p201 = scmp.ne.s32.totalorder %s196, %s198
      %p202 = scmp.eq.s32.totalorder %s31, 0
      %p203 = por %p201, %p202
      %p204 = scmp.ne.s32.totalorder %s196, %s198
      %p205 = scmp.eq.s32.totalorder %s36, 1
      %p206 = por %p204, %p205
      %p207 = scmp.ne.s32.totalorder %s198, %s199
      %p208 = scmp.eq.s32.totalorder %s36, 0
      %p209 = por %p207, %p208
      %p210 = scmp.ne.s32.totalorder %s198, %s199
      %p211 = scmp.eq.s32.totalorder %s37, 1
      %p212 = por %p210, %p211
      %p214 = scmp.ne.s32.totalorder %s199, %s213
      %p215 = scmp.eq.s32.totalorder %s37, 0
      %p216 = por %p214, %p215
      %s218 = sadd.s32 %s217, 1
      %p221 = scmp.eq.s32.totalorder %s31, 1
      %p222 = scmp.ne.s32.totalorder %s217, %s219
      %p223 = scmp.eq.s32.totalorder %s31, 0
      %p224 = por %p222, %p223
      %p225 = scmp.ne.s32.totalorder %s217, %s219
      %p226 = scmp.eq.s32.totalorder %s36, 1
      %p227 = por %p225, %p226
      %p228 = scmp.ne.s32.totalorder %s219, %s220
      %p229 = scmp.eq.s32.totalorder %s36, 0
      %p230 = por %p228, %p229
      %p231 = scmp.ne.s32.totalorder %s219, %s220
      %p232 = scmp.eq.s32.totalorder %s37, 1
      %p233 = por %p231, %p232
      %p235 = scmp.ne.s32.totalorder %s220, %s234
      %p236 = scmp.eq.s32.totalorder %s37, 0
      %p237 = por %p235, %p236
      %s239 = sadd.s32 %s238, 1
      %p242 = scmp.eq.s32.totalorder %s31, 1
      %p243 = scmp.ne.s32.totalorder %s238, %s240
      %p244 = scmp.eq.s32.totalorder %s31, 0
      %p245 = por %p243, %p244
      %p246 = scmp.ne.s32.totalorder %s238, %s240
      %p247 = scmp.eq.s32.totalorder %s36, 1
      %p248 = por %p246, %p247
      %p249 = scmp.ne.s32.totalorder %s240, %s241
      %p250 = scmp.eq.s32.totalorder %s36, 0
      %p251 = por %p249, %p250
      %p252 = scmp.ne.s32.totalorder %s240, %s241
      %p253 = scmp.eq.s32.totalorder %s37, 1
      %p254 = por %p252, %p253
      %p256 = scmp.ne.s32.totalorder %s241, %s255
      %p257 = scmp.eq.s32.totalorder %s37, 0
      %p258 = por %p256, %p257
      %s260 = sadd.s32 %s259, 1
      %p263 = scmp.eq.s32.totalorder %s31, 1
      %p264 = scmp.ne.s32.totalorder %s259, %s261
      %p265 = scmp.eq.s32.totalorder %s31, 0
      %p266 = por %p264, %p265
      %p267 = scmp.ne.s32.totalorder %s259, %s261
      %p268 = scmp.eq.s32.totalorder %s36, 1
      %p269 = por %p267, %p268
      %p270 = scmp.ne.s32.totalorder %s261, %s262
      %p271 = scmp.eq.s32.totalorder %s36, 0
      %p272 = por %p270, %p271
      %p273 = scmp.ne.s32.totalorder %s261, %s262
      %p274 = scmp.eq.s32.totalorder %s37, 1
      %p275 = por %p273, %p274
      %p277 = scmp.ne.s32.totalorder %s262, %s276
      %p278 = scmp.eq.s32.totalorder %s37, 0
      %p279 = por %p277, %p278
      %s281 = sadd.s32 %s280, 1
      %p284 = scmp.eq.s32.totalorder %s31, 1
      %p285 = scmp.ne.s32.totalorder %s280, %s282
      %p286 = scmp.eq.s32.totalorder %s31, 0
      %p287 = por %p285, %p286
      %p288 = scmp.ne.s32.totalorder %s280, %s282
      %p289 = scmp.eq.s32.totalorder %s36, 1
      %p290 = por %p288, %p289
      %p291 = scmp.ne.s32.totalorder %s282, %s283
      %p292 = scmp.eq.s32.totalorder %s36, 0
      %p293 = por %p291, %p292
      %p294 = scmp.ne.s32.totalorder %s282, %s283
      %p295 = scmp.eq.s32.totalorder %s37, 1
      %p296 = por %p294, %p295
      %p298 = scmp.ne.s32.totalorder %s283, %s297
      %p299 = scmp.eq.s32.totalorder %s37, 0
      %p300 = por %p298, %p299
      %s302 = sadd.s32 %s301, 1
      %p305 = scmp.eq.s32.totalorder %s31, 1
      %p306 = scmp.ne.s32.totalorder %s301, %s303
      %p307 = scmp.eq.s32.totalorder %s31, 0
      %p308 = por %p306, %p307
      %p309 = scmp.ne.s32.totalorder %s301, %s303
      %p310 = scmp.eq.s32.totalorder %s36, 1
      %p311 = por %p309, %p310
      %p312 = scmp.ne.s32.totalorder %s303, %s304
      %p313 = scmp.eq.s32.totalorder %s36, 0
      %p314 = por %p312, %p313
      %p315 = scmp.ne.s32.totalorder %s303, %s304
      %p316 = scmp.eq.s32.totalorder %s37, 1
      %p317 = por %p315, %p316
      %p319 = scmp.ne.s32.totalorder %s304, %s318
      %p320 = scmp.eq.s32.totalorder %s37, 0
      %p321 = por %p319, %p320
      %s323 = sadd.s32 %s322, 1
      %p326 = scmp.eq.s32.totalorder %s31, 1
      %p327 = scmp.ne.s32.totalorder %s322, %s324
      %p328 = scmp.eq.s32.totalorder %s31, 0
      %p329 = por %p327, %p328
      %p330 = scmp.ne.s32.totalorder %s322, %s324
      %p331 = scmp.eq.s32.totalorder %s36, 1
      %p332 = por %p330, %p331
      %p333 = scmp.ne.s32.totalorder %s324, %s325
      %p334 = scmp.eq.s32.totalorder %s36, 0
      %p335 = por %p333, %p334
      %p336 = scmp.ne.s32.totalorder %s324, %s325
      %p337 = scmp.eq.s32.totalorder %s37, 1
      %p338 = por %p336, %p337
      %p340 = scmp.ne.s32.totalorder %s325, %s339
      %p341 = scmp.eq.s32.totalorder %s37, 0
      %p342 = por %p340, %p341
      %s344 = sadd.s32 %s343, 1
      %p347 = scmp.eq.s32.totalorder %s31, 1
      %p348 = scmp.ne.s32.totalorder %s343, %s345
      %p349 = scmp.eq.s32.totalorder %s31, 0
      %p350 = por %p348, %p349
      %p351 = scmp.ne.s32.totalorder %s343, %s345
      %p352 = scmp.eq.s32.totalorder %s36, 1
      %p353 = por %p351, %p352
      %p354 = scmp.ne.s32.totalorder %s345, %s346
      %p355 = scmp.eq.s32.totalorder %s36, 0
      %p356 = por %p354, %p355
      %p357 = scmp.ne.s32.totalorder %s345, %s346
      %p358 = scmp.eq.s32.totalorder %s37, 1
      %p359 = por %p357, %p358
      %p361 = scmp.ne.s32.totalorder %s346, %s360
      %p362 = scmp.eq.s32.totalorder %s37, 0
      %p363 = por %p361, %p362
      %s365 = sadd.s32 %s364, 1
      %p368 = scmp.eq.s32.totalorder %s31, 1
      %p369 = scmp.ne.s32.totalorder %s364, %s366
      %p370 = scmp.eq.s32.totalorder %s31, 0
      %p371 = por %p369, %p370
      %p372 = scmp.ne.s32.totalorder %s364, %s366
      %p373 = scmp.eq.s32.totalorder %s36, 1
      %p374 = por %p372, %p373
      %p375 = scmp.ne.s32.totalorder %s366, %s367
      %p376 = scmp.eq.s32.totalorder %s36, 0
      %p377 = por %p375, %p376
      %p378 = scmp.ne.s32.totalorder %s366, %s367
      %p379 = scmp.eq.s32.totalorder %s37, 1
      %p380 = por %p378, %p379
      %p382 = scmp.ne.s32.totalorder %s367, %s381
      %p383 = scmp.eq.s32.totalorder %s37, 0
      %p384 = por %p382, %p383
      %s386 = sadd.s32 %s385, 1
      %p389 = scmp.eq.s32.totalorder %s31, 1
      %p390 = scmp.ne.s32.totalorder %s385, %s387
      %p391 = scmp.eq.s32.totalorder %s31, 0
      %p392 = por %p390, %p391
      %p393 = scmp.ne.s32.totalorder %s385, %s387
      %p394 = scmp.eq.s32.totalorder %s36, 1
      %p395 = por %p393, %p394
      %p396 = scmp.ne.s32.totalorder %s387, %s388
      %p397 = scmp.eq.s32.totalorder %s36, 0
      %p398 = por %p396, %p397
      %p399 = scmp.ne.s32.totalorder %s387, %s388
      %p400 = scmp.eq.s32.totalorder %s37, 1
      %p401 = por %p399, %p400
      %p403 = scmp.ne.s32.totalorder %s388, %s402
      %p404 = scmp.eq.s32.totalorder %s37, 0
      %p405 = por %p403, %p404
      %s407 = sadd.s32 %s406, 1
      %p410 = scmp.eq.s32.totalorder %s31, 1
      %p411 = scmp.ne.s32.totalorder %s406, %s408
      %p412 = scmp.eq.s32.totalorder %s31, 0
      %p413 = por %p411, %p412
      %p414 = scmp.ne.s32.totalorder %s406, %s408
      %p415 = scmp.eq.s32.totalorder %s36, 1
      %p416 = por %p414, %p415
      %p417 = scmp.ne.s32.totalorder %s408, %s409
      %p418 = scmp.eq.s32.totalorder %s36, 0
      %p419 = por %p417, %p418
      %p420 = scmp.ne.s32.totalorder %s408, %s409
      %p421 = scmp.eq.s32.totalorder %s37, 1
      %p422 = por %p420, %p421
      %p424 = scmp.ne.s32.totalorder %s409, %s423
      %p425 = scmp.eq.s32.totalorder %s37, 0
      %p426 = por %p424, %p425
      %s428 = sadd.s32 %s427, 1
      %p431 = scmp.eq.s32.totalorder %s31, 1
      %p432 = scmp.ne.s32.totalorder %s427, %s429
      %p433 = scmp.eq.s32.totalorder %s31, 0
      %p434 = por %p432, %p433
      %p435 = scmp.ne.s32.totalorder %s427, %s429
      %p436 = scmp.eq.s32.totalorder %s36, 1
      %p437 = por %p435, %p436
      %p438 = scmp.ne.s32.totalorder %s429, %s430
      %p439 = scmp.eq.s32.totalorder %s36, 0
      %p440 = por %p438, %p439
      %p441 = scmp.ne.s32.totalorder %s429, %s430
      %p442 = scmp.eq.s32.totalorder %s37, 1
      %p443 = por %p441, %p442
      %p445 = scmp.ne.s32.totalorder %s430, %s444
      %p446 = scmp.eq.s32.totalorder %s37, 0
      %p447 = por %p445, %p446
      %s449 = sadd.s32 %s448, 1
      %p452 = scmp.eq.s32.totalorder %s31, 1
      %p453 = scmp.ne.s32.totalorder %s448, %s450
      %p454 = scmp.eq.s32.totalorder %s31, 0
      %p455 = por %p453, %p454
      %p456 = scmp.ne.s32.totalorder %s448, %s450
      %p457 = scmp.eq.s32.totalorder %s36, 1
      %p458 = por %p456, %p457
      %p459 = scmp.ne.s32.totalorder %s450, %s451
      %p460 = scmp.eq.s32.totalorder %s36, 0
      %p461 = por %p459, %p460
      %p462 = scmp.ne.s32.totalorder %s450, %s451
      %p463 = scmp.eq.s32.totalorder %s37, 1
      %p464 = por %p462, %p463
      %p466 = scmp.ne.s32.totalorder %s451, %s465
      %p467 = scmp.eq.s32.totalorder %s37, 0
      %p468 = por %p466, %p467
      %s469 = ssub.s32 %s31, %s38
      %p470 = scmp.eq.s32.totalorder %s469, 0
      %s472 = sadd.s32 %s471, 1
      %s473 = scalar_select %p470, %s471, %s472
      %p476 = pneg %p470
      %p477 = scmp.eq.s32.totalorder %s31, 1
      %p478 = por %p476, %p477
      %p479 = scmp.ne.s32.totalorder %s471, %s474
      %p480 = scmp.eq.s32.totalorder %s31, 0
      %p481 = por %p479, %p480
      %p482 = scmp.ne.s32.totalorder %s471, %s474
      %p483 = scmp.eq.s32.totalorder %s36, 1
      %p484 = por %p482, %p483
      %p485 = scmp.ne.s32.totalorder %s474, %s475
      %p486 = scmp.eq.s32.totalorder %s36, 0
      %p487 = por %p485, %p486
      %p488 = scmp.ne.s32.totalorder %s474, %s475
      %p489 = scmp.eq.s32.totalorder %s37, 1
      %p490 = por %p488, %p489
      %p492 = scmp.ne.s32.totalorder %s475, %s491
      %p493 = scmp.eq.s32.totalorder %s37, 0
      %p494 = por %p492, %p493
      %p495 = scmp.le.s32.totalorder 1, %s31
      %p496 = scmp.lt.s32.totalorder %s31, 3
      %p497 = pnand %p495, %p496
      %p498 = pneg %p497
      // Predicated region
      $region9: #{tpu_custom_call.1} parent=5 // pred_check
        _
      $region10: #{tpu_custom_call.1} parent=5 // pred_check_branch
        %500 = sbr.rel (%p497) target = $region12
      $region11: #{tpu_custom_call.1} parent=5 // pred_region
        %s501 = ssub.s32 %s31, 1
        // Predicated region
        $region13: #{tpu_custom_call.1} parent=11 // pred_check
          %p502 = pneg %p104
        $region14: #{tpu_custom_call.1} parent=11 // pred_check_branch
          %504 = sbr.rel (%p502) target = $region16
        $region15: #{tpu_custom_call.1} parent=11 // pred_region
          _
        $region16: #{tpu_custom_call.1} parent=11 // pred_fallthru
          _
        // Predicated region
        $region17: #{tpu_custom_call.1} parent=11 // pred_check
          %p505 = pneg %p125
        $region18: #{tpu_custom_call.1} parent=11 // pred_check_branch
          %507 = sbr.rel (%p505) target = $region20
        $region19: #{tpu_custom_call.1} parent=11 // pred_region
          %s509 = ssub.s32 16, 16
          %510 = vsyncadd [#allocation3], %s509
          %s512 = sshll.u32 [#allocation2], 4
          %s513 = int_to_ptr.vmem [resolvable:$true] %s512
          %515 = dma.hbm_to_vmem [thread:$0]  %s3, 16, %s513, [#allocation3]
        $region20: #{tpu_custom_call.1} parent=11 // pred_fallthru
          _
        // Predicated region
        $region21: #{tpu_custom_call.1} parent=11 // pred_check
          %p516 = pneg %p146
        $region22: #{tpu_custom_call.1} parent=11 // pred_check_branch
          %518 = sbr.rel (%p516) target = $region24
        $region23: #{tpu_custom_call.1} parent=11 // pred_region
          _
        $region24: #{tpu_custom_call.1} parent=11 // pred_fallthru
          _
        // Predicated region
        $region25: #{tpu_custom_call.1} parent=11 // pred_check
          %p519 = pneg %p167
        $region26: #{tpu_custom_call.1} parent=11 // pred_check_branch
          %521 = sbr.rel (%p519) target = $region28
        $region27: #{tpu_custom_call.1} parent=11 // pred_region
          _
        $region28: #{tpu_custom_call.1} parent=11 // pred_fallthru
          _
        // Predicated region
        $region29: #{tpu_custom_call.1} parent=11 // pred_check
          %p522 = pneg %p188
        $region30: #{tpu_custom_call.1} parent=11 // pred_check_branch
          %524 = sbr.rel (%p522) target = $region32
        $region31: #{tpu_custom_call.1} parent=11 // pred_region
          _
        $region32: #{tpu_custom_call.1} parent=11 // pred_fallthru
          _
        // Predicated region
        $region33: #{tpu_custom_call.1} parent=11 // pred_check
          %p525 = pneg %p209
        $region34: #{tpu_custom_call.1} parent=11 // pred_check_branch
          %527 = sbr.rel (%p525) target = $region36
        $region35: #{tpu_custom_call.1} parent=11 // pred_region
          _
        $region36: #{tpu_custom_call.1} parent=11 // pred_fallthru
          _
        // Predicated region
        $region37: #{tpu_custom_call.1} parent=11 // pred_check
          %p528 = pneg %p230
        $region38: #{tpu_custom_call.1} parent=11 // pred_check_branch
          %530 = sbr.rel (%p528) target = $region40
        $region39: #{tpu_custom_call.1} parent=11 // pred_region
          _
        $region40: #{tpu_custom_call.1} parent=11 // pred_fallthru
          _
        // Predicated region
        $region41: #{tpu_custom_call.1} parent=11 // pred_check
          %p531 = pneg %p251
        $region42: #{tpu_custom_call.1} parent=11 // pred_check_branch
          %533 = sbr.rel (%p531) target = $region44
        $region43: #{tpu_custom_call.1} parent=11 // pred_region
          _
        $region44: #{tpu_custom_call.1} parent=11 // pred_fallthru
          _
        // Predicated region
        $region45: #{tpu_custom_call.1} parent=11 // pred_check
          %p534 = pneg %p272
        $region46: #{tpu_custom_call.1} parent=11 // pred_check_branch
          %536 = sbr.rel (%p534) target = $region48
        $region47: #{tpu_custom_call.1} parent=11 // pred_region
          %s538 = ssub.s32 1024, 1024
          %539 = vsyncadd [#allocation6], %s538
          %s540 = sshll.u32 [#allocation5], 4
          %s541 = int_to_ptr.vmem [resolvable:$true] %s540
          %546 = dma.hbm_to_vmem [thread:$0]  %s10, 1024, %s541, [#allocation6], 64, 64, 4
        $region48: #{tpu_custom_call.1} parent=11 // pred_fallthru
          _
        // Predicated region
        $region49: #{tpu_custom_call.1} parent=11 // pred_check
          %p547 = pneg %p293
        $region50: #{tpu_custom_call.1} parent=11 // pred_check_branch
          %549 = sbr.rel (%p547) target = $region52
        $region51: #{tpu_custom_call.1} parent=11 // pred_region
          _
        $region52: #{tpu_custom_call.1} parent=11 // pred_fallthru
          _
        // Predicated region
        $region53: #{tpu_custom_call.1} parent=11 // pred_check
          %p550 = pneg %p314
        $region54: #{tpu_custom_call.1} parent=11 // pred_check_branch
          %552 = sbr.rel (%p550) target = $region56
        $region55: #{tpu_custom_call.1} parent=11 // pred_region
          %s554 = ssub.s32 1024, 1024
          %555 = vsyncadd [#allocation6], %s554
          %s556 = sshll.u32 [#allocation7], 4
          %s557 = int_to_ptr.vmem [resolvable:$true] %s556
          %562 = dma.hbm_to_vmem [thread:$0]  %s12, 1024, %s557, [#allocation6], 64, 64, 4
        $region56: #{tpu_custom_call.1} parent=11 // pred_fallthru
          _
        // Predicated region
        $region57: #{tpu_custom_call.1} parent=11 // pred_check
          %p563 = pneg %p335
        $region58: #{tpu_custom_call.1} parent=11 // pred_check_branch
          %565 = sbr.rel (%p563) target = $region60
        $region59: #{tpu_custom_call.1} parent=11 // pred_region
          _
        $region60: #{tpu_custom_call.1} parent=11 // pred_fallthru
          _
        // Predicated region
        $region61: #{tpu_custom_call.1} parent=11 // pred_check
          %p566 = pneg %p356
        $region62: #{tpu_custom_call.1} parent=11 // pred_check_branch
          %568 = sbr.rel (%p566) target = $region64
        $region63: #{tpu_custom_call.1} parent=11 // pred_region
          _
        $region64: #{tpu_custom_call.1} parent=11 // pred_fallthru
          _
        // Predicated region
        $region65: #{tpu_custom_call.1} parent=11 // pred_check
          %p569 = pneg %p377
        $region66: #{tpu_custom_call.1} parent=11 // pred_check_branch
          %571 = sbr.rel (%p569) target = $region68
        $region67: #{tpu_custom_call.1} parent=11 // pred_region
          _
        $region68: #{tpu_custom_call.1} parent=11 // pred_fallthru
          _
        // Predicated region
        $region69: #{tpu_custom_call.1} parent=11 // pred_check
          %p572 = pneg %p398
        $region70: #{tpu_custom_call.1} parent=11 // pred_check_branch
          %574 = sbr.rel (%p572) target = $region72
        $region71: #{tpu_custom_call.1} parent=11 // pred_region
          _
        $region72: #{tpu_custom_call.1} parent=11 // pred_fallthru
          _
        // Predicated region
        $region73: #{tpu_custom_call.1} parent=11 // pred_check
          %p575 = pneg %p419
        $region74: #{tpu_custom_call.1} parent=11 // pred_check_branch
          %577 = sbr.rel (%p575) target = $region76
        $region75: #{tpu_custom_call.1} parent=11 // pred_region
          _
        $region76: #{tpu_custom_call.1} parent=11 // pred_fallthru
          _
        // Predicated region
        $region77: #{tpu_custom_call.1} parent=11 // pred_check
          %p578 = pneg %p440
        $region78: #{tpu_custom_call.1} parent=11 // pred_check_branch
          %580 = sbr.rel (%p578) target = $region80
        $region79: #{tpu_custom_call.1} parent=11 // pred_region
          _
        $region80: #{tpu_custom_call.1} parent=11 // pred_fallthru
          _
        // Predicated region
        $region81: #{tpu_custom_call.1} parent=11 // pred_check
          %p581 = pneg %p461
        $region82: #{tpu_custom_call.1} parent=11 // pred_check_branch
          %583 = sbr.rel (%p581) target = $region84
        $region83: #{tpu_custom_call.1} parent=11 // pred_region
          _
        $region84: #{tpu_custom_call.1} parent=11 // pred_fallthru
          _
      $region12: #{tpu_custom_call.1} parent=5 // pred_fallthru
        _
      %p584 = scmp.lt.s32.totalorder %s31, 2
      // Predicated region
      $region85: #{tpu_custom_call.1} parent=5 // pred_check
        %p585 = pneg %p584
      $region86: #{tpu_custom_call.1} parent=5 // pred_check_branch
        %587 = sbr.rel (%p585) target = $region88
      $region87: #{tpu_custom_call.1} parent=5 // pred_region
        // Predicated region
        $region89: #{tpu_custom_call.1} parent=87 // pred_check
          %p588 = pneg %p51
        $region90: #{tpu_custom_call.1} parent=87 // pred_check_branch
          %590 = sbr.rel (%p588) target = $region92
        $region91: #{tpu_custom_call.1} parent=87 // pred_region
          %p591 = scmp.lt.s32.totalorder %s31, 1
          %s592 = scalar_select %p591, %s31, 1
          %s593 = smul.addr %s592, 8
          %s594 = scalar_lea.vmem %s0, %s593
        $region92: #{tpu_custom_call.1} parent=87 // pred_fallthru
          _
        // Predicated region
        $region93: #{tpu_custom_call.1} parent=87 // pred_check
          %p595 = pneg %p77
        $region94: #{tpu_custom_call.1} parent=87 // pred_check_branch
          %597 = sbr.rel (%p595) target = $region96
        $region95: #{tpu_custom_call.1} parent=87 // pred_region
          %p598 = scmp.lt.s32.totalorder %s31, 1
          %s599 = scalar_select %p598, %s31, 1
          %s600 = smul.addr %s599, 8
          %s601 = scalar_lea.vmem %s1, %s600
        $region96: #{tpu_custom_call.1} parent=87 // pred_fallthru
          _
      $region88: #{tpu_custom_call.1} parent=5 // pred_fallthru
        _
      %p602 = scmp.le.s32.totalorder 1, %s31
      %p603 = scmp.lt.s32.totalorder %s31, 3
      %p604 = pnand %p602, %p603
      %p605 = pneg %p604
      // Predicated region
      $region97: #{tpu_custom_call.1} parent=5 // pred_check
        _
      $region98: #{tpu_custom_call.1} parent=5 // pred_check_branch
        %607 = sbr.rel (%p604) target = $region100
      $region99: #{tpu_custom_call.1} parent=5 // pred_region
        %s608 = ssub.s32 %s31, 1
        // Predicated region
        $region101: #{tpu_custom_call.1} parent=99 // pred_check
          %p609 = pneg %p125
        $region102: #{tpu_custom_call.1} parent=99 // pred_check_branch
          %611 = sbr.rel (%p609) target = $region104
        $region103: #{tpu_custom_call.1} parent=99 // pred_region
          %612 = dma.done [#allocation3], 16
        $region104: #{tpu_custom_call.1} parent=99 // pred_fallthru
          _
        // Predicated region
        $region105: #{tpu_custom_call.1} parent=99 // pred_check
          %p613 = pneg %p272
        $region106: #{tpu_custom_call.1} parent=99 // pred_check_branch
          %615 = sbr.rel (%p613) target = $region108
        $region107: #{tpu_custom_call.1} parent=99 // pred_region
          %616 = dma.done [#allocation6], 1024
        $region108: #{tpu_custom_call.1} parent=99 // pred_fallthru
          _
        // Predicated region
        $region109: #{tpu_custom_call.1} parent=99 // pred_check
          %p617 = pneg %p314
        $region110: #{tpu_custom_call.1} parent=99 // pred_check_branch
          %619 = sbr.rel (%p617) target = $region112
        $region111: #{tpu_custom_call.1} parent=99 // pred_region
          %620 = dma.done [#allocation6], 1024
        $region112: #{tpu_custom_call.1} parent=99 // pred_fallthru
          _
        %p621 = scmp.lt.s32.totalorder %s36, 1
        %s622 = scalar_select %p621, %s36, 1
        %s623 = smul.addr %s622, 8
        %s624 = scalar_lea.vmem %s0, %s623
        %p625 = pneg %p57
        %p626 = pneg %p54
        %p627 = scmp.lt.s32.totalorder %s36, 1
        %s628 = scalar_select %p627, %s36, 1
        %s629 = smul.addr %s628, 8
        %s630 = scalar_lea.vmem %s1, %s629
        %p631 = pneg %p83
        %p632 = pneg %p80
        %p633 = pneg %p104
        %p634 = pneg %p101
        %p635 = pneg %p125
        %p636 = pneg %p122
        %p637 = pneg %p146
        %p638 = pneg %p143
        %p639 = pneg %p167
        %p640 = pneg %p164
        %p641 = pneg %p188
        %p642 = pneg %p185
        %p643 = pneg %p209
        %p644 = pneg %p206
        %p645 = pneg %p230
        %p646 = pneg %p227
        %p647 = pneg %p251
        %p648 = pneg %p248
        %p649 = pneg %p272
        %p650 = pneg %p269
        %p651 = pneg %p293
        %p652 = pneg %p290
        %p653 = pneg %p314
        %p654 = pneg %p311
        %p655 = pneg %p335
        %p656 = pneg %p332
        %p657 = pneg %p356
        %p658 = pneg %p353
        %p659 = pneg %p377
        %p660 = pneg %p374
        %p661 = pneg %p398
        %p662 = pneg %p395
        %p663 = pneg %p419
        %p664 = pneg %p416
        %p665 = pneg %p440
        %p666 = pneg %p437
        %p667 = pneg %p461
        %p668 = pneg %p458
        %p669 = pneg %p487
        %p670 = pneg %p484
        %s671 = sand.u32 %s474, 1
        %s672 = scalar_lea.sflag [#allocation4], %s671
        %s673 = sand.u32 %s474, 1
        %s674 = smul.addr %s673, 2
        %s675 = scalar_lea.vmem [#allocation8], %s674
        %p676 = scmp.lt.s32.totalorder %s36, 1
        %s677 = scalar_select %p676, %s36, 1
        %s678 = smul.addr %s677, 8
        %s679 = scalar_lea.vmem %s0, %s678
        %p680 = scmp.lt.s32.totalorder %s36, 1
        %s681 = scalar_select %p680, %s36, 1
        %s682 = smul.addr %s681, 8
        %s683 = scalar_lea.vmem %s1, %s682
        %v685 = vld [vmem:[%s679] sm:$0xff]
        %v686 = vld [vmem:[%s2] sm:$0xf]
        %v687 = vpack.c.bf16 %v685, %v685
        %v688 = vld [vmem:[#allocation2] sm:$0x1]
        %v690 = vlaneseq
        %v691 = vshrl.u32 %v690, 7
        %v692 = vsub.s32 0, %v691
        %v693 = vrot.slane %v688, %v692
        %vm695 = vcmask 64512
        %v697 = vsel %vm695, %v687, 0
        %vm699 = vcmask 1043456
        %v701 = vsel %vm699, %v686, 0
        %703 = vmatprep.subr.bf16.mxu0 0
        %704 = vmatpush1.bf16.msra.mxu0 0
        %705 = vmatprep.subr.bf16.mxu0 0
        %706 = vmatpush1.bf16.msra.mxu0 0
        %707 = vmatprep.subr.bf16.mxu0 0
        %708 = vmatpush1.bf16.msra.mxu0 0
        %709 = vmatprep.subr.bf16.mxu0 0
        %710 = vmatpush1.bf16.msra.mxu0 0
        %711 = vmatprep.subr.bf16.mxu0 0
        %712 = vmatpush1.bf16.msra.mxu0 0
        %713 = vmatprep.subr.bf16.mxu0 0
        %714 = vmatpush1.bf16.msra.mxu0 0
        %715 = vmatprep.subr.bf16.mxu0 0
        %716 = vmatpush1.bf16.msra.mxu0 0
        %717 = vmatprep.subr.bf16.mxu0 0
        %718 = vmatpush1.bf16.msra.mxu0 %v701
        %719 = vmatprep.subr.bf16.mxu0 0
        %720 = vmatpush2.bf16.msra.mxu0 0
        %721 = vmatprep.subr.bf16.mxu0 0
        %722 = vmatpush2.bf16.msra.mxu0 0
        %723 = vmatprep.subr.bf16.mxu0 0
        %724 = vmatpush2.bf16.msra.mxu0 0
        %725 = vmatprep.subr.bf16.mxu0 0
        %726 = vmatpush2.bf16.msra.mxu0 0
        %727 = vmatprep.subr.bf16.mxu0 0
        %728 = vmatpush2.bf16.msra.mxu0 0
        %729 = vmatprep.subr.bf16.mxu0 0
        %730 = vmatpush2.bf16.msra.mxu0 0
        %731 = vmatprep.subr.bf16.mxu0 0
        %732 = vmatpush2.bf16.msra.mxu0 0
        %733 = vmatprep.subr.bf16.mxu0 0
        %734 = vmatpush2.bf16.msra.mxu0 0
        %735 = vmatprep.mubr.bf16.mxu0 0
        %736 = vmatmul.mubr.bf16.gmra.mxu0 %v697
        %v737 = vpop.f32.mrf.mxu0
        %v738 = vadd.f32 %v693, %v737
        %v739 = vpop.f32.mrf.mxu0
        %v740 = vpop.f32.mrf.mxu0
        %v741 = vpop.f32.mrf.mxu0
        %742 = vdwg.mxu0
        %v743 = vld [vmem:[%s683] sm:$0xff]
        %v744 = vadd.f32 %v738, %v743
        %v745 = vld [vmem:[%s4] sm:$0xf]
        %v746 = vld [vmem:[%s4 + $0x4] sm:$0xf]
        %v747 = vld [vmem:[%s4 + $0x8] sm:$0xf]
        %v748 = vld [vmem:[%s4 + $0xc] sm:$0xf]
        %v749 = vld [vmem:[%s4 + $0x10] sm:$0xf]
        %v750 = vld [vmem:[%s4 + $0x14] sm:$0xf]
        %v751 = vld [vmem:[%s4 + $0x18] sm:$0xf]
        %v752 = vld [vmem:[%s4 + $0x1c] sm:$0xf]
        %v753 = vpack.c.bf16 %v744, %v744
        %v754 = vld [vmem:[%s5] sm:$0x1]
        %v756 = vlaneseq
        %v757 = vshrl.u32 %v756, 7
        %v758 = vsub.s32 0, %v757
        %v759 = vrot.slane %v754, %v758
        %v769 = vunpack.c.l.b16 %v745
        %v770 = vunpack.c.l.b16 %v746
        %v771 = vunpack.c.l.b16 %v747
        %v772 = vunpack.c.l.b16 %v748
        %v773 = vunpack.c.l.b16 %v749
        %v774 = vunpack.c.l.b16 %v750
        %v775 = vunpack.c.l.b16 %v751
        %v776 = vunpack.c.l.b16 %v752
        %v777 = vpack.c.b16 %v770, %v769
        %v778 = vpack.c.b16 %v772, %v771
        %v779 = vpack.c.b16 %v774, %v773
        %v780 = vpack.c.b16 %v776, %v775
        %vm785 = vcmask 523264
        %v787 = vsel %vm785, %v753, 0
        %789 = vmatprep.subr.bf16.mxu0 0
        %790 = vmatpush1.bf16.msra.mxu0 0
        %791 = vmatprep.subr.bf16.mxu0 0
        %792 = vmatpush1.bf16.msra.mxu0 0
        %793 = vmatprep.subr.bf16.mxu0 0
        %794 = vmatpush1.bf16.msra.mxu0 0
        %795 = vmatprep.subr.bf16.mxu0 0
        %796 = vmatpush1.bf16.msra.mxu0 0
        %797 = vmatprep.subr.bf16.mxu0 0
        %798 = vmatpush1.bf16.msra.mxu0 %v780
        %799 = vmatprep.subr.bf16.mxu0 0
        %800 = vmatpush1.bf16.msra.mxu0 %v779
        %801 = vmatprep.subr.bf16.mxu0 0
        %802 = vmatpush1.bf16.msra.mxu0 %v778
        %803 = vmatprep.subr.bf16.mxu0 0
        %804 = vmatpush1.bf16.msra.mxu0 %v777
        %805 = vmatprep.subr.bf16.mxu0 0
        %806 = vmatpush2.bf16.msra.mxu0 0
        %807 = vmatprep.subr.bf16.mxu0 0
        %808 = vmatpush2.bf16.msra.mxu0 0
        %809 = vmatprep.subr.bf16.mxu0 0
        %810 = vmatpush2.bf16.msra.mxu0 0
        %811 = vmatprep.subr.bf16.mxu0 0
        %812 = vmatpush2.bf16.msra.mxu0 0
        %813 = vmatprep.subr.bf16.mxu0 0
        %814 = vmatpush2.bf16.msra.mxu0 0
        %815 = vmatprep.subr.bf16.mxu0 0
        %816 = vmatpush2.bf16.msra.mxu0 0
        %817 = vmatprep.subr.bf16.mxu0 0
        %818 = vmatpush2.bf16.msra.mxu0 0
        %819 = vmatprep.subr.bf16.mxu0 0
        %820 = vmatpush2.bf16.msra.mxu0 0
        %821 = vmatprep.mubr.bf16.mxu0 0
        %822 = vmatmul.mubr.bf16.gmra.mxu0 %v787
        %v823 = vpop.f32.mrf.mxu0
        %v824 = vadd.f32 %v759, %v823
        %v825 = vpop.f32.mrf.mxu0
        %v826 = vpop.f32.mrf.mxu0
        %v827 = vpop.f32.mrf.mxu0
        %828 = vdwg.mxu0
        %v829 = vmul.f32 %v824, 0.25
        %v830 = vld [vmem:[%s6] sm:$0xf]
        %v831 = vld [vmem:[%s6 + $0x4] sm:$0xf]
        %v832 = vld [vmem:[%s6 + $0x8] sm:$0xf]
        %v833 = vld [vmem:[%s6 + $0xc] sm:$0xf]
        %v834 = vld [vmem:[%s6 + $0x10] sm:$0xf]
        %v835 = vld [vmem:[%s6 + $0x14] sm:$0xf]
        %v836 = vld [vmem:[%s6 + $0x18] sm:$0xf]
        %v837 = vld [vmem:[%s6 + $0x1c] sm:$0xf]
        %v838 = vld [vmem:[%s7] sm:$0x1]
        %v840 = vlaneseq
        %v841 = vshrl.u32 %v840, 7
        %v842 = vsub.s32 0, %v841
        %v843 = vrot.slane %v838, %v842
        %v853 = vunpack.c.l.b16 %v830
        %v854 = vunpack.c.l.b16 %v831
        %v855 = vunpack.c.l.b16 %v832
        %v856 = vunpack.c.l.b16 %v833
        %v857 = vunpack.c.l.b16 %v834
        %v858 = vunpack.c.l.b16 %v835
        %v859 = vunpack.c.l.b16 %v836
        %v860 = vunpack.c.l.b16 %v837
        %v861 = vpack.c.b16 %v854, %v853
        %v862 = vpack.c.b16 %v856, %v855
        %v863 = vpack.c.b16 %v858, %v857
        %v864 = vpack.c.b16 %v860, %v859
        %869 = vmatprep.subr.bf16.mxu0 0
        %870 = vmatpush1.bf16.msra.mxu0 0
        %871 = vmatprep.subr.bf16.mxu0 0
        %872 = vmatpush1.bf16.msra.mxu0 0
        %873 = vmatprep.subr.bf16.mxu0 0
        %874 = vmatpush1.bf16.msra.mxu0 0
        %875 = vmatprep.subr.bf16.mxu0 0
        %876 = vmatpush1.bf16.msra.mxu0 0
        %877 = vmatprep.subr.bf16.mxu0 0
        %878 = vmatpush1.bf16.msra.mxu0 %v864
        %879 = vmatprep.subr.bf16.mxu0 0
        %880 = vmatpush1.bf16.msra.mxu0 %v863
        %881 = vmatprep.subr.bf16.mxu0 0
        %882 = vmatpush1.bf16.msra.mxu0 %v862
        %883 = vmatprep.subr.bf16.mxu0 0
        %884 = vmatpush1.bf16.msra.mxu0 %v861
        %885 = vmatprep.subr.bf16.mxu0 0
        %886 = vmatpush2.bf16.msra.mxu0 0
        %887 = vmatprep.subr.bf16.mxu0 0
        %888 = vmatpush2.bf16.msra.mxu0 0
        %889 = vmatprep.subr.bf16.mxu0 0
        %890 = vmatpush2.bf16.msra.mxu0 0
        %891 = vmatprep.subr.bf16.mxu0 0
        %892 = vmatpush2.bf16.msra.mxu0 0
        %893 = vmatprep.subr.bf16.mxu0 0
        %894 = vmatpush2.bf16.msra.mxu0 0
        %895 = vmatprep.subr.bf16.mxu0 0
        %896 = vmatpush2.bf16.msra.mxu0 0
        %897 = vmatprep.subr.bf16.mxu0 0
        %898 = vmatpush2.bf16.msra.mxu0 0
        %899 = vmatprep.subr.bf16.mxu0 0
        %900 = vmatpush2.bf16.msra.mxu0 0
        %901 = vmatprep.mubr.bf16.mxu0 0
        %902 = vmatmul.mubr.bf16.gmra.mxu0 %v787
        %v903 = vpop.f32.mrf.mxu0
        %v904 = vadd.f32 %v843, %v903
        %v905 = vpop.f32.mrf.mxu0
        %v906 = vpop.f32.mrf.mxu0
        %v907 = vpop.f32.mrf.mxu0
        %908 = vdwg.mxu0
        %v909 = vld [vmem:[%s8] sm:$0xf]
        %v910 = vld [vmem:[%s8 + $0x4] sm:$0xf]
        %v911 = vld [vmem:[%s8 + $0x8] sm:$0xf]
        %v912 = vld [vmem:[%s8 + $0xc] sm:$0xf]
        %v913 = vld [vmem:[%s8 + $0x10] sm:$0xf]
        %v914 = vld [vmem:[%s8 + $0x14] sm:$0xf]
        %v915 = vld [vmem:[%s8 + $0x18] sm:$0xf]
        %v916 = vld [vmem:[%s8 + $0x1c] sm:$0xf]
        %v917 = vld [vmem:[%s9] sm:$0x1]
        %v919 = vlaneseq
        %v920 = vshrl.u32 %v919, 7
        %v921 = vsub.s32 0, %v920
        %v922 = vrot.slane %v917, %v921
        %v932 = vunpack.c.l.b16 %v909
        %v933 = vunpack.c.l.b16 %v910
        %v934 = vunpack.c.l.b16 %v911
        %v935 = vunpack.c.l.b16 %v912
        %v936 = vunpack.c.l.b16 %v913
        %v937 = vunpack.c.l.b16 %v914
        %v938 = vunpack.c.l.b16 %v915
        %v939 = vunpack.c.l.b16 %v916
        %v940 = vpack.c.b16 %v933, %v932
        %v941 = vpack.c.b16 %v935, %v934
        %v942 = vpack.c.b16 %v937, %v936
        %v943 = vpack.c.b16 %v939, %v938
        %948 = vmatprep.subr.bf16.mxu0 0
        %949 = vmatpush1.bf16.msra.mxu0 0
        %950 = vmatprep.subr.bf16.mxu0 0
        %951 = vmatpush1.bf16.msra.mxu0 0
        %952 = vmatprep.subr.bf16.mxu0 0
        %953 = vmatpush1.bf16.msra.mxu0 0
        %954 = vmatprep.subr.bf16.mxu0 0
        %955 = vmatpush1.bf16.msra.mxu0 0
        %956 = vmatprep.subr.bf16.mxu0 0
        %957 = vmatpush1.bf16.msra.mxu0 %v943
        %958 = vmatprep.subr.bf16.mxu0 0
        %959 = vmatpush1.bf16.msra.mxu0 %v942
        %960 = vmatprep.subr.bf16.mxu0 0
        %961 = vmatpush1.bf16.msra.mxu0 %v941
        %962 = vmatprep.subr.bf16.mxu0 0
        %963 = vmatpush1.bf16.msra.mxu0 %v940
        %964 = vmatprep.subr.bf16.mxu0 0
        %965 = vmatpush2.bf16.msra.mxu0 0
        %966 = vmatprep.subr.bf16.mxu0 0
        %967 = vmatpush2.bf16.msra.mxu0 0
        %968 = vmatprep.subr.bf16.mxu0 0
        %969 = vmatpush2.bf16.msra.mxu0 0
        %970 = vmatprep.subr.bf16.mxu0 0
        %971 = vmatpush2.bf16.msra.mxu0 0
        %972 = vmatprep.subr.bf16.mxu0 0
        %973 = vmatpush2.bf16.msra.mxu0 0
        %974 = vmatprep.subr.bf16.mxu0 0
        %975 = vmatpush2.bf16.msra.mxu0 0
        %976 = vmatprep.subr.bf16.mxu0 0
        %977 = vmatpush2.bf16.msra.mxu0 0
        %978 = vmatprep.subr.bf16.mxu0 0
        %979 = vmatpush2.bf16.msra.mxu0 0
        %980 = vmatprep.mubr.bf16.mxu0 0
        %981 = vmatmul.mubr.bf16.gmra.mxu0 %v787
        %v982 = vpop.f32.mrf.mxu0
        %v983 = vadd.f32 %v922, %v982
        %v984 = vpop.f32.mrf.mxu0
        %v985 = vpop.f32.mrf.mxu0
        %v986 = vpop.f32.mrf.mxu0
        %987 = vdwg.mxu0
        %v988 = vpack.c.bf16 %v829, %v829
        %v989 = vpack.c.bf16 %v904, %v904
        %v990 = vpack.c.bf16 %v983, %v983
        %vm991 = vcmask 130048
        %v993 = vsel %vm991, %v988, 0
        %v996 = vsel %vm991, %v989, 0
        %998 = vmatprep.subr.bf16.mxu0 0
        %999 = vmatpush1.bf16.xpose.msra.mxu0 0
        %1000 = vmatprep.subr.bf16.mxu0 0
        %1001 = vmatpush1.bf16.xpose.msra.mxu0 0
        %1002 = vmatprep.subr.bf16.mxu0 0
        %1003 = vmatpush1.bf16.xpose.msra.mxu0 0
        %1004 = vmatprep.subr.bf16.mxu0 0
        %1005 = vmatpush1.bf16.xpose.msra.mxu0 0
        %1006 = vmatprep.subr.bf16.mxu0 0
        %1007 = vmatpush1.bf16.xpose.msra.mxu0 0
        %1008 = vmatprep.subr.bf16.mxu0 0
        %1009 = vmatpush1.bf16.xpose.msra.mxu0 0
        %1010 = vmatprep.subr.bf16.mxu0 0
        %1011 = vmatpush1.bf16.xpose.msra.mxu0 0
        %1012 = vmatprep.subr.bf16.mxu0 0
        %1013 = vmatpush1.bf16.xpose.msra.mxu0 %v996
        %1014 = vmatprep.subr.bf16.mxu0 0
        %1015 = vmatpush2.bf16.xpose.msra.mxu0 0
        %1016 = vmatprep.subr.bf16.mxu0 0
        %1017 = vmatpush2.bf16.xpose.msra.mxu0 0
        %1018 = vmatprep.subr.bf16.mxu0 0
        %1019 = vmatpush2.bf16.xpose.msra.mxu0 0
        %1020 = vmatprep.subr.bf16.mxu0 0
        %1021 = vmatpush2.bf16.xpose.msra.mxu0 0
        %1022 = vmatprep.subr.bf16.mxu0 0
        %1023 = vmatpush2.bf16.xpose.msra.mxu0 0
        %1024 = vmatprep.subr.bf16.mxu0 0
        %1025 = vmatpush2.bf16.xpose.msra.mxu0 0
        %1026 = vmatprep.subr.bf16.mxu0 0
        %1027 = vmatpush2.bf16.xpose.msra.mxu0 0
        %1028 = vmatprep.subr.bf16.mxu0 0
        %1029 = vmatpush2.bf16.xpose.msra.mxu0 0
        %1030 = vmatprep.mubr.bf16.mxu0 0
        %1031 = vmatmul.mubr.bf16.gmra.mxu0 %v993
        %v1032 = vpop.f32.mrf.mxu0
        %v1033 = vadd.f32 0.0, %v1032
        %v1034 = vpop.f32.mrf.mxu0
        %v1035 = vpop.f32.mrf.mxu0
        %v1036 = vpop.f32.mrf.mxu0
        %1037 = vdwg.mxu0
        %vm1038 = vcmask 9216
        %v1039 = vsel %vm1038, %v1033, -inf
        %1040 = vmax.xlane.f32.xlu0 %v1039
        %v1041 = vpop.xlane.xlu0 %1040
        %v1042 = vsub.f32 %v1033, %v1041
        %v1043 = vmul.f32 %v1042, 1.442695
        %v1044 = vpow.pop %v1043
        %v1045 = vsel %vm1038, %v1044, 0.0
        %1046 = vadd.xlane.f32.xlu0 %v1045
        %v1047 = vpop.xlane.xlu0 %1046
        %v1048 = vrcp.pop %v1047
        %v1049 = vmul.f32 %v1044, %v1048
        %v1050 = vpack.c.bf16 %v1049, %v1049
        %vm1051 = vcmask 15360
        %v1053 = vsel %vm1051, %v1050, 0
        %vm1055 = vcmask 1040384
        %v1057 = vsel %vm1055, %v990, 0
        %1059 = vmatprep.subr.bf16.mxu0 0
        %1060 = vmatpush1.bf16.msra.mxu0 0
        %1061 = vmatprep.subr.bf16.mxu0 0
        %1062 = vmatpush1.bf16.msra.mxu0 0
        %1063 = vmatprep.subr.bf16.mxu0 0
        %1064 = vmatpush1.bf16.msra.mxu0 0
        %1065 = vmatprep.subr.bf16.mxu0 0
        %1066 = vmatpush1.bf16.msra.mxu0 0
        %1067 = vmatprep.subr.bf16.mxu0 0
        %1068 = vmatpush1.bf16.msra.mxu0 0
        %1069 = vmatprep.subr.bf16.mxu0 0
        %1070 = vmatpush1.bf16.msra.mxu0 0
        %1071 = vmatprep.subr.bf16.mxu0 0
        %1072 = vmatpush1.bf16.msra.mxu0 0
        %1073 = vmatprep.subr.bf16.mxu0 0
        %1074 = vmatpush1.bf16.msra.mxu0 %v1057
        %1075 = vmatprep.subr.bf16.mxu0 0
        %1076 = vmatpush2.bf16.msra.mxu0 0
        %1077 = vmatprep.subr.bf16.mxu0 0
        %1078 = vmatpush2.bf16.msra.mxu0 0
        %1079 = vmatprep.subr.bf16.mxu0 0
        %1080 = vmatpush2.bf16.msra.mxu0 0
        %1081 = vmatprep.subr.bf16.mxu0 0
        %1082 = vmatpush2.bf16.msra.mxu0 0
        %1083 = vmatprep.subr.bf16.mxu0 0
        %1084 = vmatpush2.bf16.msra.mxu0 0
        %1085 = vmatprep.subr.bf16.mxu0 0
        %1086 = vmatpush2.bf16.msra.mxu0 0
        %1087 = vmatprep.subr.bf16.mxu0 0
        %1088 = vmatpush2.bf16.msra.mxu0 0
        %1089 = vmatprep.subr.bf16.mxu0 0
        %1090 = vmatpush2.bf16.msra.mxu0 0
        %1091 = vmatprep.mubr.bf16.mxu0 0
        %1092 = vmatmul.mubr.bf16.gmra.mxu0 %v1053
        %v1093 = vpop.f32.mrf.mxu0
        %v1094 = vadd.f32 0.0, %v1093
        %v1095 = vpop.f32.mrf.mxu0
        %v1096 = vpop.f32.mrf.mxu0
        %v1097 = vpop.f32.mrf.mxu0
        %1098 = vdwg.mxu0
        %1100 = vrot.lane.b32.xlu0 %v988, 112
        %v1101 = vpop.permute.xlu0 %1100
        %1103 = vrot.lane.b32.xlu0 %v989, 112
        %v1104 = vpop.permute.xlu0 %1103
        %v1106 = vsel %vm991, %v1101, 0
        %v1109 = vsel %vm991, %v1104, 0
        %1111 = vmatprep.subr.bf16.mxu0 0
        %1112 = vmatpush1.bf16.xpose.msra.mxu0 0
        %1113 = vmatprep.subr.bf16.mxu0 0
        %1114 = vmatpush1.bf16.xpose.msra.mxu0 0
        %1115 = vmatprep.subr.bf16.mxu0 0
        %1116 = vmatpush1.bf16.xpose.msra.mxu0 0
        %1117 = vmatprep.subr.bf16.mxu0 0
        %1118 = vmatpush1.bf16.xpose.msra.mxu0 0
        %1119 = vmatprep.subr.bf16.mxu0 0
        %1120 = vmatpush1.bf16.xpose.msra.mxu0 0
        %1121 = vmatprep.subr.bf16.mxu0 0
        %1122 = vmatpush1.bf16.xpose.msra.mxu0 0
        %1123 = vmatprep.subr.bf16.mxu0 0
        %1124 = vmatpush1.bf16.xpose.msra.mxu0 0
        %1125 = vmatprep.subr.bf16.mxu0 0
        %1126 = vmatpush1.bf16.xpose.msra.mxu0 %v1109
        %1127 = vmatprep.subr.bf16.mxu0 0
        %1128 = vmatpush2.bf16.xpose.msra.mxu0 0
        %1129 = vmatprep.subr.bf16.mxu0 0
        %1130 = vmatpush2.bf16.xpose.msra.mxu0 0
        %1131 = vmatprep.subr.bf16.mxu0 0
        %1132 = vmatpush2.bf16.xpose.msra.mxu0 0
        %1133 = vmatprep.subr.bf16.mxu0 0
        %1134 = vmatpush2.bf16.xpose.msra.mxu0 0
        %1135 = vmatprep.subr.bf16.mxu0 0
        %1136 = vmatpush2.bf16.xpose.msra.mxu0 0
        %1137 = vmatprep.subr.bf16.mxu0 0
        %1138 = vmatpush2.bf16.xpose.msra.mxu0 0
        %1139 = vmatprep.subr.bf16.mxu0 0
        %1140 = vmatpush2.bf16.xpose.msra.mxu0 0
        %1141 = vmatprep.subr.bf16.mxu0 0
        %1142 = vmatpush2.bf16.xpose.msra.mxu0 0
        %1143 = vmatprep.mubr.bf16.mxu0 0
        %1144 = vmatmul.mubr.bf16.gmra.mxu0 %v1106
        %v1145 = vpop.f32.mrf.mxu0
        %v1146 = vadd.f32 0.0, %v1145
        %v1147 = vpop.f32.mrf.mxu0
        %v1148 = vpop.f32.mrf.mxu0
        %v1149 = vpop.f32.mrf.mxu0
        %1150 = vdwg.mxu0
        %v1151 = vsel %vm1038, %v1146, -inf
        %1152 = vmax.xlane.f32.xlu0 %v1151
        %v1153 = vpop.xlane.xlu0 %1152
        %v1154 = vsub.f32 %v1146, %v1153
        %v1155 = vmul.f32 %v1154, 1.442695
        %v1156 = vpow.pop %v1155
        %v1157 = vsel %vm1038, %v1156, 0.0
        %1158 = vadd.xlane.f32.xlu0 %v1157
        %v1159 = vpop.xlane.xlu0 %1158
        %v1160 = vrcp.pop %v1159
        %v1161 = vmul.f32 %v1156, %v1160
        %v1162 = vpack.c.bf16 %v1161, %v1161
        %1164 = vrot.lane.b32.xlu0 %v990, 112
        %v1165 = vpop.permute.xlu0 %1164
        %v1167 = vsel %vm1051, %v1162, 0
        %v1170 = vsel %vm1055, %v1165, 0
        %1172 = vmatprep.subr.bf16.mxu0 0
        %1173 = vmatpush1.bf16.msra.mxu0 0
        %1174 = vmatprep.subr.bf16.mxu0 0
        %1175 = vmatpush1.bf16.msra.mxu0 0
        %1176 = vmatprep.subr.bf16.mxu0 0
        %1177 = vmatpush1.bf16.msra.mxu0 0
        %1178 = vmatprep.subr.bf16.mxu0 0
        %1179 = vmatpush1.bf16.msra.mxu0 0
        %1180 = vmatprep.subr.bf16.mxu0 0
        %1181 = vmatpush1.bf16.msra.mxu0 0
        %1182 = vmatprep.subr.bf16.mxu0 0
        %1183 = vmatpush1.bf16.msra.mxu0 0
        %1184 = vmatprep.subr.bf16.mxu0 0
        %1185 = vmatpush1.bf16.msra.mxu0 0
        %1186 = vmatprep.subr.bf16.mxu0 0
        %1187 = vmatpush1.bf16.msra.mxu0 %v1170
        %1188 = vmatprep.subr.bf16.mxu0 0
        %1189 = vmatpush2.bf16.msra.mxu0 0
        %1190 = vmatprep.subr.bf16.mxu0 0
        %1191 = vmatpush2.bf16.msra.mxu0 0
        %1192 = vmatprep.subr.bf16.mxu0 0
        %1193 = vmatpush2.bf16.msra.mxu0 0
        %1194 = vmatprep.subr.bf16.mxu0 0
        %1195 = vmatpush2.bf16.msra.mxu0 0
        %1196 = vmatprep.subr.bf16.mxu0 0
        %1197 = vmatpush2.bf16.msra.mxu0 0
        %1198 = vmatprep.subr.bf16.mxu0 0
        %1199 = vmatpush2.bf16.msra.mxu0 0
        %1200 = vmatprep.subr.bf16.mxu0 0
        %1201 = vmatpush2.bf16.msra.mxu0 0
        %1202 = vmatprep.subr.bf16.mxu0 0
        %1203 = vmatpush2.bf16.msra.mxu0 0
        %1204 = vmatprep.mubr.bf16.mxu0 0
        %1205 = vmatmul.mubr.bf16.gmra.mxu0 %v1167
        %v1206 = vpop.f32.mrf.mxu0
        %v1207 = vadd.f32 0.0, %v1206
        %v1208 = vpop.f32.mrf.mxu0
        %v1209 = vpop.f32.mrf.mxu0
        %v1210 = vpop.f32.mrf.mxu0
        %1211 = vdwg.mxu0
        %1212 = vrot.lane.b32.xlu0 %v988, 96
        %v1213 = vpop.permute.xlu0 %1212
        %1214 = vrot.lane.b32.xlu0 %v989, 96
        %v1215 = vpop.permute.xlu0 %1214
        %v1217 = vsel %vm991, %v1213, 0
        %v1220 = vsel %vm991, %v1215, 0
        %1222 = vmatprep.subr.bf16.mxu0 0
        %1223 = vmatpush1.bf16.xpose.msra.mxu0 0
        %1224 = vmatprep.subr.bf16.mxu0 0
        %1225 = vmatpush1.bf16.xpose.msra.mxu0 0
        %1226 = vmatprep.subr.bf16.mxu0 0
        %1227 = vmatpush1.bf16.xpose.msra.mxu0 0
        %1228 = vmatprep.subr.bf16.mxu0 0
        %1229 = vmatpush1.bf16.xpose.msra.mxu0 0
        %1230 = vmatprep.subr.bf16.mxu0 0
        %1231 = vmatpush1.bf16.xpose.msra.mxu0 0
        %1232 = vmatprep.subr.bf16.mxu0 0
        %1233 = vmatpush1.bf16.xpose.msra.mxu0 0
        %1234 = vmatprep.subr.bf16.mxu0 0
        %1235 = vmatpush1.bf16.xpose.msra.mxu0 0
        %1236 = vmatprep.subr.bf16.mxu0 0
        %1237 = vmatpush1.bf16.xpose.msra.mxu0 %v1220
        %1238 = vmatprep.subr.bf16.mxu0 0
        %1239 = vmatpush2.bf16.xpose.msra.mxu0 0
        %1240 = vmatprep.subr.bf16.mxu0 0
        %1241 = vmatpush2.bf16.xpose.msra.mxu0 0
        %1242 = vmatprep.subr.bf16.mxu0 0
        %1243 = vmatpush2.bf16.xpose.msra.mxu0 0
        %1244 = vmatprep.subr.bf16.mxu0 0
        %1245 = vmatpush2.bf16.xpose.msra.mxu0 0
        %1246 = vmatprep.subr.bf16.mxu0 0
        %1247 = vmatpush2.bf16.xpose.msra.mxu0 0
        %1248 = vmatprep.subr.bf16.mxu0 0
        %1249 = vmatpush2.bf16.xpose.msra.mxu0 0
        %1250 = vmatprep.subr.bf16.mxu0 0
        %1251 = vmatpush2.bf16.xpose.msra.mxu0 0
        %1252 = vmatprep.subr.bf16.mxu0 0
        %1253 = vmatpush2.bf16.xpose.msra.mxu0 0
        %1254 = vmatprep.mubr.bf16.mxu0 0
        %1255 = vmatmul.mubr.bf16.gmra.mxu0 %v1217
        %v1256 = vpop.f32.mrf.mxu0
        %v1257 = vadd.f32 0.0, %v1256
        %v1258 = vpop.f32.mrf.mxu0
        %v1259 = vpop.f32.mrf.mxu0
        %v1260 = vpop.f32.mrf.mxu0
        %1261 = vdwg.mxu0
        %v1262 = vsel %vm1038, %v1257, -inf
        %1263 = vmax.xlane.f32.xlu0 %v1262
        %v1264 = vpop.xlane.xlu0 %1263
        %v1265 = vsub.f32 %v1257, %v1264
        %v1266 = vmul.f32 %v1265, 1.442695
        %v1267 = vpow.pop %v1266
        %v1268 = vsel %vm1038, %v1267, 0.0
        %1269 = vadd.xlane.f32.xlu0 %v1268
        %v1270 = vpop.xlane.xlu0 %1269
        %v1271 = vrcp.pop %v1270
        %v1272 = vmul.f32 %v1267, %v1271
        %v1273 = vpack.c.bf16 %v1272, %v1272
        %1274 = vrot.lane.b32.xlu0 %v990, 96
        %v1275 = vpop.permute.xlu0 %1274
        %v1277 = vsel %vm1051, %v1273, 0
        %v1280 = vsel %vm1055, %v1275, 0
        %1282 = vmatprep.subr.bf16.mxu0 0
        %1283 = vmatpush1.bf16.msra.mxu0 0
        %1284 = vmatprep.subr.bf16.mxu0 0
        %1285 = vmatpush1.bf16.msra.mxu0 0
        %1286 = vmatprep.subr.bf16.mxu0 0
        %1287 = vmatpush1.bf16.msra.mxu0 0
        %1288 = vmatprep.subr.bf16.mxu0 0
        %1289 = vmatpush1.bf16.msra.mxu0 0
        %1290 = vmatprep.subr.bf16.mxu0 0
        %1291 = vmatpush1.bf16.msra.mxu0 0
        %1292 = vmatprep.subr.bf16.mxu0 0
        %1293 = vmatpush1.bf16.msra.mxu0 0
        %1294 = vmatprep.subr.bf16.mxu0 0
        %1295 = vmatpush1.bf16.msra.mxu0 0
        %1296 = vmatprep.subr.bf16.mxu0 0
        %1297 = vmatpush1.bf16.msra.mxu0 %v1280
        %1298 = vmatprep.subr.bf16.mxu0 0
        %1299 = vmatpush2.bf16.msra.mxu0 0
        %1300 = vmatprep.subr.bf16.mxu0 0
        %1301 = vmatpush2.bf16.msra.mxu0 0
        %1302 = vmatprep.subr.bf16.mxu0 0
        %1303 = vmatpush2.bf16.msra.mxu0 0
        %1304 = vmatprep.subr.bf16.mxu0 0
        %1305 = vmatpush2.bf16.msra.mxu0 0
        %1306 = vmatprep.subr.bf16.mxu0 0
        %1307 = vmatpush2.bf16.msra.mxu0 0
        %1308 = vmatprep.subr.bf16.mxu0 0
        %1309 = vmatpush2.bf16.msra.mxu0 0
        %1310 = vmatprep.subr.bf16.mxu0 0
        %1311 = vmatpush2.bf16.msra.mxu0 0
        %1312 = vmatprep.subr.bf16.mxu0 0
        %1313 = vmatpush2.bf16.msra.mxu0 0
        %1314 = vmatprep.mubr.bf16.mxu0 0
        %1315 = vmatmul.mubr.bf16.gmra.mxu0 %v1277
        %v1316 = vpop.f32.mrf.mxu0
        %v1317 = vadd.f32 0.0, %v1316
        %v1318 = vpop.f32.mrf.mxu0
        %v1319 = vpop.f32.mrf.mxu0
        %v1320 = vpop.f32.mrf.mxu0
        %1321 = vdwg.mxu0
        %1322 = vrot.lane.b32.xlu0 %v988, 80
        %v1323 = vpop.permute.xlu0 %1322
        %1324 = vrot.lane.b32.xlu0 %v989, 80
        %v1325 = vpop.permute.xlu0 %1324
        %v1327 = vsel %vm991, %v1323, 0
        %v1330 = vsel %vm991, %v1325, 0
        %1332 = vmatprep.subr.bf16.mxu0 0
        %1333 = vmatpush1.bf16.xpose.msra.mxu0 0
        %1334 = vmatprep.subr.bf16.mxu0 0
        %1335 = vmatpush1.bf16.xpose.msra.mxu0 0
        %1336 = vmatprep.subr.bf16.mxu0 0
        %1337 = vmatpush1.bf16.xpose.msra.mxu0 0
        %1338 = vmatprep.subr.bf16.mxu0 0
        %1339 = vmatpush1.bf16.xpose.msra.mxu0 0
        %1340 = vmatprep.subr.bf16.mxu0 0
        %1341 = vmatpush1.bf16.xpose.msra.mxu0 0
        %1342 = vmatprep.subr.bf16.mxu0 0
        %1343 = vmatpush1.bf16.xpose.msra.mxu0 0
        %1344 = vmatprep.subr.bf16.mxu0 0
        %1345 = vmatpush1.bf16.xpose.msra.mxu0 0
        %1346 = vmatprep.subr.bf16.mxu0 0
        %1347 = vmatpush1.bf16.xpose.msra.mxu0 %v1330
        %1348 = vmatprep.subr.bf16.mxu0 0
        %1349 = vmatpush2.bf16.xpose.msra.mxu0 0
        %1350 = vmatprep.subr.bf16.mxu0 0
        %1351 = vmatpush2.bf16.xpose.msra.mxu0 0
        %1352 = vmatprep.subr.bf16.mxu0 0
        %1353 = vmatpush2.bf16.xpose.msra.mxu0 0
        %1354 = vmatprep.subr.bf16.mxu0 0
        %1355 = vmatpush2.bf16.xpose.msra.mxu0 0
        %1356 = vmatprep.subr.bf16.mxu0 0
        %1357 = vmatpush2.bf16.xpose.msra.mxu0 0
        %1358 = vmatprep.subr.bf16.mxu0 0
        %1359 = vmatpush2.bf16.xpose.msra.mxu0 0
        %1360 = vmatprep.subr.bf16.mxu0 0
        %1361 = vmatpush2.bf16.xpose.msra.mxu0 0
        %1362 = vmatprep.subr.bf16.mxu0 0
        %1363 = vmatpush2.bf16.xpose.msra.mxu0 0
        %1364 = vmatprep.mubr.bf16.mxu0 0
        %1365 = vmatmul.mubr.bf16.gmra.mxu0 %v1327
        %v1366 = vpop.f32.mrf.mxu0
        %v1367 = vadd.f32 0.0, %v1366
        %v1368 = vpop.f32.mrf.mxu0
        %v1369 = vpop.f32.mrf.mxu0
        %v1370 = vpop.f32.mrf.mxu0
        %1371 = vdwg.mxu0
        %v1372 = vsel %vm1038, %v1367, -inf
        %1373 = vmax.xlane.f32.xlu0 %v1372
        %v1374 = vpop.xlane.xlu0 %1373
        %v1375 = vsub.f32 %v1367, %v1374
        %v1376 = vmul.f32 %v1375, 1.442695
        %v1377 = vpow.pop %v1376
        %v1378 = vsel %vm1038, %v1377, 0.0
        %1379 = vadd.xlane.f32.xlu0 %v1378
        %v1380 = vpop.xlane.xlu0 %1379
        %v1381 = vrcp.pop %v1380
        %v1382 = vmul.f32 %v1377, %v1381
        %v1383 = vpack.c.bf16 %v1382, %v1382
        %1384 = vrot.lane.b32.xlu0 %v990, 80
        %v1385 = vpop.permute.xlu0 %1384
        %v1387 = vsel %vm1051, %v1383, 0
        %v1390 = vsel %vm1055, %v1385, 0
        %1392 = vmatprep.subr.bf16.mxu0 0
        %1393 = vmatpush1.bf16.msra.mxu0 0
        %1394 = vmatprep.subr.bf16.mxu0 0
        %1395 = vmatpush1.bf16.msra.mxu0 0
        %1396 = vmatprep.subr.bf16.mxu0 0
        %1397 = vmatpush1.bf16.msra.mxu0 0
        %1398 = vmatprep.subr.bf16.mxu0 0
        %1399 = vmatpush1.bf16.msra.mxu0 0
        %1400 = vmatprep.subr.bf16.mxu0 0
        %1401 = vmatpush1.bf16.msra.mxu0 0
        %1402 = vmatprep.subr.bf16.mxu0 0
        %1403 = vmatpush1.bf16.msra.mxu0 0
        %1404 = vmatprep.subr.bf16.mxu0 0
        %1405 = vmatpush1.bf16.msra.mxu0 0
        %1406 = vmatprep.subr.bf16.mxu0 0
        %1407 = vmatpush1.bf16.msra.mxu0 %v1390
        %1408 = vmatprep.subr.bf16.mxu0 0
        %1409 = vmatpush2.bf16.msra.mxu0 0
        %1410 = vmatprep.subr.bf16.mxu0 0
        %1411 = vmatpush2.bf16.msra.mxu0 0
        %1412 = vmatprep.subr.bf16.mxu0 0
        %1413 = vmatpush2.bf16.msra.mxu0 0
        %1414 = vmatprep.subr.bf16.mxu0 0
        %1415 = vmatpush2.bf16.msra.mxu0 0
        %1416 = vmatprep.subr.bf16.mxu0 0
        %1417 = vmatpush2.bf16.msra.mxu0 0
        %1418 = vmatprep.subr.bf16.mxu0 0
        %1419 = vmatpush2.bf16.msra.mxu0 0
        %1420 = vmatprep.subr.bf16.mxu0 0
        %1421 = vmatpush2.bf16.msra.mxu0 0
        %1422 = vmatprep.subr.bf16.mxu0 0
        %1423 = vmatpush2.bf16.msra.mxu0 0
        %1424 = vmatprep.mubr.bf16.mxu0 0
        %1425 = vmatmul.mubr.bf16.gmra.mxu0 %v1387
        %v1426 = vpop.f32.mrf.mxu0
        %v1427 = vadd.f32 0.0, %v1426
        %v1428 = vpop.f32.mrf.mxu0
        %v1429 = vpop.f32.mrf.mxu0
        %v1430 = vpop.f32.mrf.mxu0
        %1431 = vdwg.mxu0
        %1433 = vrot.lane.b32.xlu0 %v1207, 16
        %v1434 = vpop.permute.xlu0 %1433
        %1437 = vrot.lane.b32.xlu0 %v1317, 32
        %v1438 = vpop.permute.xlu0 %1437
        %1441 = vrot.lane.b32.xlu0 %v1427, 48
        %v1442 = vpop.permute.xlu0 %1441
        %v1444 = vsel %vm991, %v1094, %v1434
        %vm1445 = vcmask 261120
        %v1446 = vsel %vm1445, %v1444, %v1438
        %vm1447 = vcmask 392192
        %v1448 = vsel %vm1447, %v1446, %v1442
        %v1449 = vrot.slane %v988, 1
        %v1450 = vrot.slane %v989, 1
        %v1452 = vsel %vm991, %v1449, 0
        %v1455 = vsel %vm991, %v1450, 0
        %1457 = vmatprep.subr.bf16.mxu0 0
        %1458 = vmatpush1.bf16.xpose.msra.mxu0 0
        %1459 = vmatprep.subr.bf16.mxu0 0
        %1460 = vmatpush1.bf16.xpose.msra.mxu0 0
        %1461 = vmatprep.subr.bf16.mxu0 0
        %1462 = vmatpush1.bf16.xpose.msra.mxu0 0
        %1463 = vmatprep.subr.bf16.mxu0 0
        %1464 = vmatpush1.bf16.xpose.msra.mxu0 0
        %1465 = vmatprep.subr.bf16.mxu0 0
        %1466 = vmatpush1.bf16.xpose.msra.mxu0 0
        %1467 = vmatprep.subr.bf16.mxu0 0
        %1468 = vmatpush1.bf16.xpose.msra.mxu0 0
        %1469 = vmatprep.subr.bf16.mxu0 0
        %1470 = vmatpush1.bf16.xpose.msra.mxu0 0
        %1471 = vmatprep.subr.bf16.mxu0 0
        %1472 = vmatpush1.bf16.xpose.msra.mxu0 %v1455
        %1473 = vmatprep.subr.bf16.mxu0 0
        %1474 = vmatpush2.bf16.xpose.msra.mxu0 0
        %1475 = vmatprep.subr.bf16.mxu0 0
        %1476 = vmatpush2.bf16.xpose.msra.mxu0 0
        %1477 = vmatprep.subr.bf16.mxu0 0
        %1478 = vmatpush2.bf16.xpose.msra.mxu0 0
        %1479 = vmatprep.subr.bf16.mxu0 0
        %1480 = vmatpush2.bf16.xpose.msra.mxu0 0
        %1481 = vmatprep.subr.bf16.mxu0 0
        %1482 = vmatpush2.bf16.xpose.msra.mxu0 0
        %1483 = vmatprep.subr.bf16.mxu0 0
        %1484 = vmatpush2.bf16.xpose.msra.mxu0 0
        %1485 = vmatprep.subr.bf16.mxu0 0
        %1486 = vmatpush2.bf16.xpose.msra.mxu0 0
        %1487 = vmatprep.subr.bf16.mxu0 0
        %1488 = vmatpush2.bf16.xpose.msra.mxu0 0
        %1489 = vmatprep.mubr.bf16.mxu0 0
        %1490 = vmatmul.mubr.bf16.gmra.mxu0 %v1452
        %v1491 = vpop.f32.mrf.mxu0
        %v1492 = vadd.f32 0.0, %v1491
        %v1493 = vpop.f32.mrf.mxu0
        %v1494 = vpop.f32.mrf.mxu0
        %v1495 = vpop.f32.mrf.mxu0
        %1496 = vdwg.mxu0
        %v1497 = vsel %vm1038, %v1492, -inf
        %1498 = vmax.xlane.f32.xlu0 %v1497
        %v1499 = vpop.xlane.xlu0 %1498
        %v1500 = vsub.f32 %v1492, %v1499
        %v1501 = vmul.f32 %v1500, 1.442695
        %v1502 = vpow.pop %v1501
        %v1503 = vsel %vm1038, %v1502, 0.0
        %1504 = vadd.xlane.f32.xlu0 %v1503
        %v1505 = vpop.xlane.xlu0 %1504
        %v1506 = vrcp.pop %v1505
        %v1507 = vmul.f32 %v1502, %v1506
        %v1508 = vpack.c.bf16 %v1507, %v1507
        %v1509 = vrot.slane %v990, 1
        %v1511 = vsel %vm1051, %v1508, 0
        %v1514 = vsel %vm1055, %v1509, 0
        %1516 = vmatprep.subr.bf16.mxu0 0
        %1517 = vmatpush1.bf16.msra.mxu0 0
        %1518 = vmatprep.subr.bf16.mxu0 0
        %1519 = vmatpush1.bf16.msra.mxu0 0
        %1520 = vmatprep.subr.bf16.mxu0 0
        %1521 = vmatpush1.bf16.msra.mxu0 0
        %1522 = vmatprep.subr.bf16.mxu0 0
        %1523 = vmatpush1.bf16.msra.mxu0 0
        %1524 = vmatprep.subr.bf16.mxu0 0
        %1525 = vmatpush1.bf16.msra.mxu0 0
        %1526 = vmatprep.subr.bf16.mxu0 0
        %1527 = vmatpush1.bf16.msra.mxu0 0
        %1528 = vmatprep.subr.bf16.mxu0 0
        %1529 = vmatpush1.bf16.msra.mxu0 0
        %1530 = vmatprep.subr.bf16.mxu0 0
        %1531 = vmatpush1.bf16.msra.mxu0 %v1514
        %1532 = vmatprep.subr.bf16.mxu0 0
        %1533 = vmatpush2.bf16.msra.mxu0 0
        %1534 = vmatprep.subr.bf16.mxu0 0
        %1535 = vmatpush2.bf16.msra.mxu0 0
        %1536 = vmatprep.subr.bf16.mxu0 0
        %1537 = vmatpush2.bf16.msra.mxu0 0
        %1538 = vmatprep.subr.bf16.mxu0 0
        %1539 = vmatpush2.bf16.msra.mxu0 0
        %1540 = vmatprep.subr.bf16.mxu0 0
        %1541 = vmatpush2.bf16.msra.mxu0 0
        %1542 = vmatprep.subr.bf16.mxu0 0
        %1543 = vmatpush2.bf16.msra.mxu0 0
        %1544 = vmatprep.subr.bf16.mxu0 0
        %1545 = vmatpush2.bf16.msra.mxu0 0
        %1546 = vmatprep.subr.bf16.mxu0 0
        %1547 = vmatpush2.bf16.msra.mxu0 0
        %1548 = vmatprep.mubr.bf16.mxu0 0
        %1549 = vmatmul.mubr.bf16.gmra.mxu0 %v1511
        %v1550 = vpop.f32.mrf.mxu0
        %v1551 = vadd.f32 0.0, %v1550
        %v1552 = vpop.f32.mrf.mxu0
        %v1553 = vpop.f32.mrf.mxu0
        %v1554 = vpop.f32.mrf.mxu0
        %1555 = vdwg.mxu0
        %1556 = vrot.lane.b32.xlu0 %v1449, 112
        %v1557 = vpop.permute.xlu0 %1556
        %1558 = vrot.lane.b32.xlu0 %v1450, 112
        %v1559 = vpop.permute.xlu0 %1558
        %v1561 = vsel %vm991, %v1557, 0
        %v1564 = vsel %vm991, %v1559, 0
        %1566 = vmatprep.subr.bf16.mxu0 0
        %1567 = vmatpush1.bf16.xpose.msra.mxu0 0
        %1568 = vmatprep.subr.bf16.mxu0 0
        %1569 = vmatpush1.bf16.xpose.msra.mxu0 0
        %1570 = vmatprep.subr.bf16.mxu0 0
        %1571 = vmatpush1.bf16.xpose.msra.mxu0 0
        %1572 = vmatprep.subr.bf16.mxu0 0
        %1573 = vmatpush1.bf16.xpose.msra.mxu0 0
        %1574 = vmatprep.subr.bf16.mxu0 0
        %1575 = vmatpush1.bf16.xpose.msra.mxu0 0
        %1576 = vmatprep.subr.bf16.mxu0 0
        %1577 = vmatpush1.bf16.xpose.msra.mxu0 0
        %1578 = vmatprep.subr.bf16.mxu0 0
        %1579 = vmatpush1.bf16.xpose.msra.mxu0 0
        %1580 = vmatprep.subr.bf16.mxu0 0
        %1581 = vmatpush1.bf16.xpose.msra.mxu0 %v1564
        %1582 = vmatprep.subr.bf16.mxu0 0
        %1583 = vmatpush2.bf16.xpose.msra.mxu0 0
        %1584 = vmatprep.subr.bf16.mxu0 0
        %1585 = vmatpush2.bf16.xpose.msra.mxu0 0
        %1586 = vmatprep.subr.bf16.mxu0 0
        %1587 = vmatpush2.bf16.xpose.msra.mxu0 0
        %1588 = vmatprep.subr.bf16.mxu0 0
        %1589 = vmatpush2.bf16.xpose.msra.mxu0 0
        %1590 = vmatprep.subr.bf16.mxu0 0
        %1591 = vmatpush2.bf16.xpose.msra.mxu0 0
        %1592 = vmatprep.subr.bf16.mxu0 0
        %1593 = vmatpush2.bf16.xpose.msra.mxu0 0
        %1594 = vmatprep.subr.bf16.mxu0 0
        %1595 = vmatpush2.bf16.xpose.msra.mxu0 0
        %1596 = vmatprep.subr.bf16.mxu0 0
        %1597 = vmatpush2.bf16.xpose.msra.mxu0 0
        %1598 = vmatprep.mubr.bf16.mxu0 0
        %1599 = vmatmul.mubr.bf16.gmra.mxu0 %v1561
        %v1600 = vpop.f32.mrf.mxu0
        %v1601 = vadd.f32 0.0, %v1600
        %v1602 = vpop.f32.mrf.mxu0
        %v1603 = vpop.f32.mrf.mxu0
        %v1604 = vpop.f32.mrf.mxu0
        %1605 = vdwg.mxu0
        %v1606 = vsel %vm1038, %v1601, -inf
        %1607 = vmax.xlane.f32.xlu0 %v1606
        %v1608 = vpop.xlane.xlu0 %1607
        %v1609 = vsub.f32 %v1601, %v1608
        %v1610 = vmul.f32 %v1609, 1.442695
        %v1611 = vpow.pop %v1610
        %v1612 = vsel %vm1038, %v1611, 0.0
        %1613 = vadd.xlane.f32.xlu0 %v1612
        %v1614 = vpop.xlane.xlu0 %1613
        %v1615 = vrcp.pop %v1614
        %v1616 = vmul.f32 %v1611, %v1615
        %v1617 = vpack.c.bf16 %v1616, %v1616
        %1618 = vrot.lane.b32.xlu0 %v1509, 112
        %v1619 = vpop.permute.xlu0 %1618
        %v1621 = vsel %vm1051, %v1617, 0
        %v1624 = vsel %vm1055, %v1619, 0
        %1626 = vmatprep.subr.bf16.mxu0 0
        %1627 = vmatpush1.bf16.msra.mxu0 0
        %1628 = vmatprep.subr.bf16.mxu0 0
        %1629 = vmatpush1.bf16.msra.mxu0 0
        %1630 = vmatprep.subr.bf16.mxu0 0
        %1631 = vmatpush1.bf16.msra.mxu0 0
        %1632 = vmatprep.subr.bf16.mxu0 0
        %1633 = vmatpush1.bf16.msra.mxu0 0
        %1634 = vmatprep.subr.bf16.mxu0 0
        %1635 = vmatpush1.bf16.msra.mxu0 0
        %1636 = vmatprep.subr.bf16.mxu0 0
        %1637 = vmatpush1.bf16.msra.mxu0 0
        %1638 = vmatprep.subr.bf16.mxu0 0
        %1639 = vmatpush1.bf16.msra.mxu0 0
        %1640 = vmatprep.subr.bf16.mxu0 0
        %1641 = vmatpush1.bf16.msra.mxu0 %v1624
        %1642 = vmatprep.subr.bf16.mxu0 0
        %1643 = vmatpush2.bf16.msra.mxu0 0
        %1644 = vmatprep.subr.bf16.mxu0 0
        %1645 = vmatpush2.bf16.msra.mxu0 0
        %1646 = vmatprep.subr.bf16.mxu0 0
        %1647 = vmatpush2.bf16.msra.mxu0 0
        %1648 = vmatprep.subr.bf16.mxu0 0
        %1649 = vmatpush2.bf16.msra.mxu0 0
        %1650 = vmatprep.subr.bf16.mxu0 0
        %1651 = vmatpush2.bf16.msra.mxu0 0
        %1652 = vmatprep.subr.bf16.mxu0 0
        %1653 = vmatpush2.bf16.msra.mxu0 0
        %1654 = vmatprep.subr.bf16.mxu0 0
        %1655 = vmatpush2.bf16.msra.mxu0 0
        %1656 = vmatprep.subr.bf16.mxu0 0
        %1657 = vmatpush2.bf16.msra.mxu0 0
        %1658 = vmatprep.mubr.bf16.mxu0 0
        %1659 = vmatmul.mubr.bf16.gmra.mxu0 %v1621
        %v1660 = vpop.f32.mrf.mxu0
        %v1661 = vadd.f32 0.0, %v1660
        %v1662 = vpop.f32.mrf.mxu0
        %v1663 = vpop.f32.mrf.mxu0
        %v1664 = vpop.f32.mrf.mxu0
        %1665 = vdwg.mxu0
        %1666 = vrot.lane.b32.xlu0 %v1449, 96
        %v1667 = vpop.permute.xlu0 %1666
        %1668 = vrot.lane.b32.xlu0 %v1450, 96
        %v1669 = vpop.permute.xlu0 %1668
        %v1671 = vsel %vm991, %v1667, 0
        %v1674 = vsel %vm991, %v1669, 0
        %1676 = vmatprep.subr.bf16.mxu0 0
        %1677 = vmatpush1.bf16.xpose.msra.mxu0 0
        %1678 = vmatprep.subr.bf16.mxu0 0
        %1679 = vmatpush1.bf16.xpose.msra.mxu0 0
        %1680 = vmatprep.subr.bf16.mxu0 0
        %1681 = vmatpush1.bf16.xpose.msra.mxu0 0
        %1682 = vmatprep.subr.bf16.mxu0 0
        %1683 = vmatpush1.bf16.xpose.msra.mxu0 0
        %1684 = vmatprep.subr.bf16.mxu0 0
        %1685 = vmatpush1.bf16.xpose.msra.mxu0 0
        %1686 = vmatprep.subr.bf16.mxu0 0
        %1687 = vmatpush1.bf16.xpose.msra.mxu0 0
        %1688 = vmatprep.subr.bf16.mxu0 0
        %1689 = vmatpush1.bf16.xpose.msra.mxu0 0
        %1690 = vmatprep.subr.bf16.mxu0 0
        %1691 = vmatpush1.bf16.xpose.msra.mxu0 %v1674
        %1692 = vmatprep.subr.bf16.mxu0 0
        %1693 = vmatpush2.bf16.xpose.msra.mxu0 0
        %1694 = vmatprep.subr.bf16.mxu0 0
        %1695 = vmatpush2.bf16.xpose.msra.mxu0 0
        %1696 = vmatprep.subr.bf16.mxu0 0
        %1697 = vmatpush2.bf16.xpose.msra.mxu0 0
        %1698 = vmatprep.subr.bf16.mxu0 0
        %1699 = vmatpush2.bf16.xpose.msra.mxu0 0
        %1700 = vmatprep.subr.bf16.mxu0 0
        %1701 = vmatpush2.bf16.xpose.msra.mxu0 0
        %1702 = vmatprep.subr.bf16.mxu0 0
        %1703 = vmatpush2.bf16.xpose.msra.mxu0 0
        %1704 = vmatprep.subr.bf16.mxu0 0
        %1705 = vmatpush2.bf16.xpose.msra.mxu0 0
        %1706 = vmatprep.subr.bf16.mxu0 0
        %1707 = vmatpush2.bf16.xpose.msra.mxu0 0
        %1708 = vmatprep.mubr.bf16.mxu0 0
        %1709 = vmatmul.mubr.bf16.gmra.mxu0 %v1671
        %v1710 = vpop.f32.mrf.mxu0
        %v1711 = vadd.f32 0.0, %v1710
        %v1712 = vpop.f32.mrf.mxu0
        %v1713 = vpop.f32.mrf.mxu0
        %v1714 = vpop.f32.mrf.mxu0
        %1715 = vdwg.mxu0
        %v1716 = vsel %vm1038, %v1711, -inf
        %1717 = vmax.xlane.f32.xlu0 %v1716
        %v1718 = vpop.xlane.xlu0 %1717
        %v1719 = vsub.f32 %v1711, %v1718
        %v1720 = vmul.f32 %v1719, 1.442695
        %v1721 = vpow.pop %v1720
        %v1722 = vsel %vm1038, %v1721, 0.0
        %1723 = vadd.xlane.f32.xlu0 %v1722
        %v1724 = vpop.xlane.xlu0 %1723
        %v1725 = vrcp.pop %v1724
        %v1726 = vmul.f32 %v1721, %v1725
        %v1727 = vpack.c.bf16 %v1726, %v1726
        %1728 = vrot.lane.b32.xlu0 %v1509, 96
        %v1729 = vpop.permute.xlu0 %1728
        %v1731 = vsel %vm1051, %v1727, 0
        %v1734 = vsel %vm1055, %v1729, 0
        %1736 = vmatprep.subr.bf16.mxu0 0
        %1737 = vmatpush1.bf16.msra.mxu0 0
        %1738 = vmatprep.subr.bf16.mxu0 0
        %1739 = vmatpush1.bf16.msra.mxu0 0
        %1740 = vmatprep.subr.bf16.mxu0 0
        %1741 = vmatpush1.bf16.msra.mxu0 0
        %1742 = vmatprep.subr.bf16.mxu0 0
        %1743 = vmatpush1.bf16.msra.mxu0 0
        %1744 = vmatprep.subr.bf16.mxu0 0
        %1745 = vmatpush1.bf16.msra.mxu0 0
        %1746 = vmatprep.subr.bf16.mxu0 0
        %1747 = vmatpush1.bf16.msra.mxu0 0
        %1748 = vmatprep.subr.bf16.mxu0 0
        %1749 = vmatpush1.bf16.msra.mxu0 0
        %1750 = vmatprep.subr.bf16.mxu0 0
        %1751 = vmatpush1.bf16.msra.mxu0 %v1734
        %1752 = vmatprep.subr.bf16.mxu0 0
        %1753 = vmatpush2.bf16.msra.mxu0 0
        %1754 = vmatprep.subr.bf16.mxu0 0
        %1755 = vmatpush2.bf16.msra.mxu0 0
        %1756 = vmatprep.subr.bf16.mxu0 0
        %1757 = vmatpush2.bf16.msra.mxu0 0
        %1758 = vmatprep.subr.bf16.mxu0 0
        %1759 = vmatpush2.bf16.msra.mxu0 0
        %1760 = vmatprep.subr.bf16.mxu0 0
        %1761 = vmatpush2.bf16.msra.mxu0 0
        %1762 = vmatprep.subr.bf16.mxu0 0
        %1763 = vmatpush2.bf16.msra.mxu0 0
        %1764 = vmatprep.subr.bf16.mxu0 0
        %1765 = vmatpush2.bf16.msra.mxu0 0
        %1766 = vmatprep.subr.bf16.mxu0 0
        %1767 = vmatpush2.bf16.msra.mxu0 0
        %1768 = vmatprep.mubr.bf16.mxu0 0
        %1769 = vmatmul.mubr.bf16.gmra.mxu0 %v1731
        %v1770 = vpop.f32.mrf.mxu0
        %v1771 = vadd.f32 0.0, %v1770
        %v1772 = vpop.f32.mrf.mxu0
        %v1773 = vpop.f32.mrf.mxu0
        %v1774 = vpop.f32.mrf.mxu0
        %1775 = vdwg.mxu0
        %1776 = vrot.lane.b32.xlu0 %v1449, 80
        %v1777 = vpop.permute.xlu0 %1776
        %1778 = vrot.lane.b32.xlu0 %v1450, 80
        %v1779 = vpop.permute.xlu0 %1778
        %v1781 = vsel %vm991, %v1777, 0
        %v1784 = vsel %vm991, %v1779, 0
        %1786 = vmatprep.subr.bf16.mxu0 0
        %1787 = vmatpush1.bf16.xpose.msra.mxu0 0
        %1788 = vmatprep.subr.bf16.mxu0 0
        %1789 = vmatpush1.bf16.xpose.msra.mxu0 0
        %1790 = vmatprep.subr.bf16.mxu0 0
        %1791 = vmatpush1.bf16.xpose.msra.mxu0 0
        %1792 = vmatprep.subr.bf16.mxu0 0
        %1793 = vmatpush1.bf16.xpose.msra.mxu0 0
        %1794 = vmatprep.subr.bf16.mxu0 0
        %1795 = vmatpush1.bf16.xpose.msra.mxu0 0
        %1796 = vmatprep.subr.bf16.mxu0 0
        %1797 = vmatpush1.bf16.xpose.msra.mxu0 0
        %1798 = vmatprep.subr.bf16.mxu0 0
        %1799 = vmatpush1.bf16.xpose.msra.mxu0 0
        %1800 = vmatprep.subr.bf16.mxu0 0
        %1801 = vmatpush1.bf16.xpose.msra.mxu0 %v1784
        %1802 = vmatprep.subr.bf16.mxu0 0
        %1803 = vmatpush2.bf16.xpose.msra.mxu0 0
        %1804 = vmatprep.subr.bf16.mxu0 0
        %1805 = vmatpush2.bf16.xpose.msra.mxu0 0
        %1806 = vmatprep.subr.bf16.mxu0 0
        %1807 = vmatpush2.bf16.xpose.msra.mxu0 0
        %1808 = vmatprep.subr.bf16.mxu0 0
        %1809 = vmatpush2.bf16.xpose.msra.mxu0 0
        %1810 = vmatprep.subr.bf16.mxu0 0
        %1811 = vmatpush2.bf16.xpose.msra.mxu0 0
        %1812 = vmatprep.subr.bf16.mxu0 0
        %1813 = vmatpush2.bf16.xpose.msra.mxu0 0
        %1814 = vmatprep.subr.bf16.mxu0 0
        %1815 = vmatpush2.bf16.xpose.msra.mxu0 0
        %1816 = vmatprep.subr.bf16.mxu0 0
        %1817 = vmatpush2.bf16.xpose.msra.mxu0 0
        %1818 = vmatprep.mubr.bf16.mxu0 0
        %1819 = vmatmul.mubr.bf16.gmra.mxu0 %v1781
        %v1820 = vpop.f32.mrf.mxu0
        %v1821 = vadd.f32 0.0, %v1820
        %v1822 = vpop.f32.mrf.mxu0
        %v1823 = vpop.f32.mrf.mxu0
        %v1824 = vpop.f32.mrf.mxu0
        %1825 = vdwg.mxu0
        %v1826 = vsel %vm1038, %v1821, -inf
        %1827 = vmax.xlane.f32.xlu0 %v1826
        %v1828 = vpop.xlane.xlu0 %1827
        %v1829 = vsub.f32 %v1821, %v1828
        %v1830 = vmul.f32 %v1829, 1.442695
        %v1831 = vpow.pop %v1830
        %v1832 = vsel %vm1038, %v1831, 0.0
        %1833 = vadd.xlane.f32.xlu0 %v1832
        %v1834 = vpop.xlane.xlu0 %1833
        %v1835 = vrcp.pop %v1834
        %v1836 = vmul.f32 %v1831, %v1835
        %v1837 = vpack.c.bf16 %v1836, %v1836
        %1838 = vrot.lane.b32.xlu0 %v1509, 80
        %v1839 = vpop.permute.xlu0 %1838
        %v1841 = vsel %vm1051, %v1837, 0
        %v1844 = vsel %vm1055, %v1839, 0
        %1846 = vmatprep.subr.bf16.mxu0 0
        %1847 = vmatpush1.bf16.msra.mxu0 0
        %1848 = vmatprep.subr.bf16.mxu0 0
        %1849 = vmatpush1.bf16.msra.mxu0 0
        %1850 = vmatprep.subr.bf16.mxu0 0
        %1851 = vmatpush1.bf16.msra.mxu0 0
        %1852 = vmatprep.subr.bf16.mxu0 0
        %1853 = vmatpush1.bf16.msra.mxu0 0
        %1854 = vmatprep.subr.bf16.mxu0 0
        %1855 = vmatpush1.bf16.msra.mxu0 0
        %1856 = vmatprep.subr.bf16.mxu0 0
        %1857 = vmatpush1.bf16.msra.mxu0 0
        %1858 = vmatprep.subr.bf16.mxu0 0
        %1859 = vmatpush1.bf16.msra.mxu0 0
        %1860 = vmatprep.subr.bf16.mxu0 0
        %1861 = vmatpush1.bf16.msra.mxu0 %v1844
        %1862 = vmatprep.subr.bf16.mxu0 0
        %1863 = vmatpush2.bf16.msra.mxu0 0
        %1864 = vmatprep.subr.bf16.mxu0 0
        %1865 = vmatpush2.bf16.msra.mxu0 0
        %1866 = vmatprep.subr.bf16.mxu0 0
        %1867 = vmatpush2.bf16.msra.mxu0 0
        %1868 = vmatprep.subr.bf16.mxu0 0
        %1869 = vmatpush2.bf16.msra.mxu0 0
        %1870 = vmatprep.subr.bf16.mxu0 0
        %1871 = vmatpush2.bf16.msra.mxu0 0
        %1872 = vmatprep.subr.bf16.mxu0 0
        %1873 = vmatpush2.bf16.msra.mxu0 0
        %1874 = vmatprep.subr.bf16.mxu0 0
        %1875 = vmatpush2.bf16.msra.mxu0 0
        %1876 = vmatprep.subr.bf16.mxu0 0
        %1877 = vmatpush2.bf16.msra.mxu0 0
        %1878 = vmatprep.mubr.bf16.mxu0 0
        %1879 = vmatmul.mubr.bf16.gmra.mxu0 %v1841
        %v1880 = vpop.f32.mrf.mxu0
        %v1881 = vadd.f32 0.0, %v1880
        %v1882 = vpop.f32.mrf.mxu0
        %v1883 = vpop.f32.mrf.mxu0
        %v1884 = vpop.f32.mrf.mxu0
        %1885 = vdwg.mxu0
        %1887 = vrot.lane.b32.xlu0 %v1661, 16
        %v1888 = vpop.permute.xlu0 %1887
        %1891 = vrot.lane.b32.xlu0 %v1771, 32
        %v1892 = vpop.permute.xlu0 %1891
        %1895 = vrot.lane.b32.xlu0 %v1881, 48
        %v1896 = vpop.permute.xlu0 %1895
        %v1898 = vsel %vm991, %v1551, %v1888
        %v1899 = vsel %vm1445, %v1898, %v1892
        %v1900 = vsel %vm1447, %v1899, %v1896
        %v1901 = vrot.slane %v988, 2
        %v1902 = vrot.slane %v989, 2
        %v1904 = vsel %vm991, %v1901, 0
        %v1907 = vsel %vm991, %v1902, 0
        %1909 = vmatprep.subr.bf16.mxu0 0
        %1910 = vmatpush1.bf16.xpose.msra.mxu0 0
        %1911 = vmatprep.subr.bf16.mxu0 0
        %1912 = vmatpush1.bf16.xpose.msra.mxu0 0
        %1913 = vmatprep.subr.bf16.mxu0 0
        %1914 = vmatpush1.bf16.xpose.msra.mxu0 0
        %1915 = vmatprep.subr.bf16.mxu0 0
        %1916 = vmatpush1.bf16.xpose.msra.mxu0 0
        %1917 = vmatprep.subr.bf16.mxu0 0
        %1918 = vmatpush1.bf16.xpose.msra.mxu0 0
        %1919 = vmatprep.subr.bf16.mxu0 0
        %1920 = vmatpush1.bf16.xpose.msra.mxu0 0
        %1921 = vmatprep.subr.bf16.mxu0 0
        %1922 = vmatpush1.bf16.xpose.msra.mxu0 0
        %1923 = vmatprep.subr.bf16.mxu0 0
        %1924 = vmatpush1.bf16.xpose.msra.mxu0 %v1907
        %1925 = vmatprep.subr.bf16.mxu0 0
        %1926 = vmatpush2.bf16.xpose.msra.mxu0 0
        %1927 = vmatprep.subr.bf16.mxu0 0
        %1928 = vmatpush2.bf16.xpose.msra.mxu0 0
        %1929 = vmatprep.subr.bf16.mxu0 0
        %1930 = vmatpush2.bf16.xpose.msra.mxu0 0
        %1931 = vmatprep.subr.bf16.mxu0 0
        %1932 = vmatpush2.bf16.xpose.msra.mxu0 0
        %1933 = vmatprep.subr.bf16.mxu0 0
        %1934 = vmatpush2.bf16.xpose.msra.mxu0 0
        %1935 = vmatprep.subr.bf16.mxu0 0
        %1936 = vmatpush2.bf16.xpose.msra.mxu0 0
        %1937 = vmatprep.subr.bf16.mxu0 0
        %1938 = vmatpush2.bf16.xpose.msra.mxu0 0
        %1939 = vmatprep.subr.bf16.mxu0 0
        %1940 = vmatpush2.bf16.xpose.msra.mxu0 0
        %1941 = vmatprep.mubr.bf16.mxu0 0
        %1942 = vmatmul.mubr.bf16.gmra.mxu0 %v1904
        %v1943 = vpop.f32.mrf.mxu0
        %v1944 = vadd.f32 0.0, %v1943
        %v1945 = vpop.f32.mrf.mxu0
        %v1946 = vpop.f32.mrf.mxu0
        %v1947 = vpop.f32.mrf.mxu0
        %1948 = vdwg.mxu0
        %v1949 = vsel %vm1038, %v1944, -inf
        %1950 = vmax.xlane.f32.xlu0 %v1949
        %v1951 = vpop.xlane.xlu0 %1950
        %v1952 = vsub.f32 %v1944, %v1951
        %v1953 = vmul.f32 %v1952, 1.442695
        %v1954 = vpow.pop %v1953
        %v1955 = vsel %vm1038, %v1954, 0.0
        %1956 = vadd.xlane.f32.xlu0 %v1955
        %v1957 = vpop.xlane.xlu0 %1956
        %v1958 = vrcp.pop %v1957
        %v1959 = vmul.f32 %v1954, %v1958
        %v1960 = vpack.c.bf16 %v1959, %v1959
        %v1961 = vrot.slane %v990, 2
        %v1963 = vsel %vm1051, %v1960, 0
        %v1966 = vsel %vm1055, %v1961, 0
        %1968 = vmatprep.subr.bf16.mxu0 0
        %1969 = vmatpush1.bf16.msra.mxu0 0
        %1970 = vmatprep.subr.bf16.mxu0 0
        %1971 = vmatpush1.bf16.msra.mxu0 0
        %1972 = vmatprep.subr.bf16.mxu0 0
        %1973 = vmatpush1.bf16.msra.mxu0 0
        %1974 = vmatprep.subr.bf16.mxu0 0
        %1975 = vmatpush1.bf16.msra.mxu0 0
        %1976 = vmatprep.subr.bf16.mxu0 0
        %1977 = vmatpush1.bf16.msra.mxu0 0
        %1978 = vmatprep.subr.bf16.mxu0 0
        %1979 = vmatpush1.bf16.msra.mxu0 0
        %1980 = vmatprep.subr.bf16.mxu0 0
        %1981 = vmatpush1.bf16.msra.mxu0 0
        %1982 = vmatprep.subr.bf16.mxu0 0
        %1983 = vmatpush1.bf16.msra.mxu0 %v1966
        %1984 = vmatprep.subr.bf16.mxu0 0
        %1985 = vmatpush2.bf16.msra.mxu0 0
        %1986 = vmatprep.subr.bf16.mxu0 0
        %1987 = vmatpush2.bf16.msra.mxu0 0
        %1988 = vmatprep.subr.bf16.mxu0 0
        %1989 = vmatpush2.bf16.msra.mxu0 0
        %1990 = vmatprep.subr.bf16.mxu0 0
        %1991 = vmatpush2.bf16.msra.mxu0 0
        %1992 = vmatprep.subr.bf16.mxu0 0
        %1993 = vmatpush2.bf16.msra.mxu0 0
        %1994 = vmatprep.subr.bf16.mxu0 0
        %1995 = vmatpush2.bf16.msra.mxu0 0
        %1996 = vmatprep.subr.bf16.mxu0 0
        %1997 = vmatpush2.bf16.msra.mxu0 0
        %1998 = vmatprep.subr.bf16.mxu0 0
        %1999 = vmatpush2.bf16.msra.mxu0 0
        %2000 = vmatprep.mubr.bf16.mxu0 0
        %2001 = vmatmul.mubr.bf16.gmra.mxu0 %v1963
        %v2002 = vpop.f32.mrf.mxu0
        %v2003 = vadd.f32 0.0, %v2002
        %v2004 = vpop.f32.mrf.mxu0
        %v2005 = vpop.f32.mrf.mxu0
        %v2006 = vpop.f32.mrf.mxu0
        %2007 = vdwg.mxu0
        %2008 = vrot.lane.b32.xlu0 %v1901, 112
        %v2009 = vpop.permute.xlu0 %2008
        %2010 = vrot.lane.b32.xlu0 %v1902, 112
        %v2011 = vpop.permute.xlu0 %2010
        %v2013 = vsel %vm991, %v2009, 0
        %v2016 = vsel %vm991, %v2011, 0
        %2018 = vmatprep.subr.bf16.mxu0 0
        %2019 = vmatpush1.bf16.xpose.msra.mxu0 0
        %2020 = vmatprep.subr.bf16.mxu0 0
        %2021 = vmatpush1.bf16.xpose.msra.mxu0 0
        %2022 = vmatprep.subr.bf16.mxu0 0
        %2023 = vmatpush1.bf16.xpose.msra.mxu0 0
        %2024 = vmatprep.subr.bf16.mxu0 0
        %2025 = vmatpush1.bf16.xpose.msra.mxu0 0
        %2026 = vmatprep.subr.bf16.mxu0 0
        %2027 = vmatpush1.bf16.xpose.msra.mxu0 0
        %2028 = vmatprep.subr.bf16.mxu0 0
        %2029 = vmatpush1.bf16.xpose.msra.mxu0 0
        %2030 = vmatprep.subr.bf16.mxu0 0
        %2031 = vmatpush1.bf16.xpose.msra.mxu0 0
        %2032 = vmatprep.subr.bf16.mxu0 0
        %2033 = vmatpush1.bf16.xpose.msra.mxu0 %v2016
        %2034 = vmatprep.subr.bf16.mxu0 0
        %2035 = vmatpush2.bf16.xpose.msra.mxu0 0
        %2036 = vmatprep.subr.bf16.mxu0 0
        %2037 = vmatpush2.bf16.xpose.msra.mxu0 0
        %2038 = vmatprep.subr.bf16.mxu0 0
        %2039 = vmatpush2.bf16.xpose.msra.mxu0 0
        %2040 = vmatprep.subr.bf16.mxu0 0
        %2041 = vmatpush2.bf16.xpose.msra.mxu0 0
        %2042 = vmatprep.subr.bf16.mxu0 0
        %2043 = vmatpush2.bf16.xpose.msra.mxu0 0
        %2044 = vmatprep.subr.bf16.mxu0 0
        %2045 = vmatpush2.bf16.xpose.msra.mxu0 0
        %2046 = vmatprep.subr.bf16.mxu0 0
        %2047 = vmatpush2.bf16.xpose.msra.mxu0 0
        %2048 = vmatprep.subr.bf16.mxu0 0
        %2049 = vmatpush2.bf16.xpose.msra.mxu0 0
        %2050 = vmatprep.mubr.bf16.mxu0 0
        %2051 = vmatmul.mubr.bf16.gmra.mxu0 %v2013
        %v2052 = vpop.f32.mrf.mxu0
        %v2053 = vadd.f32 0.0, %v2052
        %v2054 = vpop.f32.mrf.mxu0
        %v2055 = vpop.f32.mrf.mxu0
        %v2056 = vpop.f32.mrf.mxu0
        %2057 = vdwg.mxu0
        %v2058 = vsel %vm1038, %v2053, -inf
        %2059 = vmax.xlane.f32.xlu0 %v2058
        %v2060 = vpop.xlane.xlu0 %2059
        %v2061 = vsub.f32 %v2053, %v2060
        %v2062 = vmul.f32 %v2061, 1.442695
        %v2063 = vpow.pop %v2062
        %v2064 = vsel %vm1038, %v2063, 0.0
        %2065 = vadd.xlane.f32.xlu0 %v2064
        %v2066 = vpop.xlane.xlu0 %2065
        %v2067 = vrcp.pop %v2066
        %v2068 = vmul.f32 %v2063, %v2067
        %v2069 = vpack.c.bf16 %v2068, %v2068
        %2070 = vrot.lane.b32.xlu0 %v1961, 112
        %v2071 = vpop.permute.xlu0 %2070
        %v2073 = vsel %vm1051, %v2069, 0
        %v2076 = vsel %vm1055, %v2071, 0
        %2078 = vmatprep.subr.bf16.mxu0 0
        %2079 = vmatpush1.bf16.msra.mxu0 0
        %2080 = vmatprep.subr.bf16.mxu0 0
        %2081 = vmatpush1.bf16.msra.mxu0 0
        %2082 = vmatprep.subr.bf16.mxu0 0
        %2083 = vmatpush1.bf16.msra.mxu0 0
        %2084 = vmatprep.subr.bf16.mxu0 0
        %2085 = vmatpush1.bf16.msra.mxu0 0
        %2086 = vmatprep.subr.bf16.mxu0 0
        %2087 = vmatpush1.bf16.msra.mxu0 0
        %2088 = vmatprep.subr.bf16.mxu0 0
        %2089 = vmatpush1.bf16.msra.mxu0 0
        %2090 = vmatprep.subr.bf16.mxu0 0
        %2091 = vmatpush1.bf16.msra.mxu0 0
        %2092 = vmatprep.subr.bf16.mxu0 0
        %2093 = vmatpush1.bf16.msra.mxu0 %v2076
        %2094 = vmatprep.subr.bf16.mxu0 0
        %2095 = vmatpush2.bf16.msra.mxu0 0
        %2096 = vmatprep.subr.bf16.mxu0 0
        %2097 = vmatpush2.bf16.msra.mxu0 0
        %2098 = vmatprep.subr.bf16.mxu0 0
        %2099 = vmatpush2.bf16.msra.mxu0 0
        %2100 = vmatprep.subr.bf16.mxu0 0
        %2101 = vmatpush2.bf16.msra.mxu0 0
        %2102 = vmatprep.subr.bf16.mxu0 0
        %2103 = vmatpush2.bf16.msra.mxu0 0
        %2104 = vmatprep.subr.bf16.mxu0 0
        %2105 = vmatpush2.bf16.msra.mxu0 0
        %2106 = vmatprep.subr.bf16.mxu0 0
        %2107 = vmatpush2.bf16.msra.mxu0 0
        %2108 = vmatprep.subr.bf16.mxu0 0
        %2109 = vmatpush2.bf16.msra.mxu0 0
        %2110 = vmatprep.mubr.bf16.mxu0 0
        %2111 = vmatmul.mubr.bf16.gmra.mxu0 %v2073
        %v2112 = vpop.f32.mrf.mxu0
        %v2113 = vadd.f32 0.0, %v2112
        %v2114 = vpop.f32.mrf.mxu0
        %v2115 = vpop.f32.mrf.mxu0
        %v2116 = vpop.f32.mrf.mxu0
        %2117 = vdwg.mxu0
        %2118 = vrot.lane.b32.xlu0 %v1901, 96
        %v2119 = vpop.permute.xlu0 %2118
        %2120 = vrot.lane.b32.xlu0 %v1902, 96
        %v2121 = vpop.permute.xlu0 %2120
        %v2123 = vsel %vm991, %v2119, 0
        %v2126 = vsel %vm991, %v2121, 0
        %2128 = vmatprep.subr.bf16.mxu0 0
        %2129 = vmatpush1.bf16.xpose.msra.mxu0 0
        %2130 = vmatprep.subr.bf16.mxu0 0
        %2131 = vmatpush1.bf16.xpose.msra.mxu0 0
        %2132 = vmatprep.subr.bf16.mxu0 0
        %2133 = vmatpush1.bf16.xpose.msra.mxu0 0
        %2134 = vmatprep.subr.bf16.mxu0 0
        %2135 = vmatpush1.bf16.xpose.msra.mxu0 0
        %2136 = vmatprep.subr.bf16.mxu0 0
        %2137 = vmatpush1.bf16.xpose.msra.mxu0 0
        %2138 = vmatprep.subr.bf16.mxu0 0
        %2139 = vmatpush1.bf16.xpose.msra.mxu0 0
        %2140 = vmatprep.subr.bf16.mxu0 0
        %2141 = vmatpush1.bf16.xpose.msra.mxu0 0
        %2142 = vmatprep.subr.bf16.mxu0 0
        %2143 = vmatpush1.bf16.xpose.msra.mxu0 %v2126
        %2144 = vmatprep.subr.bf16.mxu0 0
        %2145 = vmatpush2.bf16.xpose.msra.mxu0 0
        %2146 = vmatprep.subr.bf16.mxu0 0
        %2147 = vmatpush2.bf16.xpose.msra.mxu0 0
        %2148 = vmatprep.subr.bf16.mxu0 0
        %2149 = vmatpush2.bf16.xpose.msra.mxu0 0
        %2150 = vmatprep.subr.bf16.mxu0 0
        %2151 = vmatpush2.bf16.xpose.msra.mxu0 0
        %2152 = vmatprep.subr.bf16.mxu0 0
        %2153 = vmatpush2.bf16.xpose.msra.mxu0 0
        %2154 = vmatprep.subr.bf16.mxu0 0
        %2155 = vmatpush2.bf16.xpose.msra.mxu0 0
        %2156 = vmatprep.subr.bf16.mxu0 0
        %2157 = vmatpush2.bf16.xpose.msra.mxu0 0
        %2158 = vmatprep.subr.bf16.mxu0 0
        %2159 = vmatpush2.bf16.xpose.msra.mxu0 0
        %2160 = vmatprep.mubr.bf16.mxu0 0
        %2161 = vmatmul.mubr.bf16.gmra.mxu0 %v2123
        %v2162 = vpop.f32.mrf.mxu0
        %v2163 = vadd.f32 0.0, %v2162
        %v2164 = vpop.f32.mrf.mxu0
        %v2165 = vpop.f32.mrf.mxu0
        %v2166 = vpop.f32.mrf.mxu0
        %2167 = vdwg.mxu0
        %v2168 = vsel %vm1038, %v2163, -inf
        %2169 = vmax.xlane.f32.xlu0 %v2168
        %v2170 = vpop.xlane.xlu0 %2169
        %v2171 = vsub.f32 %v2163, %v2170
        %v2172 = vmul.f32 %v2171, 1.442695
        %v2173 = vpow.pop %v2172
        %v2174 = vsel %vm1038, %v2173, 0.0
        %2175 = vadd.xlane.f32.xlu0 %v2174
        %v2176 = vpop.xlane.xlu0 %2175
        %v2177 = vrcp.pop %v2176
        %v2178 = vmul.f32 %v2173, %v2177
        %v2179 = vpack.c.bf16 %v2178, %v2178
        %2180 = vrot.lane.b32.xlu0 %v1961, 96
        %v2181 = vpop.permute.xlu0 %2180
        %v2183 = vsel %vm1051, %v2179, 0
        %v2186 = vsel %vm1055, %v2181, 0
        %2188 = vmatprep.subr.bf16.mxu0 0
        %2189 = vmatpush1.bf16.msra.mxu0 0
        %2190 = vmatprep.subr.bf16.mxu0 0
        %2191 = vmatpush1.bf16.msra.mxu0 0
        %2192 = vmatprep.subr.bf16.mxu0 0
        %2193 = vmatpush1.bf16.msra.mxu0 0
        %2194 = vmatprep.subr.bf16.mxu0 0
        %2195 = vmatpush1.bf16.msra.mxu0 0
        %2196 = vmatprep.subr.bf16.mxu0 0
        %2197 = vmatpush1.bf16.msra.mxu0 0
        %2198 = vmatprep.subr.bf16.mxu0 0
        %2199 = vmatpush1.bf16.msra.mxu0 0
        %2200 = vmatprep.subr.bf16.mxu0 0
        %2201 = vmatpush1.bf16.msra.mxu0 0
        %2202 = vmatprep.subr.bf16.mxu0 0
        %2203 = vmatpush1.bf16.msra.mxu0 %v2186
        %2204 = vmatprep.subr.bf16.mxu0 0
        %2205 = vmatpush2.bf16.msra.mxu0 0
        %2206 = vmatprep.subr.bf16.mxu0 0
        %2207 = vmatpush2.bf16.msra.mxu0 0
        %2208 = vmatprep.subr.bf16.mxu0 0
        %2209 = vmatpush2.bf16.msra.mxu0 0
        %2210 = vmatprep.subr.bf16.mxu0 0
        %2211 = vmatpush2.bf16.msra.mxu0 0
        %2212 = vmatprep.subr.bf16.mxu0 0
        %2213 = vmatpush2.bf16.msra.mxu0 0
        %2214 = vmatprep.subr.bf16.mxu0 0
        %2215 = vmatpush2.bf16.msra.mxu0 0
        %2216 = vmatprep.subr.bf16.mxu0 0
        %2217 = vmatpush2.bf16.msra.mxu0 0
        %2218 = vmatprep.subr.bf16.mxu0 0
        %2219 = vmatpush2.bf16.msra.mxu0 0
        %2220 = vmatprep.mubr.bf16.mxu0 0
        %2221 = vmatmul.mubr.bf16.gmra.mxu0 %v2183
        %v2222 = vpop.f32.mrf.mxu0
        %v2223 = vadd.f32 0.0, %v2222
        %v2224 = vpop.f32.mrf.mxu0
        %v2225 = vpop.f32.mrf.mxu0
        %v2226 = vpop.f32.mrf.mxu0
        %2227 = vdwg.mxu0
        %2228 = vrot.lane.b32.xlu0 %v1901, 80
        %v2229 = vpop.permute.xlu0 %2228
        %2230 = vrot.lane.b32.xlu0 %v1902, 80
        %v2231 = vpop.permute.xlu0 %2230
        %v2233 = vsel %vm991, %v2229, 0
        %v2236 = vsel %vm991, %v2231, 0
        %2238 = vmatprep.subr.bf16.mxu0 0
        %2239 = vmatpush1.bf16.xpose.msra.mxu0 0
        %2240 = vmatprep.subr.bf16.mxu0 0
        %2241 = vmatpush1.bf16.xpose.msra.mxu0 0
        %2242 = vmatprep.subr.bf16.mxu0 0
        %2243 = vmatpush1.bf16.xpose.msra.mxu0 0
        %2244 = vmatprep.subr.bf16.mxu0 0
        %2245 = vmatpush1.bf16.xpose.msra.mxu0 0
        %2246 = vmatprep.subr.bf16.mxu0 0
        %2247 = vmatpush1.bf16.xpose.msra.mxu0 0
        %2248 = vmatprep.subr.bf16.mxu0 0
        %2249 = vmatpush1.bf16.xpose.msra.mxu0 0
        %2250 = vmatprep.subr.bf16.mxu0 0
        %2251 = vmatpush1.bf16.xpose.msra.mxu0 0
        %2252 = vmatprep.subr.bf16.mxu0 0
        %2253 = vmatpush1.bf16.xpose.msra.mxu0 %v2236
        %2254 = vmatprep.subr.bf16.mxu0 0
        %2255 = vmatpush2.bf16.xpose.msra.mxu0 0
        %2256 = vmatprep.subr.bf16.mxu0 0
        %2257 = vmatpush2.bf16.xpose.msra.mxu0 0
        %2258 = vmatprep.subr.bf16.mxu0 0
        %2259 = vmatpush2.bf16.xpose.msra.mxu0 0
        %2260 = vmatprep.subr.bf16.mxu0 0
        %2261 = vmatpush2.bf16.xpose.msra.mxu0 0
        %2262 = vmatprep.subr.bf16.mxu0 0
        %2263 = vmatpush2.bf16.xpose.msra.mxu0 0
        %2264 = vmatprep.subr.bf16.mxu0 0
        %2265 = vmatpush2.bf16.xpose.msra.mxu0 0
        %2266 = vmatprep.subr.bf16.mxu0 0
        %2267 = vmatpush2.bf16.xpose.msra.mxu0 0
        %2268 = vmatprep.subr.bf16.mxu0 0
        %2269 = vmatpush2.bf16.xpose.msra.mxu0 0
        %2270 = vmatprep.mubr.bf16.mxu0 0
        %2271 = vmatmul.mubr.bf16.gmra.mxu0 %v2233
        %v2272 = vpop.f32.mrf.mxu0
        %v2273 = vadd.f32 0.0, %v2272
        %v2274 = vpop.f32.mrf.mxu0
        %v2275 = vpop.f32.mrf.mxu0
        %v2276 = vpop.f32.mrf.mxu0
        %2277 = vdwg.mxu0
        %v2278 = vsel %vm1038, %v2273, -inf
        %2279 = vmax.xlane.f32.xlu0 %v2278
        %v2280 = vpop.xlane.xlu0 %2279
        %v2281 = vsub.f32 %v2273, %v2280
        %v2282 = vmul.f32 %v2281, 1.442695
        %v2283 = vpow.pop %v2282
        %v2284 = vsel %vm1038, %v2283, 0.0
        %2285 = vadd.xlane.f32.xlu0 %v2284
        %v2286 = vpop.xlane.xlu0 %2285
        %v2287 = vrcp.pop %v2286
        %v2288 = vmul.f32 %v2283, %v2287
        %v2289 = vpack.c.bf16 %v2288, %v2288
        %2290 = vrot.lane.b32.xlu0 %v1961, 80
        %v2291 = vpop.permute.xlu0 %2290
        %v2293 = vsel %vm1051, %v2289, 0
        %v2296 = vsel %vm1055, %v2291, 0
        %2298 = vmatprep.subr.bf16.mxu0 0
        %2299 = vmatpush1.bf16.msra.mxu0 0
        %2300 = vmatprep.subr.bf16.mxu0 0
        %2301 = vmatpush1.bf16.msra.mxu0 0
        %2302 = vmatprep.subr.bf16.mxu0 0
        %2303 = vmatpush1.bf16.msra.mxu0 0
        %2304 = vmatprep.subr.bf16.mxu0 0
        %2305 = vmatpush1.bf16.msra.mxu0 0
        %2306 = vmatprep.subr.bf16.mxu0 0
        %2307 = vmatpush1.bf16.msra.mxu0 0
        %2308 = vmatprep.subr.bf16.mxu0 0
        %2309 = vmatpush1.bf16.msra.mxu0 0
        %2310 = vmatprep.subr.bf16.mxu0 0
        %2311 = vmatpush1.bf16.msra.mxu0 0
        %2312 = vmatprep.subr.bf16.mxu0 0
        %2313 = vmatpush1.bf16.msra.mxu0 %v2296
        %2314 = vmatprep.subr.bf16.mxu0 0
        %2315 = vmatpush2.bf16.msra.mxu0 0
        %2316 = vmatprep.subr.bf16.mxu0 0
        %2317 = vmatpush2.bf16.msra.mxu0 0
        %2318 = vmatprep.subr.bf16.mxu0 0
        %2319 = vmatpush2.bf16.msra.mxu0 0
        %2320 = vmatprep.subr.bf16.mxu0 0
        %2321 = vmatpush2.bf16.msra.mxu0 0
        %2322 = vmatprep.subr.bf16.mxu0 0
        %2323 = vmatpush2.bf16.msra.mxu0 0
        %2324 = vmatprep.subr.bf16.mxu0 0
        %2325 = vmatpush2.bf16.msra.mxu0 0
        %2326 = vmatprep.subr.bf16.mxu0 0
        %2327 = vmatpush2.bf16.msra.mxu0 0
        %2328 = vmatprep.subr.bf16.mxu0 0
        %2329 = vmatpush2.bf16.msra.mxu0 0
        %2330 = vmatprep.mubr.bf16.mxu0 0
        %2331 = vmatmul.mubr.bf16.gmra.mxu0 %v2293
        %v2332 = vpop.f32.mrf.mxu0
        %v2333 = vadd.f32 0.0, %v2332
        %v2334 = vpop.f32.mrf.mxu0
        %v2335 = vpop.f32.mrf.mxu0
        %v2336 = vpop.f32.mrf.mxu0
        %2337 = vdwg.mxu0
        %2339 = vrot.lane.b32.xlu0 %v2113, 16
        %v2340 = vpop.permute.xlu0 %2339
        %2343 = vrot.lane.b32.xlu0 %v2223, 32
        %v2344 = vpop.permute.xlu0 %2343
        %2347 = vrot.lane.b32.xlu0 %v2333, 48
        %v2348 = vpop.permute.xlu0 %2347
        %v2350 = vsel %vm991, %v2003, %v2340
        %v2351 = vsel %vm1445, %v2350, %v2344
        %v2352 = vsel %vm1447, %v2351, %v2348
        %v2353 = vrot.slane %v988, 3
        %v2354 = vrot.slane %v989, 3
        %v2356 = vsel %vm991, %v2353, 0
        %v2359 = vsel %vm991, %v2354, 0
        %2361 = vmatprep.subr.bf16.mxu0 0
        %2362 = vmatpush1.bf16.xpose.msra.mxu0 0
        %2363 = vmatprep.subr.bf16.mxu0 0
        %2364 = vmatpush1.bf16.xpose.msra.mxu0 0
        %2365 = vmatprep.subr.bf16.mxu0 0
        %2366 = vmatpush1.bf16.xpose.msra.mxu0 0
        %2367 = vmatprep.subr.bf16.mxu0 0
        %2368 = vmatpush1.bf16.xpose.msra.mxu0 0
        %2369 = vmatprep.subr.bf16.mxu0 0
        %2370 = vmatpush1.bf16.xpose.msra.mxu0 0
        %2371 = vmatprep.subr.bf16.mxu0 0
        %2372 = vmatpush1.bf16.xpose.msra.mxu0 0
        %2373 = vmatprep.subr.bf16.mxu0 0
        %2374 = vmatpush1.bf16.xpose.msra.mxu0 0
        %2375 = vmatprep.subr.bf16.mxu0 0
        %2376 = vmatpush1.bf16.xpose.msra.mxu0 %v2359
        %2377 = vmatprep.subr.bf16.mxu0 0
        %2378 = vmatpush2.bf16.xpose.msra.mxu0 0
        %2379 = vmatprep.subr.bf16.mxu0 0
        %2380 = vmatpush2.bf16.xpose.msra.mxu0 0
        %2381 = vmatprep.subr.bf16.mxu0 0
        %2382 = vmatpush2.bf16.xpose.msra.mxu0 0
        %2383 = vmatprep.subr.bf16.mxu0 0
        %2384 = vmatpush2.bf16.xpose.msra.mxu0 0
        %2385 = vmatprep.subr.bf16.mxu0 0
        %2386 = vmatpush2.bf16.xpose.msra.mxu0 0
        %2387 = vmatprep.subr.bf16.mxu0 0
        %2388 = vmatpush2.bf16.xpose.msra.mxu0 0
        %2389 = vmatprep.subr.bf16.mxu0 0
        %2390 = vmatpush2.bf16.xpose.msra.mxu0 0
        %2391 = vmatprep.subr.bf16.mxu0 0
        %2392 = vmatpush2.bf16.xpose.msra.mxu0 0
        %2393 = vmatprep.mubr.bf16.mxu0 0
        %2394 = vmatmul.mubr.bf16.gmra.mxu0 %v2356
        %v2395 = vpop.f32.mrf.mxu0
        %v2396 = vadd.f32 0.0, %v2395
        %v2397 = vpop.f32.mrf.mxu0
        %v2398 = vpop.f32.mrf.mxu0
        %v2399 = vpop.f32.mrf.mxu0
        %2400 = vdwg.mxu0
        %v2401 = vsel %vm1038, %v2396, -inf
        %2402 = vmax.xlane.f32.xlu0 %v2401
        %v2403 = vpop.xlane.xlu0 %2402
        %v2404 = vsub.f32 %v2396, %v2403
        %v2405 = vmul.f32 %v2404, 1.442695
        %v2406 = vpow.pop %v2405
        %v2407 = vsel %vm1038, %v2406, 0.0
        %2408 = vadd.xlane.f32.xlu0 %v2407
        %v2409 = vpop.xlane.xlu0 %2408
        %v2410 = vrcp.pop %v2409
        %v2411 = vmul.f32 %v2406, %v2410
        %v2412 = vpack.c.bf16 %v2411, %v2411
        %v2413 = vrot.slane %v990, 3
        %v2415 = vsel %vm1051, %v2412, 0
        %v2418 = vsel %vm1055, %v2413, 0
        %2420 = vmatprep.subr.bf16.mxu0 0
        %2421 = vmatpush1.bf16.msra.mxu0 0
        %2422 = vmatprep.subr.bf16.mxu0 0
        %2423 = vmatpush1.bf16.msra.mxu0 0
        %2424 = vmatprep.subr.bf16.mxu0 0
        %2425 = vmatpush1.bf16.msra.mxu0 0
        %2426 = vmatprep.subr.bf16.mxu0 0
        %2427 = vmatpush1.bf16.msra.mxu0 0
        %2428 = vmatprep.subr.bf16.mxu0 0
        %2429 = vmatpush1.bf16.msra.mxu0 0
        %2430 = vmatprep.subr.bf16.mxu0 0
        %2431 = vmatpush1.bf16.msra.mxu0 0
        %2432 = vmatprep.subr.bf16.mxu0 0
        %2433 = vmatpush1.bf16.msra.mxu0 0
        %2434 = vmatprep.subr.bf16.mxu0 0
        %2435 = vmatpush1.bf16.msra.mxu0 %v2418
        %2436 = vmatprep.subr.bf16.mxu0 0
        %2437 = vmatpush2.bf16.msra.mxu0 0
        %2438 = vmatprep.subr.bf16.mxu0 0
        %2439 = vmatpush2.bf16.msra.mxu0 0
        %2440 = vmatprep.subr.bf16.mxu0 0
        %2441 = vmatpush2.bf16.msra.mxu0 0
        %2442 = vmatprep.subr.bf16.mxu0 0
        %2443 = vmatpush2.bf16.msra.mxu0 0
        %2444 = vmatprep.subr.bf16.mxu0 0
        %2445 = vmatpush2.bf16.msra.mxu0 0
        %2446 = vmatprep.subr.bf16.mxu0 0
        %2447 = vmatpush2.bf16.msra.mxu0 0
        %2448 = vmatprep.subr.bf16.mxu0 0
        %2449 = vmatpush2.bf16.msra.mxu0 0
        %2450 = vmatprep.subr.bf16.mxu0 0
        %2451 = vmatpush2.bf16.msra.mxu0 0
        %2452 = vmatprep.mubr.bf16.mxu0 0
        %2453 = vmatmul.mubr.bf16.gmra.mxu0 %v2415
        %v2454 = vpop.f32.mrf.mxu0
        %v2455 = vadd.f32 0.0, %v2454
        %v2456 = vpop.f32.mrf.mxu0
        %v2457 = vpop.f32.mrf.mxu0
        %v2458 = vpop.f32.mrf.mxu0
        %2459 = vdwg.mxu0
        %2460 = vrot.lane.b32.xlu0 %v2353, 112
        %v2461 = vpop.permute.xlu0 %2460
        %2462 = vrot.lane.b32.xlu0 %v2354, 112
        %v2463 = vpop.permute.xlu0 %2462
        %v2465 = vsel %vm991, %v2461, 0
        %v2468 = vsel %vm991, %v2463, 0
        %2470 = vmatprep.subr.bf16.mxu0 0
        %2471 = vmatpush1.bf16.xpose.msra.mxu0 0
        %2472 = vmatprep.subr.bf16.mxu0 0
        %2473 = vmatpush1.bf16.xpose.msra.mxu0 0
        %2474 = vmatprep.subr.bf16.mxu0 0
        %2475 = vmatpush1.bf16.xpose.msra.mxu0 0
        %2476 = vmatprep.subr.bf16.mxu0 0
        %2477 = vmatpush1.bf16.xpose.msra.mxu0 0
        %2478 = vmatprep.subr.bf16.mxu0 0
        %2479 = vmatpush1.bf16.xpose.msra.mxu0 0
        %2480 = vmatprep.subr.bf16.mxu0 0
        %2481 = vmatpush1.bf16.xpose.msra.mxu0 0
        %2482 = vmatprep.subr.bf16.mxu0 0
        %2483 = vmatpush1.bf16.xpose.msra.mxu0 0
        %2484 = vmatprep.subr.bf16.mxu0 0
        %2485 = vmatpush1.bf16.xpose.msra.mxu0 %v2468
        %2486 = vmatprep.subr.bf16.mxu0 0
        %2487 = vmatpush2.bf16.xpose.msra.mxu0 0
        %2488 = vmatprep.subr.bf16.mxu0 0
        %2489 = vmatpush2.bf16.xpose.msra.mxu0 0
        %2490 = vmatprep.subr.bf16.mxu0 0
        %2491 = vmatpush2.bf16.xpose.msra.mxu0 0
        %2492 = vmatprep.subr.bf16.mxu0 0
        %2493 = vmatpush2.bf16.xpose.msra.mxu0 0
        %2494 = vmatprep.subr.bf16.mxu0 0
        %2495 = vmatpush2.bf16.xpose.msra.mxu0 0
        %2496 = vmatprep.subr.bf16.mxu0 0
        %2497 = vmatpush2.bf16.xpose.msra.mxu0 0
        %2498 = vmatprep.subr.bf16.mxu0 0
        %2499 = vmatpush2.bf16.xpose.msra.mxu0 0
        %2500 = vmatprep.subr.bf16.mxu0 0
        %2501 = vmatpush2.bf16.xpose.msra.mxu0 0
        %2502 = vmatprep.mubr.bf16.mxu0 0
        %2503 = vmatmul.mubr.bf16.gmra.mxu0 %v2465
        %v2504 = vpop.f32.mrf.mxu0
        %v2505 = vadd.f32 0.0, %v2504
        %v2506 = vpop.f32.mrf.mxu0
        %v2507 = vpop.f32.mrf.mxu0
        %v2508 = vpop.f32.mrf.mxu0
        %2509 = vdwg.mxu0
        %v2510 = vsel %vm1038, %v2505, -inf
        %2511 = vmax.xlane.f32.xlu0 %v2510
        %v2512 = vpop.xlane.xlu0 %2511
        %v2513 = vsub.f32 %v2505, %v2512
        %v2514 = vmul.f32 %v2513, 1.442695
        %v2515 = vpow.pop %v2514
        %v2516 = vsel %vm1038, %v2515, 0.0
        %2517 = vadd.xlane.f32.xlu0 %v2516
        %v2518 = vpop.xlane.xlu0 %2517
        %v2519 = vrcp.pop %v2518
        %v2520 = vmul.f32 %v2515, %v2519
        %v2521 = vpack.c.bf16 %v2520, %v2520
        %2522 = vrot.lane.b32.xlu0 %v2413, 112
        %v2523 = vpop.permute.xlu0 %2522
        %v2525 = vsel %vm1051, %v2521, 0
        %v2528 = vsel %vm1055, %v2523, 0
        %2530 = vmatprep.subr.bf16.mxu0 0
        %2531 = vmatpush1.bf16.msra.mxu0 0
        %2532 = vmatprep.subr.bf16.mxu0 0
        %2533 = vmatpush1.bf16.msra.mxu0 0
        %2534 = vmatprep.subr.bf16.mxu0 0
        %2535 = vmatpush1.bf16.msra.mxu0 0
        %2536 = vmatprep.subr.bf16.mxu0 0
        %2537 = vmatpush1.bf16.msra.mxu0 0
        %2538 = vmatprep.subr.bf16.mxu0 0
        %2539 = vmatpush1.bf16.msra.mxu0 0
        %2540 = vmatprep.subr.bf16.mxu0 0
        %2541 = vmatpush1.bf16.msra.mxu0 0
        %2542 = vmatprep.subr.bf16.mxu0 0
        %2543 = vmatpush1.bf16.msra.mxu0 0
        %2544 = vmatprep.subr.bf16.mxu0 0
        %2545 = vmatpush1.bf16.msra.mxu0 %v2528
        %2546 = vmatprep.subr.bf16.mxu0 0
        %2547 = vmatpush2.bf16.msra.mxu0 0
        %2548 = vmatprep.subr.bf16.mxu0 0
        %2549 = vmatpush2.bf16.msra.mxu0 0
        %2550 = vmatprep.subr.bf16.mxu0 0
        %2551 = vmatpush2.bf16.msra.mxu0 0
        %2552 = vmatprep.subr.bf16.mxu0 0
        %2553 = vmatpush2.bf16.msra.mxu0 0
        %2554 = vmatprep.subr.bf16.mxu0 0
        %2555 = vmatpush2.bf16.msra.mxu0 0
        %2556 = vmatprep.subr.bf16.mxu0 0
        %2557 = vmatpush2.bf16.msra.mxu0 0
        %2558 = vmatprep.subr.bf16.mxu0 0
        %2559 = vmatpush2.bf16.msra.mxu0 0
        %2560 = vmatprep.subr.bf16.mxu0 0
        %2561 = vmatpush2.bf16.msra.mxu0 0
        %2562 = vmatprep.mubr.bf16.mxu0 0
        %2563 = vmatmul.mubr.bf16.gmra.mxu0 %v2525
        %v2564 = vpop.f32.mrf.mxu0
        %v2565 = vadd.f32 0.0, %v2564
        %v2566 = vpop.f32.mrf.mxu0
        %v2567 = vpop.f32.mrf.mxu0
        %v2568 = vpop.f32.mrf.mxu0
        %2569 = vdwg.mxu0
        %2570 = vrot.lane.b32.xlu0 %v2353, 96
        %v2571 = vpop.permute.xlu0 %2570
        %2572 = vrot.lane.b32.xlu0 %v2354, 96
        %v2573 = vpop.permute.xlu0 %2572
        %v2575 = vsel %vm991, %v2571, 0
        %v2578 = vsel %vm991, %v2573, 0
        %2580 = vmatprep.subr.bf16.mxu0 0
        %2581 = vmatpush1.bf16.xpose.msra.mxu0 0
        %2582 = vmatprep.subr.bf16.mxu0 0
        %2583 = vmatpush1.bf16.xpose.msra.mxu0 0
        %2584 = vmatprep.subr.bf16.mxu0 0
        %2585 = vmatpush1.bf16.xpose.msra.mxu0 0
        %2586 = vmatprep.subr.bf16.mxu0 0
        %2587 = vmatpush1.bf16.xpose.msra.mxu0 0
        %2588 = vmatprep.subr.bf16.mxu0 0
        %2589 = vmatpush1.bf16.xpose.msra.mxu0 0
        %2590 = vmatprep.subr.bf16.mxu0 0
        %2591 = vmatpush1.bf16.xpose.msra.mxu0 0
        %2592 = vmatprep.subr.bf16.mxu0 0
        %2593 = vmatpush1.bf16.xpose.msra.mxu0 0
        %2594 = vmatprep.subr.bf16.mxu0 0
        %2595 = vmatpush1.bf16.xpose.msra.mxu0 %v2578
        %2596 = vmatprep.subr.bf16.mxu0 0
        %2597 = vmatpush2.bf16.xpose.msra.mxu0 0
        %2598 = vmatprep.subr.bf16.mxu0 0
        %2599 = vmatpush2.bf16.xpose.msra.mxu0 0
        %2600 = vmatprep.subr.bf16.mxu0 0
        %2601 = vmatpush2.bf16.xpose.msra.mxu0 0
        %2602 = vmatprep.subr.bf16.mxu0 0
        %2603 = vmatpush2.bf16.xpose.msra.mxu0 0
        %2604 = vmatprep.subr.bf16.mxu0 0
        %2605 = vmatpush2.bf16.xpose.msra.mxu0 0
        %2606 = vmatprep.subr.bf16.mxu0 0
        %2607 = vmatpush2.bf16.xpose.msra.mxu0 0
        %2608 = vmatprep.subr.bf16.mxu0 0
        %2609 = vmatpush2.bf16.xpose.msra.mxu0 0
        %2610 = vmatprep.subr.bf16.mxu0 0
        %2611 = vmatpush2.bf16.xpose.msra.mxu0 0
        %2612 = vmatprep.mubr.bf16.mxu0 0
        %2613 = vmatmul.mubr.bf16.gmra.mxu0 %v2575
        %v2614 = vpop.f32.mrf.mxu0
        %v2615 = vadd.f32 0.0, %v2614
        %v2616 = vpop.f32.mrf.mxu0
        %v2617 = vpop.f32.mrf.mxu0
        %v2618 = vpop.f32.mrf.mxu0
        %2619 = vdwg.mxu0
        %v2620 = vsel %vm1038, %v2615, -inf
        %2621 = vmax.xlane.f32.xlu0 %v2620
        %v2622 = vpop.xlane.xlu0 %2621
        %v2623 = vsub.f32 %v2615, %v2622
        %v2624 = vmul.f32 %v2623, 1.442695
        %v2625 = vpow.pop %v2624
        %v2626 = vsel %vm1038, %v2625, 0.0
        %2627 = vadd.xlane.f32.xlu0 %v2626
        %v2628 = vpop.xlane.xlu0 %2627
        %v2629 = vrcp.pop %v2628
        %v2630 = vmul.f32 %v2625, %v2629
        %v2631 = vpack.c.bf16 %v2630, %v2630
        %2632 = vrot.lane.b32.xlu0 %v2413, 96
        %v2633 = vpop.permute.xlu0 %2632
        %v2635 = vsel %vm1051, %v2631, 0
        %v2638 = vsel %vm1055, %v2633, 0
        %2640 = vmatprep.subr.bf16.mxu0 0
        %2641 = vmatpush1.bf16.msra.mxu0 0
        %2642 = vmatprep.subr.bf16.mxu0 0
        %2643 = vmatpush1.bf16.msra.mxu0 0
        %2644 = vmatprep.subr.bf16.mxu0 0
        %2645 = vmatpush1.bf16.msra.mxu0 0
        %2646 = vmatprep.subr.bf16.mxu0 0
        %2647 = vmatpush1.bf16.msra.mxu0 0
        %2648 = vmatprep.subr.bf16.mxu0 0
        %2649 = vmatpush1.bf16.msra.mxu0 0
        %2650 = vmatprep.subr.bf16.mxu0 0
        %2651 = vmatpush1.bf16.msra.mxu0 0
        %2652 = vmatprep.subr.bf16.mxu0 0
        %2653 = vmatpush1.bf16.msra.mxu0 0
        %2654 = vmatprep.subr.bf16.mxu0 0
        %2655 = vmatpush1.bf16.msra.mxu0 %v2638
        %2656 = vmatprep.subr.bf16.mxu0 0
        %2657 = vmatpush2.bf16.msra.mxu0 0
        %2658 = vmatprep.subr.bf16.mxu0 0
        %2659 = vmatpush2.bf16.msra.mxu0 0
        %2660 = vmatprep.subr.bf16.mxu0 0
        %2661 = vmatpush2.bf16.msra.mxu0 0
        %2662 = vmatprep.subr.bf16.mxu0 0
        %2663 = vmatpush2.bf16.msra.mxu0 0
        %2664 = vmatprep.subr.bf16.mxu0 0
        %2665 = vmatpush2.bf16.msra.mxu0 0
        %2666 = vmatprep.subr.bf16.mxu0 0
        %2667 = vmatpush2.bf16.msra.mxu0 0
        %2668 = vmatprep.subr.bf16.mxu0 0
        %2669 = vmatpush2.bf16.msra.mxu0 0
        %2670 = vmatprep.subr.bf16.mxu0 0
        %2671 = vmatpush2.bf16.msra.mxu0 0
        %2672 = vmatprep.mubr.bf16.mxu0 0
        %2673 = vmatmul.mubr.bf16.gmra.mxu0 %v2635
        %v2674 = vpop.f32.mrf.mxu0
        %v2675 = vadd.f32 0.0, %v2674
        %v2676 = vpop.f32.mrf.mxu0
        %v2677 = vpop.f32.mrf.mxu0
        %v2678 = vpop.f32.mrf.mxu0
        %2679 = vdwg.mxu0
        %2680 = vrot.lane.b32.xlu0 %v2353, 80
        %v2681 = vpop.permute.xlu0 %2680
        %2682 = vrot.lane.b32.xlu0 %v2354, 80
        %v2683 = vpop.permute.xlu0 %2682
        %v2685 = vsel %vm991, %v2681, 0
        %v2688 = vsel %vm991, %v2683, 0
        %2690 = vmatprep.subr.bf16.mxu0 0
        %2691 = vmatpush1.bf16.xpose.msra.mxu0 0
        %2692 = vmatprep.subr.bf16.mxu0 0
        %2693 = vmatpush1.bf16.xpose.msra.mxu0 0
        %2694 = vmatprep.subr.bf16.mxu0 0
        %2695 = vmatpush1.bf16.xpose.msra.mxu0 0
        %2696 = vmatprep.subr.bf16.mxu0 0
        %2697 = vmatpush1.bf16.xpose.msra.mxu0 0
        %2698 = vmatprep.subr.bf16.mxu0 0
        %2699 = vmatpush1.bf16.xpose.msra.mxu0 0
        %2700 = vmatprep.subr.bf16.mxu0 0
        %2701 = vmatpush1.bf16.xpose.msra.mxu0 0
        %2702 = vmatprep.subr.bf16.mxu0 0
        %2703 = vmatpush1.bf16.xpose.msra.mxu0 0
        %2704 = vmatprep.subr.bf16.mxu0 0
        %2705 = vmatpush1.bf16.xpose.msra.mxu0 %v2688
        %2706 = vmatprep.subr.bf16.mxu0 0
        %2707 = vmatpush2.bf16.xpose.msra.mxu0 0
        %2708 = vmatprep.subr.bf16.mxu0 0
        %2709 = vmatpush2.bf16.xpose.msra.mxu0 0
        %2710 = vmatprep.subr.bf16.mxu0 0
        %2711 = vmatpush2.bf16.xpose.msra.mxu0 0
        %2712 = vmatprep.subr.bf16.mxu0 0
        %2713 = vmatpush2.bf16.xpose.msra.mxu0 0
        %2714 = vmatprep.subr.bf16.mxu0 0
        %2715 = vmatpush2.bf16.xpose.msra.mxu0 0
        %2716 = vmatprep.subr.bf16.mxu0 0
        %2717 = vmatpush2.bf16.xpose.msra.mxu0 0
        %2718 = vmatprep.subr.bf16.mxu0 0
        %2719 = vmatpush2.bf16.xpose.msra.mxu0 0
        %2720 = vmatprep.subr.bf16.mxu0 0
        %2721 = vmatpush2.bf16.xpose.msra.mxu0 0
        %2722 = vmatprep.mubr.bf16.mxu0 0
        %2723 = vmatmul.mubr.bf16.gmra.mxu0 %v2685
        %v2724 = vpop.f32.mrf.mxu0
        %v2725 = vadd.f32 0.0, %v2724
        %v2726 = vpop.f32.mrf.mxu0
        %v2727 = vpop.f32.mrf.mxu0
        %v2728 = vpop.f32.mrf.mxu0
        %2729 = vdwg.mxu0
        %v2730 = vsel %vm1038, %v2725, -inf
        %2731 = vmax.xlane.f32.xlu0 %v2730
        %v2732 = vpop.xlane.xlu0 %2731
        %v2733 = vsub.f32 %v2725, %v2732
        %v2734 = vmul.f32 %v2733, 1.442695
        %v2735 = vpow.pop %v2734
        %v2736 = vsel %vm1038, %v2735, 0.0
        %2737 = vadd.xlane.f32.xlu0 %v2736
        %v2738 = vpop.xlane.xlu0 %2737
        %v2739 = vrcp.pop %v2738
        %v2740 = vmul.f32 %v2735, %v2739
        %v2741 = vpack.c.bf16 %v2740, %v2740
        %2742 = vrot.lane.b32.xlu0 %v2413, 80
        %v2743 = vpop.permute.xlu0 %2742
        %v2745 = vsel %vm1051, %v2741, 0
        %v2748 = vsel %vm1055, %v2743, 0
        %2750 = vmatprep.subr.bf16.mxu0 0
        %2751 = vmatpush1.bf16.msra.mxu0 0
        %2752 = vmatprep.subr.bf16.mxu0 0
        %2753 = vmatpush1.bf16.msra.mxu0 0
        %2754 = vmatprep.subr.bf16.mxu0 0
        %2755 = vmatpush1.bf16.msra.mxu0 0
        %2756 = vmatprep.subr.bf16.mxu0 0
        %2757 = vmatpush1.bf16.msra.mxu0 0
        %2758 = vmatprep.subr.bf16.mxu0 0
        %2759 = vmatpush1.bf16.msra.mxu0 0
        %2760 = vmatprep.subr.bf16.mxu0 0
        %2761 = vmatpush1.bf16.msra.mxu0 0
        %2762 = vmatprep.subr.bf16.mxu0 0
        %2763 = vmatpush1.bf16.msra.mxu0 0
        %2764 = vmatprep.subr.bf16.mxu0 0
        %2765 = vmatpush1.bf16.msra.mxu0 %v2748
        %2766 = vmatprep.subr.bf16.mxu0 0
        %2767 = vmatpush2.bf16.msra.mxu0 0
        %2768 = vmatprep.subr.bf16.mxu0 0
        %2769 = vmatpush2.bf16.msra.mxu0 0
        %2770 = vmatprep.subr.bf16.mxu0 0
        %2771 = vmatpush2.bf16.msra.mxu0 0
        %2772 = vmatprep.subr.bf16.mxu0 0
        %2773 = vmatpush2.bf16.msra.mxu0 0
        %2774 = vmatprep.subr.bf16.mxu0 0
        %2775 = vmatpush2.bf16.msra.mxu0 0
        %2776 = vmatprep.subr.bf16.mxu0 0
        %2777 = vmatpush2.bf16.msra.mxu0 0
        %2778 = vmatprep.subr.bf16.mxu0 0
        %2779 = vmatpush2.bf16.msra.mxu0 0
        %2780 = vmatprep.subr.bf16.mxu0 0
        %2781 = vmatpush2.bf16.msra.mxu0 0
        %2782 = vmatprep.mubr.bf16.mxu0 0
        %2783 = vmatmul.mubr.bf16.gmra.mxu0 %v2745
        %v2784 = vpop.f32.mrf.mxu0
        %v2785 = vadd.f32 0.0, %v2784
        %v2786 = vpop.f32.mrf.mxu0
        %v2787 = vpop.f32.mrf.mxu0
        %v2788 = vpop.f32.mrf.mxu0
        %2789 = vdwg.mxu0
        %2791 = vrot.lane.b32.xlu0 %v2565, 16
        %v2792 = vpop.permute.xlu0 %2791
        %2795 = vrot.lane.b32.xlu0 %v2675, 32
        %v2796 = vpop.permute.xlu0 %2795
        %2799 = vrot.lane.b32.xlu0 %v2785, 48
        %v2800 = vpop.permute.xlu0 %2799
        %v2802 = vsel %vm991, %v2455, %v2792
        %v2803 = vsel %vm1445, %v2802, %v2796
        %v2804 = vsel %vm1447, %v2803, %v2800
        %v2806 = vrot.slane %v1900, 6
        %v2809 = vrot.slane %v2352, 4
        %v2812 = vrot.slane %v2804, 2
        %vm2814 = vcmask 1041408
        %v2815 = vsel %vm2814, %v1448, %v2806
        %v2816 = vsel %vm699, %v2815, %v2809
        %vm2817 = vcmask 1045504
        %v2818 = vsel %vm2817, %v2816, %v2812
        %v2819 = vld [vmem:[#allocation5] sm:$0xf]
        %v2820 = vld [vmem:[#allocation5 + $0x4] sm:$0xf]
        %v2821 = vld [vmem:[#allocation5 + $0x8] sm:$0xf]
        %v2822 = vld [vmem:[#allocation5 + $0xc] sm:$0xf]
        %v2823 = vld [vmem:[#allocation5 + $0x10] sm:$0xf]
        %v2824 = vld [vmem:[#allocation5 + $0x14] sm:$0xf]
        %v2825 = vld [vmem:[#allocation5 + $0x18] sm:$0xf]
        %v2826 = vld [vmem:[#allocation5 + $0x1c] sm:$0xf]
        %v2827 = vpack.c.bf16 %v2818, %v2818
        %v2828 = vld [vmem:[%s11] sm:$0x1]
        %v2830 = vlaneseq
        %v2831 = vshrl.u32 %v2830, 7
        %v2832 = vsub.s32 0, %v2831
        %v2833 = vrot.slane %v2828, %v2832
        %v2843 = vunpack.c.l.b16 %v2819
        %v2844 = vunpack.c.l.b16 %v2820
        %v2845 = vunpack.c.l.b16 %v2821
        %v2846 = vunpack.c.l.b16 %v2822
        %v2847 = vunpack.c.l.b16 %v2823
        %v2848 = vunpack.c.l.b16 %v2824
        %v2849 = vunpack.c.l.b16 %v2825
        %v2850 = vunpack.c.l.b16 %v2826
        %v2851 = vpack.c.b16 %v2844, %v2843
        %v2852 = vpack.c.b16 %v2846, %v2845
        %v2853 = vpack.c.b16 %v2848, %v2847
        %v2854 = vpack.c.b16 %v2850, %v2849
        %v2860 = vsel %vm785, %v2827, 0
        %2862 = vmatprep.subr.bf16.mxu0 0
        %2863 = vmatpush1.bf16.msra.mxu0 0
        %2864 = vmatprep.subr.bf16.mxu0 0
        %2865 = vmatpush1.bf16.msra.mxu0 0
        %2866 = vmatprep.subr.bf16.mxu0 0
        %2867 = vmatpush1.bf16.msra.mxu0 0
        %2868 = vmatprep.subr.bf16.mxu0 0
        %2869 = vmatpush1.bf16.msra.mxu0 0
        %2870 = vmatprep.subr.bf16.mxu0 0
        %2871 = vmatpush1.bf16.msra.mxu0 %v2854
        %2872 = vmatprep.subr.bf16.mxu0 0
        %2873 = vmatpush1.bf16.msra.mxu0 %v2853
        %2874 = vmatprep.subr.bf16.mxu0 0
        %2875 = vmatpush1.bf16.msra.mxu0 %v2852
        %2876 = vmatprep.subr.bf16.mxu0 0
        %2877 = vmatpush1.bf16.msra.mxu0 %v2851
        %2878 = vmatprep.subr.bf16.mxu0 0
        %2879 = vmatpush2.bf16.msra.mxu0 0
        %2880 = vmatprep.subr.bf16.mxu0 0
        %2881 = vmatpush2.bf16.msra.mxu0 0
        %2882 = vmatprep.subr.bf16.mxu0 0
        %2883 = vmatpush2.bf16.msra.mxu0 0
        %2884 = vmatprep.subr.bf16.mxu0 0
        %2885 = vmatpush2.bf16.msra.mxu0 0
        %2886 = vmatprep.subr.bf16.mxu0 0
        %2887 = vmatpush2.bf16.msra.mxu0 0
        %2888 = vmatprep.subr.bf16.mxu0 0
        %2889 = vmatpush2.bf16.msra.mxu0 0
        %2890 = vmatprep.subr.bf16.mxu0 0
        %2891 = vmatpush2.bf16.msra.mxu0 0
        %2892 = vmatprep.subr.bf16.mxu0 0
        %2893 = vmatpush2.bf16.msra.mxu0 0
        %2894 = vmatprep.mubr.bf16.mxu0 0
        %2895 = vmatmul.mubr.bf16.gmra.mxu0 %v2860
        %v2896 = vpop.f32.mrf.mxu0
        %v2897 = vadd.f32 %v2833, %v2896
        %v2898 = vpop.f32.mrf.mxu0
        %v2899 = vpop.f32.mrf.mxu0
        %v2900 = vpop.f32.mrf.mxu0
        %2901 = vdwg.mxu0
        %v2902 = vadd.f32 %v744, %v2897
        %v2903 = vld [vmem:[%s16] sm:$0x1]
        %v2904 = vld [vmem:[%s17] sm:$0x1]
        %v2905 = vsel %vm785, %v2902, 0.0
        %2906 = vadd.xlane.f32.xlu0 %v2905
        %v2907 = vpop.xlane.xlu0 %2906
        %v2908 = vrcp.pop 64.0
        %v2909 = vmul.f32 %v2907, %v2908
        %v2910 = vsub.f32 %v2902, %v2909
        %v2911 = vmul.f32 %v2910, %v2910
        %v2912 = vsel %vm785, %v2911, 0.0
        %2913 = vadd.xlane.f32.xlu0 %v2912
        %v2914 = vpop.xlane.xlu0 %2913
        %v2915 = vmul.f32 %v2914, %v2908
        %v2916 = vadd.f32 %v2915, 1e-05
        %v2917 = vrsqrt.pop %v2916
        %v2918 = vmul.f32 %v2910, %v2917
        %v2920 = vlaneseq
        %v2921 = vshrl.u32 %v2920, 7
        %v2922 = vsub.s32 0, %v2921
        %v2923 = vrot.slane %v2903, %v2922
        %v2925 = vmul.f32 %v2918, %v2923
        %v2927 = vlaneseq
        %v2928 = vshrl.u32 %v2927, 7
        %v2929 = vsub.s32 0, %v2928
        %v2930 = vrot.slane %v2904, %v2929
        %v2932 = vadd.f32 %v2925, %v2930
        %v2933 = vld [vmem:[#allocation7] sm:$0xf]
        %v2934 = vld [vmem:[#allocation7 + $0x4] sm:$0xf]
        %v2935 = vld [vmem:[#allocation7 + $0x8] sm:$0xf]
        %v2936 = vld [vmem:[#allocation7 + $0xc] sm:$0xf]
        %v2937 = vld [vmem:[#allocation7 + $0x10] sm:$0xf]
        %v2938 = vld [vmem:[#allocation7 + $0x14] sm:$0xf]
        %v2939 = vld [vmem:[#allocation7 + $0x18] sm:$0xf]
        %v2940 = vld [vmem:[#allocation7 + $0x1c] sm:$0xf]
        %v2941 = vpack.c.bf16 %v2932, %v2932
        %v2942 = vld [vmem:[%s13] sm:$0x1]
        %v2944 = vlaneseq
        %v2945 = vshrl.u32 %v2944, 7
        %v2946 = vsub.s32 0, %v2945
        %v2947 = vrot.slane %v2942, %v2946
        %v2957 = vunpack.c.l.b16 %v2933
        %v2958 = vunpack.c.l.b16 %v2934
        %v2959 = vunpack.c.l.b16 %v2935
        %v2960 = vunpack.c.l.b16 %v2936
        %v2961 = vunpack.c.l.b16 %v2937
        %v2962 = vunpack.c.l.b16 %v2938
        %v2963 = vunpack.c.l.b16 %v2939
        %v2964 = vunpack.c.l.b16 %v2940
        %v2965 = vpack.c.b16 %v2958, %v2957
        %v2966 = vpack.c.b16 %v2960, %v2959
        %v2967 = vpack.c.b16 %v2962, %v2961
        %v2968 = vpack.c.b16 %v2964, %v2963
        %v2974 = vsel %vm785, %v2941, 0
        %2976 = vmatprep.subr.bf16.mxu0 0
        %2977 = vmatpush1.bf16.msra.mxu0 0
        %2978 = vmatprep.subr.bf16.mxu0 0
        %2979 = vmatpush1.bf16.msra.mxu0 0
        %2980 = vmatprep.subr.bf16.mxu0 0
        %2981 = vmatpush1.bf16.msra.mxu0 0
        %2982 = vmatprep.subr.bf16.mxu0 0
        %2983 = vmatpush1.bf16.msra.mxu0 0
        %2984 = vmatprep.subr.bf16.mxu0 0
        %2985 = vmatpush1.bf16.msra.mxu0 %v2968
        %2986 = vmatprep.subr.bf16.mxu0 0
        %2987 = vmatpush1.bf16.msra.mxu0 %v2967
        %2988 = vmatprep.subr.bf16.mxu0 0
        %2989 = vmatpush1.bf16.msra.mxu0 %v2966
        %2990 = vmatprep.subr.bf16.mxu0 0
        %2991 = vmatpush1.bf16.msra.mxu0 %v2965
        %2992 = vmatprep.subr.bf16.mxu0 0
        %2993 = vmatpush2.bf16.msra.mxu0 0
        %2994 = vmatprep.subr.bf16.mxu0 0
        %2995 = vmatpush2.bf16.msra.mxu0 0
        %2996 = vmatprep.subr.bf16.mxu0 0
        %2997 = vmatpush2.bf16.msra.mxu0 0
        %2998 = vmatprep.subr.bf16.mxu0 0
        %2999 = vmatpush2.bf16.msra.mxu0 0
        %3000 = vmatprep.subr.bf16.mxu0 0
        %3001 = vmatpush2.bf16.msra.mxu0 0
        %3002 = vmatprep.subr.bf16.mxu0 0
        %3003 = vmatpush2.bf16.msra.mxu0 0
        %3004 = vmatprep.subr.bf16.mxu0 0
        %3005 = vmatpush2.bf16.msra.mxu0 0
        %3006 = vmatprep.subr.bf16.mxu0 0
        %3007 = vmatpush2.bf16.msra.mxu0 0
        %3008 = vmatprep.mubr.bf16.mxu0 0
        %3009 = vmatmul.mubr.bf16.gmra.mxu0 %v2974
        %v3010 = vpop.f32.mrf.mxu0
        %v3011 = vadd.f32 %v2947, %v3010
        %v3012 = vpop.f32.mrf.mxu0
        %v3013 = vpop.f32.mrf.mxu0
        %v3014 = vpop.f32.mrf.mxu0
        %3015 = vdwg.mxu0
        %v3016 = vmax.f32 %v3011, 0.0
        %v3017 = vld [vmem:[%s14] sm:$0xf]
        %v3018 = vld [vmem:[%s14 + $0x4] sm:$0xf]
        %v3019 = vld [vmem:[%s14 + $0x8] sm:$0xf]
        %v3020 = vld [vmem:[%s14 + $0xc] sm:$0xf]
        %v3021 = vld [vmem:[%s14 + $0x10] sm:$0xf]
        %v3022 = vld [vmem:[%s14 + $0x14] sm:$0xf]
        %v3023 = vld [vmem:[%s14 + $0x18] sm:$0xf]
        %v3024 = vld [vmem:[%s14 + $0x1c] sm:$0xf]
        %v3025 = vld [vmem:[%s14 + $0x20] sm:$0xf]
        %v3026 = vld [vmem:[%s14 + $0x24] sm:$0xf]
        %v3027 = vld [vmem:[%s14 + $0x28] sm:$0xf]
        %v3028 = vld [vmem:[%s14 + $0x2c] sm:$0xf]
        %v3029 = vld [vmem:[%s14 + $0x30] sm:$0xf]
        %v3030 = vld [vmem:[%s14 + $0x34] sm:$0xf]
        %v3031 = vld [vmem:[%s14 + $0x38] sm:$0xf]
        %v3032 = vld [vmem:[%s14 + $0x3c] sm:$0xf]
        %v3033 = vpack.c.bf16 %v3016, %v3016
        %v3034 = vld [vmem:[%s15] sm:$0x1]
        %v3036 = vlaneseq
        %v3037 = vshrl.u32 %v3036, 7
        %v3038 = vsub.s32 0, %v3037
        %v3039 = vrot.slane %v3034, %v3038
        %v3057 = vunpack.c.l.b16 %v3017
        %v3058 = vunpack.c.l.b16 %v3018
        %v3059 = vunpack.c.l.b16 %v3019
        %v3060 = vunpack.c.l.b16 %v3020
        %v3061 = vunpack.c.l.b16 %v3021
        %v3062 = vunpack.c.l.b16 %v3022
        %v3063 = vunpack.c.l.b16 %v3023
        %v3064 = vunpack.c.l.b16 %v3024
        %v3065 = vunpack.c.l.b16 %v3025
        %v3066 = vunpack.c.l.b16 %v3026
        %v3067 = vunpack.c.l.b16 %v3027
        %v3068 = vunpack.c.l.b16 %v3028
        %v3069 = vunpack.c.l.b16 %v3029
        %v3070 = vunpack.c.l.b16 %v3030
        %v3071 = vunpack.c.l.b16 %v3031
        %v3072 = vunpack.c.l.b16 %v3032
        %v3073 = vpack.c.b16 %v3058, %v3057
        %v3074 = vpack.c.b16 %v3060, %v3059
        %v3075 = vpack.c.b16 %v3062, %v3061
        %v3076 = vpack.c.b16 %v3064, %v3063
        %v3077 = vpack.c.b16 %v3066, %v3065
        %v3078 = vpack.c.b16 %v3068, %v3067
        %v3079 = vpack.c.b16 %v3070, %v3069
        %v3080 = vpack.c.b16 %v3072, %v3071
        %3089 = vmatprep.subr.bf16.mxu0 0
        %3090 = vmatpush1.bf16.msra.mxu0 %v3080
        %3091 = vmatprep.subr.bf16.mxu0 0
        %3092 = vmatpush1.bf16.msra.mxu0 %v3079
        %3093 = vmatprep.subr.bf16.mxu0 0
        %3094 = vmatpush1.bf16.msra.mxu0 %v3078
        %3095 = vmatprep.subr.bf16.mxu0 0
        %3096 = vmatpush1.bf16.msra.mxu0 %v3077
        %3097 = vmatprep.subr.bf16.mxu0 0
        %3098 = vmatpush1.bf16.msra.mxu0 %v3076
        %3099 = vmatprep.subr.bf16.mxu0 0
        %3100 = vmatpush1.bf16.msra.mxu0 %v3075
        %3101 = vmatprep.subr.bf16.mxu0 0
        %3102 = vmatpush1.bf16.msra.mxu0 %v3074
        %3103 = vmatprep.subr.bf16.mxu0 0
        %3104 = vmatpush1.bf16.msra.mxu0 %v3073
        %3105 = vmatprep.subr.bf16.mxu0 0
        %3106 = vmatpush2.bf16.msra.mxu0 0
        %3107 = vmatprep.subr.bf16.mxu0 0
        %3108 = vmatpush2.bf16.msra.mxu0 0
        %3109 = vmatprep.subr.bf16.mxu0 0
        %3110 = vmatpush2.bf16.msra.mxu0 0
        %3111 = vmatprep.subr.bf16.mxu0 0
        %3112 = vmatpush2.bf16.msra.mxu0 0
        %3113 = vmatprep.subr.bf16.mxu0 0
        %3114 = vmatpush2.bf16.msra.mxu0 0
        %3115 = vmatprep.subr.bf16.mxu0 0
        %3116 = vmatpush2.bf16.msra.mxu0 0
        %3117 = vmatprep.subr.bf16.mxu0 0
        %3118 = vmatpush2.bf16.msra.mxu0 0
        %3119 = vmatprep.subr.bf16.mxu0 0
        %3120 = vmatpush2.bf16.msra.mxu0 0
        %3121 = vmatprep.mubr.bf16.mxu0 0
        %3122 = vmatmul.mubr.bf16.gmra.mxu0 %v3033
        %v3123 = vpop.f32.mrf.mxu0
        %v3124 = vadd.f32 %v3039, %v3123
        %v3125 = vpop.f32.mrf.mxu0
        %v3126 = vpop.f32.mrf.mxu0
        %v3127 = vpop.f32.mrf.mxu0
        %3128 = vdwg.mxu0
        %v3129 = vadd.f32 %v2932, %v3124
        %v3130 = vld [vmem:[%s18] sm:$0x1]
        %v3131 = vld [vmem:[%s19] sm:$0x1]
        %v3132 = vsel %vm785, %v3129, 0.0
        %3133 = vadd.xlane.f32.xlu0 %v3132
        %v3134 = vpop.xlane.xlu0 %3133
        %v3135 = vmul.f32 %v3134, %v2908
        %v3136 = vsub.f32 %v3129, %v3135
        %v3137 = vmul.f32 %v3136, %v3136
        %v3138 = vsel %vm785, %v3137, 0.0
        %3139 = vadd.xlane.f32.xlu0 %v3138
        %v3140 = vpop.xlane.xlu0 %3139
        %v3141 = vmul.f32 %v3140, %v2908
        %v3142 = vadd.f32 %v3141, 1e-05
        %v3143 = vrsqrt.pop %v3142
        %v3144 = vmul.f32 %v3136, %v3143
        %v3146 = vlaneseq
        %v3147 = vshrl.u32 %v3146, 7
        %v3148 = vsub.s32 0, %v3147
        %v3149 = vrot.slane %v3130, %v3148
        %v3151 = vmul.f32 %v3144, %v3149
        %v3153 = vlaneseq
        %v3154 = vshrl.u32 %v3153, 7
        %v3155 = vsub.s32 0, %v3154
        %v3156 = vrot.slane %v3131, %v3155
        %v3158 = vadd.f32 %v3151, %v3156
        %s3159 = scalar_lea.vmem %s4, 32
        %v3160 = vld [vmem:[%s3159] sm:$0xf]
        %v3161 = vld [vmem:[%s3159 + $0x4] sm:$0xf]
        %v3162 = vld [vmem:[%s3159 + $0x8] sm:$0xf]
        %v3163 = vld [vmem:[%s3159 + $0xc] sm:$0xf]
        %v3164 = vld [vmem:[%s3159 + $0x10] sm:$0xf]
        %v3165 = vld [vmem:[%s3159 + $0x14] sm:$0xf]
        %v3166 = vld [vmem:[%s3159 + $0x18] sm:$0xf]
        %v3167 = vld [vmem:[%s3159 + $0x1c] sm:$0xf]
        %v3168 = vpack.c.bf16 %v3158, %v3158
        %s3169 = scalar_lea.vmem %s5, 1
        %v3170 = vld [vmem:[%s3169] sm:$0x1]
        %v3172 = vlaneseq
        %v3173 = vshrl.u32 %v3172, 7
        %v3174 = vsub.s32 0, %v3173
        %v3175 = vrot.slane %v3170, %v3174
        %v3185 = vunpack.c.l.b16 %v3160
        %v3186 = vunpack.c.l.b16 %v3161
        %v3187 = vunpack.c.l.b16 %v3162
        %v3188 = vunpack.c.l.b16 %v3163
        %v3189 = vunpack.c.l.b16 %v3164
        %v3190 = vunpack.c.l.b16 %v3165
        %v3191 = vunpack.c.l.b16 %v3166
        %v3192 = vunpack.c.l.b16 %v3167
        %v3193 = vpack.c.b16 %v3186, %v3185
        %v3194 = vpack.c.b16 %v3188, %v3187
        %v3195 = vpack.c.b16 %v3190, %v3189
        %v3196 = vpack.c.b16 %v3192, %v3191
        %v3202 = vsel %vm785, %v3168, 0
        %3204 = vmatprep.subr.bf16.mxu0 0
        %3205 = vmatpush1.bf16.msra.mxu0 0
        %3206 = vmatprep.subr.bf16.mxu0 0
        %3207 = vmatpush1.bf16.msra.mxu0 0
        %3208 = vmatprep.subr.bf16.mxu0 0
        %3209 = vmatpush1.bf16.msra.mxu0 0
        %3210 = vmatprep.subr.bf16.mxu0 0
        %3211 = vmatpush1.bf16.msra.mxu0 0
        %3212 = vmatprep.subr.bf16.mxu0 0
        %3213 = vmatpush1.bf16.msra.mxu0 %v3196
        %3214 = vmatprep.subr.bf16.mxu0 0
        %3215 = vmatpush1.bf16.msra.mxu0 %v3195
        %3216 = vmatprep.subr.bf16.mxu0 0
        %3217 = vmatpush1.bf16.msra.mxu0 %v3194
        %3218 = vmatprep.subr.bf16.mxu0 0
        %3219 = vmatpush1.bf16.msra.mxu0 %v3193
        %3220 = vmatprep.subr.bf16.mxu0 0
        %3221 = vmatpush2.bf16.msra.mxu0 0
        %3222 = vmatprep.subr.bf16.mxu0 0
        %3223 = vmatpush2.bf16.msra.mxu0 0
        %3224 = vmatprep.subr.bf16.mxu0 0
        %3225 = vmatpush2.bf16.msra.mxu0 0
        %3226 = vmatprep.subr.bf16.mxu0 0
        %3227 = vmatpush2.bf16.msra.mxu0 0
        %3228 = vmatprep.subr.bf16.mxu0 0
        %3229 = vmatpush2.bf16.msra.mxu0 0
        %3230 = vmatprep.subr.bf16.mxu0 0
        %3231 = vmatpush2.bf16.msra.mxu0 0
        %3232 = vmatprep.subr.bf16.mxu0 0
        %3233 = vmatpush2.bf16.msra.mxu0 0
        %3234 = vmatprep.subr.bf16.mxu0 0
        %3235 = vmatpush2.bf16.msra.mxu0 0
        %3236 = vmatprep.mubr.bf16.mxu0 0
        %3237 = vmatmul.mubr.bf16.gmra.mxu0 %v3202
        %v3238 = vpop.f32.mrf.mxu0
        %v3239 = vadd.f32 %v3175, %v3238
        %v3240 = vpop.f32.mrf.mxu0
        %v3241 = vpop.f32.mrf.mxu0
        %v3242 = vpop.f32.mrf.mxu0
        %3243 = vdwg.mxu0
        %v3244 = vmul.f32 %v3239, 0.25
        %s3245 = scalar_lea.vmem %s6, 32
        %v3246 = vld [vmem:[%s3245] sm:$0xf]
        %v3247 = vld [vmem:[%s3245 + $0x4] sm:$0xf]
        %v3248 = vld [vmem:[%s3245 + $0x8] sm:$0xf]
        %v3249 = vld [vmem:[%s3245 + $0xc] sm:$0xf]
        %v3250 = vld [vmem:[%s3245 + $0x10] sm:$0xf]
        %v3251 = vld [vmem:[%s3245 + $0x14] sm:$0xf]
        %v3252 = vld [vmem:[%s3245 + $0x18] sm:$0xf]
        %v3253 = vld [vmem:[%s3245 + $0x1c] sm:$0xf]
        %s3254 = scalar_lea.vmem %s7, 1
        %v3255 = vld [vmem:[%s3254] sm:$0x1]
        %v3257 = vlaneseq
        %v3258 = vshrl.u32 %v3257, 7
        %v3259 = vsub.s32 0, %v3258
        %v3260 = vrot.slane %v3255, %v3259
        %v3270 = vunpack.c.l.b16 %v3246
        %v3271 = vunpack.c.l.b16 %v3247
        %v3272 = vunpack.c.l.b16 %v3248
        %v3273 = vunpack.c.l.b16 %v3249
        %v3274 = vunpack.c.l.b16 %v3250
        %v3275 = vunpack.c.l.b16 %v3251
        %v3276 = vunpack.c.l.b16 %v3252
        %v3277 = vunpack.c.l.b16 %v3253
        %v3278 = vpack.c.b16 %v3271, %v3270
        %v3279 = vpack.c.b16 %v3273, %v3272
        %v3280 = vpack.c.b16 %v3275, %v3274
        %v3281 = vpack.c.b16 %v3277, %v3276
        %3286 = vmatprep.subr.bf16.mxu0 0
        %3287 = vmatpush1.bf16.msra.mxu0 0
        %3288 = vmatprep.subr.bf16.mxu0 0
        %3289 = vmatpush1.bf16.msra.mxu0 0
        %3290 = vmatprep.subr.bf16.mxu0 0
        %3291 = vmatpush1.bf16.msra.mxu0 0
        %3292 = vmatprep.subr.bf16.mxu0 0
        %3293 = vmatpush1.bf16.msra.mxu0 0
        %3294 = vmatprep.subr.bf16.mxu0 0
        %3295 = vmatpush1.bf16.msra.mxu0 %v3281
        %3296 = vmatprep.subr.bf16.mxu0 0
        %3297 = vmatpush1.bf16.msra.mxu0 %v3280
        %3298 = vmatprep.subr.bf16.mxu0 0
        %3299 = vmatpush1.bf16.msra.mxu0 %v3279
        %3300 = vmatprep.subr.bf16.mxu0 0
        %3301 = vmatpush1.bf16.msra.mxu0 %v3278
        %3302 = vmatprep.subr.bf16.mxu0 0
        %3303 = vmatpush2.bf16.msra.mxu0 0
        %3304 = vmatprep.subr.bf16.mxu0 0
        %3305 = vmatpush2.bf16.msra.mxu0 0
        %3306 = vmatprep.subr.bf16.mxu0 0
        %3307 = vmatpush2.bf16.msra.mxu0 0
        %3308 = vmatprep.subr.bf16.mxu0 0
        %3309 = vmatpush2.bf16.msra.mxu0 0
        %3310 = vmatprep.subr.bf16.mxu0 0
        %3311 = vmatpush2.bf16.msra.mxu0 0
        %3312 = vmatprep.subr.bf16.mxu0 0
        %3313 = vmatpush2.bf16.msra.mxu0 0
        %3314 = vmatprep.subr.bf16.mxu0 0
        %3315 = vmatpush2.bf16.msra.mxu0 0
        %3316 = vmatprep.subr.bf16.mxu0 0
        %3317 = vmatpush2.bf16.msra.mxu0 0
        %3318 = vmatprep.mubr.bf16.mxu0 0
        %3319 = vmatmul.mubr.bf16.gmra.mxu0 %v3202
        %v3320 = vpop.f32.mrf.mxu0
        %v3321 = vadd.f32 %v3260, %v3320
        %v3322 = vpop.f32.mrf.mxu0
        %v3323 = vpop.f32.mrf.mxu0
        %v3324 = vpop.f32.mrf.mxu0
        %3325 = vdwg.mxu0
        %s3326 = scalar_lea.vmem %s8, 32
        %v3327 = vld [vmem:[%s3326] sm:$0xf]
        %v3328 = vld [vmem:[%s3326 + $0x4] sm:$0xf]
        %v3329 = vld [vmem:[%s3326 + $0x8] sm:$0xf]
        %v3330 = vld [vmem:[%s3326 + $0xc] sm:$0xf]
        %v3331 = vld [vmem:[%s3326 + $0x10] sm:$0xf]
        %v3332 = vld [vmem:[%s3326 + $0x14] sm:$0xf]
        %v3333 = vld [vmem:[%s3326 + $0x18] sm:$0xf]
        %v3334 = vld [vmem:[%s3326 + $0x1c] sm:$0xf]
        %s3335 = scalar_lea.vmem %s9, 1
        %v3336 = vld [vmem:[%s3335] sm:$0x1]
        %v3338 = vlaneseq
        %v3339 = vshrl.u32 %v3338, 7
        %v3340 = vsub.s32 0, %v3339
        %v3341 = vrot.slane %v3336, %v3340
        %v3351 = vunpack.c.l.b16 %v3327
        %v3352 = vunpack.c.l.b16 %v3328
        %v3353 = vunpack.c.l.b16 %v3329
        %v3354 = vunpack.c.l.b16 %v3330
        %v3355 = vunpack.c.l.b16 %v3331
        %v3356 = vunpack.c.l.b16 %v3332
        %v3357 = vunpack.c.l.b16 %v3333
        %v3358 = vunpack.c.l.b16 %v3334
        %v3359 = vpack.c.b16 %v3352, %v3351
        %v3360 = vpack.c.b16 %v3354, %v3353
        %v3361 = vpack.c.b16 %v3356, %v3355
        %v3362 = vpack.c.b16 %v3358, %v3357
        %3367 = vmatprep.subr.bf16.mxu0 0
        %3368 = vmatpush1.bf16.msra.mxu0 0
        %3369 = vmatprep.subr.bf16.mxu0 0
        %3370 = vmatpush1.bf16.msra.mxu0 0
        %3371 = vmatprep.subr.bf16.mxu0 0
        %3372 = vmatpush1.bf16.msra.mxu0 0
        %3373 = vmatprep.subr.bf16.mxu0 0
        %3374 = vmatpush1.bf16.msra.mxu0 0
        %3375 = vmatprep.subr.bf16.mxu0 0
        %3376 = vmatpush1.bf16.msra.mxu0 %v3362
        %3377 = vmatprep.subr.bf16.mxu0 0
        %3378 = vmatpush1.bf16.msra.mxu0 %v3361
        %3379 = vmatprep.subr.bf16.mxu0 0
        %3380 = vmatpush1.bf16.msra.mxu0 %v3360
        %3381 = vmatprep.subr.bf16.mxu0 0
        %3382 = vmatpush1.bf16.msra.mxu0 %v3359
        %3383 = vmatprep.subr.bf16.mxu0 0
        %3384 = vmatpush2.bf16.msra.mxu0 0
        %3385 = vmatprep.subr.bf16.mxu0 0
        %3386 = vmatpush2.bf16.msra.mxu0 0
        %3387 = vmatprep.subr.bf16.mxu0 0
        %3388 = vmatpush2.bf16.msra.mxu0 0
        %3389 = vmatprep.subr.bf16.mxu0 0
        %3390 = vmatpush2.bf16.msra.mxu0 0
        %3391 = vmatprep.subr.bf16.mxu0 0
        %3392 = vmatpush2.bf16.msra.mxu0 0
        %3393 = vmatprep.subr.bf16.mxu0 0
        %3394 = vmatpush2.bf16.msra.mxu0 0
        %3395 = vmatprep.subr.bf16.mxu0 0
        %3396 = vmatpush2.bf16.msra.mxu0 0
        %3397 = vmatprep.subr.bf16.mxu0 0
        %3398 = vmatpush2.bf16.msra.mxu0 0
        %3399 = vmatprep.mubr.bf16.mxu0 0
        %3400 = vmatmul.mubr.bf16.gmra.mxu0 %v3202
        %v3401 = vpop.f32.mrf.mxu0
        %v3402 = vadd.f32 %v3341, %v3401
        %v3403 = vpop.f32.mrf.mxu0
        %v3404 = vpop.f32.mrf.mxu0
        %v3405 = vpop.f32.mrf.mxu0
        %3406 = vdwg.mxu0
        %v3407 = vpack.c.bf16 %v3244, %v3244
        %v3408 = vpack.c.bf16 %v3321, %v3321
        %v3409 = vpack.c.bf16 %v3402, %v3402
        %v3411 = vsel %vm991, %v3407, 0
        %v3414 = vsel %vm991, %v3408, 0
        %3416 = vmatprep.subr.bf16.mxu0 0
        %3417 = vmatpush1.bf16.xpose.msra.mxu0 0
        %3418 = vmatprep.subr.bf16.mxu0 0
        %3419 = vmatpush1.bf16.xpose.msra.mxu0 0
        %3420 = vmatprep.subr.bf16.mxu0 0
        %3421 = vmatpush1.bf16.xpose.msra.mxu0 0
        %3422 = vmatprep.subr.bf16.mxu0 0
        %3423 = vmatpush1.bf16.xpose.msra.mxu0 0
        %3424 = vmatprep.subr.bf16.mxu0 0
        %3425 = vmatpush1.bf16.xpose.msra.mxu0 0
        %3426 = vmatprep.subr.bf16.mxu0 0
        %3427 = vmatpush1.bf16.xpose.msra.mxu0 0
        %3428 = vmatprep.subr.bf16.mxu0 0
        %3429 = vmatpush1.bf16.xpose.msra.mxu0 0
        %3430 = vmatprep.subr.bf16.mxu0 0
        %3431 = vmatpush1.bf16.xpose.msra.mxu0 %v3414
        %3432 = vmatprep.subr.bf16.mxu0 0
        %3433 = vmatpush2.bf16.xpose.msra.mxu0 0
        %3434 = vmatprep.subr.bf16.mxu0 0
        %3435 = vmatpush2.bf16.xpose.msra.mxu0 0
        %3436 = vmatprep.subr.bf16.mxu0 0
        %3437 = vmatpush2.bf16.xpose.msra.mxu0 0
        %3438 = vmatprep.subr.bf16.mxu0 0
        %3439 = vmatpush2.bf16.xpose.msra.mxu0 0
        %3440 = vmatprep.subr.bf16.mxu0 0
        %3441 = vmatpush2.bf16.xpose.msra.mxu0 0
        %3442 = vmatprep.subr.bf16.mxu0 0
        %3443 = vmatpush2.bf16.xpose.msra.mxu0 0
        %3444 = vmatprep.subr.bf16.mxu0 0
        %3445 = vmatpush2.bf16.xpose.msra.mxu0 0
        %3446 = vmatprep.subr.bf16.mxu0 0
        %3447 = vmatpush2.bf16.xpose.msra.mxu0 0
        %3448 = vmatprep.mubr.bf16.mxu0 0
        %3449 = vmatmul.mubr.bf16.gmra.mxu0 %v3411
        %v3450 = vpop.f32.mrf.mxu0
        %v3451 = vadd.f32 0.0, %v3450
        %v3452 = vpop.f32.mrf.mxu0
        %v3453 = vpop.f32.mrf.mxu0
        %v3454 = vpop.f32.mrf.mxu0
        %3455 = vdwg.mxu0
        %v3456 = vsel %vm1038, %v3451, -inf
        %3457 = vmax.xlane.f32.xlu0 %v3456
        %v3458 = vpop.xlane.xlu0 %3457
        %v3459 = vsub.f32 %v3451, %v3458
        %v3460 = vmul.f32 %v3459, 1.442695
        %v3461 = vpow.pop %v3460
        %v3462 = vsel %vm1038, %v3461, 0.0
        %3463 = vadd.xlane.f32.xlu0 %v3462
        %v3464 = vpop.xlane.xlu0 %3463
        %v3465 = vrcp.pop %v3464
        %v3466 = vmul.f32 %v3461, %v3465
        %v3467 = vpack.c.bf16 %v3466, %v3466
        %v3469 = vsel %vm1051, %v3467, 0
        %v3472 = vsel %vm1055, %v3409, 0
        %3474 = vmatprep.subr.bf16.mxu0 0
        %3475 = vmatpush1.bf16.msra.mxu0 0
        %3476 = vmatprep.subr.bf16.mxu0 0
        %3477 = vmatpush1.bf16.msra.mxu0 0
        %3478 = vmatprep.subr.bf16.mxu0 0
        %3479 = vmatpush1.bf16.msra.mxu0 0
        %3480 = vmatprep.subr.bf16.mxu0 0
        %3481 = vmatpush1.bf16.msra.mxu0 0
        %3482 = vmatprep.subr.bf16.mxu0 0
        %3483 = vmatpush1.bf16.msra.mxu0 0
        %3484 = vmatprep.subr.bf16.mxu0 0
        %3485 = vmatpush1.bf16.msra.mxu0 0
        %3486 = vmatprep.subr.bf16.mxu0 0
        %3487 = vmatpush1.bf16.msra.mxu0 0
        %3488 = vmatprep.subr.bf16.mxu0 0
        %3489 = vmatpush1.bf16.msra.mxu0 %v3472
        %3490 = vmatprep.subr.bf16.mxu0 0
        %3491 = vmatpush2.bf16.msra.mxu0 0
        %3492 = vmatprep.subr.bf16.mxu0 0
        %3493 = vmatpush2.bf16.msra.mxu0 0
        %3494 = vmatprep.subr.bf16.mxu0 0
        %3495 = vmatpush2.bf16.msra.mxu0 0
        %3496 = vmatprep.subr.bf16.mxu0 0
        %3497 = vmatpush2.bf16.msra.mxu0 0
        %3498 = vmatprep.subr.bf16.mxu0 0
        %3499 = vmatpush2.bf16.msra.mxu0 0
        %3500 = vmatprep.subr.bf16.mxu0 0
        %3501 = vmatpush2.bf16.msra.mxu0 0
        %3502 = vmatprep.subr.bf16.mxu0 0
        %3503 = vmatpush2.bf16.msra.mxu0 0
        %3504 = vmatprep.subr.bf16.mxu0 0
        %3505 = vmatpush2.bf16.msra.mxu0 0
        %3506 = vmatprep.mubr.bf16.mxu0 0
        %3507 = vmatmul.mubr.bf16.gmra.mxu0 %v3469
        %v3508 = vpop.f32.mrf.mxu0
        %v3509 = vadd.f32 0.0, %v3508
        %v3510 = vpop.f32.mrf.mxu0
        %v3511 = vpop.f32.mrf.mxu0
        %v3512 = vpop.f32.mrf.mxu0
        %3513 = vdwg.mxu0
        %3515 = vrot.lane.b32.xlu0 %v3407, 112
        %v3516 = vpop.permute.xlu0 %3515
        %3518 = vrot.lane.b32.xlu0 %v3408, 112
        %v3519 = vpop.permute.xlu0 %3518
        %v3521 = vsel %vm991, %v3516, 0
        %v3524 = vsel %vm991, %v3519, 0
        %3526 = vmatprep.subr.bf16.mxu0 0
        %3527 = vmatpush1.bf16.xpose.msra.mxu0 0
        %3528 = vmatprep.subr.bf16.mxu0 0
        %3529 = vmatpush1.bf16.xpose.msra.mxu0 0
        %3530 = vmatprep.subr.bf16.mxu0 0
        %3531 = vmatpush1.bf16.xpose.msra.mxu0 0
        %3532 = vmatprep.subr.bf16.mxu0 0
        %3533 = vmatpush1.bf16.xpose.msra.mxu0 0
        %3534 = vmatprep.subr.bf16.mxu0 0
        %3535 = vmatpush1.bf16.xpose.msra.mxu0 0
        %3536 = vmatprep.subr.bf16.mxu0 0
        %3537 = vmatpush1.bf16.xpose.msra.mxu0 0
        %3538 = vmatprep.subr.bf16.mxu0 0
        %3539 = vmatpush1.bf16.xpose.msra.mxu0 0
        %3540 = vmatprep.subr.bf16.mxu0 0
        %3541 = vmatpush1.bf16.xpose.msra.mxu0 %v3524
        %3542 = vmatprep.subr.bf16.mxu0 0
        %3543 = vmatpush2.bf16.xpose.msra.mxu0 0
        %3544 = vmatprep.subr.bf16.mxu0 0
        %3545 = vmatpush2.bf16.xpose.msra.mxu0 0
        %3546 = vmatprep.subr.bf16.mxu0 0
        %3547 = vmatpush2.bf16.xpose.msra.mxu0 0
        %3548 = vmatprep.subr.bf16.mxu0 0
        %3549 = vmatpush2.bf16.xpose.msra.mxu0 0
        %3550 = vmatprep.subr.bf16.mxu0 0
        %3551 = vmatpush2.bf16.xpose.msra.mxu0 0
        %3552 = vmatprep.subr.bf16.mxu0 0
        %3553 = vmatpush2.bf16.xpose.msra.mxu0 0
        %3554 = vmatprep.subr.bf16.mxu0 0
        %3555 = vmatpush2.bf16.xpose.msra.mxu0 0
        %3556 = vmatprep.subr.bf16.mxu0 0
        %3557 = vmatpush2.bf16.xpose.msra.mxu0 0
        %3558 = vmatprep.mubr.bf16.mxu0 0
        %3559 = vmatmul.mubr.bf16.gmra.mxu0 %v3521
        %v3560 = vpop.f32.mrf.mxu0
        %v3561 = vadd.f32 0.0, %v3560
        %v3562 = vpop.f32.mrf.mxu0
        %v3563 = vpop.f32.mrf.mxu0
        %v3564 = vpop.f32.mrf.mxu0
        %3565 = vdwg.mxu0
        %v3566 = vsel %vm1038, %v3561, -inf
        %3567 = vmax.xlane.f32.xlu0 %v3566
        %v3568 = vpop.xlane.xlu0 %3567
        %v3569 = vsub.f32 %v3561, %v3568
        %v3570 = vmul.f32 %v3569, 1.442695
        %v3571 = vpow.pop %v3570
        %v3572 = vsel %vm1038, %v3571, 0.0
        %3573 = vadd.xlane.f32.xlu0 %v3572
        %v3574 = vpop.xlane.xlu0 %3573
        %v3575 = vrcp.pop %v3574
        %v3576 = vmul.f32 %v3571, %v3575
        %v3577 = vpack.c.bf16 %v3576, %v3576
        %3579 = vrot.lane.b32.xlu0 %v3409, 112
        %v3580 = vpop.permute.xlu0 %3579
        %v3582 = vsel %vm1051, %v3577, 0
        %v3585 = vsel %vm1055, %v3580, 0
        %3587 = vmatprep.subr.bf16.mxu0 0
        %3588 = vmatpush1.bf16.msra.mxu0 0
        %3589 = vmatprep.subr.bf16.mxu0 0
        %3590 = vmatpush1.bf16.msra.mxu0 0
        %3591 = vmatprep.subr.bf16.mxu0 0
        %3592 = vmatpush1.bf16.msra.mxu0 0
        %3593 = vmatprep.subr.bf16.mxu0 0
        %3594 = vmatpush1.bf16.msra.mxu0 0
        %3595 = vmatprep.subr.bf16.mxu0 0
        %3596 = vmatpush1.bf16.msra.mxu0 0
        %3597 = vmatprep.subr.bf16.mxu0 0
        %3598 = vmatpush1.bf16.msra.mxu0 0
        %3599 = vmatprep.subr.bf16.mxu0 0
        %3600 = vmatpush1.bf16.msra.mxu0 0
        %3601 = vmatprep.subr.bf16.mxu0 0
        %3602 = vmatpush1.bf16.msra.mxu0 %v3585
        %3603 = vmatprep.subr.bf16.mxu0 0
        %3604 = vmatpush2.bf16.msra.mxu0 0
        %3605 = vmatprep.subr.bf16.mxu0 0
        %3606 = vmatpush2.bf16.msra.mxu0 0
        %3607 = vmatprep.subr.bf16.mxu0 0
        %3608 = vmatpush2.bf16.msra.mxu0 0
        %3609 = vmatprep.subr.bf16.mxu0 0
        %3610 = vmatpush2.bf16.msra.mxu0 0
        %3611 = vmatprep.subr.bf16.mxu0 0
        %3612 = vmatpush2.bf16.msra.mxu0 0
        %3613 = vmatprep.subr.bf16.mxu0 0
        %3614 = vmatpush2.bf16.msra.mxu0 0
        %3615 = vmatprep.subr.bf16.mxu0 0
        %3616 = vmatpush2.bf16.msra.mxu0 0
        %3617 = vmatprep.subr.bf16.mxu0 0
        %3618 = vmatpush2.bf16.msra.mxu0 0
        %3619 = vmatprep.mubr.bf16.mxu0 0
        %3620 = vmatmul.mubr.bf16.gmra.mxu0 %v3582
        %v3621 = vpop.f32.mrf.mxu0
        %v3622 = vadd.f32 0.0, %v3621
        %v3623 = vpop.f32.mrf.mxu0
        %v3624 = vpop.f32.mrf.mxu0
        %v3625 = vpop.f32.mrf.mxu0
        %3626 = vdwg.mxu0
        %3627 = vrot.lane.b32.xlu0 %v3407, 96
        %v3628 = vpop.permute.xlu0 %3627
        %3629 = vrot.lane.b32.xlu0 %v3408, 96
        %v3630 = vpop.permute.xlu0 %3629
        %v3632 = vsel %vm991, %v3628, 0
        %v3635 = vsel %vm991, %v3630, 0
        %3637 = vmatprep.subr.bf16.mxu0 0
        %3638 = vmatpush1.bf16.xpose.msra.mxu0 0
        %3639 = vmatprep.subr.bf16.mxu0 0
        %3640 = vmatpush1.bf16.xpose.msra.mxu0 0
        %3641 = vmatprep.subr.bf16.mxu0 0
        %3642 = vmatpush1.bf16.xpose.msra.mxu0 0
        %3643 = vmatprep.subr.bf16.mxu0 0
        %3644 = vmatpush1.bf16.xpose.msra.mxu0 0
        %3645 = vmatprep.subr.bf16.mxu0 0
        %3646 = vmatpush1.bf16.xpose.msra.mxu0 0
        %3647 = vmatprep.subr.bf16.mxu0 0
        %3648 = vmatpush1.bf16.xpose.msra.mxu0 0
        %3649 = vmatprep.subr.bf16.mxu0 0
        %3650 = vmatpush1.bf16.xpose.msra.mxu0 0
        %3651 = vmatprep.subr.bf16.mxu0 0
        %3652 = vmatpush1.bf16.xpose.msra.mxu0 %v3635
        %3653 = vmatprep.subr.bf16.mxu0 0
        %3654 = vmatpush2.bf16.xpose.msra.mxu0 0
        %3655 = vmatprep.subr.bf16.mxu0 0
        %3656 = vmatpush2.bf16.xpose.msra.mxu0 0
        %3657 = vmatprep.subr.bf16.mxu0 0
        %3658 = vmatpush2.bf16.xpose.msra.mxu0 0
        %3659 = vmatprep.subr.bf16.mxu0 0
        %3660 = vmatpush2.bf16.xpose.msra.mxu0 0
        %3661 = vmatprep.subr.bf16.mxu0 0
        %3662 = vmatpush2.bf16.xpose.msra.mxu0 0
        %3663 = vmatprep.subr.bf16.mxu0 0
        %3664 = vmatpush2.bf16.xpose.msra.mxu0 0
        %3665 = vmatprep.subr.bf16.mxu0 0
        %3666 = vmatpush2.bf16.xpose.msra.mxu0 0
        %3667 = vmatprep.subr.bf16.mxu0 0
        %3668 = vmatpush2.bf16.xpose.msra.mxu0 0
        %3669 = vmatprep.mubr.bf16.mxu0 0
        %3670 = vmatmul.mubr.bf16.gmra.mxu0 %v3632
        %v3671 = vpop.f32.mrf.mxu0
        %v3672 = vadd.f32 0.0, %v3671
        %v3673 = vpop.f32.mrf.mxu0
        %v3674 = vpop.f32.mrf.mxu0
        %v3675 = vpop.f32.mrf.mxu0
        %3676 = vdwg.mxu0
        %v3677 = vsel %vm1038, %v3672, -inf
        %3678 = vmax.xlane.f32.xlu0 %v3677
        %v3679 = vpop.xlane.xlu0 %3678
        %v3680 = vsub.f32 %v3672, %v3679
        %v3681 = vmul.f32 %v3680, 1.442695
        %v3682 = vpow.pop %v3681
        %v3683 = vsel %vm1038, %v3682, 0.0
        %3684 = vadd.xlane.f32.xlu0 %v3683
        %v3685 = vpop.xlane.xlu0 %3684
        %v3686 = vrcp.pop %v3685
        %v3687 = vmul.f32 %v3682, %v3686
        %v3688 = vpack.c.bf16 %v3687, %v3687
        %3689 = vrot.lane.b32.xlu0 %v3409, 96
        %v3690 = vpop.permute.xlu0 %3689
        %v3692 = vsel %vm1051, %v3688, 0
        %v3695 = vsel %vm1055, %v3690, 0
        %3697 = vmatprep.subr.bf16.mxu0 0
        %3698 = vmatpush1.bf16.msra.mxu0 0
        %3699 = vmatprep.subr.bf16.mxu0 0
        %3700 = vmatpush1.bf16.msra.mxu0 0
        %3701 = vmatprep.subr.bf16.mxu0 0
        %3702 = vmatpush1.bf16.msra.mxu0 0
        %3703 = vmatprep.subr.bf16.mxu0 0
        %3704 = vmatpush1.bf16.msra.mxu0 0
        %3705 = vmatprep.subr.bf16.mxu0 0
        %3706 = vmatpush1.bf16.msra.mxu0 0
        %3707 = vmatprep.subr.bf16.mxu0 0
        %3708 = vmatpush1.bf16.msra.mxu0 0
        %3709 = vmatprep.subr.bf16.mxu0 0
        %3710 = vmatpush1.bf16.msra.mxu0 0
        %3711 = vmatprep.subr.bf16.mxu0 0
        %3712 = vmatpush1.bf16.msra.mxu0 %v3695
        %3713 = vmatprep.subr.bf16.mxu0 0
        %3714 = vmatpush2.bf16.msra.mxu0 0
        %3715 = vmatprep.subr.bf16.mxu0 0
        %3716 = vmatpush2.bf16.msra.mxu0 0
        %3717 = vmatprep.subr.bf16.mxu0 0
        %3718 = vmatpush2.bf16.msra.mxu0 0
        %3719 = vmatprep.subr.bf16.mxu0 0
        %3720 = vmatpush2.bf16.msra.mxu0 0
        %3721 = vmatprep.subr.bf16.mxu0 0
        %3722 = vmatpush2.bf16.msra.mxu0 0
        %3723 = vmatprep.subr.bf16.mxu0 0
        %3724 = vmatpush2.bf16.msra.mxu0 0
        %3725 = vmatprep.subr.bf16.mxu0 0
        %3726 = vmatpush2.bf16.msra.mxu0 0
        %3727 = vmatprep.subr.bf16.mxu0 0
        %3728 = vmatpush2.bf16.msra.mxu0 0
        %3729 = vmatprep.mubr.bf16.mxu0 0
        %3730 = vmatmul.mubr.bf16.gmra.mxu0 %v3692
        %v3731 = vpop.f32.mrf.mxu0
        %v3732 = vadd.f32 0.0, %v3731
        %v3733 = vpop.f32.mrf.mxu0
        %v3734 = vpop.f32.mrf.mxu0
        %v3735 = vpop.f32.mrf.mxu0
        %3736 = vdwg.mxu0
        %3737 = vrot.lane.b32.xlu0 %v3407, 80
        %v3738 = vpop.permute.xlu0 %3737
        %3739 = vrot.lane.b32.xlu0 %v3408, 80
        %v3740 = vpop.permute.xlu0 %3739
        %v3742 = vsel %vm991, %v3738, 0
        %v3745 = vsel %vm991, %v3740, 0
        %3747 = vmatprep.subr.bf16.mxu0 0
        %3748 = vmatpush1.bf16.xpose.msra.mxu0 0
        %3749 = vmatprep.subr.bf16.mxu0 0
        %3750 = vmatpush1.bf16.xpose.msra.mxu0 0
        %3751 = vmatprep.subr.bf16.mxu0 0
        %3752 = vmatpush1.bf16.xpose.msra.mxu0 0
        %3753 = vmatprep.subr.bf16.mxu0 0
        %3754 = vmatpush1.bf16.xpose.msra.mxu0 0
        %3755 = vmatprep.subr.bf16.mxu0 0
        %3756 = vmatpush1.bf16.xpose.msra.mxu0 0
        %3757 = vmatprep.subr.bf16.mxu0 0
        %3758 = vmatpush1.bf16.xpose.msra.mxu0 0
        %3759 = vmatprep.subr.bf16.mxu0 0
        %3760 = vmatpush1.bf16.xpose.msra.mxu0 0
        %3761 = vmatprep.subr.bf16.mxu0 0
        %3762 = vmatpush1.bf16.xpose.msra.mxu0 %v3745
        %3763 = vmatprep.subr.bf16.mxu0 0
        %3764 = vmatpush2.bf16.xpose.msra.mxu0 0
        %3765 = vmatprep.subr.bf16.mxu0 0
        %3766 = vmatpush2.bf16.xpose.msra.mxu0 0
        %3767 = vmatprep.subr.bf16.mxu0 0
        %3768 = vmatpush2.bf16.xpose.msra.mxu0 0
        %3769 = vmatprep.subr.bf16.mxu0 0
        %3770 = vmatpush2.bf16.xpose.msra.mxu0 0
        %3771 = vmatprep.subr.bf16.mxu0 0
        %3772 = vmatpush2.bf16.xpose.msra.mxu0 0
        %3773 = vmatprep.subr.bf16.mxu0 0
        %3774 = vmatpush2.bf16.xpose.msra.mxu0 0
        %3775 = vmatprep.subr.bf16.mxu0 0
        %3776 = vmatpush2.bf16.xpose.msra.mxu0 0
        %3777 = vmatprep.subr.bf16.mxu0 0
        %3778 = vmatpush2.bf16.xpose.msra.mxu0 0
        %3779 = vmatprep.mubr.bf16.mxu0 0
        %3780 = vmatmul.mubr.bf16.gmra.mxu0 %v3742
        %v3781 = vpop.f32.mrf.mxu0
        %v3782 = vadd.f32 0.0, %v3781
        %v3783 = vpop.f32.mrf.mxu0
        %v3784 = vpop.f32.mrf.mxu0
        %v3785 = vpop.f32.mrf.mxu0
        %3786 = vdwg.mxu0
        %v3787 = vsel %vm1038, %v3782, -inf
        %3788 = vmax.xlane.f32.xlu0 %v3787
        %v3789 = vpop.xlane.xlu0 %3788
        %v3790 = vsub.f32 %v3782, %v3789
        %v3791 = vmul.f32 %v3790, 1.442695
        %v3792 = vpow.pop %v3791
        %v3793 = vsel %vm1038, %v3792, 0.0
        %3794 = vadd.xlane.f32.xlu0 %v3793
        %v3795 = vpop.xlane.xlu0 %3794
        %v3796 = vrcp.pop %v3795
        %v3797 = vmul.f32 %v3792, %v3796
        %v3798 = vpack.c.bf16 %v3797, %v3797
        %3799 = vrot.lane.b32.xlu0 %v3409, 80
        %v3800 = vpop.permute.xlu0 %3799
        %v3802 = vsel %vm1051, %v3798, 0
        %v3805 = vsel %vm1055, %v3800, 0
        %3807 = vmatprep.subr.bf16.mxu0 0
        %3808 = vmatpush1.bf16.msra.mxu0 0
        %3809 = vmatprep.subr.bf16.mxu0 0
        %3810 = vmatpush1.bf16.msra.mxu0 0
        %3811 = vmatprep.subr.bf16.mxu0 0
        %3812 = vmatpush1.bf16.msra.mxu0 0
        %3813 = vmatprep.subr.bf16.mxu0 0
        %3814 = vmatpush1.bf16.msra.mxu0 0
        %3815 = vmatprep.subr.bf16.mxu0 0
        %3816 = vmatpush1.bf16.msra.mxu0 0
        %3817 = vmatprep.subr.bf16.mxu0 0
        %3818 = vmatpush1.bf16.msra.mxu0 0
        %3819 = vmatprep.subr.bf16.mxu0 0
        %3820 = vmatpush1.bf16.msra.mxu0 0
        %3821 = vmatprep.subr.bf16.mxu0 0
        %3822 = vmatpush1.bf16.msra.mxu0 %v3805
        %3823 = vmatprep.subr.bf16.mxu0 0
        %3824 = vmatpush2.bf16.msra.mxu0 0
        %3825 = vmatprep.subr.bf16.mxu0 0
        %3826 = vmatpush2.bf16.msra.mxu0 0
        %3827 = vmatprep.subr.bf16.mxu0 0
        %3828 = vmatpush2.bf16.msra.mxu0 0
        %3829 = vmatprep.subr.bf16.mxu0 0
        %3830 = vmatpush2.bf16.msra.mxu0 0
        %3831 = vmatprep.subr.bf16.mxu0 0
        %3832 = vmatpush2.bf16.msra.mxu0 0
        %3833 = vmatprep.subr.bf16.mxu0 0
        %3834 = vmatpush2.bf16.msra.mxu0 0
        %3835 = vmatprep.subr.bf16.mxu0 0
        %3836 = vmatpush2.bf16.msra.mxu0 0
        %3837 = vmatprep.subr.bf16.mxu0 0
        %3838 = vmatpush2.bf16.msra.mxu0 0
        %3839 = vmatprep.mubr.bf16.mxu0 0
        %3840 = vmatmul.mubr.bf16.gmra.mxu0 %v3802
        %v3841 = vpop.f32.mrf.mxu0
        %v3842 = vadd.f32 0.0, %v3841
        %v3843 = vpop.f32.mrf.mxu0
        %v3844 = vpop.f32.mrf.mxu0
        %v3845 = vpop.f32.mrf.mxu0
        %3846 = vdwg.mxu0
        %3848 = vrot.lane.b32.xlu0 %v3622, 16
        %v3849 = vpop.permute.xlu0 %3848
        %3852 = vrot.lane.b32.xlu0 %v3732, 32
        %v3853 = vpop.permute.xlu0 %3852
        %3856 = vrot.lane.b32.xlu0 %v3842, 48
        %v3857 = vpop.permute.xlu0 %3856
        %v3859 = vsel %vm991, %v3509, %v3849
        %v3860 = vsel %vm1445, %v3859, %v3853
        %v3861 = vsel %vm1447, %v3860, %v3857
        %v3862 = vrot.slane %v3407, 1
        %v3863 = vrot.slane %v3408, 1
        %v3865 = vsel %vm991, %v3862, 0
        %v3868 = vsel %vm991, %v3863, 0
        %3870 = vmatprep.subr.bf16.mxu0 0
        %3871 = vmatpush1.bf16.xpose.msra.mxu0 0
        %3872 = vmatprep.subr.bf16.mxu0 0
        %3873 = vmatpush1.bf16.xpose.msra.mxu0 0
        %3874 = vmatprep.subr.bf16.mxu0 0
        %3875 = vmatpush1.bf16.xpose.msra.mxu0 0
        %3876 = vmatprep.subr.bf16.mxu0 0
        %3877 = vmatpush1.bf16.xpose.msra.mxu0 0
        %3878 = vmatprep.subr.bf16.mxu0 0
        %3879 = vmatpush1.bf16.xpose.msra.mxu0 0
        %3880 = vmatprep.subr.bf16.mxu0 0
        %3881 = vmatpush1.bf16.xpose.msra.mxu0 0
        %3882 = vmatprep.subr.bf16.mxu0 0
        %3883 = vmatpush1.bf16.xpose.msra.mxu0 0
        %3884 = vmatprep.subr.bf16.mxu0 0
        %3885 = vmatpush1.bf16.xpose.msra.mxu0 %v3868
        %3886 = vmatprep.subr.bf16.mxu0 0
        %3887 = vmatpush2.bf16.xpose.msra.mxu0 0
        %3888 = vmatprep.subr.bf16.mxu0 0
        %3889 = vmatpush2.bf16.xpose.msra.mxu0 0
        %3890 = vmatprep.subr.bf16.mxu0 0
        %3891 = vmatpush2.bf16.xpose.msra.mxu0 0
        %3892 = vmatprep.subr.bf16.mxu0 0
        %3893 = vmatpush2.bf16.xpose.msra.mxu0 0
        %3894 = vmatprep.subr.bf16.mxu0 0
        %3895 = vmatpush2.bf16.xpose.msra.mxu0 0
        %3896 = vmatprep.subr.bf16.mxu0 0
        %3897 = vmatpush2.bf16.xpose.msra.mxu0 0
        %3898 = vmatprep.subr.bf16.mxu0 0
        %3899 = vmatpush2.bf16.xpose.msra.mxu0 0
        %3900 = vmatprep.subr.bf16.mxu0 0
        %3901 = vmatpush2.bf16.xpose.msra.mxu0 0
        %3902 = vmatprep.mubr.bf16.mxu0 0
        %3903 = vmatmul.mubr.bf16.gmra.mxu0 %v3865
        %v3904 = vpop.f32.mrf.mxu0
        %v3905 = vadd.f32 0.0, %v3904
        %v3906 = vpop.f32.mrf.mxu0
        %v3907 = vpop.f32.mrf.mxu0
        %v3908 = vpop.f32.mrf.mxu0
        %3909 = vdwg.mxu0
        %v3910 = vsel %vm1038, %v3905, -inf
        %3911 = vmax.xlane.f32.xlu0 %v3910
        %v3912 = vpop.xlane.xlu0 %3911
        %v3913 = vsub.f32 %v3905, %v3912
        %v3914 = vmul.f32 %v3913, 1.442695
        %v3915 = vpow.pop %v3914
        %v3916 = vsel %vm1038, %v3915, 0.0
        %3917 = vadd.xlane.f32.xlu0 %v3916
        %v3918 = vpop.xlane.xlu0 %3917
        %v3919 = vrcp.pop %v3918
        %v3920 = vmul.f32 %v3915, %v3919
        %v3921 = vpack.c.bf16 %v3920, %v3920
        %v3922 = vrot.slane %v3409, 1
        %v3924 = vsel %vm1051, %v3921, 0
        %v3927 = vsel %vm1055, %v3922, 0
        %3929 = vmatprep.subr.bf16.mxu0 0
        %3930 = vmatpush1.bf16.msra.mxu0 0
        %3931 = vmatprep.subr.bf16.mxu0 0
        %3932 = vmatpush1.bf16.msra.mxu0 0
        %3933 = vmatprep.subr.bf16.mxu0 0
        %3934 = vmatpush1.bf16.msra.mxu0 0
        %3935 = vmatprep.subr.bf16.mxu0 0
        %3936 = vmatpush1.bf16.msra.mxu0 0
        %3937 = vmatprep.subr.bf16.mxu0 0
        %3938 = vmatpush1.bf16.msra.mxu0 0
        %3939 = vmatprep.subr.bf16.mxu0 0
        %3940 = vmatpush1.bf16.msra.mxu0 0
        %3941 = vmatprep.subr.bf16.mxu0 0
        %3942 = vmatpush1.bf16.msra.mxu0 0
        %3943 = vmatprep.subr.bf16.mxu0 0
        %3944 = vmatpush1.bf16.msra.mxu0 %v3927
        %3945 = vmatprep.subr.bf16.mxu0 0
        %3946 = vmatpush2.bf16.msra.mxu0 0
        %3947 = vmatprep.subr.bf16.mxu0 0
        %3948 = vmatpush2.bf16.msra.mxu0 0
        %3949 = vmatprep.subr.bf16.mxu0 0
        %3950 = vmatpush2.bf16.msra.mxu0 0
        %3951 = vmatprep.subr.bf16.mxu0 0
        %3952 = vmatpush2.bf16.msra.mxu0 0
        %3953 = vmatprep.subr.bf16.mxu0 0
        %3954 = vmatpush2.bf16.msra.mxu0 0
        %3955 = vmatprep.subr.bf16.mxu0 0
        %3956 = vmatpush2.bf16.msra.mxu0 0
        %3957 = vmatprep.subr.bf16.mxu0 0
        %3958 = vmatpush2.bf16.msra.mxu0 0
        %3959 = vmatprep.subr.bf16.mxu0 0
        %3960 = vmatpush2.bf16.msra.mxu0 0
        %3961 = vmatprep.mubr.bf16.mxu0 0
        %3962 = vmatmul.mubr.bf16.gmra.mxu0 %v3924
        %v3963 = vpop.f32.mrf.mxu0
        %v3964 = vadd.f32 0.0, %v3963
        %v3965 = vpop.f32.mrf.mxu0
        %v3966 = vpop.f32.mrf.mxu0
        %v3967 = vpop.f32.mrf.mxu0
        %3968 = vdwg.mxu0
        %3969 = vrot.lane.b32.xlu0 %v3862, 112
        %v3970 = vpop.permute.xlu0 %3969
        %3971 = vrot.lane.b32.xlu0 %v3863, 112
        %v3972 = vpop.permute.xlu0 %3971
        %v3974 = vsel %vm991, %v3970, 0
        %v3977 = vsel %vm991, %v3972, 0
        %3979 = vmatprep.subr.bf16.mxu0 0
        %3980 = vmatpush1.bf16.xpose.msra.mxu0 0
        %3981 = vmatprep.subr.bf16.mxu0 0
        %3982 = vmatpush1.bf16.xpose.msra.mxu0 0
        %3983 = vmatprep.subr.bf16.mxu0 0
        %3984 = vmatpush1.bf16.xpose.msra.mxu0 0
        %3985 = vmatprep.subr.bf16.mxu0 0
        %3986 = vmatpush1.bf16.xpose.msra.mxu0 0
        %3987 = vmatprep.subr.bf16.mxu0 0
        %3988 = vmatpush1.bf16.xpose.msra.mxu0 0
        %3989 = vmatprep.subr.bf16.mxu0 0
        %3990 = vmatpush1.bf16.xpose.msra.mxu0 0
        %3991 = vmatprep.subr.bf16.mxu0 0
        %3992 = vmatpush1.bf16.xpose.msra.mxu0 0
        %3993 = vmatprep.subr.bf16.mxu0 0
        %3994 = vmatpush1.bf16.xpose.msra.mxu0 %v3977
        %3995 = vmatprep.subr.bf16.mxu0 0
        %3996 = vmatpush2.bf16.xpose.msra.mxu0 0
        %3997 = vmatprep.subr.bf16.mxu0 0
        %3998 = vmatpush2.bf16.xpose.msra.mxu0 0
        %3999 = vmatprep.subr.bf16.mxu0 0
        %4000 = vmatpush2.bf16.xpose.msra.mxu0 0
        %4001 = vmatprep.subr.bf16.mxu0 0
        %4002 = vmatpush2.bf16.xpose.msra.mxu0 0
        %4003 = vmatprep.subr.bf16.mxu0 0
        %4004 = vmatpush2.bf16.xpose.msra.mxu0 0
        %4005 = vmatprep.subr.bf16.mxu0 0
        %4006 = vmatpush2.bf16.xpose.msra.mxu0 0
        %4007 = vmatprep.subr.bf16.mxu0 0
        %4008 = vmatpush2.bf16.xpose.msra.mxu0 0
        %4009 = vmatprep.subr.bf16.mxu0 0
        %4010 = vmatpush2.bf16.xpose.msra.mxu0 0
        %4011 = vmatprep.mubr.bf16.mxu0 0
        %4012 = vmatmul.mubr.bf16.gmra.mxu0 %v3974
        %v4013 = vpop.f32.mrf.mxu0
        %v4014 = vadd.f32 0.0, %v4013
        %v4015 = vpop.f32.mrf.mxu0
        %v4016 = vpop.f32.mrf.mxu0
        %v4017 = vpop.f32.mrf.mxu0
        %4018 = vdwg.mxu0
        %v4019 = vsel %vm1038, %v4014, -inf
        %4020 = vmax.xlane.f32.xlu0 %v4019
        %v4021 = vpop.xlane.xlu0 %4020
        %v4022 = vsub.f32 %v4014, %v4021
        %v4023 = vmul.f32 %v4022, 1.442695
        %v4024 = vpow.pop %v4023
        %v4025 = vsel %vm1038, %v4024, 0.0
        %4026 = vadd.xlane.f32.xlu0 %v4025
        %v4027 = vpop.xlane.xlu0 %4026
        %v4028 = vrcp.pop %v4027
        %v4029 = vmul.f32 %v4024, %v4028
        %v4030 = vpack.c.bf16 %v4029, %v4029
        %4031 = vrot.lane.b32.xlu0 %v3922, 112
        %v4032 = vpop.permute.xlu0 %4031
        %v4034 = vsel %vm1051, %v4030, 0
        %v4037 = vsel %vm1055, %v4032, 0
        %4039 = vmatprep.subr.bf16.mxu0 0
        %4040 = vmatpush1.bf16.msra.mxu0 0
        %4041 = vmatprep.subr.bf16.mxu0 0
        %4042 = vmatpush1.bf16.msra.mxu0 0
        %4043 = vmatprep.subr.bf16.mxu0 0
        %4044 = vmatpush1.bf16.msra.mxu0 0
        %4045 = vmatprep.subr.bf16.mxu0 0
        %4046 = vmatpush1.bf16.msra.mxu0 0
        %4047 = vmatprep.subr.bf16.mxu0 0
        %4048 = vmatpush1.bf16.msra.mxu0 0
        %4049 = vmatprep.subr.bf16.mxu0 0
        %4050 = vmatpush1.bf16.msra.mxu0 0
        %4051 = vmatprep.subr.bf16.mxu0 0
        %4052 = vmatpush1.bf16.msra.mxu0 0
        %4053 = vmatprep.subr.bf16.mxu0 0
        %4054 = vmatpush1.bf16.msra.mxu0 %v4037
        %4055 = vmatprep.subr.bf16.mxu0 0
        %4056 = vmatpush2.bf16.msra.mxu0 0
        %4057 = vmatprep.subr.bf16.mxu0 0
        %4058 = vmatpush2.bf16.msra.mxu0 0
        %4059 = vmatprep.subr.bf16.mxu0 0
        %4060 = vmatpush2.bf16.msra.mxu0 0
        %4061 = vmatprep.subr.bf16.mxu0 0
        %4062 = vmatpush2.bf16.msra.mxu0 0
        %4063 = vmatprep.subr.bf16.mxu0 0
        %4064 = vmatpush2.bf16.msra.mxu0 0
        %4065 = vmatprep.subr.bf16.mxu0 0
        %4066 = vmatpush2.bf16.msra.mxu0 0
        %4067 = vmatprep.subr.bf16.mxu0 0
        %4068 = vmatpush2.bf16.msra.mxu0 0
        %4069 = vmatprep.subr.bf16.mxu0 0
        %4070 = vmatpush2.bf16.msra.mxu0 0
        %4071 = vmatprep.mubr.bf16.mxu0 0
        %4072 = vmatmul.mubr.bf16.gmra.mxu0 %v4034
        %v4073 = vpop.f32.mrf.mxu0
        %v4074 = vadd.f32 0.0, %v4073
        %v4075 = vpop.f32.mrf.mxu0
        %v4076 = vpop.f32.mrf.mxu0
        %v4077 = vpop.f32.mrf.mxu0
        %4078 = vdwg.mxu0
        %4079 = vrot.lane.b32.xlu0 %v3862, 96
        %v4080 = vpop.permute.xlu0 %4079
        %4081 = vrot.lane.b32.xlu0 %v3863, 96
        %v4082 = vpop.permute.xlu0 %4081
        %v4084 = vsel %vm991, %v4080, 0
        %v4087 = vsel %vm991, %v4082, 0
        %4089 = vmatprep.subr.bf16.mxu0 0
        %4090 = vmatpush1.bf16.xpose.msra.mxu0 0
        %4091 = vmatprep.subr.bf16.mxu0 0
        %4092 = vmatpush1.bf16.xpose.msra.mxu0 0
        %4093 = vmatprep.subr.bf16.mxu0 0
        %4094 = vmatpush1.bf16.xpose.msra.mxu0 0
        %4095 = vmatprep.subr.bf16.mxu0 0
        %4096 = vmatpush1.bf16.xpose.msra.mxu0 0
        %4097 = vmatprep.subr.bf16.mxu0 0
        %4098 = vmatpush1.bf16.xpose.msra.mxu0 0
        %4099 = vmatprep.subr.bf16.mxu0 0
        %4100 = vmatpush1.bf16.xpose.msra.mxu0 0
        %4101 = vmatprep.subr.bf16.mxu0 0
        %4102 = vmatpush1.bf16.xpose.msra.mxu0 0
        %4103 = vmatprep.subr.bf16.mxu0 0
        %4104 = vmatpush1.bf16.xpose.msra.mxu0 %v4087
        %4105 = vmatprep.subr.bf16.mxu0 0
        %4106 = vmatpush2.bf16.xpose.msra.mxu0 0
        %4107 = vmatprep.subr.bf16.mxu0 0
        %4108 = vmatpush2.bf16.xpose.msra.mxu0 0
        %4109 = vmatprep.subr.bf16.mxu0 0
        %4110 = vmatpush2.bf16.xpose.msra.mxu0 0
        %4111 = vmatprep.subr.bf16.mxu0 0
        %4112 = vmatpush2.bf16.xpose.msra.mxu0 0
        %4113 = vmatprep.subr.bf16.mxu0 0
        %4114 = vmatpush2.bf16.xpose.msra.mxu0 0
        %4115 = vmatprep.subr.bf16.mxu0 0
        %4116 = vmatpush2.bf16.xpose.msra.mxu0 0
        %4117 = vmatprep.subr.bf16.mxu0 0
        %4118 = vmatpush2.bf16.xpose.msra.mxu0 0
        %4119 = vmatprep.subr.bf16.mxu0 0
        %4120 = vmatpush2.bf16.xpose.msra.mxu0 0
        %4121 = vmatprep.mubr.bf16.mxu0 0
        %4122 = vmatmul.mubr.bf16.gmra.mxu0 %v4084
        %v4123 = vpop.f32.mrf.mxu0
        %v4124 = vadd.f32 0.0, %v4123
        %v4125 = vpop.f32.mrf.mxu0
        %v4126 = vpop.f32.mrf.mxu0
        %v4127 = vpop.f32.mrf.mxu0
        %4128 = vdwg.mxu0
        %v4129 = vsel %vm1038, %v4124, -inf
        %4130 = vmax.xlane.f32.xlu0 %v4129
        %v4131 = vpop.xlane.xlu0 %4130
        %v4132 = vsub.f32 %v4124, %v4131
        %v4133 = vmul.f32 %v4132, 1.442695
        %v4134 = vpow.pop %v4133
        %v4135 = vsel %vm1038, %v4134, 0.0
        %4136 = vadd.xlane.f32.xlu0 %v4135
        %v4137 = vpop.xlane.xlu0 %4136
        %v4138 = vrcp.pop %v4137
        %v4139 = vmul.f32 %v4134, %v4138
        %v4140 = vpack.c.bf16 %v4139, %v4139
        %4141 = vrot.lane.b32.xlu0 %v3922, 96
        %v4142 = vpop.permute.xlu0 %4141
        %v4144 = vsel %vm1051, %v4140, 0
        %v4147 = vsel %vm1055, %v4142, 0
        %4149 = vmatprep.subr.bf16.mxu0 0
        %4150 = vmatpush1.bf16.msra.mxu0 0
        %4151 = vmatprep.subr.bf16.mxu0 0
        %4152 = vmatpush1.bf16.msra.mxu0 0
        %4153 = vmatprep.subr.bf16.mxu0 0
        %4154 = vmatpush1.bf16.msra.mxu0 0
        %4155 = vmatprep.subr.bf16.mxu0 0
        %4156 = vmatpush1.bf16.msra.mxu0 0
        %4157 = vmatprep.subr.bf16.mxu0 0
        %4158 = vmatpush1.bf16.msra.mxu0 0
        %4159 = vmatprep.subr.bf16.mxu0 0
        %4160 = vmatpush1.bf16.msra.mxu0 0
        %4161 = vmatprep.subr.bf16.mxu0 0
        %4162 = vmatpush1.bf16.msra.mxu0 0
        %4163 = vmatprep.subr.bf16.mxu0 0
        %4164 = vmatpush1.bf16.msra.mxu0 %v4147
        %4165 = vmatprep.subr.bf16.mxu0 0
        %4166 = vmatpush2.bf16.msra.mxu0 0
        %4167 = vmatprep.subr.bf16.mxu0 0
        %4168 = vmatpush2.bf16.msra.mxu0 0
        %4169 = vmatprep.subr.bf16.mxu0 0
        %4170 = vmatpush2.bf16.msra.mxu0 0
        %4171 = vmatprep.subr.bf16.mxu0 0
        %4172 = vmatpush2.bf16.msra.mxu0 0
        %4173 = vmatprep.subr.bf16.mxu0 0
        %4174 = vmatpush2.bf16.msra.mxu0 0
        %4175 = vmatprep.subr.bf16.mxu0 0
        %4176 = vmatpush2.bf16.msra.mxu0 0
        %4177 = vmatprep.subr.bf16.mxu0 0
        %4178 = vmatpush2.bf16.msra.mxu0 0
        %4179 = vmatprep.subr.bf16.mxu0 0
        %4180 = vmatpush2.bf16.msra.mxu0 0
        %4181 = vmatprep.mubr.bf16.mxu0 0
        %4182 = vmatmul.mubr.bf16.gmra.mxu0 %v4144
        %v4183 = vpop.f32.mrf.mxu0
        %v4184 = vadd.f32 0.0, %v4183
        %v4185 = vpop.f32.mrf.mxu0
        %v4186 = vpop.f32.mrf.mxu0
        %v4187 = vpop.f32.mrf.mxu0
        %4188 = vdwg.mxu0
        %4189 = vrot.lane.b32.xlu0 %v3862, 80
        %v4190 = vpop.permute.xlu0 %4189
        %4191 = vrot.lane.b32.xlu0 %v3863, 80
        %v4192 = vpop.permute.xlu0 %4191
        %v4194 = vsel %vm991, %v4190, 0
        %v4197 = vsel %vm991, %v4192, 0
        %4199 = vmatprep.subr.bf16.mxu0 0
        %4200 = vmatpush1.bf16.xpose.msra.mxu0 0
        %4201 = vmatprep.subr.bf16.mxu0 0
        %4202 = vmatpush1.bf16.xpose.msra.mxu0 0
        %4203 = vmatprep.subr.bf16.mxu0 0
        %4204 = vmatpush1.bf16.xpose.msra.mxu0 0
        %4205 = vmatprep.subr.bf16.mxu0 0
        %4206 = vmatpush1.bf16.xpose.msra.mxu0 0
        %4207 = vmatprep.subr.bf16.mxu0 0
        %4208 = vmatpush1.bf16.xpose.msra.mxu0 0
        %4209 = vmatprep.subr.bf16.mxu0 0
        %4210 = vmatpush1.bf16.xpose.msra.mxu0 0
        %4211 = vmatprep.subr.bf16.mxu0 0
        %4212 = vmatpush1.bf16.xpose.msra.mxu0 0
        %4213 = vmatprep.subr.bf16.mxu0 0
        %4214 = vmatpush1.bf16.xpose.msra.mxu0 %v4197
        %4215 = vmatprep.subr.bf16.mxu0 0
        %4216 = vmatpush2.bf16.xpose.msra.mxu0 0
        %4217 = vmatprep.subr.bf16.mxu0 0
        %4218 = vmatpush2.bf16.xpose.msra.mxu0 0
        %4219 = vmatprep.subr.bf16.mxu0 0
        %4220 = vmatpush2.bf16.xpose.msra.mxu0 0
        %4221 = vmatprep.subr.bf16.mxu0 0
        %4222 = vmatpush2.bf16.xpose.msra.mxu0 0
        %4223 = vmatprep.subr.bf16.mxu0 0
        %4224 = vmatpush2.bf16.xpose.msra.mxu0 0
        %4225 = vmatprep.subr.bf16.mxu0 0
        %4226 = vmatpush2.bf16.xpose.msra.mxu0 0
        %4227 = vmatprep.subr.bf16.mxu0 0
        %4228 = vmatpush2.bf16.xpose.msra.mxu0 0
        %4229 = vmatprep.subr.bf16.mxu0 0
        %4230 = vmatpush2.bf16.xpose.msra.mxu0 0
        %4231 = vmatprep.mubr.bf16.mxu0 0
        %4232 = vmatmul.mubr.bf16.gmra.mxu0 %v4194
        %v4233 = vpop.f32.mrf.mxu0
        %v4234 = vadd.f32 0.0, %v4233
        %v4235 = vpop.f32.mrf.mxu0
        %v4236 = vpop.f32.mrf.mxu0
        %v4237 = vpop.f32.mrf.mxu0
        %4238 = vdwg.mxu0
        %v4239 = vsel %vm1038, %v4234, -inf
        %4240 = vmax.xlane.f32.xlu0 %v4239
        %v4241 = vpop.xlane.xlu0 %4240
        %v4242 = vsub.f32 %v4234, %v4241
        %v4243 = vmul.f32 %v4242, 1.442695
        %v4244 = vpow.pop %v4243
        %v4245 = vsel %vm1038, %v4244, 0.0
        %4246 = vadd.xlane.f32.xlu0 %v4245
        %v4247 = vpop.xlane.xlu0 %4246
        %v4248 = vrcp.pop %v4247
        %v4249 = vmul.f32 %v4244, %v4248
        %v4250 = vpack.c.bf16 %v4249, %v4249
        %4251 = vrot.lane.b32.xlu0 %v3922, 80
        %v4252 = vpop.permute.xlu0 %4251
        %v4254 = vsel %vm1051, %v4250, 0
        %v4257 = vsel %vm1055, %v4252, 0
        %4259 = vmatprep.subr.bf16.mxu0 0
        %4260 = vmatpush1.bf16.msra.mxu0 0
        %4261 = vmatprep.subr.bf16.mxu0 0
        %4262 = vmatpush1.bf16.msra.mxu0 0
        %4263 = vmatprep.subr.bf16.mxu0 0
        %4264 = vmatpush1.bf16.msra.mxu0 0
        %4265 = vmatprep.subr.bf16.mxu0 0
        %4266 = vmatpush1.bf16.msra.mxu0 0
        %4267 = vmatprep.subr.bf16.mxu0 0
        %4268 = vmatpush1.bf16.msra.mxu0 0
        %4269 = vmatprep.subr.bf16.mxu0 0
        %4270 = vmatpush1.bf16.msra.mxu0 0
        %4271 = vmatprep.subr.bf16.mxu0 0
        %4272 = vmatpush1.bf16.msra.mxu0 0
        %4273 = vmatprep.subr.bf16.mxu0 0
        %4274 = vmatpush1.bf16.msra.mxu0 %v4257
        %4275 = vmatprep.subr.bf16.mxu0 0
        %4276 = vmatpush2.bf16.msra.mxu0 0
        %4277 = vmatprep.subr.bf16.mxu0 0
        %4278 = vmatpush2.bf16.msra.mxu0 0
        %4279 = vmatprep.subr.bf16.mxu0 0
        %4280 = vmatpush2.bf16.msra.mxu0 0
        %4281 = vmatprep.subr.bf16.mxu0 0
        %4282 = vmatpush2.bf16.msra.mxu0 0
        %4283 = vmatprep.subr.bf16.mxu0 0
        %4284 = vmatpush2.bf16.msra.mxu0 0
        %4285 = vmatprep.subr.bf16.mxu0 0
        %4286 = vmatpush2.bf16.msra.mxu0 0
        %4287 = vmatprep.subr.bf16.mxu0 0
        %4288 = vmatpush2.bf16.msra.mxu0 0
        %4289 = vmatprep.subr.bf16.mxu0 0
        %4290 = vmatpush2.bf16.msra.mxu0 0
        %4291 = vmatprep.mubr.bf16.mxu0 0
        %4292 = vmatmul.mubr.bf16.gmra.mxu0 %v4254
        %v4293 = vpop.f32.mrf.mxu0
        %v4294 = vadd.f32 0.0, %v4293
        %v4295 = vpop.f32.mrf.mxu0
        %v4296 = vpop.f32.mrf.mxu0
        %v4297 = vpop.f32.mrf.mxu0
        %4298 = vdwg.mxu0
        %4300 = vrot.lane.b32.xlu0 %v4074, 16
        %v4301 = vpop.permute.xlu0 %4300
        %4304 = vrot.lane.b32.xlu0 %v4184, 32
        %v4305 = vpop.permute.xlu0 %4304
        %4308 = vrot.lane.b32.xlu0 %v4294, 48
        %v4309 = vpop.permute.xlu0 %4308
        %v4311 = vsel %vm991, %v3964, %v4301
        %v4312 = vsel %vm1445, %v4311, %v4305
        %v4313 = vsel %vm1447, %v4312, %v4309
        %v4314 = vrot.slane %v3407, 2
        %v4315 = vrot.slane %v3408, 2
        %v4317 = vsel %vm991, %v4314, 0
        %v4320 = vsel %vm991, %v4315, 0
        %4322 = vmatprep.subr.bf16.mxu0 0
        %4323 = vmatpush1.bf16.xpose.msra.mxu0 0
        %4324 = vmatprep.subr.bf16.mxu0 0
        %4325 = vmatpush1.bf16.xpose.msra.mxu0 0
        %4326 = vmatprep.subr.bf16.mxu0 0
        %4327 = vmatpush1.bf16.xpose.msra.mxu0 0
        %4328 = vmatprep.subr.bf16.mxu0 0
        %4329 = vmatpush1.bf16.xpose.msra.mxu0 0
        %4330 = vmatprep.subr.bf16.mxu0 0
        %4331 = vmatpush1.bf16.xpose.msra.mxu0 0
        %4332 = vmatprep.subr.bf16.mxu0 0
        %4333 = vmatpush1.bf16.xpose.msra.mxu0 0
        %4334 = vmatprep.subr.bf16.mxu0 0
        %4335 = vmatpush1.bf16.xpose.msra.mxu0 0
        %4336 = vmatprep.subr.bf16.mxu0 0
        %4337 = vmatpush1.bf16.xpose.msra.mxu0 %v4320
        %4338 = vmatprep.subr.bf16.mxu0 0
        %4339 = vmatpush2.bf16.xpose.msra.mxu0 0
        %4340 = vmatprep.subr.bf16.mxu0 0
        %4341 = vmatpush2.bf16.xpose.msra.mxu0 0
        %4342 = vmatprep.subr.bf16.mxu0 0
        %4343 = vmatpush2.bf16.xpose.msra.mxu0 0
        %4344 = vmatprep.subr.bf16.mxu0 0
        %4345 = vmatpush2.bf16.xpose.msra.mxu0 0
        %4346 = vmatprep.subr.bf16.mxu0 0
        %4347 = vmatpush2.bf16.xpose.msra.mxu0 0
        %4348 = vmatprep.subr.bf16.mxu0 0
        %4349 = vmatpush2.bf16.xpose.msra.mxu0 0
        %4350 = vmatprep.subr.bf16.mxu0 0
        %4351 = vmatpush2.bf16.xpose.msra.mxu0 0
        %4352 = vmatprep.subr.bf16.mxu0 0
        %4353 = vmatpush2.bf16.xpose.msra.mxu0 0
        %4354 = vmatprep.mubr.bf16.mxu0 0
        %4355 = vmatmul.mubr.bf16.gmra.mxu0 %v4317
        %v4356 = vpop.f32.mrf.mxu0
        %v4357 = vadd.f32 0.0, %v4356
        %v4358 = vpop.f32.mrf.mxu0
        %v4359 = vpop.f32.mrf.mxu0
        %v4360 = vpop.f32.mrf.mxu0
        %4361 = vdwg.mxu0
        %v4362 = vsel %vm1038, %v4357, -inf
        %4363 = vmax.xlane.f32.xlu0 %v4362
        %v4364 = vpop.xlane.xlu0 %4363
        %v4365 = vsub.f32 %v4357, %v4364
        %v4366 = vmul.f32 %v4365, 1.442695
        %v4367 = vpow.pop %v4366
        %v4368 = vsel %vm1038, %v4367, 0.0
        %4369 = vadd.xlane.f32.xlu0 %v4368
        %v4370 = vpop.xlane.xlu0 %4369
        %v4371 = vrcp.pop %v4370
        %v4372 = vmul.f32 %v4367, %v4371
        %v4373 = vpack.c.bf16 %v4372, %v4372
        %v4374 = vrot.slane %v3409, 2
        %v4376 = vsel %vm1051, %v4373, 0
        %v4379 = vsel %vm1055, %v4374, 0
        %4381 = vmatprep.subr.bf16.mxu0 0
        %4382 = vmatpush1.bf16.msra.mxu0 0
        %4383 = vmatprep.subr.bf16.mxu0 0
        %4384 = vmatpush1.bf16.msra.mxu0 0
        %4385 = vmatprep.subr.bf16.mxu0 0
        %4386 = vmatpush1.bf16.msra.mxu0 0
        %4387 = vmatprep.subr.bf16.mxu0 0
        %4388 = vmatpush1.bf16.msra.mxu0 0
        %4389 = vmatprep.subr.bf16.mxu0 0
        %4390 = vmatpush1.bf16.msra.mxu0 0
        %4391 = vmatprep.subr.bf16.mxu0 0
        %4392 = vmatpush1.bf16.msra.mxu0 0
        %4393 = vmatprep.subr.bf16.mxu0 0
        %4394 = vmatpush1.bf16.msra.mxu0 0
        %4395 = vmatprep.subr.bf16.mxu0 0
        %4396 = vmatpush1.bf16.msra.mxu0 %v4379
        %4397 = vmatprep.subr.bf16.mxu0 0
        %4398 = vmatpush2.bf16.msra.mxu0 0
        %4399 = vmatprep.subr.bf16.mxu0 0
        %4400 = vmatpush2.bf16.msra.mxu0 0
        %4401 = vmatprep.subr.bf16.mxu0 0
        %4402 = vmatpush2.bf16.msra.mxu0 0
        %4403 = vmatprep.subr.bf16.mxu0 0
        %4404 = vmatpush2.bf16.msra.mxu0 0
        %4405 = vmatprep.subr.bf16.mxu0 0
        %4406 = vmatpush2.bf16.msra.mxu0 0
        %4407 = vmatprep.subr.bf16.mxu0 0
        %4408 = vmatpush2.bf16.msra.mxu0 0
        %4409 = vmatprep.subr.bf16.mxu0 0
        %4410 = vmatpush2.bf16.msra.mxu0 0
        %4411 = vmatprep.subr.bf16.mxu0 0
        %4412 = vmatpush2.bf16.msra.mxu0 0
        %4413 = vmatprep.mubr.bf16.mxu0 0
        %4414 = vmatmul.mubr.bf16.gmra.mxu0 %v4376
        %v4415 = vpop.f32.mrf.mxu0
        %v4416 = vadd.f32 0.0, %v4415
        %v4417 = vpop.f32.mrf.mxu0
        %v4418 = vpop.f32.mrf.mxu0
        %v4419 = vpop.f32.mrf.mxu0
        %4420 = vdwg.mxu0
        %4421 = vrot.lane.b32.xlu0 %v4314, 112
        %v4422 = vpop.permute.xlu0 %4421
        %4423 = vrot.lane.b32.xlu0 %v4315, 112
        %v4424 = vpop.permute.xlu0 %4423
        %v4426 = vsel %vm991, %v4422, 0
        %v4429 = vsel %vm991, %v4424, 0
        %4431 = vmatprep.subr.bf16.mxu0 0
        %4432 = vmatpush1.bf16.xpose.msra.mxu0 0
        %4433 = vmatprep.subr.bf16.mxu0 0
        %4434 = vmatpush1.bf16.xpose.msra.mxu0 0
        %4435 = vmatprep.subr.bf16.mxu0 0
        %4436 = vmatpush1.bf16.xpose.msra.mxu0 0
        %4437 = vmatprep.subr.bf16.mxu0 0
        %4438 = vmatpush1.bf16.xpose.msra.mxu0 0
        %4439 = vmatprep.subr.bf16.mxu0 0
        %4440 = vmatpush1.bf16.xpose.msra.mxu0 0
        %4441 = vmatprep.subr.bf16.mxu0 0
        %4442 = vmatpush1.bf16.xpose.msra.mxu0 0
        %4443 = vmatprep.subr.bf16.mxu0 0
        %4444 = vmatpush1.bf16.xpose.msra.mxu0 0
        %4445 = vmatprep.subr.bf16.mxu0 0
        %4446 = vmatpush1.bf16.xpose.msra.mxu0 %v4429
        %4447 = vmatprep.subr.bf16.mxu0 0
        %4448 = vmatpush2.bf16.xpose.msra.mxu0 0
        %4449 = vmatprep.subr.bf16.mxu0 0
        %4450 = vmatpush2.bf16.xpose.msra.mxu0 0
        %4451 = vmatprep.subr.bf16.mxu0 0
        %4452 = vmatpush2.bf16.xpose.msra.mxu0 0
        %4453 = vmatprep.subr.bf16.mxu0 0
        %4454 = vmatpush2.bf16.xpose.msra.mxu0 0
        %4455 = vmatprep.subr.bf16.mxu0 0
        %4456 = vmatpush2.bf16.xpose.msra.mxu0 0
        %4457 = vmatprep.subr.bf16.mxu0 0
        %4458 = vmatpush2.bf16.xpose.msra.mxu0 0
        %4459 = vmatprep.subr.bf16.mxu0 0
        %4460 = vmatpush2.bf16.xpose.msra.mxu0 0
        %4461 = vmatprep.subr.bf16.mxu0 0
        %4462 = vmatpush2.bf16.xpose.msra.mxu0 0
        %4463 = vmatprep.mubr.bf16.mxu0 0
        %4464 = vmatmul.mubr.bf16.gmra.mxu0 %v4426
        %v4465 = vpop.f32.mrf.mxu0
        %v4466 = vadd.f32 0.0, %v4465
        %v4467 = vpop.f32.mrf.mxu0
        %v4468 = vpop.f32.mrf.mxu0
        %v4469 = vpop.f32.mrf.mxu0
        %4470 = vdwg.mxu0
        %v4471 = vsel %vm1038, %v4466, -inf
        %4472 = vmax.xlane.f32.xlu0 %v4471
        %v4473 = vpop.xlane.xlu0 %4472
        %v4474 = vsub.f32 %v4466, %v4473
        %v4475 = vmul.f32 %v4474, 1.442695
        %v4476 = vpow.pop %v4475
        %v4477 = vsel %vm1038, %v4476, 0.0
        %4478 = vadd.xlane.f32.xlu0 %v4477
        %v4479 = vpop.xlane.xlu0 %4478
        %v4480 = vrcp.pop %v4479
        %v4481 = vmul.f32 %v4476, %v4480
        %v4482 = vpack.c.bf16 %v4481, %v4481
        %4483 = vrot.lane.b32.xlu0 %v4374, 112
        %v4484 = vpop.permute.xlu0 %4483
        %v4486 = vsel %vm1051, %v4482, 0
        %v4489 = vsel %vm1055, %v4484, 0
        %4491 = vmatprep.subr.bf16.mxu0 0
        %4492 = vmatpush1.bf16.msra.mxu0 0
        %4493 = vmatprep.subr.bf16.mxu0 0
        %4494 = vmatpush1.bf16.msra.mxu0 0
        %4495 = vmatprep.subr.bf16.mxu0 0
        %4496 = vmatpush1.bf16.msra.mxu0 0
        %4497 = vmatprep.subr.bf16.mxu0 0
        %4498 = vmatpush1.bf16.msra.mxu0 0
        %4499 = vmatprep.subr.bf16.mxu0 0
        %4500 = vmatpush1.bf16.msra.mxu0 0
        %4501 = vmatprep.subr.bf16.mxu0 0
        %4502 = vmatpush1.bf16.msra.mxu0 0
        %4503 = vmatprep.subr.bf16.mxu0 0
        %4504 = vmatpush1.bf16.msra.mxu0 0
        %4505 = vmatprep.subr.bf16.mxu0 0
        %4506 = vmatpush1.bf16.msra.mxu0 %v4489
        %4507 = vmatprep.subr.bf16.mxu0 0
        %4508 = vmatpush2.bf16.msra.mxu0 0
        %4509 = vmatprep.subr.bf16.mxu0 0
        %4510 = vmatpush2.bf16.msra.mxu0 0
        %4511 = vmatprep.subr.bf16.mxu0 0
        %4512 = vmatpush2.bf16.msra.mxu0 0
        %4513 = vmatprep.subr.bf16.mxu0 0
        %4514 = vmatpush2.bf16.msra.mxu0 0
        %4515 = vmatprep.subr.bf16.mxu0 0
        %4516 = vmatpush2.bf16.msra.mxu0 0
        %4517 = vmatprep.subr.bf16.mxu0 0
        %4518 = vmatpush2.bf16.msra.mxu0 0
        %4519 = vmatprep.subr.bf16.mxu0 0
        %4520 = vmatpush2.bf16.msra.mxu0 0
        %4521 = vmatprep.subr.bf16.mxu0 0
        %4522 = vmatpush2.bf16.msra.mxu0 0
        %4523 = vmatprep.mubr.bf16.mxu0 0
        %4524 = vmatmul.mubr.bf16.gmra.mxu0 %v4486
        %v4525 = vpop.f32.mrf.mxu0
        %v4526 = vadd.f32 0.0, %v4525
        %v4527 = vpop.f32.mrf.mxu0
        %v4528 = vpop.f32.mrf.mxu0
        %v4529 = vpop.f32.mrf.mxu0
        %4530 = vdwg.mxu0
        %4531 = vrot.lane.b32.xlu0 %v4314, 96
        %v4532 = vpop.permute.xlu0 %4531
        %4533 = vrot.lane.b32.xlu0 %v4315, 96
        %v4534 = vpop.permute.xlu0 %4533
        %v4536 = vsel %vm991, %v4532, 0
        %v4539 = vsel %vm991, %v4534, 0
        %4541 = vmatprep.subr.bf16.mxu0 0
        %4542 = vmatpush1.bf16.xpose.msra.mxu0 0
        %4543 = vmatprep.subr.bf16.mxu0 0
        %4544 = vmatpush1.bf16.xpose.msra.mxu0 0
        %4545 = vmatprep.subr.bf16.mxu0 0
        %4546 = vmatpush1.bf16.xpose.msra.mxu0 0
        %4547 = vmatprep.subr.bf16.mxu0 0
        %4548 = vmatpush1.bf16.xpose.msra.mxu0 0
        %4549 = vmatprep.subr.bf16.mxu0 0
        %4550 = vmatpush1.bf16.xpose.msra.mxu0 0
        %4551 = vmatprep.subr.bf16.mxu0 0
        %4552 = vmatpush1.bf16.xpose.msra.mxu0 0
        %4553 = vmatprep.subr.bf16.mxu0 0
        %4554 = vmatpush1.bf16.xpose.msra.mxu0 0
        %4555 = vmatprep.subr.bf16.mxu0 0
        %4556 = vmatpush1.bf16.xpose.msra.mxu0 %v4539
        %4557 = vmatprep.subr.bf16.mxu0 0
        %4558 = vmatpush2.bf16.xpose.msra.mxu0 0
        %4559 = vmatprep.subr.bf16.mxu0 0
        %4560 = vmatpush2.bf16.xpose.msra.mxu0 0
        %4561 = vmatprep.subr.bf16.mxu0 0
        %4562 = vmatpush2.bf16.xpose.msra.mxu0 0
        %4563 = vmatprep.subr.bf16.mxu0 0
        %4564 = vmatpush2.bf16.xpose.msra.mxu0 0
        %4565 = vmatprep.subr.bf16.mxu0 0
        %4566 = vmatpush2.bf16.xpose.msra.mxu0 0
        %4567 = vmatprep.subr.bf16.mxu0 0
        %4568 = vmatpush2.bf16.xpose.msra.mxu0 0
        %4569 = vmatprep.subr.bf16.mxu0 0
        %4570 = vmatpush2.bf16.xpose.msra.mxu0 0
        %4571 = vmatprep.subr.bf16.mxu0 0
        %4572 = vmatpush2.bf16.xpose.msra.mxu0 0
        %4573 = vmatprep.mubr.bf16.mxu0 0
        %4574 = vmatmul.mubr.bf16.gmra.mxu0 %v4536
        %v4575 = vpop.f32.mrf.mxu0
        %v4576 = vadd.f32 0.0, %v4575
        %v4577 = vpop.f32.mrf.mxu0
        %v4578 = vpop.f32.mrf.mxu0
        %v4579 = vpop.f32.mrf.mxu0
        %4580 = vdwg.mxu0
        %v4581 = vsel %vm1038, %v4576, -inf
        %4582 = vmax.xlane.f32.xlu0 %v4581
        %v4583 = vpop.xlane.xlu0 %4582
        %v4584 = vsub.f32 %v4576, %v4583
        %v4585 = vmul.f32 %v4584, 1.442695
        %v4586 = vpow.pop %v4585
        %v4587 = vsel %vm1038, %v4586, 0.0
        %4588 = vadd.xlane.f32.xlu0 %v4587
        %v4589 = vpop.xlane.xlu0 %4588
        %v4590 = vrcp.pop %v4589
        %v4591 = vmul.f32 %v4586, %v4590
        %v4592 = vpack.c.bf16 %v4591, %v4591
        %4593 = vrot.lane.b32.xlu0 %v4374, 96
        %v4594 = vpop.permute.xlu0 %4593
        %v4596 = vsel %vm1051, %v4592, 0
        %v4599 = vsel %vm1055, %v4594, 0
        %4601 = vmatprep.subr.bf16.mxu0 0
        %4602 = vmatpush1.bf16.msra.mxu0 0
        %4603 = vmatprep.subr.bf16.mxu0 0
        %4604 = vmatpush1.bf16.msra.mxu0 0
        %4605 = vmatprep.subr.bf16.mxu0 0
        %4606 = vmatpush1.bf16.msra.mxu0 0
        %4607 = vmatprep.subr.bf16.mxu0 0
        %4608 = vmatpush1.bf16.msra.mxu0 0
        %4609 = vmatprep.subr.bf16.mxu0 0
        %4610 = vmatpush1.bf16.msra.mxu0 0
        %4611 = vmatprep.subr.bf16.mxu0 0
        %4612 = vmatpush1.bf16.msra.mxu0 0
        %4613 = vmatprep.subr.bf16.mxu0 0
        %4614 = vmatpush1.bf16.msra.mxu0 0
        %4615 = vmatprep.subr.bf16.mxu0 0
        %4616 = vmatpush1.bf16.msra.mxu0 %v4599
        %4617 = vmatprep.subr.bf16.mxu0 0
        %4618 = vmatpush2.bf16.msra.mxu0 0
        %4619 = vmatprep.subr.bf16.mxu0 0
        %4620 = vmatpush2.bf16.msra.mxu0 0
        %4621 = vmatprep.subr.bf16.mxu0 0
        %4622 = vmatpush2.bf16.msra.mxu0 0
        %4623 = vmatprep.subr.bf16.mxu0 0
        %4624 = vmatpush2.bf16.msra.mxu0 0
        %4625 = vmatprep.subr.bf16.mxu0 0
        %4626 = vmatpush2.bf16.msra.mxu0 0
        %4627 = vmatprep.subr.bf16.mxu0 0
        %4628 = vmatpush2.bf16.msra.mxu0 0
        %4629 = vmatprep.subr.bf16.mxu0 0
        %4630 = vmatpush2.bf16.msra.mxu0 0
        %4631 = vmatprep.subr.bf16.mxu0 0
        %4632 = vmatpush2.bf16.msra.mxu0 0
        %4633 = vmatprep.mubr.bf16.mxu0 0
        %4634 = vmatmul.mubr.bf16.gmra.mxu0 %v4596
        %v4635 = vpop.f32.mrf.mxu0
        %v4636 = vadd.f32 0.0, %v4635
        %v4637 = vpop.f32.mrf.mxu0
        %v4638 = vpop.f32.mrf.mxu0
        %v4639 = vpop.f32.mrf.mxu0
        %4640 = vdwg.mxu0
        %4641 = vrot.lane.b32.xlu0 %v4314, 80
        %v4642 = vpop.permute.xlu0 %4641
        %4643 = vrot.lane.b32.xlu0 %v4315, 80
        %v4644 = vpop.permute.xlu0 %4643
        %v4646 = vsel %vm991, %v4642, 0
        %v4649 = vsel %vm991, %v4644, 0
        %4651 = vmatprep.subr.bf16.mxu0 0
        %4652 = vmatpush1.bf16.xpose.msra.mxu0 0
        %4653 = vmatprep.subr.bf16.mxu0 0
        %4654 = vmatpush1.bf16.xpose.msra.mxu0 0
        %4655 = vmatprep.subr.bf16.mxu0 0
        %4656 = vmatpush1.bf16.xpose.msra.mxu0 0
        %4657 = vmatprep.subr.bf16.mxu0 0
        %4658 = vmatpush1.bf16.xpose.msra.mxu0 0
        %4659 = vmatprep.subr.bf16.mxu0 0
        %4660 = vmatpush1.bf16.xpose.msra.mxu0 0
        %4661 = vmatprep.subr.bf16.mxu0 0
        %4662 = vmatpush1.bf16.xpose.msra.mxu0 0
        %4663 = vmatprep.subr.bf16.mxu0 0
        %4664 = vmatpush1.bf16.xpose.msra.mxu0 0
        %4665 = vmatprep.subr.bf16.mxu0 0
        %4666 = vmatpush1.bf16.xpose.msra.mxu0 %v4649
        %4667 = vmatprep.subr.bf16.mxu0 0
        %4668 = vmatpush2.bf16.xpose.msra.mxu0 0
        %4669 = vmatprep.subr.bf16.mxu0 0
        %4670 = vmatpush2.bf16.xpose.msra.mxu0 0
        %4671 = vmatprep.subr.bf16.mxu0 0
        %4672 = vmatpush2.bf16.xpose.msra.mxu0 0
        %4673 = vmatprep.subr.bf16.mxu0 0
        %4674 = vmatpush2.bf16.xpose.msra.mxu0 0
        %4675 = vmatprep.subr.bf16.mxu0 0
        %4676 = vmatpush2.bf16.xpose.msra.mxu0 0
        %4677 = vmatprep.subr.bf16.mxu0 0
        %4678 = vmatpush2.bf16.xpose.msra.mxu0 0
        %4679 = vmatprep.subr.bf16.mxu0 0
        %4680 = vmatpush2.bf16.xpose.msra.mxu0 0
        %4681 = vmatprep.subr.bf16.mxu0 0
        %4682 = vmatpush2.bf16.xpose.msra.mxu0 0
        %4683 = vmatprep.mubr.bf16.mxu0 0
        %4684 = vmatmul.mubr.bf16.gmra.mxu0 %v4646
        %v4685 = vpop.f32.mrf.mxu0
        %v4686 = vadd.f32 0.0, %v4685
        %v4687 = vpop.f32.mrf.mxu0
        %v4688 = vpop.f32.mrf.mxu0
        %v4689 = vpop.f32.mrf.mxu0
        %4690 = vdwg.mxu0
        %v4691 = vsel %vm1038, %v4686, -inf
        %4692 = vmax.xlane.f32.xlu0 %v4691
        %v4693 = vpop.xlane.xlu0 %4692
        %v4694 = vsub.f32 %v4686, %v4693
        %v4695 = vmul.f32 %v4694, 1.442695
        %v4696 = vpow.pop %v4695
        %v4697 = vsel %vm1038, %v4696, 0.0
        %4698 = vadd.xlane.f32.xlu0 %v4697
        %v4699 = vpop.xlane.xlu0 %4698
        %v4700 = vrcp.pop %v4699
        %v4701 = vmul.f32 %v4696, %v4700
        %v4702 = vpack.c.bf16 %v4701, %v4701
        %4703 = vrot.lane.b32.xlu0 %v4374, 80
        %v4704 = vpop.permute.xlu0 %4703
        %v4706 = vsel %vm1051, %v4702, 0
        %v4709 = vsel %vm1055, %v4704, 0
        %4711 = vmatprep.subr.bf16.mxu0 0
        %4712 = vmatpush1.bf16.msra.mxu0 0
        %4713 = vmatprep.subr.bf16.mxu0 0
        %4714 = vmatpush1.bf16.msra.mxu0 0
        %4715 = vmatprep.subr.bf16.mxu0 0
        %4716 = vmatpush1.bf16.msra.mxu0 0
        %4717 = vmatprep.subr.bf16.mxu0 0
        %4718 = vmatpush1.bf16.msra.mxu0 0
        %4719 = vmatprep.subr.bf16.mxu0 0
        %4720 = vmatpush1.bf16.msra.mxu0 0
        %4721 = vmatprep.subr.bf16.mxu0 0
        %4722 = vmatpush1.bf16.msra.mxu0 0
        %4723 = vmatprep.subr.bf16.mxu0 0
        %4724 = vmatpush1.bf16.msra.mxu0 0
        %4725 = vmatprep.subr.bf16.mxu0 0
        %4726 = vmatpush1.bf16.msra.mxu0 %v4709
        %4727 = vmatprep.subr.bf16.mxu0 0
        %4728 = vmatpush2.bf16.msra.mxu0 0
        %4729 = vmatprep.subr.bf16.mxu0 0
        %4730 = vmatpush2.bf16.msra.mxu0 0
        %4731 = vmatprep.subr.bf16.mxu0 0
        %4732 = vmatpush2.bf16.msra.mxu0 0
        %4733 = vmatprep.subr.bf16.mxu0 0
        %4734 = vmatpush2.bf16.msra.mxu0 0
        %4735 = vmatprep.subr.bf16.mxu0 0
        %4736 = vmatpush2.bf16.msra.mxu0 0
        %4737 = vmatprep.subr.bf16.mxu0 0
        %4738 = vmatpush2.bf16.msra.mxu0 0
        %4739 = vmatprep.subr.bf16.mxu0 0
        %4740 = vmatpush2.bf16.msra.mxu0 0
        %4741 = vmatprep.subr.bf16.mxu0 0
        %4742 = vmatpush2.bf16.msra.mxu0 0
        %4743 = vmatprep.mubr.bf16.mxu0 0
        %4744 = vmatmul.mubr.bf16.gmra.mxu0 %v4706
        %v4745 = vpop.f32.mrf.mxu0
        %v4746 = vadd.f32 0.0, %v4745
        %v4747 = vpop.f32.mrf.mxu0
        %v4748 = vpop.f32.mrf.mxu0
        %v4749 = vpop.f32.mrf.mxu0
        %4750 = vdwg.mxu0
        %4752 = vrot.lane.b32.xlu0 %v4526, 16
        %v4753 = vpop.permute.xlu0 %4752
        %4756 = vrot.lane.b32.xlu0 %v4636, 32
        %v4757 = vpop.permute.xlu0 %4756
        %4760 = vrot.lane.b32.xlu0 %v4746, 48
        %v4761 = vpop.permute.xlu0 %4760
        %v4763 = vsel %vm991, %v4416, %v4753
        %v4764 = vsel %vm1445, %v4763, %v4757
        %v4765 = vsel %vm1447, %v4764, %v4761
        %v4766 = vrot.slane %v3407, 3
        %v4767 = vrot.slane %v3408, 3
        %v4769 = vsel %vm991, %v4766, 0
        %v4772 = vsel %vm991, %v4767, 0
        %4774 = vmatprep.subr.bf16.mxu0 0
        %4775 = vmatpush1.bf16.xpose.msra.mxu0 0
        %4776 = vmatprep.subr.bf16.mxu0 0
        %4777 = vmatpush1.bf16.xpose.msra.mxu0 0
        %4778 = vmatprep.subr.bf16.mxu0 0
        %4779 = vmatpush1.bf16.xpose.msra.mxu0 0
        %4780 = vmatprep.subr.bf16.mxu0 0
        %4781 = vmatpush1.bf16.xpose.msra.mxu0 0
        %4782 = vmatprep.subr.bf16.mxu0 0
        %4783 = vmatpush1.bf16.xpose.msra.mxu0 0
        %4784 = vmatprep.subr.bf16.mxu0 0
        %4785 = vmatpush1.bf16.xpose.msra.mxu0 0
        %4786 = vmatprep.subr.bf16.mxu0 0
        %4787 = vmatpush1.bf16.xpose.msra.mxu0 0
        %4788 = vmatprep.subr.bf16.mxu0 0
        %4789 = vmatpush1.bf16.xpose.msra.mxu0 %v4772
        %4790 = vmatprep.subr.bf16.mxu0 0
        %4791 = vmatpush2.bf16.xpose.msra.mxu0 0
        %4792 = vmatprep.subr.bf16.mxu0 0
        %4793 = vmatpush2.bf16.xpose.msra.mxu0 0
        %4794 = vmatprep.subr.bf16.mxu0 0
        %4795 = vmatpush2.bf16.xpose.msra.mxu0 0
        %4796 = vmatprep.subr.bf16.mxu0 0
        %4797 = vmatpush2.bf16.xpose.msra.mxu0 0
        %4798 = vmatprep.subr.bf16.mxu0 0
        %4799 = vmatpush2.bf16.xpose.msra.mxu0 0
        %4800 = vmatprep.subr.bf16.mxu0 0
        %4801 = vmatpush2.bf16.xpose.msra.mxu0 0
        %4802 = vmatprep.subr.bf16.mxu0 0
        %4803 = vmatpush2.bf16.xpose.msra.mxu0 0
        %4804 = vmatprep.subr.bf16.mxu0 0
        %4805 = vmatpush2.bf16.xpose.msra.mxu0 0
        %4806 = vmatprep.mubr.bf16.mxu0 0
        %4807 = vmatmul.mubr.bf16.gmra.mxu0 %v4769
        %v4808 = vpop.f32.mrf.mxu0
        %v4809 = vadd.f32 0.0, %v4808
        %v4810 = vpop.f32.mrf.mxu0
        %v4811 = vpop.f32.mrf.mxu0
        %v4812 = vpop.f32.mrf.mxu0
        %4813 = vdwg.mxu0
        %v4814 = vsel %vm1038, %v4809, -inf
        %4815 = vmax.xlane.f32.xlu0 %v4814
        %v4816 = vpop.xlane.xlu0 %4815
        %v4817 = vsub.f32 %v4809, %v4816
        %v4818 = vmul.f32 %v4817, 1.442695
        %v4819 = vpow.pop %v4818
        %v4820 = vsel %vm1038, %v4819, 0.0
        %4821 = vadd.xlane.f32.xlu0 %v4820
        %v4822 = vpop.xlane.xlu0 %4821
        %v4823 = vrcp.pop %v4822
        %v4824 = vmul.f32 %v4819, %v4823
        %v4825 = vpack.c.bf16 %v4824, %v4824
        %v4826 = vrot.slane %v3409, 3
        %v4828 = vsel %vm1051, %v4825, 0
        %v4831 = vsel %vm1055, %v4826, 0
        %4833 = vmatprep.subr.bf16.mxu0 0
        %4834 = vmatpush1.bf16.msra.mxu0 0
        %4835 = vmatprep.subr.bf16.mxu0 0
        %4836 = vmatpush1.bf16.msra.mxu0 0
        %4837 = vmatprep.subr.bf16.mxu0 0
        %4838 = vmatpush1.bf16.msra.mxu0 0
        %4839 = vmatprep.subr.bf16.mxu0 0
        %4840 = vmatpush1.bf16.msra.mxu0 0
        %4841 = vmatprep.subr.bf16.mxu0 0
        %4842 = vmatpush1.bf16.msra.mxu0 0
        %4843 = vmatprep.subr.bf16.mxu0 0
        %4844 = vmatpush1.bf16.msra.mxu0 0
        %4845 = vmatprep.subr.bf16.mxu0 0
        %4846 = vmatpush1.bf16.msra.mxu0 0
        %4847 = vmatprep.subr.bf16.mxu0 0
        %4848 = vmatpush1.bf16.msra.mxu0 %v4831
        %4849 = vmatprep.subr.bf16.mxu0 0
        %4850 = vmatpush2.bf16.msra.mxu0 0
        %4851 = vmatprep.subr.bf16.mxu0 0
        %4852 = vmatpush2.bf16.msra.mxu0 0
        %4853 = vmatprep.subr.bf16.mxu0 0
        %4854 = vmatpush2.bf16.msra.mxu0 0
        %4855 = vmatprep.subr.bf16.mxu0 0
        %4856 = vmatpush2.bf16.msra.mxu0 0
        %4857 = vmatprep.subr.bf16.mxu0 0
        %4858 = vmatpush2.bf16.msra.mxu0 0
        %4859 = vmatprep.subr.bf16.mxu0 0
        %4860 = vmatpush2.bf16.msra.mxu0 0
        %4861 = vmatprep.subr.bf16.mxu0 0
        %4862 = vmatpush2.bf16.msra.mxu0 0
        %4863 = vmatprep.subr.bf16.mxu0 0
        %4864 = vmatpush2.bf16.msra.mxu0 0
        %4865 = vmatprep.mubr.bf16.mxu0 0
        %4866 = vmatmul.mubr.bf16.gmra.mxu0 %v4828
        %v4867 = vpop.f32.mrf.mxu0
        %v4868 = vadd.f32 0.0, %v4867
        %v4869 = vpop.f32.mrf.mxu0
        %v4870 = vpop.f32.mrf.mxu0
        %v4871 = vpop.f32.mrf.mxu0
        %4872 = vdwg.mxu0
        %4873 = vrot.lane.b32.xlu0 %v4766, 112
        %v4874 = vpop.permute.xlu0 %4873
        %4875 = vrot.lane.b32.xlu0 %v4767, 112
        %v4876 = vpop.permute.xlu0 %4875
        %v4878 = vsel %vm991, %v4874, 0
        %v4881 = vsel %vm991, %v4876, 0
        %4883 = vmatprep.subr.bf16.mxu0 0
        %4884 = vmatpush1.bf16.xpose.msra.mxu0 0
        %4885 = vmatprep.subr.bf16.mxu0 0
        %4886 = vmatpush1.bf16.xpose.msra.mxu0 0
        %4887 = vmatprep.subr.bf16.mxu0 0
        %4888 = vmatpush1.bf16.xpose.msra.mxu0 0
        %4889 = vmatprep.subr.bf16.mxu0 0
        %4890 = vmatpush1.bf16.xpose.msra.mxu0 0
        %4891 = vmatprep.subr.bf16.mxu0 0
        %4892 = vmatpush1.bf16.xpose.msra.mxu0 0
        %4893 = vmatprep.subr.bf16.mxu0 0
        %4894 = vmatpush1.bf16.xpose.msra.mxu0 0
        %4895 = vmatprep.subr.bf16.mxu0 0
        %4896 = vmatpush1.bf16.xpose.msra.mxu0 0
        %4897 = vmatprep.subr.bf16.mxu0 0
        %4898 = vmatpush1.bf16.xpose.msra.mxu0 %v4881
        %4899 = vmatprep.subr.bf16.mxu0 0
        %4900 = vmatpush2.bf16.xpose.msra.mxu0 0
        %4901 = vmatprep.subr.bf16.mxu0 0
        %4902 = vmatpush2.bf16.xpose.msra.mxu0 0
        %4903 = vmatprep.subr.bf16.mxu0 0
        %4904 = vmatpush2.bf16.xpose.msra.mxu0 0
        %4905 = vmatprep.subr.bf16.mxu0 0
        %4906 = vmatpush2.bf16.xpose.msra.mxu0 0
        %4907 = vmatprep.subr.bf16.mxu0 0
        %4908 = vmatpush2.bf16.xpose.msra.mxu0 0
        %4909 = vmatprep.subr.bf16.mxu0 0
        %4910 = vmatpush2.bf16.xpose.msra.mxu0 0
        %4911 = vmatprep.subr.bf16.mxu0 0
        %4912 = vmatpush2.bf16.xpose.msra.mxu0 0
        %4913 = vmatprep.subr.bf16.mxu0 0
        %4914 = vmatpush2.bf16.xpose.msra.mxu0 0
        %4915 = vmatprep.mubr.bf16.mxu0 0
        %4916 = vmatmul.mubr.bf16.gmra.mxu0 %v4878
        %v4917 = vpop.f32.mrf.mxu0
        %v4918 = vadd.f32 0.0, %v4917
        %v4919 = vpop.f32.mrf.mxu0
        %v4920 = vpop.f32.mrf.mxu0
        %v4921 = vpop.f32.mrf.mxu0
        %4922 = vdwg.mxu0
        %v4923 = vsel %vm1038, %v4918, -inf
        %4924 = vmax.xlane.f32.xlu0 %v4923
        %v4925 = vpop.xlane.xlu0 %4924
        %v4926 = vsub.f32 %v4918, %v4925
        %v4927 = vmul.f32 %v4926, 1.442695
        %v4928 = vpow.pop %v4927
        %v4929 = vsel %vm1038, %v4928, 0.0
        %4930 = vadd.xlane.f32.xlu0 %v4929
        %v4931 = vpop.xlane.xlu0 %4930
        %v4932 = vrcp.pop %v4931
        %v4933 = vmul.f32 %v4928, %v4932
        %v4934 = vpack.c.bf16 %v4933, %v4933
        %4935 = vrot.lane.b32.xlu0 %v4826, 112
        %v4936 = vpop.permute.xlu0 %4935
        %v4938 = vsel %vm1051, %v4934, 0
        %v4941 = vsel %vm1055, %v4936, 0
        %4943 = vmatprep.subr.bf16.mxu0 0
        %4944 = vmatpush1.bf16.msra.mxu0 0
        %4945 = vmatprep.subr.bf16.mxu0 0
        %4946 = vmatpush1.bf16.msra.mxu0 0
        %4947 = vmatprep.subr.bf16.mxu0 0
        %4948 = vmatpush1.bf16.msra.mxu0 0
        %4949 = vmatprep.subr.bf16.mxu0 0
        %4950 = vmatpush1.bf16.msra.mxu0 0
        %4951 = vmatprep.subr.bf16.mxu0 0
        %4952 = vmatpush1.bf16.msra.mxu0 0
        %4953 = vmatprep.subr.bf16.mxu0 0
        %4954 = vmatpush1.bf16.msra.mxu0 0
        %4955 = vmatprep.subr.bf16.mxu0 0
        %4956 = vmatpush1.bf16.msra.mxu0 0
        %4957 = vmatprep.subr.bf16.mxu0 0
        %4958 = vmatpush1.bf16.msra.mxu0 %v4941
        %4959 = vmatprep.subr.bf16.mxu0 0
        %4960 = vmatpush2.bf16.msra.mxu0 0
        %4961 = vmatprep.subr.bf16.mxu0 0
        %4962 = vmatpush2.bf16.msra.mxu0 0
        %4963 = vmatprep.subr.bf16.mxu0 0
        %4964 = vmatpush2.bf16.msra.mxu0 0
        %4965 = vmatprep.subr.bf16.mxu0 0
        %4966 = vmatpush2.bf16.msra.mxu0 0
        %4967 = vmatprep.subr.bf16.mxu0 0
        %4968 = vmatpush2.bf16.msra.mxu0 0
        %4969 = vmatprep.subr.bf16.mxu0 0
        %4970 = vmatpush2.bf16.msra.mxu0 0
        %4971 = vmatprep.subr.bf16.mxu0 0
        %4972 = vmatpush2.bf16.msra.mxu0 0
        %4973 = vmatprep.subr.bf16.mxu0 0
        %4974 = vmatpush2.bf16.msra.mxu0 0
        %4975 = vmatprep.mubr.bf16.mxu0 0
        %4976 = vmatmul.mubr.bf16.gmra.mxu0 %v4938
        %v4977 = vpop.f32.mrf.mxu0
        %v4978 = vadd.f32 0.0, %v4977
        %v4979 = vpop.f32.mrf.mxu0
        %v4980 = vpop.f32.mrf.mxu0
        %v4981 = vpop.f32.mrf.mxu0
        %4982 = vdwg.mxu0
        %4983 = vrot.lane.b32.xlu0 %v4766, 96
        %v4984 = vpop.permute.xlu0 %4983
        %4985 = vrot.lane.b32.xlu0 %v4767, 96
        %v4986 = vpop.permute.xlu0 %4985
        %v4988 = vsel %vm991, %v4984, 0
        %v4991 = vsel %vm991, %v4986, 0
        %4993 = vmatprep.subr.bf16.mxu0 0
        %4994 = vmatpush1.bf16.xpose.msra.mxu0 0
        %4995 = vmatprep.subr.bf16.mxu0 0
        %4996 = vmatpush1.bf16.xpose.msra.mxu0 0
        %4997 = vmatprep.subr.bf16.mxu0 0
        %4998 = vmatpush1.bf16.xpose.msra.mxu0 0
        %4999 = vmatprep.subr.bf16.mxu0 0
        %5000 = vmatpush1.bf16.xpose.msra.mxu0 0
        %5001 = vmatprep.subr.bf16.mxu0 0
        %5002 = vmatpush1.bf16.xpose.msra.mxu0 0
        %5003 = vmatprep.subr.bf16.mxu0 0
        %5004 = vmatpush1.bf16.xpose.msra.mxu0 0
        %5005 = vmatprep.subr.bf16.mxu0 0
        %5006 = vmatpush1.bf16.xpose.msra.mxu0 0
        %5007 = vmatprep.subr.bf16.mxu0 0
        %5008 = vmatpush1.bf16.xpose.msra.mxu0 %v4991
        %5009 = vmatprep.subr.bf16.mxu0 0
        %5010 = vmatpush2.bf16.xpose.msra.mxu0 0
        %5011 = vmatprep.subr.bf16.mxu0 0
        %5012 = vmatpush2.bf16.xpose.msra.mxu0 0
        %5013 = vmatprep.subr.bf16.mxu0 0
        %5014 = vmatpush2.bf16.xpose.msra.mxu0 0
        %5015 = vmatprep.subr.bf16.mxu0 0
        %5016 = vmatpush2.bf16.xpose.msra.mxu0 0
        %5017 = vmatprep.subr.bf16.mxu0 0
        %5018 = vmatpush2.bf16.xpose.msra.mxu0 0
        %5019 = vmatprep.subr.bf16.mxu0 0
        %5020 = vmatpush2.bf16.xpose.msra.mxu0 0
        %5021 = vmatprep.subr.bf16.mxu0 0
        %5022 = vmatpush2.bf16.xpose.msra.mxu0 0
        %5023 = vmatprep.subr.bf16.mxu0 0
        %5024 = vmatpush2.bf16.xpose.msra.mxu0 0
        %5025 = vmatprep.mubr.bf16.mxu0 0
        %5026 = vmatmul.mubr.bf16.gmra.mxu0 %v4988
        %v5027 = vpop.f32.mrf.mxu0
        %v5028 = vadd.f32 0.0, %v5027
        %v5029 = vpop.f32.mrf.mxu0
        %v5030 = vpop.f32.mrf.mxu0
        %v5031 = vpop.f32.mrf.mxu0
        %5032 = vdwg.mxu0
        %v5033 = vsel %vm1038, %v5028, -inf
        %5034 = vmax.xlane.f32.xlu0 %v5033
        %v5035 = vpop.xlane.xlu0 %5034
        %v5036 = vsub.f32 %v5028, %v5035
        %v5037 = vmul.f32 %v5036, 1.442695
        %v5038 = vpow.pop %v5037
        %v5039 = vsel %vm1038, %v5038, 0.0
        %5040 = vadd.xlane.f32.xlu0 %v5039
        %v5041 = vpop.xlane.xlu0 %5040
        %v5042 = vrcp.pop %v5041
        %v5043 = vmul.f32 %v5038, %v5042
        %v5044 = vpack.c.bf16 %v5043, %v5043
        %5045 = vrot.lane.b32.xlu0 %v4826, 96
        %v5046 = vpop.permute.xlu0 %5045
        %v5048 = vsel %vm1051, %v5044, 0
        %v5051 = vsel %vm1055, %v5046, 0
        %5053 = vmatprep.subr.bf16.mxu0 0
        %5054 = vmatpush1.bf16.msra.mxu0 0
        %5055 = vmatprep.subr.bf16.mxu0 0
        %5056 = vmatpush1.bf16.msra.mxu0 0
        %5057 = vmatprep.subr.bf16.mxu0 0
        %5058 = vmatpush1.bf16.msra.mxu0 0
        %5059 = vmatprep.subr.bf16.mxu0 0
        %5060 = vmatpush1.bf16.msra.mxu0 0
        %5061 = vmatprep.subr.bf16.mxu0 0
        %5062 = vmatpush1.bf16.msra.mxu0 0
        %5063 = vmatprep.subr.bf16.mxu0 0
        %5064 = vmatpush1.bf16.msra.mxu0 0
        %5065 = vmatprep.subr.bf16.mxu0 0
        %5066 = vmatpush1.bf16.msra.mxu0 0
        %5067 = vmatprep.subr.bf16.mxu0 0
        %5068 = vmatpush1.bf16.msra.mxu0 %v5051
        %5069 = vmatprep.subr.bf16.mxu0 0
        %5070 = vmatpush2.bf16.msra.mxu0 0
        %5071 = vmatprep.subr.bf16.mxu0 0
        %5072 = vmatpush2.bf16.msra.mxu0 0
        %5073 = vmatprep.subr.bf16.mxu0 0
        %5074 = vmatpush2.bf16.msra.mxu0 0
        %5075 = vmatprep.subr.bf16.mxu0 0
        %5076 = vmatpush2.bf16.msra.mxu0 0
        %5077 = vmatprep.subr.bf16.mxu0 0
        %5078 = vmatpush2.bf16.msra.mxu0 0
        %5079 = vmatprep.subr.bf16.mxu0 0
        %5080 = vmatpush2.bf16.msra.mxu0 0
        %5081 = vmatprep.subr.bf16.mxu0 0
        %5082 = vmatpush2.bf16.msra.mxu0 0
        %5083 = vmatprep.subr.bf16.mxu0 0
        %5084 = vmatpush2.bf16.msra.mxu0 0
        %5085 = vmatprep.mubr.bf16.mxu0 0
        %5086 = vmatmul.mubr.bf16.gmra.mxu0 %v5048
        %v5087 = vpop.f32.mrf.mxu0
        %v5088 = vadd.f32 0.0, %v5087
        %v5089 = vpop.f32.mrf.mxu0
        %v5090 = vpop.f32.mrf.mxu0
        %v5091 = vpop.f32.mrf.mxu0
        %5092 = vdwg.mxu0
        %5093 = vrot.lane.b32.xlu0 %v4766, 80
        %v5094 = vpop.permute.xlu0 %5093
        %5095 = vrot.lane.b32.xlu0 %v4767, 80
        %v5096 = vpop.permute.xlu0 %5095
        %v5098 = vsel %vm991, %v5094, 0
        %v5101 = vsel %vm991, %v5096, 0
        %5103 = vmatprep.subr.bf16.mxu0 0
        %5104 = vmatpush1.bf16.xpose.msra.mxu0 0
        %5105 = vmatprep.subr.bf16.mxu0 0
        %5106 = vmatpush1.bf16.xpose.msra.mxu0 0
        %5107 = vmatprep.subr.bf16.mxu0 0
        %5108 = vmatpush1.bf16.xpose.msra.mxu0 0
        %5109 = vmatprep.subr.bf16.mxu0 0
        %5110 = vmatpush1.bf16.xpose.msra.mxu0 0
        %5111 = vmatprep.subr.bf16.mxu0 0
        %5112 = vmatpush1.bf16.xpose.msra.mxu0 0
        %5113 = vmatprep.subr.bf16.mxu0 0
        %5114 = vmatpush1.bf16.xpose.msra.mxu0 0
        %5115 = vmatprep.subr.bf16.mxu0 0
        %5116 = vmatpush1.bf16.xpose.msra.mxu0 0
        %5117 = vmatprep.subr.bf16.mxu0 0
        %5118 = vmatpush1.bf16.xpose.msra.mxu0 %v5101
        %5119 = vmatprep.subr.bf16.mxu0 0
        %5120 = vmatpush2.bf16.xpose.msra.mxu0 0
        %5121 = vmatprep.subr.bf16.mxu0 0
        %5122 = vmatpush2.bf16.xpose.msra.mxu0 0
        %5123 = vmatprep.subr.bf16.mxu0 0
        %5124 = vmatpush2.bf16.xpose.msra.mxu0 0
        %5125 = vmatprep.subr.bf16.mxu0 0
        %5126 = vmatpush2.bf16.xpose.msra.mxu0 0
        %5127 = vmatprep.subr.bf16.mxu0 0
        %5128 = vmatpush2.bf16.xpose.msra.mxu0 0
        %5129 = vmatprep.subr.bf16.mxu0 0
        %5130 = vmatpush2.bf16.xpose.msra.mxu0 0
        %5131 = vmatprep.subr.bf16.mxu0 0
        %5132 = vmatpush2.bf16.xpose.msra.mxu0 0
        %5133 = vmatprep.subr.bf16.mxu0 0
        %5134 = vmatpush2.bf16.xpose.msra.mxu0 0
        %5135 = vmatprep.mubr.bf16.mxu0 0
        %5136 = vmatmul.mubr.bf16.gmra.mxu0 %v5098
        %v5137 = vpop.f32.mrf.mxu0
        %v5138 = vadd.f32 0.0, %v5137
        %v5139 = vpop.f32.mrf.mxu0
        %v5140 = vpop.f32.mrf.mxu0
        %v5141 = vpop.f32.mrf.mxu0
        %5142 = vdwg.mxu0
        %v5143 = vsel %vm1038, %v5138, -inf
        %5144 = vmax.xlane.f32.xlu0 %v5143
        %v5145 = vpop.xlane.xlu0 %5144
        %v5146 = vsub.f32 %v5138, %v5145
        %v5147 = vmul.f32 %v5146, 1.442695
        %v5148 = vpow.pop %v5147
        %v5149 = vsel %vm1038, %v5148, 0.0
        %5150 = vadd.xlane.f32.xlu0 %v5149
        %v5151 = vpop.xlane.xlu0 %5150
        %v5152 = vrcp.pop %v5151
        %v5153 = vmul.f32 %v5148, %v5152
        %v5154 = vpack.c.bf16 %v5153, %v5153
        %5155 = vrot.lane.b32.xlu0 %v4826, 80
        %v5156 = vpop.permute.xlu0 %5155
        %v5158 = vsel %vm1051, %v5154, 0
        %v5161 = vsel %vm1055, %v5156, 0
        %5163 = vmatprep.subr.bf16.mxu0 0
        %5164 = vmatpush1.bf16.msra.mxu0 0
        %5165 = vmatprep.subr.bf16.mxu0 0
        %5166 = vmatpush1.bf16.msra.mxu0 0
        %5167 = vmatprep.subr.bf16.mxu0 0
        %5168 = vmatpush1.bf16.msra.mxu0 0
        %5169 = vmatprep.subr.bf16.mxu0 0
        %5170 = vmatpush1.bf16.msra.mxu0 0
        %5171 = vmatprep.subr.bf16.mxu0 0
        %5172 = vmatpush1.bf16.msra.mxu0 0
        %5173 = vmatprep.subr.bf16.mxu0 0
        %5174 = vmatpush1.bf16.msra.mxu0 0
        %5175 = vmatprep.subr.bf16.mxu0 0
        %5176 = vmatpush1.bf16.msra.mxu0 0
        %5177 = vmatprep.subr.bf16.mxu0 0
        %5178 = vmatpush1.bf16.msra.mxu0 %v5161
        %5179 = vmatprep.subr.bf16.mxu0 0
        %5180 = vmatpush2.bf16.msra.mxu0 0
        %5181 = vmatprep.subr.bf16.mxu0 0
        %5182 = vmatpush2.bf16.msra.mxu0 0
        %5183 = vmatprep.subr.bf16.mxu0 0
        %5184 = vmatpush2.bf16.msra.mxu0 0
        %5185 = vmatprep.subr.bf16.mxu0 0
        %5186 = vmatpush2.bf16.msra.mxu0 0
        %5187 = vmatprep.subr.bf16.mxu0 0
        %5188 = vmatpush2.bf16.msra.mxu0 0
        %5189 = vmatprep.subr.bf16.mxu0 0
        %5190 = vmatpush2.bf16.msra.mxu0 0
        %5191 = vmatprep.subr.bf16.mxu0 0
        %5192 = vmatpush2.bf16.msra.mxu0 0
        %5193 = vmatprep.subr.bf16.mxu0 0
        %5194 = vmatpush2.bf16.msra.mxu0 0
        %5195 = vmatprep.mubr.bf16.mxu0 0
        %5196 = vmatmul.mubr.bf16.gmra.mxu0 %v5158
        %v5197 = vpop.f32.mrf.mxu0
        %v5198 = vadd.f32 0.0, %v5197
        %v5199 = vpop.f32.mrf.mxu0
        %v5200 = vpop.f32.mrf.mxu0
        %v5201 = vpop.f32.mrf.mxu0
        %5202 = vdwg.mxu0
        %5204 = vrot.lane.b32.xlu0 %v4978, 16
        %v5205 = vpop.permute.xlu0 %5204
        %5208 = vrot.lane.b32.xlu0 %v5088, 32
        %v5209 = vpop.permute.xlu0 %5208
        %5212 = vrot.lane.b32.xlu0 %v5198, 48
        %v5213 = vpop.permute.xlu0 %5212
        %v5215 = vsel %vm991, %v4868, %v5205
        %v5216 = vsel %vm1445, %v5215, %v5209
        %v5217 = vsel %vm1447, %v5216, %v5213
        %v5219 = vrot.slane %v4313, 6
        %v5222 = vrot.slane %v4765, 4
        %v5225 = vrot.slane %v5217, 2
        %v5227 = vsel %vm2814, %v3861, %v5219
        %v5228 = vsel %vm699, %v5227, %v5222
        %v5229 = vsel %vm2817, %v5228, %v5225
        %s5230 = scalar_lea.vmem [#allocation5], 32
        %v5231 = vld [vmem:[%s5230] sm:$0xf]
        %v5232 = vld [vmem:[%s5230 + $0x4] sm:$0xf]
        %v5233 = vld [vmem:[%s5230 + $0x8] sm:$0xf]
        %v5234 = vld [vmem:[%s5230 + $0xc] sm:$0xf]
        %v5235 = vld [vmem:[%s5230 + $0x10] sm:$0xf]
        %v5236 = vld [vmem:[%s5230 + $0x14] sm:$0xf]
        %v5237 = vld [vmem:[%s5230 + $0x18] sm:$0xf]
        %v5238 = vld [vmem:[%s5230 + $0x1c] sm:$0xf]
        %v5239 = vpack.c.bf16 %v5229, %v5229
        %s5240 = scalar_lea.vmem %s11, 1
        %v5241 = vld [vmem:[%s5240] sm:$0x1]
        %v5243 = vlaneseq
        %v5244 = vshrl.u32 %v5243, 7
        %v5245 = vsub.s32 0, %v5244
        %v5246 = vrot.slane %v5241, %v5245
        %v5256 = vunpack.c.l.b16 %v5231
        %v5257 = vunpack.c.l.b16 %v5232
        %v5258 = vunpack.c.l.b16 %v5233
        %v5259 = vunpack.c.l.b16 %v5234
        %v5260 = vunpack.c.l.b16 %v5235
        %v5261 = vunpack.c.l.b16 %v5236
        %v5262 = vunpack.c.l.b16 %v5237
        %v5263 = vunpack.c.l.b16 %v5238
        %v5264 = vpack.c.b16 %v5257, %v5256
        %v5265 = vpack.c.b16 %v5259, %v5258
        %v5266 = vpack.c.b16 %v5261, %v5260
        %v5267 = vpack.c.b16 %v5263, %v5262
        %v5273 = vsel %vm785, %v5239, 0
        %5275 = vmatprep.subr.bf16.mxu0 0
        %5276 = vmatpush1.bf16.msra.mxu0 0
        %5277 = vmatprep.subr.bf16.mxu0 0
        %5278 = vmatpush1.bf16.msra.mxu0 0
        %5279 = vmatprep.subr.bf16.mxu0 0
        %5280 = vmatpush1.bf16.msra.mxu0 0
        %5281 = vmatprep.subr.bf16.mxu0 0
        %5282 = vmatpush1.bf16.msra.mxu0 0
        %5283 = vmatprep.subr.bf16.mxu0 0
        %5284 = vmatpush1.bf16.msra.mxu0 %v5267
        %5285 = vmatprep.subr.bf16.mxu0 0
        %5286 = vmatpush1.bf16.msra.mxu0 %v5266
        %5287 = vmatprep.subr.bf16.mxu0 0
        %5288 = vmatpush1.bf16.msra.mxu0 %v5265
        %5289 = vmatprep.subr.bf16.mxu0 0
        %5290 = vmatpush1.bf16.msra.mxu0 %v5264
        %5291 = vmatprep.subr.bf16.mxu0 0
        %5292 = vmatpush2.bf16.msra.mxu0 0
        %5293 = vmatprep.subr.bf16.mxu0 0
        %5294 = vmatpush2.bf16.msra.mxu0 0
        %5295 = vmatprep.subr.bf16.mxu0 0
        %5296 = vmatpush2.bf16.msra.mxu0 0
        %5297 = vmatprep.subr.bf16.mxu0 0
        %5298 = vmatpush2.bf16.msra.mxu0 0
        %5299 = vmatprep.subr.bf16.mxu0 0
        %5300 = vmatpush2.bf16.msra.mxu0 0
        %5301 = vmatprep.subr.bf16.mxu0 0
        %5302 = vmatpush2.bf16.msra.mxu0 0
        %5303 = vmatprep.subr.bf16.mxu0 0
        %5304 = vmatpush2.bf16.msra.mxu0 0
        %5305 = vmatprep.subr.bf16.mxu0 0
        %5306 = vmatpush2.bf16.msra.mxu0 0
        %5307 = vmatprep.mubr.bf16.mxu0 0
        %5308 = vmatmul.mubr.bf16.gmra.mxu0 %v5273
        %v5309 = vpop.f32.mrf.mxu0
        %v5310 = vadd.f32 %v5246, %v5309
        %v5311 = vpop.f32.mrf.mxu0
        %v5312 = vpop.f32.mrf.mxu0
        %v5313 = vpop.f32.mrf.mxu0
        %5314 = vdwg.mxu0
        %v5315 = vadd.f32 %v3158, %v5310
        %s5316 = scalar_lea.vmem %s16, 1
        %v5317 = vld [vmem:[%s5316] sm:$0x1]
        %s5318 = scalar_lea.vmem %s17, 1
        %v5319 = vld [vmem:[%s5318] sm:$0x1]
        %v5320 = vsel %vm785, %v5315, 0.0
        %5321 = vadd.xlane.f32.xlu0 %v5320
        %v5322 = vpop.xlane.xlu0 %5321
        %v5323 = vmul.f32 %v5322, %v2908
        %v5324 = vsub.f32 %v5315, %v5323
        %v5325 = vmul.f32 %v5324, %v5324
        %v5326 = vsel %vm785, %v5325, 0.0
        %5327 = vadd.xlane.f32.xlu0 %v5326
        %v5328 = vpop.xlane.xlu0 %5327
        %v5329 = vmul.f32 %v5328, %v2908
        %v5330 = vadd.f32 %v5329, 1e-05
        %v5331 = vrsqrt.pop %v5330
        %v5332 = vmul.f32 %v5324, %v5331
        %v5334 = vlaneseq
        %v5335 = vshrl.u32 %v5334, 7
        %v5336 = vsub.s32 0, %v5335
        %v5337 = vrot.slane %v5317, %v5336
        %v5339 = vmul.f32 %v5332, %v5337
        %v5341 = vlaneseq
        %v5342 = vshrl.u32 %v5341, 7
        %v5343 = vsub.s32 0, %v5342
        %v5344 = vrot.slane %v5319, %v5343
        %v5346 = vadd.f32 %v5339, %v5344
        %s5347 = scalar_lea.vmem [#allocation7], 32
        %v5348 = vld [vmem:[%s5347] sm:$0xf]
        %v5349 = vld [vmem:[%s5347 + $0x4] sm:$0xf]
        %v5350 = vld [vmem:[%s5347 + $0x8] sm:$0xf]
        %v5351 = vld [vmem:[%s5347 + $0xc] sm:$0xf]
        %v5352 = vld [vmem:[%s5347 + $0x10] sm:$0xf]
        %v5353 = vld [vmem:[%s5347 + $0x14] sm:$0xf]
        %v5354 = vld [vmem:[%s5347 + $0x18] sm:$0xf]
        %v5355 = vld [vmem:[%s5347 + $0x1c] sm:$0xf]
        %v5356 = vpack.c.bf16 %v5346, %v5346
        %s5357 = scalar_lea.vmem %s13, 1
        %v5358 = vld [vmem:[%s5357] sm:$0x1]
        %v5360 = vlaneseq
        %v5361 = vshrl.u32 %v5360, 7
        %v5362 = vsub.s32 0, %v5361
        %v5363 = vrot.slane %v5358, %v5362
        %v5373 = vunpack.c.l.b16 %v5348
        %v5374 = vunpack.c.l.b16 %v5349
        %v5375 = vunpack.c.l.b16 %v5350
        %v5376 = vunpack.c.l.b16 %v5351
        %v5377 = vunpack.c.l.b16 %v5352
        %v5378 = vunpack.c.l.b16 %v5353
        %v5379 = vunpack.c.l.b16 %v5354
        %v5380 = vunpack.c.l.b16 %v5355
        %v5381 = vpack.c.b16 %v5374, %v5373
        %v5382 = vpack.c.b16 %v5376, %v5375
        %v5383 = vpack.c.b16 %v5378, %v5377
        %v5384 = vpack.c.b16 %v5380, %v5379
        %v5390 = vsel %vm785, %v5356, 0
        %5392 = vmatprep.subr.bf16.mxu0 0
        %5393 = vmatpush1.bf16.msra.mxu0 0
        %5394 = vmatprep.subr.bf16.mxu0 0
        %5395 = vmatpush1.bf16.msra.mxu0 0
        %5396 = vmatprep.subr.bf16.mxu0 0
        %5397 = vmatpush1.bf16.msra.mxu0 0
        %5398 = vmatprep.subr.bf16.mxu0 0
        %5399 = vmatpush1.bf16.msra.mxu0 0
        %5400 = vmatprep.subr.bf16.mxu0 0
        %5401 = vmatpush1.bf16.msra.mxu0 %v5384
        %5402 = vmatprep.subr.bf16.mxu0 0
        %5403 = vmatpush1.bf16.msra.mxu0 %v5383
        %5404 = vmatprep.subr.bf16.mxu0 0
        %5405 = vmatpush1.bf16.msra.mxu0 %v5382
        %5406 = vmatprep.subr.bf16.mxu0 0
        %5407 = vmatpush1.bf16.msra.mxu0 %v5381
        %5408 = vmatprep.subr.bf16.mxu0 0
        %5409 = vmatpush2.bf16.msra.mxu0 0
        %5410 = vmatprep.subr.bf16.mxu0 0
        %5411 = vmatpush2.bf16.msra.mxu0 0
        %5412 = vmatprep.subr.bf16.mxu0 0
        %5413 = vmatpush2.bf16.msra.mxu0 0
        %5414 = vmatprep.subr.bf16.mxu0 0
        %5415 = vmatpush2.bf16.msra.mxu0 0
        %5416 = vmatprep.subr.bf16.mxu0 0
        %5417 = vmatpush2.bf16.msra.mxu0 0
        %5418 = vmatprep.subr.bf16.mxu0 0
        %5419 = vmatpush2.bf16.msra.mxu0 0
        %5420 = vmatprep.subr.bf16.mxu0 0
        %5421 = vmatpush2.bf16.msra.mxu0 0
        %5422 = vmatprep.subr.bf16.mxu0 0
        %5423 = vmatpush2.bf16.msra.mxu0 0
        %5424 = vmatprep.mubr.bf16.mxu0 0
        %5425 = vmatmul.mubr.bf16.gmra.mxu0 %v5390
        %v5426 = vpop.f32.mrf.mxu0
        %v5427 = vadd.f32 %v5363, %v5426
        %v5428 = vpop.f32.mrf.mxu0
        %v5429 = vpop.f32.mrf.mxu0
        %v5430 = vpop.f32.mrf.mxu0
        %5431 = vdwg.mxu0
        %v5432 = vmax.f32 %v5427, 0.0
        %s5433 = scalar_lea.vmem %s14, 64
        %v5434 = vld [vmem:[%s5433] sm:$0xf]
        %v5435 = vld [vmem:[%s5433 + $0x4] sm:$0xf]
        %v5436 = vld [vmem:[%s5433 + $0x8] sm:$0xf]
        %v5437 = vld [vmem:[%s5433 + $0xc] sm:$0xf]
        %v5438 = vld [vmem:[%s5433 + $0x10] sm:$0xf]
        %v5439 = vld [vmem:[%s5433 + $0x14] sm:$0xf]
        %v5440 = vld [vmem:[%s5433 + $0x18] sm:$0xf]
        %v5441 = vld [vmem:[%s5433 + $0x1c] sm:$0xf]
        %v5442 = vld [vmem:[%s5433 + $0x20] sm:$0xf]
        %v5443 = vld [vmem:[%s5433 + $0x24] sm:$0xf]
        %v5444 = vld [vmem:[%s5433 + $0x28] sm:$0xf]
        %v5445 = vld [vmem:[%s5433 + $0x2c] sm:$0xf]
        %v5446 = vld [vmem:[%s5433 + $0x30] sm:$0xf]
        %v5447 = vld [vmem:[%s5433 + $0x34] sm:$0xf]
        %v5448 = vld [vmem:[%s5433 + $0x38] sm:$0xf]
        %v5449 = vld [vmem:[%s5433 + $0x3c] sm:$0xf]
        %v5450 = vpack.c.bf16 %v5432, %v5432
        %s5451 = scalar_lea.vmem %s15, 1
        %v5452 = vld [vmem:[%s5451] sm:$0x1]
        %v5454 = vlaneseq
        %v5455 = vshrl.u32 %v5454, 7
        %v5456 = vsub.s32 0, %v5455
        %v5457 = vrot.slane %v5452, %v5456
        %v5475 = vunpack.c.l.b16 %v5434
        %v5476 = vunpack.c.l.b16 %v5435
        %v5477 = vunpack.c.l.b16 %v5436
        %v5478 = vunpack.c.l.b16 %v5437
        %v5479 = vunpack.c.l.b16 %v5438
        %v5480 = vunpack.c.l.b16 %v5439
        %v5481 = vunpack.c.l.b16 %v5440
        %v5482 = vunpack.c.l.b16 %v5441
        %v5483 = vunpack.c.l.b16 %v5442
        %v5484 = vunpack.c.l.b16 %v5443
        %v5485 = vunpack.c.l.b16 %v5444
        %v5486 = vunpack.c.l.b16 %v5445
        %v5487 = vunpack.c.l.b16 %v5446
        %v5488 = vunpack.c.l.b16 %v5447
        %v5489 = vunpack.c.l.b16 %v5448
        %v5490 = vunpack.c.l.b16 %v5449
        %v5491 = vpack.c.b16 %v5476, %v5475
        %v5492 = vpack.c.b16 %v5478, %v5477
        %v5493 = vpack.c.b16 %v5480, %v5479
        %v5494 = vpack.c.b16 %v5482, %v5481
        %v5495 = vpack.c.b16 %v5484, %v5483
        %v5496 = vpack.c.b16 %v5486, %v5485
        %v5497 = vpack.c.b16 %v5488, %v5487
        %v5498 = vpack.c.b16 %v5490, %v5489
        %5507 = vmatprep.subr.bf16.mxu0 0
        %5508 = vmatpush1.bf16.msra.mxu0 %v5498
        %5509 = vmatprep.subr.bf16.mxu0 0
        %5510 = vmatpush1.bf16.msra.mxu0 %v5497
        %5511 = vmatprep.subr.bf16.mxu0 0
        %5512 = vmatpush1.bf16.msra.mxu0 %v5496
        %5513 = vmatprep.subr.bf16.mxu0 0
        %5514 = vmatpush1.bf16.msra.mxu0 %v5495
        %5515 = vmatprep.subr.bf16.mxu0 0
        %5516 = vmatpush1.bf16.msra.mxu0 %v5494
        %5517 = vmatprep.subr.bf16.mxu0 0
        %5518 = vmatpush1.bf16.msra.mxu0 %v5493
        %5519 = vmatprep.subr.bf16.mxu0 0
        %5520 = vmatpush1.bf16.msra.mxu0 %v5492
        %5521 = vmatprep.subr.bf16.mxu0 0
        %5522 = vmatpush1.bf16.msra.mxu0 %v5491
        %5523 = vmatprep.subr.bf16.mxu0 0
        %5524 = vmatpush2.bf16.msra.mxu0 0
        %5525 = vmatprep.subr.bf16.mxu0 0
        %5526 = vmatpush2.bf16.msra.mxu0 0
        %5527 = vmatprep.subr.bf16.mxu0 0
        %5528 = vmatpush2.bf16.msra.mxu0 0
        %5529 = vmatprep.subr.bf16.mxu0 0
        %5530 = vmatpush2.bf16.msra.mxu0 0
        %5531 = vmatprep.subr.bf16.mxu0 0
        %5532 = vmatpush2.bf16.msra.mxu0 0
        %5533 = vmatprep.subr.bf16.mxu0 0
        %5534 = vmatpush2.bf16.msra.mxu0 0
        %5535 = vmatprep.subr.bf16.mxu0 0
        %5536 = vmatpush2.bf16.msra.mxu0 0
        %5537 = vmatprep.subr.bf16.mxu0 0
        %5538 = vmatpush2.bf16.msra.mxu0 0
        %5539 = vmatprep.mubr.bf16.mxu0 0
        %5540 = vmatmul.mubr.bf16.gmra.mxu0 %v5450
        %v5541 = vpop.f32.mrf.mxu0
        %v5542 = vadd.f32 %v5457, %v5541
        %v5543 = vpop.f32.mrf.mxu0
        %v5544 = vpop.f32.mrf.mxu0
        %v5545 = vpop.f32.mrf.mxu0
        %5546 = vdwg.mxu0
        %v5547 = vadd.f32 %v5346, %v5542
        %s5548 = scalar_lea.vmem %s18, 1
        %v5549 = vld [vmem:[%s5548] sm:$0x1]
        %s5550 = scalar_lea.vmem %s19, 1
        %v5551 = vld [vmem:[%s5550] sm:$0x1]
        %v5552 = vsel %vm785, %v5547, 0.0
        %5553 = vadd.xlane.f32.xlu0 %v5552
        %v5554 = vpop.xlane.xlu0 %5553
        %v5555 = vmul.f32 %v5554, %v2908
        %v5556 = vsub.f32 %v5547, %v5555
        %v5557 = vmul.f32 %v5556, %v5556
        %v5558 = vsel %vm785, %v5557, 0.0
        %5559 = vadd.xlane.f32.xlu0 %v5558
        %v5560 = vpop.xlane.xlu0 %5559
        %v5561 = vmul.f32 %v5560, %v2908
        %v5562 = vadd.f32 %v5561, 1e-05
        %v5563 = vrsqrt.pop %v5562
        %v5564 = vmul.f32 %v5556, %v5563
        %v5566 = vlaneseq
        %v5567 = vshrl.u32 %v5566, 7
        %v5568 = vsub.s32 0, %v5567
        %v5569 = vrot.slane %v5549, %v5568
        %v5571 = vmul.f32 %v5564, %v5569
        %v5573 = vlaneseq
        %v5574 = vshrl.u32 %v5573, 7
        %v5575 = vsub.s32 0, %v5574
        %v5576 = vrot.slane %v5551, %v5575
        %v5578 = vadd.f32 %v5571, %v5576
        %v5580 = vrot.slane %v5578, 2
        %v5582 = vadd.f32 %v5578, %v5580
        %v5583 = vrot.slane %v5578, 4
        %v5585 = vadd.f32 %v5582, %v5583
        %v5586 = vrot.slane %v5578, 6
        %v5588 = vadd.f32 %v5585, %v5586
        %vm5589 = vcmask 517120
        %5590 = vst.msk [vmem:[%s675] sm:$0x3] %vm5589, %v5588
        %s5591 = sand.u32 %s474, 1
        %s5592 = scalar_lea.sflag [#allocation4], %s5591
        %s5593 = sand.u32 %s474, 1
        %s5594 = smul.addr %s5593, 2
        %s5595 = scalar_lea.vmem [#allocation8], %s5594
        // Predicated region
        $region113: #{tpu_custom_call.1} parent=99 // pred_check
          %p5596 = pneg %p484
        $region114: #{tpu_custom_call.1} parent=99 // pred_check_branch
          %5598 = sbr.rel (%p5596) target = $region116
        $region115: #{tpu_custom_call.1} parent=99 // pred_region
          %s5600 = ssub.s32 32, 32
          %5601 = vsyncadd %s5592, %s5600
          %s5602 = smul.addr %s36, 32
          %s5603 = scalar_lea.hbm %s20, %s5602
          %s5605 = sshll.u32 %s5595, 4
          %s5606 = int_to_ptr.vmem [resolvable:$true] %s5605
          %5608 = dma.vmem_to_hbm [thread:$0]  %s5606, 32, %s5603, %s5592
        $region116: #{tpu_custom_call.1} parent=99 // pred_fallthru
          _
      $region100: #{tpu_custom_call.1} parent=5 // pred_fallthru
        _
      %p5609 = scmp.le.s32.totalorder 2, %s31
      // Predicated region
      $region117: #{tpu_custom_call.1} parent=5 // pred_check
        %p5610 = pneg %p5609
      $region118: #{tpu_custom_call.1} parent=5 // pred_check_branch
        %5612 = sbr.rel (%p5610) target = $region120
      $region119: #{tpu_custom_call.1} parent=5 // pred_region
        %s5613 = ssub.s32 %s31, 2
        // Predicated region
        $region121: #{tpu_custom_call.1} parent=119 // pred_check
          %p5614 = pneg %p490
        $region122: #{tpu_custom_call.1} parent=119 // pred_check_branch
          %5616 = sbr.rel (%p5614) target = $region124
        $region123: #{tpu_custom_call.1} parent=119 // pred_region
          %s5617 = sand.u32 %s475, 1
          %s5618 = scalar_lea.sflag [#allocation4], %s5617
          %s5619 = sand.u32 %s475, 1
          %s5620 = smul.addr %s5619, 2
          %s5621 = scalar_lea.vmem [#allocation8], %s5620
          %5622 = dma.done %s5618, 32
        $region124: #{tpu_custom_call.1} parent=119 // pred_fallthru
          _
      $region120: #{tpu_custom_call.1} parent=5 // pred_fallthru
        _
    $region6: #{tpu_custom_call.1} parent=1 // loop_footer
      %s35 = sadd.s32 1, %s31
    $region7: #{tpu_custom_call.1} parent=1 // loop_footer_branch
      %30 = sbr.rel target = $region3
    $region8: #{tpu_custom_call.1} parent=1 // loop_exit
      _
    %5623 = vsyncpa [#allocation3], 1
    %s5624 = scalar_lea.sflag [#allocation3], 1
    %5625 = vsyncpa %s5624, 1
    %5626 = vsyncpa [#allocation6], 1
    %5627 = vsyncpa [#allocation4], 1
    %s5628 = scalar_lea.sflag [#allocation4], 1
    %5629 = vsyncpa %s5628, 1

</llo_original>
